<compile_context>
chip_gen: v5e
topology: v5e:2x2
jax: 0.10.0
libtpu: 0.0.40
codegen_flags: <defaults>
</compile_context>

<pallas_src>
import functools

import jax
import jax.numpy as jnp
from jax import lax
from jax.experimental import pallas as pl
from jax.experimental.pallas import tpu as pltpu


def _pixel_attention_kernel(
    hpos_ref, wpos_ref,                 # [1, L] int32 spatial position vectors
    x_ref, rgb_ref, temp_ref,           # [cp, L] activations (zero-padded rows)
    w1x_ref,                            # [9, 2*cp, cp]  stacked x-halves (A;B)
    w1r_ref, b1a_ref,                   # [9, cp, cp], [cp, 1]   branch A layer 1
    w1t_ref, b1b_ref,                   # [9, cp, cp], [cp, 1]   branch B layer 1
    w2a_ref, b2a_ref,                   # [9, cp, cp], [cp, 1]   branch A layer 2
    w2b_ref, b2b_ref,                   # [9, cp, cp], [cp, 1]   branch B layer 2
    w3a_ref, b3a_ref,                   # [1, cp], [1, 1]        branch A head
    w3b_ref, b3b_ref,                   # [1, cp], [1, 1]        branch B head
    out_ref,                            # [cp, L]
    *, H, W, eps, gate_flag):
    cp, L = out_ref.shape
    l_inv = 1.0 / L

    h_pos = hpos_ref[...]               # [1, L]
    w_pos = wpos_ref[...]               # [1, L]

    # ---- 9 taps: lane shift + (optional) {0,1} f32 boundary mask, built once.
    taps = []
    for kh in range(3):
        for kw in range(3):
            dh, dw = kh - 1, kw - 1
            shift = (-(dh * W + dw)) % L        # tap[l] = act[l + dh*W + dw]
            if dh == 0 and dw == 0:
                taps.append((0, None))          # centre tap: always valid
                continue
            valid = None
            if dh != 0:                         # only the h-test is needed
                valid = (h_pos + dh >= 0) & (h_pos + dh < H)
            if dw != 0:                         # only the w-test is needed
                vw = (w_pos + dw >= 0) & (w_pos + dw < W)
                valid = vw if valid is None else (valid & vw)
            # Pre-broadcast once so per-conv use is a plain elementwise mul.
            mask = jnp.broadcast_to(valid.astype(jnp.float32), (cp, L))
            taps.append((shift, mask))

    def conv3x3(act, w_ref, bias=None):
        # act: [cp, L]; w_ref: [9, rows, cp]; per-tap dot accumulation (no im2col).
        w = w_ref[...]
        acc = None
        for t, (shift, mask) in enumerate(taps):
            tap = act if shift == 0 else pltpu.roll(act, shift, axis=1)
            if mask is not None:
                tap = tap * mask
            part = jnp.dot(w[t], tap, preferred_element_type=jnp.float32)
            acc = part if acc is None else acc + part
        if bias is not None:
            acc = acc + bias
        return acc

    def relu_bn(y):
        # ReLU + train-mode BatchNorm (batch stats, biased var, gamma=1/beta=0).
        # Single traversal: var = E[y^2] - mean^2.  Padded rows stay exactly 0.
        y = jnp.maximum(y, 0.0)
        s = jnp.sum(y, axis=1, keepdims=True)
        s2 = jnp.sum(y * y, axis=1, keepdims=True)
        mean = s * l_inv
        var = s2 * l_inv - mean * mean
        return (y - mean) * lax.rsqrt(var + eps)

    def head_sigmoid(w_ref, b_ref, y):
        m = jnp.dot(w_ref[...], y, preferred_element_type=jnp.float32) + b_ref[...]
        return 1.0 / (1.0 + jnp.exp(-m))        # [1, L], f32

    x = x_ref[...]
    rgb = rgb_ref[...]
    temp = temp_ref[...]

    # Layer 1: the x contribution of BOTH branches shares one stacked matmul
    # against the same rolled/masked x taps.
    y1x = conv3x3(x, w1x_ref)                   # [2*cp, L]

    y1a = relu_bn(y1x[:cp] + conv3x3(rgb, w1r_ref, b1a_ref[...]))
    y2a = relu_bn(conv3x3(y1a, w2a_ref, b2a_ref[...]))
    mask1 = head_sigmoid(w3a_ref, b3a_ref, y2a)

    result = x + rgb * mask1                    # [cp, L]

    if gate_flag:                               # static python flag
        y1b = relu_bn(y1x[cp:] + conv3x3(temp, w1t_ref, b1b_ref[...]))
        y2b = relu_bn(conv3x3(y1b, w2b_ref, b2b_ref[...]))
        mask2 = head_sigmoid(w3b_ref, b3b_ref, y2b)
        result = result + temp * mask2

    out_ref[...] = result


# ----------------------------- wrapper / plumbing -----------------------------

def _round_up(n, m):
    return ((n + m - 1) // m) * m


def _to_lanes(t_nchw):
    # [N, C, H, W] -> [C, N*H*W]   (flat spatial index = n*H*W + h*W + w)
    N, C, H, W = t_nchw.shape
    return jnp.transpose(t_nchw, (1, 0, 2, 3)).reshape(C, N * H * W)


def _pad_rows(a, rows):
    if a.shape[0] == rows:
        return a
    return jnp.pad(a, ((0, rows - a.shape[0]), (0, 0)))


def _prep_conv3x3_taps(w, cout_p, cin_p):
    # torch Conv2d weight [Cout, Cin, 3, 3] -> [9, Cout_p, Cin_p], tap t=kh*3+kw.
    cout, cin = w.shape[0], w.shape[1]
    wp = jnp.zeros((cout_p, cin_p, 3, 3), jnp.float32).at[:cout, :cin].set(w)
    return jnp.transpose(wp, (2, 3, 0, 1)).reshape(9, cout_p, cin_p)


def _prep_conv1x1(w, b, cin_p):
    # torch Conv2d weight [1, Cin, 1, 1] -> [1, Cin_p]
    cin = w.shape[1]
    wp = jnp.zeros((1, cin_p), jnp.float32).at[:, :cin].set(w.reshape(1, cin))
    return wp, b.reshape(1, 1).astype(jnp.float32)


def _pad_bias(b, cp):
    return jnp.zeros((cp, 1), jnp.float32).at[:b.shape[0], 0].set(b)


def pixel_attention_forward(params, x, rgb, temperature, gate_flag):
    N, C, H, W = x.shape
    L = N * H * W
    cp = _round_up(C, 8)               # padded channel count (sublane tile)

    xk = _pad_rows(_to_lanes(x), cp)
    rk = _pad_rows(_to_lanes(rgb), cp)
    tk = _pad_rows(_to_lanes(temperature), cp)

    lin = jnp.arange(L, dtype=jnp.int32)
    h_pos = ((lin // W) % H).reshape(1, L)
    w_pos = (lin % W).reshape(1, L)

    (w1a, b1a), (w2a, b2a), (w3a, b3a) = params["mask_conv1"]
    (w1b, b1b), (w2b, b2b), (w3b, b3b) = params["mask_conv2"]

    # Split layer-1 weights into x-half / other-half; stack the two x-halves.
    w1a_x = _prep_conv3x3_taps(w1a[:, :C], cp, cp)
    w1a_r = _prep_conv3x3_taps(w1a[:, C:], cp, cp)
    w1b_x = _prep_conv3x3_taps(w1b[:, :C], cp, cp)
    w1b_t = _prep_conv3x3_taps(w1b[:, C:], cp, cp)
    w1x_stack = jnp.concatenate([w1a_x, w1b_x], axis=1)        # [9, 2*cp, cp]

    w2a_p = _prep_conv3x3_taps(w2a, cp, cp)
    w2b_p = _prep_conv3x3_taps(w2b, cp, cp)
    w3a_p, b3a_p = _prep_conv1x1(w3a, b3a, cp)
    w3b_p, b3b_p = _prep_conv1x1(w3b, b3b, cp)

    args = (h_pos, w_pos, xk, rk, tk,
            w1x_stack,
            w1a_r, _pad_bias(b1a, cp),
            w1b_t, _pad_bias(b1b, cp),
            w2a_p, _pad_bias(b2a, cp),
            w2b_p, _pad_bias(b2b, cp),
            w3a_p, b3a_p,
            w3b_p, b3b_p)

    kernel = functools.partial(_pixel_attention_kernel, H=H, W=W, eps=1e-5,
                               gate_flag=bool(gate_flag))

    def _full_spec(a):
        nd = a.ndim
        return pl.BlockSpec(a.shape, lambda i, _n=nd: (0,) * _n)

    # Explicit VMEM budget (working set is tiny at these shapes); capped at the
    # v7x physical limit so the same value is valid on every generation.
    vmem_est = 48 * cp * L * 4 + (2 << 20)
    vmem_limit = int(min(max(vmem_est, 16 << 20), 64 << 20))

    out_k = pl.pallas_call(
        kernel,
        out_shape=jax.ShapeDtypeStruct((cp, L), jnp.float32),
        grid=(1,),
        in_specs=[_full_spec(a) for a in args],
        out_specs=pl.BlockSpec((cp, L), lambda i: (0, 0)),
        compiler_params=pltpu.CompilerParams(
            dimension_semantics=("arbitrary",),
            vmem_limit_bytes=vmem_limit),
    )(*args)

    out = out_k[:C]                     # drop padded channel rows
    return jnp.transpose(out.reshape(C, N, H, W), (1, 0, 2, 3))


def init_params(key, inchannels):
    """Deterministic init mirroring the module: kaiming_uniform_(a=1), bias=0."""
    def conv_init(k, cin, cout, ksize):
        fan_in = cin * ksize * ksize
        bound = (3.0 / fan_in) ** 0.5          # gain = 1 for a = 1
        w = jax.random.uniform(k, (cout, cin, ksize, ksize), jnp.float32,
                               -bound, bound)
        b = jnp.zeros((cout,), jnp.float32)    # nn.init.constant_(bias, 0)
        return (w, b)

    C = inchannels
    ks = jax.random.split(key, 6)
    return {
        "mask_conv1": [conv_init(ks[0], 2 * C, C, 3),
                       conv_init(ks[1], C, C, 3),
                       conv_init(ks[2], C, 1, 1)],
        "mask_conv2": [conv_init(ks[3], 2 * C, C, 3),
                       conv_init(ks[4], C, C, 3),
                       conv_init(ks[5], C, 1, 1)],
    }


if __name__ == "__main__":
    N, C, H, W = 2, 4, 16, 16

    key = jax.random.PRNGKey(0)
    kp, kx, kr, kt = jax.random.split(key, 4)
    params = init_params(kp, C)
    x = jax.random.normal(kx, (N, C, H, W), jnp.float32)
    rgb = jax.random.normal(kr, (N, C, H, W), jnp.float32)
    temperature = jax.random.normal(kt, (N, C, H, W), jnp.float32)

    fwd = jax.jit(functools.partial(pixel_attention_forward, gate_flag=True))
    out = fwd(params, x, rgb, temperature)
    jax.block_until_ready(out)

    assert out.shape == (N, C, H, W)
    assert bool(jnp.all(jnp.isfinite(out)))
    print("KERNEL_OK")
</pallas_src>

<mosaic_0001>
module attributes {stable_mosaic.version = 11 : i64} {
  func.func @_pixel_attention_kernel(%arg0: i32, %arg1: memref<1x512xi32, #tpu.memory_space<vmem>>, %arg2: memref<1x512xi32, #tpu.memory_space<vmem>>, %arg3: memref<8x512xf32, #tpu.memory_space<vmem>>, %arg4: memref<8x512xf32, #tpu.memory_space<vmem>>, %arg5: memref<8x512xf32, #tpu.memory_space<vmem>>, %arg6: memref<9x16x8xf32, #tpu.memory_space<vmem>>, %arg7: memref<9x8x8xf32, #tpu.memory_space<vmem>>, %arg8: memref<8x1xf32, #tpu.memory_space<vmem>>, %arg9: memref<9x8x8xf32, #tpu.memory_space<vmem>>, %arg10: memref<8x1xf32, #tpu.memory_space<vmem>>, %arg11: memref<9x8x8xf32, #tpu.memory_space<vmem>>, %arg12: memref<8x1xf32, #tpu.memory_space<vmem>>, %arg13: memref<9x8x8xf32, #tpu.memory_space<vmem>>, %arg14: memref<8x1xf32, #tpu.memory_space<vmem>>, %arg15: memref<1x8xf32, #tpu.memory_space<vmem>>, %arg16: memref<1x1xf32, #tpu.memory_space<vmem>>, %arg17: memref<1x8xf32, #tpu.memory_space<vmem>>, %arg18: memref<1x1xf32, #tpu.memory_space<vmem>>, %arg19: memref<8x512xf32, #tpu.memory_space<vmem>>) attributes {dimension_semantics = [#tpu.dimension_semantics<arbitrary>], iteration_bounds = array<i64: 1>, scalar_prefetch = 0 : i64, scratch_operands = 0 : i64, tpu.core_type = #tpu.core_type<tc>, window_params = [{pipeline_mode = #tpu.pipeline_mode<synchronous>, transform_indices = @transform_0, window_bounds = array<i64: 1, 512>}, {pipeline_mode = #tpu.pipeline_mode<synchronous>, transform_indices = @transform_1, window_bounds = array<i64: 1, 512>}, {pipeline_mode = #tpu.pipeline_mode<synchronous>, transform_indices = @transform_2, window_bounds = array<i64: 8, 512>}, {pipeline_mode = #tpu.pipeline_mode<synchronous>, transform_indices = @transform_3, window_bounds = array<i64: 8, 512>}, {pipeline_mode = #tpu.pipeline_mode<synchronous>, transform_indices = @transform_4, window_bounds = array<i64: 8, 512>}, {pipeline_mode = #tpu.pipeline_mode<synchronous>, transform_indices = @transform_5, window_bounds = array<i64: 9, 16, 8>}, {pipeline_mode = #tpu.pipeline_mode<synchronous>, transform_indices = @transform_6, window_bounds = array<i64: 9, 8, 8>}, {pipeline_mode = #tpu.pipeline_mode<synchronous>, transform_indices = @transform_7, window_bounds = array<i64: 8, 1>}, {pipeline_mode = #tpu.pipeline_mode<synchronous>, transform_indices = @transform_8, window_bounds = array<i64: 9, 8, 8>}, {pipeline_mode = #tpu.pipeline_mode<synchronous>, transform_indices = @transform_9, window_bounds = array<i64: 8, 1>}, {pipeline_mode = #tpu.pipeline_mode<synchronous>, transform_indices = @transform_10, window_bounds = array<i64: 9, 8, 8>}, {pipeline_mode = #tpu.pipeline_mode<synchronous>, transform_indices = @transform_11, window_bounds = array<i64: 8, 1>}, {pipeline_mode = #tpu.pipeline_mode<synchronous>, transform_indices = @transform_12, window_bounds = array<i64: 9, 8, 8>}, {pipeline_mode = #tpu.pipeline_mode<synchronous>, transform_indices = @transform_13, window_bounds = array<i64: 8, 1>}, {pipeline_mode = #tpu.pipeline_mode<synchronous>, transform_indices = @transform_14, window_bounds = array<i64: 1, 8>}, {pipeline_mode = #tpu.pipeline_mode<synchronous>, transform_indices = @transform_15, window_bounds = array<i64: 1, 1>}, {pipeline_mode = #tpu.pipeline_mode<synchronous>, transform_indices = @transform_16, window_bounds = array<i64: 1, 8>}, {pipeline_mode = #tpu.pipeline_mode<synchronous>, transform_indices = @transform_17, window_bounds = array<i64: 1, 1>}, {pipeline_mode = #tpu.pipeline_mode<synchronous>, transform_indices = @transform_18, window_bounds = array<i64: 8, 512>}]} {
    %c0 = arith.constant 0 : index
    %c0_0 = arith.constant 0 : index
    %0 = vector.load %arg1[%c0, %c0_0] : memref<1x512xi32, #tpu.memory_space<vmem>>, vector<1x512xi32>
    %c0_1 = arith.constant 0 : index
    %c0_2 = arith.constant 0 : index
    %1 = vector.load %arg2[%c0_1, %c0_2] : memref<1x512xi32, #tpu.memory_space<vmem>>, vector<1x512xi32>
    %c-1_i32 = arith.constant -1 : i32
    %2 = vector.broadcast %c-1_i32 : i32 to vector<1x512xi32>
    %3 = arith.addi %0, %2 : vector<1x512xi32>
    %c0_i32 = arith.constant 0 : i32
    %4 = vector.broadcast %c0_i32 : i32 to vector<1x512xi32>
    %5 = arith.cmpi sge, %3, %4 : vector<1x512xi32>
    %c-1_i32_3 = arith.constant -1 : i32
    %6 = vector.broadcast %c-1_i32_3 : i32 to vector<1x512xi32>
    %7 = arith.addi %0, %6 : vector<1x512xi32>
    %c16_i32 = arith.constant 16 : i32
    %8 = vector.broadcast %c16_i32 : i32 to vector<1x512xi32>
    %9 = arith.cmpi slt, %7, %8 : vector<1x512xi32>
    %10 = arith.andi %5, %9 : vector<1x512xi1>
    %c-1_i32_4 = arith.constant -1 : i32
    %11 = vector.broadcast %c-1_i32_4 : i32 to vector<1x512xi32>
    %12 = arith.addi %1, %11 : vector<1x512xi32>
    %c0_i32_5 = arith.constant 0 : i32
    %13 = vector.broadcast %c0_i32_5 : i32 to vector<1x512xi32>
    %14 = arith.cmpi sge, %12, %13 : vector<1x512xi32>
    %c-1_i32_6 = arith.constant -1 : i32
    %15 = vector.broadcast %c-1_i32_6 : i32 to vector<1x512xi32>
    %16 = arith.addi %1, %15 : vector<1x512xi32>
    %c16_i32_7 = arith.constant 16 : i32
    %17 = vector.broadcast %c16_i32_7 : i32 to vector<1x512xi32>
    %18 = arith.cmpi slt, %16, %17 : vector<1x512xi32>
    %19 = arith.andi %14, %18 : vector<1x512xi1>
    %20 = arith.andi %10, %19 : vector<1x512xi1>
    %21 = arith.extui %20 : vector<1x512xi1> to vector<1x512xi32>
    %22 = arith.sitofp %21 : vector<1x512xi32> to vector<1x512xf32>
    %23 = vector.shape_cast %22 : vector<1x512xf32> to vector<1x512xf32>
    %24 = vector.broadcast %23 : vector<1x512xf32> to vector<8x512xf32>
    %c-1_i32_8 = arith.constant -1 : i32
    %25 = vector.broadcast %c-1_i32_8 : i32 to vector<1x512xi32>
    %26 = arith.addi %0, %25 : vector<1x512xi32>
    %c0_i32_9 = arith.constant 0 : i32
    %27 = vector.broadcast %c0_i32_9 : i32 to vector<1x512xi32>
    %28 = arith.cmpi sge, %26, %27 : vector<1x512xi32>
    %c-1_i32_10 = arith.constant -1 : i32
    %29 = vector.broadcast %c-1_i32_10 : i32 to vector<1x512xi32>
    %30 = arith.addi %0, %29 : vector<1x512xi32>
    %c16_i32_11 = arith.constant 16 : i32
    %31 = vector.broadcast %c16_i32_11 : i32 to vector<1x512xi32>
    %32 = arith.cmpi slt, %30, %31 : vector<1x512xi32>
    %33 = arith.andi %28, %32 : vector<1x512xi1>
    %34 = arith.extui %33 : vector<1x512xi1> to vector<1x512xi32>
    %35 = arith.sitofp %34 : vector<1x512xi32> to vector<1x512xf32>
    %36 = vector.shape_cast %35 : vector<1x512xf32> to vector<1x512xf32>
    %37 = vector.broadcast %36 : vector<1x512xf32> to vector<8x512xf32>
    %c-1_i32_12 = arith.constant -1 : i32
    %38 = vector.broadcast %c-1_i32_12 : i32 to vector<1x512xi32>
    %39 = arith.addi %0, %38 : vector<1x512xi32>
    %c0_i32_13 = arith.constant 0 : i32
    %40 = vector.broadcast %c0_i32_13 : i32 to vector<1x512xi32>
    %41 = arith.cmpi sge, %39, %40 : vector<1x512xi32>
    %c-1_i32_14 = arith.constant -1 : i32
    %42 = vector.broadcast %c-1_i32_14 : i32 to vector<1x512xi32>
    %43 = arith.addi %0, %42 : vector<1x512xi32>
    %c16_i32_15 = arith.constant 16 : i32
    %44 = vector.broadcast %c16_i32_15 : i32 to vector<1x512xi32>
    %45 = arith.cmpi slt, %43, %44 : vector<1x512xi32>
    %46 = arith.andi %41, %45 : vector<1x512xi1>
    %c1_i32 = arith.constant 1 : i32
    %47 = vector.broadcast %c1_i32 : i32 to vector<1x512xi32>
    %48 = arith.addi %1, %47 : vector<1x512xi32>
    %c0_i32_16 = arith.constant 0 : i32
    %49 = vector.broadcast %c0_i32_16 : i32 to vector<1x512xi32>
    %50 = arith.cmpi sge, %48, %49 : vector<1x512xi32>
    %c1_i32_17 = arith.constant 1 : i32
    %51 = vector.broadcast %c1_i32_17 : i32 to vector<1x512xi32>
    %52 = arith.addi %1, %51 : vector<1x512xi32>
    %c16_i32_18 = arith.constant 16 : i32
    %53 = vector.broadcast %c16_i32_18 : i32 to vector<1x512xi32>
    %54 = arith.cmpi slt, %52, %53 : vector<1x512xi32>
    %55 = arith.andi %50, %54 : vector<1x512xi1>
    %56 = arith.andi %46, %55 : vector<1x512xi1>
    %57 = arith.extui %56 : vector<1x512xi1> to vector<1x512xi32>
    %58 = arith.sitofp %57 : vector<1x512xi32> to vector<1x512xf32>
    %59 = vector.shape_cast %58 : vector<1x512xf32> to vector<1x512xf32>
    %60 = vector.broadcast %59 : vector<1x512xf32> to vector<8x512xf32>
    %c-1_i32_19 = arith.constant -1 : i32
    %61 = vector.broadcast %c-1_i32_19 : i32 to vector<1x512xi32>
    %62 = arith.addi %1, %61 : vector<1x512xi32>
    %c0_i32_20 = arith.constant 0 : i32
    %63 = vector.broadcast %c0_i32_20 : i32 to vector<1x512xi32>
    %64 = arith.cmpi sge, %62, %63 : vector<1x512xi32>
    %c-1_i32_21 = arith.constant -1 : i32
    %65 = vector.broadcast %c-1_i32_21 : i32 to vector<1x512xi32>
    %66 = arith.addi %1, %65 : vector<1x512xi32>
    %c16_i32_22 = arith.constant 16 : i32
    %67 = vector.broadcast %c16_i32_22 : i32 to vector<1x512xi32>
    %68 = arith.cmpi slt, %66, %67 : vector<1x512xi32>
    %69 = arith.andi %64, %68 : vector<1x512xi1>
    %70 = arith.extui %69 : vector<1x512xi1> to vector<1x512xi32>
    %71 = arith.sitofp %70 : vector<1x512xi32> to vector<1x512xf32>
    %72 = vector.shape_cast %71 : vector<1x512xf32> to vector<1x512xf32>
    %73 = vector.broadcast %72 : vector<1x512xf32> to vector<8x512xf32>
    %c1_i32_23 = arith.constant 1 : i32
    %74 = vector.broadcast %c1_i32_23 : i32 to vector<1x512xi32>
    %75 = arith.addi %1, %74 : vector<1x512xi32>
    %c0_i32_24 = arith.constant 0 : i32
    %76 = vector.broadcast %c0_i32_24 : i32 to vector<1x512xi32>
    %77 = arith.cmpi sge, %75, %76 : vector<1x512xi32>
    %c1_i32_25 = arith.constant 1 : i32
    %78 = vector.broadcast %c1_i32_25 : i32 to vector<1x512xi32>
    %79 = arith.addi %1, %78 : vector<1x512xi32>
    %c16_i32_26 = arith.constant 16 : i32
    %80 = vector.broadcast %c16_i32_26 : i32 to vector<1x512xi32>
    %81 = arith.cmpi slt, %79, %80 : vector<1x512xi32>
    %82 = arith.andi %77, %81 : vector<1x512xi1>
    %83 = arith.extui %82 : vector<1x512xi1> to vector<1x512xi32>
    %84 = arith.sitofp %83 : vector<1x512xi32> to vector<1x512xf32>
    %85 = vector.shape_cast %84 : vector<1x512xf32> to vector<1x512xf32>
    %86 = vector.broadcast %85 : vector<1x512xf32> to vector<8x512xf32>
    %c1_i32_27 = arith.constant 1 : i32
    %87 = vector.broadcast %c1_i32_27 : i32 to vector<1x512xi32>
    %88 = arith.addi %0, %87 : vector<1x512xi32>
    %c0_i32_28 = arith.constant 0 : i32
    %89 = vector.broadcast %c0_i32_28 : i32 to vector<1x512xi32>
    %90 = arith.cmpi sge, %88, %89 : vector<1x512xi32>
    %c1_i32_29 = arith.constant 1 : i32
    %91 = vector.broadcast %c1_i32_29 : i32 to vector<1x512xi32>
    %92 = arith.addi %0, %91 : vector<1x512xi32>
    %c16_i32_30 = arith.constant 16 : i32
    %93 = vector.broadcast %c16_i32_30 : i32 to vector<1x512xi32>
    %94 = arith.cmpi slt, %92, %93 : vector<1x512xi32>
    %95 = arith.andi %90, %94 : vector<1x512xi1>
    %c-1_i32_31 = arith.constant -1 : i32
    %96 = vector.broadcast %c-1_i32_31 : i32 to vector<1x512xi32>
    %97 = arith.addi %1, %96 : vector<1x512xi32>
    %c0_i32_32 = arith.constant 0 : i32
    %98 = vector.broadcast %c0_i32_32 : i32 to vector<1x512xi32>
    %99 = arith.cmpi sge, %97, %98 : vector<1x512xi32>
    %c-1_i32_33 = arith.constant -1 : i32
    %100 = vector.broadcast %c-1_i32_33 : i32 to vector<1x512xi32>
    %101 = arith.addi %1, %100 : vector<1x512xi32>
    %c16_i32_34 = arith.constant 16 : i32
    %102 = vector.broadcast %c16_i32_34 : i32 to vector<1x512xi32>
    %103 = arith.cmpi slt, %101, %102 : vector<1x512xi32>
    %104 = arith.andi %99, %103 : vector<1x512xi1>
    %105 = arith.andi %95, %104 : vector<1x512xi1>
    %106 = arith.extui %105 : vector<1x512xi1> to vector<1x512xi32>
    %107 = arith.sitofp %106 : vector<1x512xi32> to vector<1x512xf32>
    %108 = vector.shape_cast %107 : vector<1x512xf32> to vector<1x512xf32>
    %109 = vector.broadcast %108 : vector<1x512xf32> to vector<8x512xf32>
    %c1_i32_35 = arith.constant 1 : i32
    %110 = vector.broadcast %c1_i32_35 : i32 to vector<1x512xi32>
    %111 = arith.addi %0, %110 : vector<1x512xi32>
    %c0_i32_36 = arith.constant 0 : i32
    %112 = vector.broadcast %c0_i32_36 : i32 to vector<1x512xi32>
    %113 = arith.cmpi sge, %111, %112 : vector<1x512xi32>
    %c1_i32_37 = arith.constant 1 : i32
    %114 = vector.broadcast %c1_i32_37 : i32 to vector<1x512xi32>
    %115 = arith.addi %0, %114 : vector<1x512xi32>
    %c16_i32_38 = arith.constant 16 : i32
    %116 = vector.broadcast %c16_i32_38 : i32 to vector<1x512xi32>
    %117 = arith.cmpi slt, %115, %116 : vector<1x512xi32>
    %118 = arith.andi %113, %117 : vector<1x512xi1>
    %119 = arith.extui %118 : vector<1x512xi1> to vector<1x512xi32>
    %120 = arith.sitofp %119 : vector<1x512xi32> to vector<1x512xf32>
    %121 = vector.shape_cast %120 : vector<1x512xf32> to vector<1x512xf32>
    %122 = vector.broadcast %121 : vector<1x512xf32> to vector<8x512xf32>
    %c1_i32_39 = arith.constant 1 : i32
    %123 = vector.broadcast %c1_i32_39 : i32 to vector<1x512xi32>
    %124 = arith.addi %0, %123 : vector<1x512xi32>
    %c0_i32_40 = arith.constant 0 : i32
    %125 = vector.broadcast %c0_i32_40 : i32 to vector<1x512xi32>
    %126 = arith.cmpi sge, %124, %125 : vector<1x512xi32>
    %c1_i32_41 = arith.constant 1 : i32
    %127 = vector.broadcast %c1_i32_41 : i32 to vector<1x512xi32>
    %128 = arith.addi %0, %127 : vector<1x512xi32>
    %c16_i32_42 = arith.constant 16 : i32
    %129 = vector.broadcast %c16_i32_42 : i32 to vector<1x512xi32>
    %130 = arith.cmpi slt, %128, %129 : vector<1x512xi32>
    %131 = arith.andi %126, %130 : vector<1x512xi1>
    %c1_i32_43 = arith.constant 1 : i32
    %132 = vector.broadcast %c1_i32_43 : i32 to vector<1x512xi32>
    %133 = arith.addi %1, %132 : vector<1x512xi32>
    %c0_i32_44 = arith.constant 0 : i32
    %134 = vector.broadcast %c0_i32_44 : i32 to vector<1x512xi32>
    %135 = arith.cmpi sge, %133, %134 : vector<1x512xi32>
    %c1_i32_45 = arith.constant 1 : i32
    %136 = vector.broadcast %c1_i32_45 : i32 to vector<1x512xi32>
    %137 = arith.addi %1, %136 : vector<1x512xi32>
    %c16_i32_46 = arith.constant 16 : i32
    %138 = vector.broadcast %c16_i32_46 : i32 to vector<1x512xi32>
    %139 = arith.cmpi slt, %137, %138 : vector<1x512xi32>
    %140 = arith.andi %135, %139 : vector<1x512xi1>
    %141 = arith.andi %131, %140 : vector<1x512xi1>
    %142 = arith.extui %141 : vector<1x512xi1> to vector<1x512xi32>
    %143 = arith.sitofp %142 : vector<1x512xi32> to vector<1x512xf32>
    %144 = vector.shape_cast %143 : vector<1x512xf32> to vector<1x512xf32>
    %145 = vector.broadcast %144 : vector<1x512xf32> to vector<8x512xf32>
    %c0_47 = arith.constant 0 : index
    %c0_48 = arith.constant 0 : index
    %146 = vector.load %arg3[%c0_47, %c0_48] : memref<8x512xf32, #tpu.memory_space<vmem>>, vector<8x512xf32>
    %c0_49 = arith.constant 0 : index
    %c0_50 = arith.constant 0 : index
    %147 = vector.load %arg4[%c0_49, %c0_50] : memref<8x512xf32, #tpu.memory_space<vmem>>, vector<8x512xf32>
    %c0_51 = arith.constant 0 : index
    %c0_52 = arith.constant 0 : index
    %148 = vector.load %arg5[%c0_51, %c0_52] : memref<8x512xf32, #tpu.memory_space<vmem>>, vector<8x512xf32>
    %c0_53 = arith.constant 0 : index
    %c0_54 = arith.constant 0 : index
    %c0_55 = arith.constant 0 : index
    %149 = vector.load %arg6[%c0_53, %c0_54, %c0_55] : memref<9x16x8xf32, #tpu.memory_space<vmem>>, vector<9x16x8xf32>
    %c17_i32 = arith.constant 17 : i32
    %150 = tpu.dynamic_rotate %146 by %c17_i32 dim 1 : vector<8x512xf32>, i32 -> vector<8x512xf32>
    %151 = arith.mulf %150, %24 : vector<8x512xf32>
    %152 = vector.extract_strided_slice %149 {offsets = [0, 0, 0], sizes = [1, 16, 8], strides = [1, 1, 1]} : vector<9x16x8xf32> to vector<1x16x8xf32>
    %153 = vector.shape_cast %152 : vector<1x16x8xf32> to vector<16x8xf32>
    %cst = arith.constant dense<0.000000e+00> : vector<16x512xf32>
    %154 = tpu.matmul %153, %151, %cst {dimension_numbers = #tpu.dot_dimension_numbers<[1], [0], [0], [1], [0, 0, 1, 1], [], []>} : vector<16x8xf32>, vector<8x512xf32>, vector<16x512xf32> -> vector<16x512xf32>
    %c16_i32_56 = arith.constant 16 : i32
    %155 = tpu.dynamic_rotate %146 by %c16_i32_56 dim 1 : vector<8x512xf32>, i32 -> vector<8x512xf32>
    %156 = arith.mulf %155, %37 : vector<8x512xf32>
    %157 = vector.extract_strided_slice %149 {offsets = [1, 0, 0], sizes = [1, 16, 8], strides = [1, 1, 1]} : vector<9x16x8xf32> to vector<1x16x8xf32>
    %158 = vector.shape_cast %157 : vector<1x16x8xf32> to vector<16x8xf32>
    %cst_57 = arith.constant dense<0.000000e+00> : vector<16x512xf32>
    %159 = tpu.matmul %158, %156, %cst_57 {dimension_numbers = #tpu.dot_dimension_numbers<[1], [0], [0], [1], [0, 0, 1, 1], [], []>} : vector<16x8xf32>, vector<8x512xf32>, vector<16x512xf32> -> vector<16x512xf32>
    %160 = arith.addf %154, %159 : vector<16x512xf32>
    %c15_i32 = arith.constant 15 : i32
    %161 = tpu.dynamic_rotate %146 by %c15_i32 dim 1 : vector<8x512xf32>, i32 -> vector<8x512xf32>
    %162 = arith.mulf %161, %60 : vector<8x512xf32>
    %163 = vector.extract_strided_slice %149 {offsets = [2, 0, 0], sizes = [1, 16, 8], strides = [1, 1, 1]} : vector<9x16x8xf32> to vector<1x16x8xf32>
    %164 = vector.shape_cast %163 : vector<1x16x8xf32> to vector<16x8xf32>
    %cst_58 = arith.constant dense<0.000000e+00> : vector<16x512xf32>
    %165 = tpu.matmul %164, %162, %cst_58 {dimension_numbers = #tpu.dot_dimension_numbers<[1], [0], [0], [1], [0, 0, 1, 1], [], []>} : vector<16x8xf32>, vector<8x512xf32>, vector<16x512xf32> -> vector<16x512xf32>
    %166 = arith.addf %160, %165 : vector<16x512xf32>
    %c1_i32_59 = arith.constant 1 : i32
    %167 = tpu.dynamic_rotate %146 by %c1_i32_59 dim 1 : vector<8x512xf32>, i32 -> vector<8x512xf32>
    %168 = arith.mulf %167, %73 : vector<8x512xf32>
    %169 = vector.extract_strided_slice %149 {offsets = [3, 0, 0], sizes = [1, 16, 8], strides = [1, 1, 1]} : vector<9x16x8xf32> to vector<1x16x8xf32>
    %170 = vector.shape_cast %169 : vector<1x16x8xf32> to vector<16x8xf32>
    %cst_60 = arith.constant dense<0.000000e+00> : vector<16x512xf32>
    %171 = tpu.matmul %170, %168, %cst_60 {dimension_numbers = #tpu.dot_dimension_numbers<[1], [0], [0], [1], [0, 0, 1, 1], [], []>} : vector<16x8xf32>, vector<8x512xf32>, vector<16x512xf32> -> vector<16x512xf32>
    %172 = arith.addf %166, %171 : vector<16x512xf32>
    %173 = vector.extract_strided_slice %149 {offsets = [4, 0, 0], sizes = [1, 16, 8], strides = [1, 1, 1]} : vector<9x16x8xf32> to vector<1x16x8xf32>
    %174 = vector.shape_cast %173 : vector<1x16x8xf32> to vector<16x8xf32>
    %cst_61 = arith.constant dense<0.000000e+00> : vector<16x512xf32>
    %175 = tpu.matmul %174, %146, %cst_61 {dimension_numbers = #tpu.dot_dimension_numbers<[1], [0], [0], [1], [0, 0, 1, 1], [], []>} : vector<16x8xf32>, vector<8x512xf32>, vector<16x512xf32> -> vector<16x512xf32>
    %176 = arith.addf %172, %175 : vector<16x512xf32>
    %c511_i32 = arith.constant 511 : i32
    %177 = tpu.dynamic_rotate %146 by %c511_i32 dim 1 : vector<8x512xf32>, i32 -> vector<8x512xf32>
    %178 = arith.mulf %177, %86 : vector<8x512xf32>
    %179 = vector.extract_strided_slice %149 {offsets = [5, 0, 0], sizes = [1, 16, 8], strides = [1, 1, 1]} : vector<9x16x8xf32> to vector<1x16x8xf32>
    %180 = vector.shape_cast %179 : vector<1x16x8xf32> to vector<16x8xf32>
    %cst_62 = arith.constant dense<0.000000e+00> : vector<16x512xf32>
    %181 = tpu.matmul %180, %178, %cst_62 {dimension_numbers = #tpu.dot_dimension_numbers<[1], [0], [0], [1], [0, 0, 1, 1], [], []>} : vector<16x8xf32>, vector<8x512xf32>, vector<16x512xf32> -> vector<16x512xf32>
    %182 = arith.addf %176, %181 : vector<16x512xf32>
    %c497_i32 = arith.constant 497 : i32
    %183 = tpu.dynamic_rotate %146 by %c497_i32 dim 1 : vector<8x512xf32>, i32 -> vector<8x512xf32>
    %184 = arith.mulf %183, %109 : vector<8x512xf32>
    %185 = vector.extract_strided_slice %149 {offsets = [6, 0, 0], sizes = [1, 16, 8], strides = [1, 1, 1]} : vector<9x16x8xf32> to vector<1x16x8xf32>
    %186 = vector.shape_cast %185 : vector<1x16x8xf32> to vector<16x8xf32>
    %cst_63 = arith.constant dense<0.000000e+00> : vector<16x512xf32>
    %187 = tpu.matmul %186, %184, %cst_63 {dimension_numbers = #tpu.dot_dimension_numbers<[1], [0], [0], [1], [0, 0, 1, 1], [], []>} : vector<16x8xf32>, vector<8x512xf32>, vector<16x512xf32> -> vector<16x512xf32>
    %188 = arith.addf %182, %187 : vector<16x512xf32>
    %c496_i32 = arith.constant 496 : i32
    %189 = tpu.dynamic_rotate %146 by %c496_i32 dim 1 : vector<8x512xf32>, i32 -> vector<8x512xf32>
    %190 = arith.mulf %189, %122 : vector<8x512xf32>
    %191 = vector.extract_strided_slice %149 {offsets = [7, 0, 0], sizes = [1, 16, 8], strides = [1, 1, 1]} : vector<9x16x8xf32> to vector<1x16x8xf32>
    %192 = vector.shape_cast %191 : vector<1x16x8xf32> to vector<16x8xf32>
    %cst_64 = arith.constant dense<0.000000e+00> : vector<16x512xf32>
    %193 = tpu.matmul %192, %190, %cst_64 {dimension_numbers = #tpu.dot_dimension_numbers<[1], [0], [0], [1], [0, 0, 1, 1], [], []>} : vector<16x8xf32>, vector<8x512xf32>, vector<16x512xf32> -> vector<16x512xf32>
    %194 = arith.addf %188, %193 : vector<16x512xf32>
    %c495_i32 = arith.constant 495 : i32
    %195 = tpu.dynamic_rotate %146 by %c495_i32 dim 1 : vector<8x512xf32>, i32 -> vector<8x512xf32>
    %196 = arith.mulf %195, %145 : vector<8x512xf32>
    %197 = vector.extract_strided_slice %149 {offsets = [8, 0, 0], sizes = [1, 16, 8], strides = [1, 1, 1]} : vector<9x16x8xf32> to vector<1x16x8xf32>
    %198 = vector.shape_cast %197 : vector<1x16x8xf32> to vector<16x8xf32>
    %cst_65 = arith.constant dense<0.000000e+00> : vector<16x512xf32>
    %199 = tpu.matmul %198, %196, %cst_65 {dimension_numbers = #tpu.dot_dimension_numbers<[1], [0], [0], [1], [0, 0, 1, 1], [], []>} : vector<16x8xf32>, vector<8x512xf32>, vector<16x512xf32> -> vector<16x512xf32>
    %200 = arith.addf %194, %199 : vector<16x512xf32>
    %201 = vector.extract_strided_slice %200 {offsets = [0, 0], sizes = [8, 512], strides = [1, 1]} : vector<16x512xf32> to vector<8x512xf32>
    %c0_66 = arith.constant 0 : index
    %c0_67 = arith.constant 0 : index
    %202 = vector.load %arg8[%c0_66, %c0_67] : memref<8x1xf32, #tpu.memory_space<vmem>>, vector<8x1xf32>
    %c0_68 = arith.constant 0 : index
    %c0_69 = arith.constant 0 : index
    %c0_70 = arith.constant 0 : index
    %203 = vector.load %arg7[%c0_68, %c0_69, %c0_70] : memref<9x8x8xf32, #tpu.memory_space<vmem>>, vector<9x8x8xf32>
    %c17_i32_71 = arith.constant 17 : i32
    %204 = tpu.dynamic_rotate %147 by %c17_i32_71 dim 1 : vector<8x512xf32>, i32 -> vector<8x512xf32>
    %205 = arith.mulf %204, %24 : vector<8x512xf32>
    %206 = vector.extract_strided_slice %203 {offsets = [0, 0, 0], sizes = [1, 8, 8], strides = [1, 1, 1]} : vector<9x8x8xf32> to vector<1x8x8xf32>
    %207 = vector.shape_cast %206 : vector<1x8x8xf32> to vector<8x8xf32>
    %cst_72 = arith.constant dense<0.000000e+00> : vector<8x512xf32>
    %208 = tpu.matmul %207, %205, %cst_72 {dimension_numbers = #tpu.dot_dimension_numbers<[1], [0], [0], [1], [0, 0, 1, 1], [], []>} : vector<8x8xf32>, vector<8x512xf32>, vector<8x512xf32> -> vector<8x512xf32>
    %c16_i32_73 = arith.constant 16 : i32
    %209 = tpu.dynamic_rotate %147 by %c16_i32_73 dim 1 : vector<8x512xf32>, i32 -> vector<8x512xf32>
    %210 = arith.mulf %209, %37 : vector<8x512xf32>
    %211 = vector.extract_strided_slice %203 {offsets = [1, 0, 0], sizes = [1, 8, 8], strides = [1, 1, 1]} : vector<9x8x8xf32> to vector<1x8x8xf32>
    %212 = vector.shape_cast %211 : vector<1x8x8xf32> to vector<8x8xf32>
    %cst_74 = arith.constant dense<0.000000e+00> : vector<8x512xf32>
    %213 = tpu.matmul %212, %210, %cst_74 {dimension_numbers = #tpu.dot_dimension_numbers<[1], [0], [0], [1], [0, 0, 1, 1], [], []>} : vector<8x8xf32>, vector<8x512xf32>, vector<8x512xf32> -> vector<8x512xf32>
    %214 = arith.addf %208, %213 : vector<8x512xf32>
    %c15_i32_75 = arith.constant 15 : i32
    %215 = tpu.dynamic_rotate %147 by %c15_i32_75 dim 1 : vector<8x512xf32>, i32 -> vector<8x512xf32>
    %216 = arith.mulf %215, %60 : vector<8x512xf32>
    %217 = vector.extract_strided_slice %203 {offsets = [2, 0, 0], sizes = [1, 8, 8], strides = [1, 1, 1]} : vector<9x8x8xf32> to vector<1x8x8xf32>
    %218 = vector.shape_cast %217 : vector<1x8x8xf32> to vector<8x8xf32>
    %cst_76 = arith.constant dense<0.000000e+00> : vector<8x512xf32>
    %219 = tpu.matmul %218, %216, %cst_76 {dimension_numbers = #tpu.dot_dimension_numbers<[1], [0], [0], [1], [0, 0, 1, 1], [], []>} : vector<8x8xf32>, vector<8x512xf32>, vector<8x512xf32> -> vector<8x512xf32>
    %220 = arith.addf %214, %219 : vector<8x512xf32>
    %c1_i32_77 = arith.constant 1 : i32
    %221 = tpu.dynamic_rotate %147 by %c1_i32_77 dim 1 : vector<8x512xf32>, i32 -> vector<8x512xf32>
    %222 = arith.mulf %221, %73 : vector<8x512xf32>
    %223 = vector.extract_strided_slice %203 {offsets = [3, 0, 0], sizes = [1, 8, 8], strides = [1, 1, 1]} : vector<9x8x8xf32> to vector<1x8x8xf32>
    %224 = vector.shape_cast %223 : vector<1x8x8xf32> to vector<8x8xf32>
    %cst_78 = arith.constant dense<0.000000e+00> : vector<8x512xf32>
    %225 = tpu.matmul %224, %222, %cst_78 {dimension_numbers = #tpu.dot_dimension_numbers<[1], [0], [0], [1], [0, 0, 1, 1], [], []>} : vector<8x8xf32>, vector<8x512xf32>, vector<8x512xf32> -> vector<8x512xf32>
    %226 = arith.addf %220, %225 : vector<8x512xf32>
    %227 = vector.extract_strided_slice %203 {offsets = [4, 0, 0], sizes = [1, 8, 8], strides = [1, 1, 1]} : vector<9x8x8xf32> to vector<1x8x8xf32>
    %228 = vector.shape_cast %227 : vector<1x8x8xf32> to vector<8x8xf32>
    %cst_79 = arith.constant dense<0.000000e+00> : vector<8x512xf32>
    %229 = tpu.matmul %228, %147, %cst_79 {dimension_numbers = #tpu.dot_dimension_numbers<[1], [0], [0], [1], [0, 0, 1, 1], [], []>} : vector<8x8xf32>, vector<8x512xf32>, vector<8x512xf32> -> vector<8x512xf32>
    %230 = arith.addf %226, %229 : vector<8x512xf32>
    %c511_i32_80 = arith.constant 511 : i32
    %231 = tpu.dynamic_rotate %147 by %c511_i32_80 dim 1 : vector<8x512xf32>, i32 -> vector<8x512xf32>
    %232 = arith.mulf %231, %86 : vector<8x512xf32>
    %233 = vector.extract_strided_slice %203 {offsets = [5, 0, 0], sizes = [1, 8, 8], strides = [1, 1, 1]} : vector<9x8x8xf32> to vector<1x8x8xf32>
    %234 = vector.shape_cast %233 : vector<1x8x8xf32> to vector<8x8xf32>
    %cst_81 = arith.constant dense<0.000000e+00> : vector<8x512xf32>
    %235 = tpu.matmul %234, %232, %cst_81 {dimension_numbers = #tpu.dot_dimension_numbers<[1], [0], [0], [1], [0, 0, 1, 1], [], []>} : vector<8x8xf32>, vector<8x512xf32>, vector<8x512xf32> -> vector<8x512xf32>
    %236 = arith.addf %230, %235 : vector<8x512xf32>
    %c497_i32_82 = arith.constant 497 : i32
    %237 = tpu.dynamic_rotate %147 by %c497_i32_82 dim 1 : vector<8x512xf32>, i32 -> vector<8x512xf32>
    %238 = arith.mulf %237, %109 : vector<8x512xf32>
    %239 = vector.extract_strided_slice %203 {offsets = [6, 0, 0], sizes = [1, 8, 8], strides = [1, 1, 1]} : vector<9x8x8xf32> to vector<1x8x8xf32>
    %240 = vector.shape_cast %239 : vector<1x8x8xf32> to vector<8x8xf32>
    %cst_83 = arith.constant dense<0.000000e+00> : vector<8x512xf32>
    %241 = tpu.matmul %240, %238, %cst_83 {dimension_numbers = #tpu.dot_dimension_numbers<[1], [0], [0], [1], [0, 0, 1, 1], [], []>} : vector<8x8xf32>, vector<8x512xf32>, vector<8x512xf32> -> vector<8x512xf32>
    %242 = arith.addf %236, %241 : vector<8x512xf32>
    %c496_i32_84 = arith.constant 496 : i32
    %243 = tpu.dynamic_rotate %147 by %c496_i32_84 dim 1 : vector<8x512xf32>, i32 -> vector<8x512xf32>
    %244 = arith.mulf %243, %122 : vector<8x512xf32>
    %245 = vector.extract_strided_slice %203 {offsets = [7, 0, 0], sizes = [1, 8, 8], strides = [1, 1, 1]} : vector<9x8x8xf32> to vector<1x8x8xf32>
    %246 = vector.shape_cast %245 : vector<1x8x8xf32> to vector<8x8xf32>
    %cst_85 = arith.constant dense<0.000000e+00> : vector<8x512xf32>
    %247 = tpu.matmul %246, %244, %cst_85 {dimension_numbers = #tpu.dot_dimension_numbers<[1], [0], [0], [1], [0, 0, 1, 1], [], []>} : vector<8x8xf32>, vector<8x512xf32>, vector<8x512xf32> -> vector<8x512xf32>
    %248 = arith.addf %242, %247 : vector<8x512xf32>
    %c495_i32_86 = arith.constant 495 : i32
    %249 = tpu.dynamic_rotate %147 by %c495_i32_86 dim 1 : vector<8x512xf32>, i32 -> vector<8x512xf32>
    %250 = arith.mulf %249, %145 : vector<8x512xf32>
    %251 = vector.extract_strided_slice %203 {offsets = [8, 0, 0], sizes = [1, 8, 8], strides = [1, 1, 1]} : vector<9x8x8xf32> to vector<1x8x8xf32>
    %252 = vector.shape_cast %251 : vector<1x8x8xf32> to vector<8x8xf32>
    %cst_87 = arith.constant dense<0.000000e+00> : vector<8x512xf32>
    %253 = tpu.matmul %252, %250, %cst_87 {dimension_numbers = #tpu.dot_dimension_numbers<[1], [0], [0], [1], [0, 0, 1, 1], [], []>} : vector<8x8xf32>, vector<8x512xf32>, vector<8x512xf32> -> vector<8x512xf32>
    %254 = arith.addf %248, %253 : vector<8x512xf32>
    %255 = vector.broadcast %202 : vector<8x1xf32> to vector<8x512xf32>
    %256 = arith.addf %254, %255 : vector<8x512xf32>
    %257 = arith.addf %201, %256 : vector<8x512xf32>
    %cst_88 = arith.constant 0.000000e+00 : f32
    %258 = vector.broadcast %cst_88 : f32 to vector<8x512xf32>
    %259 = arith.maximumf %257, %258 : vector<8x512xf32>
    %cst_89 = arith.constant dense<0.000000e+00> : vector<8xf32>
    %260 = vector.multi_reduction <add>, %259, %cst_89 [1] : vector<8x512xf32> to vector<8xf32>
    %261 = vector.shape_cast %260 : vector<8xf32> to vector<8x1xf32>
    %262 = arith.mulf %259, %259 : vector<8x512xf32>
    %cst_90 = arith.constant dense<0.000000e+00> : vector<8xf32>
    %263 = vector.multi_reduction <add>, %262, %cst_90 [1] : vector<8x512xf32> to vector<8xf32>
    %264 = vector.shape_cast %263 : vector<8xf32> to vector<8x1xf32>
    %cst_91 = arith.constant 0.001953125 : f32
    %265 = vector.broadcast %cst_91 : f32 to vector<8x1xf32>
    %266 = arith.mulf %261, %265 : vector<8x1xf32>
    %cst_92 = arith.constant 0.001953125 : f32
    %267 = vector.broadcast %cst_92 : f32 to vector<8x1xf32>
    %268 = arith.mulf %264, %267 : vector<8x1xf32>
    %269 = arith.mulf %266, %266 : vector<8x1xf32>
    %270 = arith.subf %268, %269 : vector<8x1xf32>
    %271 = vector.broadcast %266 : vector<8x1xf32> to vector<8x512xf32>
    %272 = arith.subf %259, %271 : vector<8x512xf32>
    %cst_93 = arith.constant 9.99999974E-6 : f32
    %273 = vector.broadcast %cst_93 : f32 to vector<8x1xf32>
    %274 = arith.addf %270, %273 : vector<8x1xf32>
    %275 = math.rsqrt %274 : vector<8x1xf32>
    %276 = vector.broadcast %275 : vector<8x1xf32> to vector<8x512xf32>
    %277 = arith.mulf %272, %276 : vector<8x512xf32>
    %c0_94 = arith.constant 0 : index
    %c0_95 = arith.constant 0 : index
    %278 = vector.load %arg12[%c0_94, %c0_95] : memref<8x1xf32, #tpu.memory_space<vmem>>, vector<8x1xf32>
    %c0_96 = arith.constant 0 : index
    %c0_97 = arith.constant 0 : index
    %c0_98 = arith.constant 0 : index
    %279 = vector.load %arg11[%c0_96, %c0_97, %c0_98] : memref<9x8x8xf32, #tpu.memory_space<vmem>>, vector<9x8x8xf32>
    %c17_i32_99 = arith.constant 17 : i32
    %280 = tpu.dynamic_rotate %277 by %c17_i32_99 dim 1 : vector<8x512xf32>, i32 -> vector<8x512xf32>
    %281 = arith.mulf %280, %24 : vector<8x512xf32>
    %282 = vector.extract_strided_slice %279 {offsets = [0, 0, 0], sizes = [1, 8, 8], strides = [1, 1, 1]} : vector<9x8x8xf32> to vector<1x8x8xf32>
    %283 = vector.shape_cast %282 : vector<1x8x8xf32> to vector<8x8xf32>
    %cst_100 = arith.constant dense<0.000000e+00> : vector<8x512xf32>
    %284 = tpu.matmul %283, %281, %cst_100 {dimension_numbers = #tpu.dot_dimension_numbers<[1], [0], [0], [1], [0, 0, 1, 1], [], []>} : vector<8x8xf32>, vector<8x512xf32>, vector<8x512xf32> -> vector<8x512xf32>
    %c16_i32_101 = arith.constant 16 : i32
    %285 = tpu.dynamic_rotate %277 by %c16_i32_101 dim 1 : vector<8x512xf32>, i32 -> vector<8x512xf32>
    %286 = arith.mulf %285, %37 : vector<8x512xf32>
    %287 = vector.extract_strided_slice %279 {offsets = [1, 0, 0], sizes = [1, 8, 8], strides = [1, 1, 1]} : vector<9x8x8xf32> to vector<1x8x8xf32>
    %288 = vector.shape_cast %287 : vector<1x8x8xf32> to vector<8x8xf32>
    %cst_102 = arith.constant dense<0.000000e+00> : vector<8x512xf32>
    %289 = tpu.matmul %288, %286, %cst_102 {dimension_numbers = #tpu.dot_dimension_numbers<[1], [0], [0], [1], [0, 0, 1, 1], [], []>} : vector<8x8xf32>, vector<8x512xf32>, vector<8x512xf32> -> vector<8x512xf32>
    %290 = arith.addf %284, %289 : vector<8x512xf32>
    %c15_i32_103 = arith.constant 15 : i32
    %291 = tpu.dynamic_rotate %277 by %c15_i32_103 dim 1 : vector<8x512xf32>, i32 -> vector<8x512xf32>
    %292 = arith.mulf %291, %60 : vector<8x512xf32>
    %293 = vector.extract_strided_slice %279 {offsets = [2, 0, 0], sizes = [1, 8, 8], strides = [1, 1, 1]} : vector<9x8x8xf32> to vector<1x8x8xf32>
    %294 = vector.shape_cast %293 : vector<1x8x8xf32> to vector<8x8xf32>
    %cst_104 = arith.constant dense<0.000000e+00> : vector<8x512xf32>
    %295 = tpu.matmul %294, %292, %cst_104 {dimension_numbers = #tpu.dot_dimension_numbers<[1], [0], [0], [1], [0, 0, 1, 1], [], []>} : vector<8x8xf32>, vector<8x512xf32>, vector<8x512xf32> -> vector<8x512xf32>
    %296 = arith.addf %290, %295 : vector<8x512xf32>
    %c1_i32_105 = arith.constant 1 : i32
    %297 = tpu.dynamic_rotate %277 by %c1_i32_105 dim 1 : vector<8x512xf32>, i32 -> vector<8x512xf32>
    %298 = arith.mulf %297, %73 : vector<8x512xf32>
    %299 = vector.extract_strided_slice %279 {offsets = [3, 0, 0], sizes = [1, 8, 8], strides = [1, 1, 1]} : vector<9x8x8xf32> to vector<1x8x8xf32>
    %300 = vector.shape_cast %299 : vector<1x8x8xf32> to vector<8x8xf32>
    %cst_106 = arith.constant dense<0.000000e+00> : vector<8x512xf32>
    %301 = tpu.matmul %300, %298, %cst_106 {dimension_numbers = #tpu.dot_dimension_numbers<[1], [0], [0], [1], [0, 0, 1, 1], [], []>} : vector<8x8xf32>, vector<8x512xf32>, vector<8x512xf32> -> vector<8x512xf32>
    %302 = arith.addf %296, %301 : vector<8x512xf32>
    %303 = vector.extract_strided_slice %279 {offsets = [4, 0, 0], sizes = [1, 8, 8], strides = [1, 1, 1]} : vector<9x8x8xf32> to vector<1x8x8xf32>
    %304 = vector.shape_cast %303 : vector<1x8x8xf32> to vector<8x8xf32>
    %cst_107 = arith.constant dense<0.000000e+00> : vector<8x512xf32>
    %305 = tpu.matmul %304, %277, %cst_107 {dimension_numbers = #tpu.dot_dimension_numbers<[1], [0], [0], [1], [0, 0, 1, 1], [], []>} : vector<8x8xf32>, vector<8x512xf32>, vector<8x512xf32> -> vector<8x512xf32>
    %306 = arith.addf %302, %305 : vector<8x512xf32>
    %c511_i32_108 = arith.constant 511 : i32
    %307 = tpu.dynamic_rotate %277 by %c511_i32_108 dim 1 : vector<8x512xf32>, i32 -> vector<8x512xf32>
    %308 = arith.mulf %307, %86 : vector<8x512xf32>
    %309 = vector.extract_strided_slice %279 {offsets = [5, 0, 0], sizes = [1, 8, 8], strides = [1, 1, 1]} : vector<9x8x8xf32> to vector<1x8x8xf32>
    %310 = vector.shape_cast %309 : vector<1x8x8xf32> to vector<8x8xf32>
    %cst_109 = arith.constant dense<0.000000e+00> : vector<8x512xf32>
    %311 = tpu.matmul %310, %308, %cst_109 {dimension_numbers = #tpu.dot_dimension_numbers<[1], [0], [0], [1], [0, 0, 1, 1], [], []>} : vector<8x8xf32>, vector<8x512xf32>, vector<8x512xf32> -> vector<8x512xf32>
    %312 = arith.addf %306, %311 : vector<8x512xf32>
    %c497_i32_110 = arith.constant 497 : i32
    %313 = tpu.dynamic_rotate %277 by %c497_i32_110 dim 1 : vector<8x512xf32>, i32 -> vector<8x512xf32>
    %314 = arith.mulf %313, %109 : vector<8x512xf32>
    %315 = vector.extract_strided_slice %279 {offsets = [6, 0, 0], sizes = [1, 8, 8], strides = [1, 1, 1]} : vector<9x8x8xf32> to vector<1x8x8xf32>
    %316 = vector.shape_cast %315 : vector<1x8x8xf32> to vector<8x8xf32>
    %cst_111 = arith.constant dense<0.000000e+00> : vector<8x512xf32>
    %317 = tpu.matmul %316, %314, %cst_111 {dimension_numbers = #tpu.dot_dimension_numbers<[1], [0], [0], [1], [0, 0, 1, 1], [], []>} : vector<8x8xf32>, vector<8x512xf32>, vector<8x512xf32> -> vector<8x512xf32>
    %318 = arith.addf %312, %317 : vector<8x512xf32>
    %c496_i32_112 = arith.constant 496 : i32
    %319 = tpu.dynamic_rotate %277 by %c496_i32_112 dim 1 : vector<8x512xf32>, i32 -> vector<8x512xf32>
    %320 = arith.mulf %319, %122 : vector<8x512xf32>
    %321 = vector.extract_strided_slice %279 {offsets = [7, 0, 0], sizes = [1, 8, 8], strides = [1, 1, 1]} : vector<9x8x8xf32> to vector<1x8x8xf32>
    %322 = vector.shape_cast %321 : vector<1x8x8xf32> to vector<8x8xf32>
    %cst_113 = arith.constant dense<0.000000e+00> : vector<8x512xf32>
    %323 = tpu.matmul %322, %320, %cst_113 {dimension_numbers = #tpu.dot_dimension_numbers<[1], [0], [0], [1], [0, 0, 1, 1], [], []>} : vector<8x8xf32>, vector<8x512xf32>, vector<8x512xf32> -> vector<8x512xf32>
    %324 = arith.addf %318, %323 : vector<8x512xf32>
    %c495_i32_114 = arith.constant 495 : i32
    %325 = tpu.dynamic_rotate %277 by %c495_i32_114 dim 1 : vector<8x512xf32>, i32 -> vector<8x512xf32>
    %326 = arith.mulf %325, %145 : vector<8x512xf32>
    %327 = vector.extract_strided_slice %279 {offsets = [8, 0, 0], sizes = [1, 8, 8], strides = [1, 1, 1]} : vector<9x8x8xf32> to vector<1x8x8xf32>
    %328 = vector.shape_cast %327 : vector<1x8x8xf32> to vector<8x8xf32>
    %cst_115 = arith.constant dense<0.000000e+00> : vector<8x512xf32>
    %329 = tpu.matmul %328, %326, %cst_115 {dimension_numbers = #tpu.dot_dimension_numbers<[1], [0], [0], [1], [0, 0, 1, 1], [], []>} : vector<8x8xf32>, vector<8x512xf32>, vector<8x512xf32> -> vector<8x512xf32>
    %330 = arith.addf %324, %329 : vector<8x512xf32>
    %331 = vector.broadcast %278 : vector<8x1xf32> to vector<8x512xf32>
    %332 = arith.addf %330, %331 : vector<8x512xf32>
    %cst_116 = arith.constant 0.000000e+00 : f32
    %333 = vector.broadcast %cst_116 : f32 to vector<8x512xf32>
    %334 = arith.maximumf %332, %333 : vector<8x512xf32>
    %cst_117 = arith.constant dense<0.000000e+00> : vector<8xf32>
    %335 = vector.multi_reduction <add>, %334, %cst_117 [1] : vector<8x512xf32> to vector<8xf32>
    %336 = vector.shape_cast %335 : vector<8xf32> to vector<8x1xf32>
    %337 = arith.mulf %334, %334 : vector<8x512xf32>
    %cst_118 = arith.constant dense<0.000000e+00> : vector<8xf32>
    %338 = vector.multi_reduction <add>, %337, %cst_118 [1] : vector<8x512xf32> to vector<8xf32>
    %339 = vector.shape_cast %338 : vector<8xf32> to vector<8x1xf32>
    %cst_119 = arith.constant 0.001953125 : f32
    %340 = vector.broadcast %cst_119 : f32 to vector<8x1xf32>
    %341 = arith.mulf %336, %340 : vector<8x1xf32>
    %cst_120 = arith.constant 0.001953125 : f32
    %342 = vector.broadcast %cst_120 : f32 to vector<8x1xf32>
    %343 = arith.mulf %339, %342 : vector<8x1xf32>
    %344 = arith.mulf %341, %341 : vector<8x1xf32>
    %345 = arith.subf %343, %344 : vector<8x1xf32>
    %346 = vector.broadcast %341 : vector<8x1xf32> to vector<8x512xf32>
    %347 = arith.subf %334, %346 : vector<8x512xf32>
    %cst_121 = arith.constant 9.99999974E-6 : f32
    %348 = vector.broadcast %cst_121 : f32 to vector<8x1xf32>
    %349 = arith.addf %345, %348 : vector<8x1xf32>
    %350 = math.rsqrt %349 : vector<8x1xf32>
    %351 = vector.broadcast %350 : vector<8x1xf32> to vector<8x512xf32>
    %352 = arith.mulf %347, %351 : vector<8x512xf32>
    %c0_122 = arith.constant 0 : index
    %c0_123 = arith.constant 0 : index
    %353 = vector.load %arg15[%c0_122, %c0_123] : memref<1x8xf32, #tpu.memory_space<vmem>>, vector<1x8xf32>
    %cst_124 = arith.constant dense<0.000000e+00> : vector<1x512xf32>
    %354 = tpu.matmul %353, %352, %cst_124 {dimension_numbers = #tpu.dot_dimension_numbers<[1], [0], [0], [1], [0, 0, 1, 1], [], []>} : vector<1x8xf32>, vector<8x512xf32>, vector<1x512xf32> -> vector<1x512xf32>
    %c0_125 = arith.constant 0 : index
    %c0_126 = arith.constant 0 : index
    %355 = vector.load %arg16[%c0_125, %c0_126] : memref<1x1xf32, #tpu.memory_space<vmem>>, vector<1x1xf32>
    %356 = vector.broadcast %355 : vector<1x1xf32> to vector<1x512xf32>
    %357 = arith.addf %354, %356 : vector<1x512xf32>
    %cst_127 = arith.constant 0.000000e+00 : f32
    %358 = vector.broadcast %cst_127 : f32 to vector<1x512xf32>
    %359 = arith.subf %358, %357 : vector<1x512xf32>
    %360 = math.exp %359 : vector<1x512xf32>
    %cst_128 = arith.constant 1.000000e+00 : f32
    %361 = vector.broadcast %cst_128 : f32 to vector<1x512xf32>
    %362 = arith.addf %361, %360 : vector<1x512xf32>
    %cst_129 = arith.constant 1.000000e+00 : f32
    %363 = vector.broadcast %cst_129 : f32 to vector<1x512xf32>
    %364 = arith.divf %363, %362 : vector<1x512xf32>
    %365 = vector.broadcast %364 : vector<1x512xf32> to vector<8x512xf32>
    %366 = arith.mulf %147, %365 : vector<8x512xf32>
    %367 = arith.addf %146, %366 : vector<8x512xf32>
    %368 = vector.extract_strided_slice %200 {offsets = [8, 0], sizes = [8, 512], strides = [1, 1]} : vector<16x512xf32> to vector<8x512xf32>
    %c0_130 = arith.constant 0 : index
    %c0_131 = arith.constant 0 : index
    %369 = vector.load %arg10[%c0_130, %c0_131] : memref<8x1xf32, #tpu.memory_space<vmem>>, vector<8x1xf32>
    %c0_132 = arith.constant 0 : index
    %c0_133 = arith.constant 0 : index
    %c0_134 = arith.constant 0 : index
    %370 = vector.load %arg9[%c0_132, %c0_133, %c0_134] : memref<9x8x8xf32, #tpu.memory_space<vmem>>, vector<9x8x8xf32>
    %c17_i32_135 = arith.constant 17 : i32
    %371 = tpu.dynamic_rotate %148 by %c17_i32_135 dim 1 : vector<8x512xf32>, i32 -> vector<8x512xf32>
    %372 = arith.mulf %371, %24 : vector<8x512xf32>
    %373 = vector.extract_strided_slice %370 {offsets = [0, 0, 0], sizes = [1, 8, 8], strides = [1, 1, 1]} : vector<9x8x8xf32> to vector<1x8x8xf32>
    %374 = vector.shape_cast %373 : vector<1x8x8xf32> to vector<8x8xf32>
    %cst_136 = arith.constant dense<0.000000e+00> : vector<8x512xf32>
    %375 = tpu.matmul %374, %372, %cst_136 {dimension_numbers = #tpu.dot_dimension_numbers<[1], [0], [0], [1], [0, 0, 1, 1], [], []>} : vector<8x8xf32>, vector<8x512xf32>, vector<8x512xf32> -> vector<8x512xf32>
    %c16_i32_137 = arith.constant 16 : i32
    %376 = tpu.dynamic_rotate %148 by %c16_i32_137 dim 1 : vector<8x512xf32>, i32 -> vector<8x512xf32>
    %377 = arith.mulf %376, %37 : vector<8x512xf32>
    %378 = vector.extract_strided_slice %370 {offsets = [1, 0, 0], sizes = [1, 8, 8], strides = [1, 1, 1]} : vector<9x8x8xf32> to vector<1x8x8xf32>
    %379 = vector.shape_cast %378 : vector<1x8x8xf32> to vector<8x8xf32>
    %cst_138 = arith.constant dense<0.000000e+00> : vector<8x512xf32>
    %380 = tpu.matmul %379, %377, %cst_138 {dimension_numbers = #tpu.dot_dimension_numbers<[1], [0], [0], [1], [0, 0, 1, 1], [], []>} : vector<8x8xf32>, vector<8x512xf32>, vector<8x512xf32> -> vector<8x512xf32>
    %381 = arith.addf %375, %380 : vector<8x512xf32>
    %c15_i32_139 = arith.constant 15 : i32
    %382 = tpu.dynamic_rotate %148 by %c15_i32_139 dim 1 : vector<8x512xf32>, i32 -> vector<8x512xf32>
    %383 = arith.mulf %382, %60 : vector<8x512xf32>
    %384 = vector.extract_strided_slice %370 {offsets = [2, 0, 0], sizes = [1, 8, 8], strides = [1, 1, 1]} : vector<9x8x8xf32> to vector<1x8x8xf32>
    %385 = vector.shape_cast %384 : vector<1x8x8xf32> to vector<8x8xf32>
    %cst_140 = arith.constant dense<0.000000e+00> : vector<8x512xf32>
    %386 = tpu.matmul %385, %383, %cst_140 {dimension_numbers = #tpu.dot_dimension_numbers<[1], [0], [0], [1], [0, 0, 1, 1], [], []>} : vector<8x8xf32>, vector<8x512xf32>, vector<8x512xf32> -> vector<8x512xf32>
    %387 = arith.addf %381, %386 : vector<8x512xf32>
    %c1_i32_141 = arith.constant 1 : i32
    %388 = tpu.dynamic_rotate %148 by %c1_i32_141 dim 1 : vector<8x512xf32>, i32 -> vector<8x512xf32>
    %389 = arith.mulf %388, %73 : vector<8x512xf32>
    %390 = vector.extract_strided_slice %370 {offsets = [3, 0, 0], sizes = [1, 8, 8], strides = [1, 1, 1]} : vector<9x8x8xf32> to vector<1x8x8xf32>
    %391 = vector.shape_cast %390 : vector<1x8x8xf32> to vector<8x8xf32>
    %cst_142 = arith.constant dense<0.000000e+00> : vector<8x512xf32>
    %392 = tpu.matmul %391, %389, %cst_142 {dimension_numbers = #tpu.dot_dimension_numbers<[1], [0], [0], [1], [0, 0, 1, 1], [], []>} : vector<8x8xf32>, vector<8x512xf32>, vector<8x512xf32> -> vector<8x512xf32>
    %393 = arith.addf %387, %392 : vector<8x512xf32>
    %394 = vector.extract_strided_slice %370 {offsets = [4, 0, 0], sizes = [1, 8, 8], strides = [1, 1, 1]} : vector<9x8x8xf32> to vector<1x8x8xf32>
    %395 = vector.shape_cast %394 : vector<1x8x8xf32> to vector<8x8xf32>
    %cst_143 = arith.constant dense<0.000000e+00> : vector<8x512xf32>
    %396 = tpu.matmul %395, %148, %cst_143 {dimension_numbers = #tpu.dot_dimension_numbers<[1], [0], [0], [1], [0, 0, 1, 1], [], []>} : vector<8x8xf32>, vector<8x512xf32>, vector<8x512xf32> -> vector<8x512xf32>
    %397 = arith.addf %393, %396 : vector<8x512xf32>
    %c511_i32_144 = arith.constant 511 : i32
    %398 = tpu.dynamic_rotate %148 by %c511_i32_144 dim 1 : vector<8x512xf32>, i32 -> vector<8x512xf32>
    %399 = arith.mulf %398, %86 : vector<8x512xf32>
    %400 = vector.extract_strided_slice %370 {offsets = [5, 0, 0], sizes = [1, 8, 8], strides = [1, 1, 1]} : vector<9x8x8xf32> to vector<1x8x8xf32>
    %401 = vector.shape_cast %400 : vector<1x8x8xf32> to vector<8x8xf32>
    %cst_145 = arith.constant dense<0.000000e+00> : vector<8x512xf32>
    %402 = tpu.matmul %401, %399, %cst_145 {dimension_numbers = #tpu.dot_dimension_numbers<[1], [0], [0], [1], [0, 0, 1, 1], [], []>} : vector<8x8xf32>, vector<8x512xf32>, vector<8x512xf32> -> vector<8x512xf32>
    %403 = arith.addf %397, %402 : vector<8x512xf32>
    %c497_i32_146 = arith.constant 497 : i32
    %404 = tpu.dynamic_rotate %148 by %c497_i32_146 dim 1 : vector<8x512xf32>, i32 -> vector<8x512xf32>
    %405 = arith.mulf %404, %109 : vector<8x512xf32>
    %406 = vector.extract_strided_slice %370 {offsets = [6, 0, 0], sizes = [1, 8, 8], strides = [1, 1, 1]} : vector<9x8x8xf32> to vector<1x8x8xf32>
    %407 = vector.shape_cast %406 : vector<1x8x8xf32> to vector<8x8xf32>
    %cst_147 = arith.constant dense<0.000000e+00> : vector<8x512xf32>
    %408 = tpu.matmul %407, %405, %cst_147 {dimension_numbers = #tpu.dot_dimension_numbers<[1], [0], [0], [1], [0, 0, 1, 1], [], []>} : vector<8x8xf32>, vector<8x512xf32>, vector<8x512xf32> -> vector<8x512xf32>
    %409 = arith.addf %403, %408 : vector<8x512xf32>
    %c496_i32_148 = arith.constant 496 : i32
    %410 = tpu.dynamic_rotate %148 by %c496_i32_148 dim 1 : vector<8x512xf32>, i32 -> vector<8x512xf32>
    %411 = arith.mulf %410, %122 : vector<8x512xf32>
    %412 = vector.extract_strided_slice %370 {offsets = [7, 0, 0], sizes = [1, 8, 8], strides = [1, 1, 1]} : vector<9x8x8xf32> to vector<1x8x8xf32>
    %413 = vector.shape_cast %412 : vector<1x8x8xf32> to vector<8x8xf32>
    %cst_149 = arith.constant dense<0.000000e+00> : vector<8x512xf32>
    %414 = tpu.matmul %413, %411, %cst_149 {dimension_numbers = #tpu.dot_dimension_numbers<[1], [0], [0], [1], [0, 0, 1, 1], [], []>} : vector<8x8xf32>, vector<8x512xf32>, vector<8x512xf32> -> vector<8x512xf32>
    %415 = arith.addf %409, %414 : vector<8x512xf32>
    %c495_i32_150 = arith.constant 495 : i32
    %416 = tpu.dynamic_rotate %148 by %c495_i32_150 dim 1 : vector<8x512xf32>, i32 -> vector<8x512xf32>
    %417 = arith.mulf %416, %145 : vector<8x512xf32>
    %418 = vector.extract_strided_slice %370 {offsets = [8, 0, 0], sizes = [1, 8, 8], strides = [1, 1, 1]} : vector<9x8x8xf32> to vector<1x8x8xf32>
    %419 = vector.shape_cast %418 : vector<1x8x8xf32> to vector<8x8xf32>
    %cst_151 = arith.constant dense<0.000000e+00> : vector<8x512xf32>
    %420 = tpu.matmul %419, %417, %cst_151 {dimension_numbers = #tpu.dot_dimension_numbers<[1], [0], [0], [1], [0, 0, 1, 1], [], []>} : vector<8x8xf32>, vector<8x512xf32>, vector<8x512xf32> -> vector<8x512xf32>
    %421 = arith.addf %415, %420 : vector<8x512xf32>
    %422 = vector.broadcast %369 : vector<8x1xf32> to vector<8x512xf32>
    %423 = arith.addf %421, %422 : vector<8x512xf32>
    %424 = arith.addf %368, %423 : vector<8x512xf32>
    %cst_152 = arith.constant 0.000000e+00 : f32
    %425 = vector.broadcast %cst_152 : f32 to vector<8x512xf32>
    %426 = arith.maximumf %424, %425 : vector<8x512xf32>
    %cst_153 = arith.constant dense<0.000000e+00> : vector<8xf32>
    %427 = vector.multi_reduction <add>, %426, %cst_153 [1] : vector<8x512xf32> to vector<8xf32>
    %428 = vector.shape_cast %427 : vector<8xf32> to vector<8x1xf32>
    %429 = arith.mulf %426, %426 : vector<8x512xf32>
    %cst_154 = arith.constant dense<0.000000e+00> : vector<8xf32>
    %430 = vector.multi_reduction <add>, %429, %cst_154 [1] : vector<8x512xf32> to vector<8xf32>
    %431 = vector.shape_cast %430 : vector<8xf32> to vector<8x1xf32>
    %cst_155 = arith.constant 0.001953125 : f32
    %432 = vector.broadcast %cst_155 : f32 to vector<8x1xf32>
    %433 = arith.mulf %428, %432 : vector<8x1xf32>
    %cst_156 = arith.constant 0.001953125 : f32
    %434 = vector.broadcast %cst_156 : f32 to vector<8x1xf32>
    %435 = arith.mulf %431, %434 : vector<8x1xf32>
    %436 = arith.mulf %433, %433 : vector<8x1xf32>
    %437 = arith.subf %435, %436 : vector<8x1xf32>
    %438 = vector.broadcast %433 : vector<8x1xf32> to vector<8x512xf32>
    %439 = arith.subf %426, %438 : vector<8x512xf32>
    %cst_157 = arith.constant 9.99999974E-6 : f32
    %440 = vector.broadcast %cst_157 : f32 to vector<8x1xf32>
    %441 = arith.addf %437, %440 : vector<8x1xf32>
    %442 = math.rsqrt %441 : vector<8x1xf32>
    %443 = vector.broadcast %442 : vector<8x1xf32> to vector<8x512xf32>
    %444 = arith.mulf %439, %443 : vector<8x512xf32>
    %c0_158 = arith.constant 0 : index
    %c0_159 = arith.constant 0 : index
    %445 = vector.load %arg14[%c0_158, %c0_159] : memref<8x1xf32, #tpu.memory_space<vmem>>, vector<8x1xf32>
    %c0_160 = arith.constant 0 : index
    %c0_161 = arith.constant 0 : index
    %c0_162 = arith.constant 0 : index
    %446 = vector.load %arg13[%c0_160, %c0_161, %c0_162] : memref<9x8x8xf32, #tpu.memory_space<vmem>>, vector<9x8x8xf32>
    %c17_i32_163 = arith.constant 17 : i32
    %447 = tpu.dynamic_rotate %444 by %c17_i32_163 dim 1 : vector<8x512xf32>, i32 -> vector<8x512xf32>
    %448 = arith.mulf %447, %24 : vector<8x512xf32>
    %449 = vector.extract_strided_slice %446 {offsets = [0, 0, 0], sizes = [1, 8, 8], strides = [1, 1, 1]} : vector<9x8x8xf32> to vector<1x8x8xf32>
    %450 = vector.shape_cast %449 : vector<1x8x8xf32> to vector<8x8xf32>
    %cst_164 = arith.constant dense<0.000000e+00> : vector<8x512xf32>
    %451 = tpu.matmul %450, %448, %cst_164 {dimension_numbers = #tpu.dot_dimension_numbers<[1], [0], [0], [1], [0, 0, 1, 1], [], []>} : vector<8x8xf32>, vector<8x512xf32>, vector<8x512xf32> -> vector<8x512xf32>
    %c16_i32_165 = arith.constant 16 : i32
    %452 = tpu.dynamic_rotate %444 by %c16_i32_165 dim 1 : vector<8x512xf32>, i32 -> vector<8x512xf32>
    %453 = arith.mulf %452, %37 : vector<8x512xf32>
    %454 = vector.extract_strided_slice %446 {offsets = [1, 0, 0], sizes = [1, 8, 8], strides = [1, 1, 1]} : vector<9x8x8xf32> to vector<1x8x8xf32>
    %455 = vector.shape_cast %454 : vector<1x8x8xf32> to vector<8x8xf32>
    %cst_166 = arith.constant dense<0.000000e+00> : vector<8x512xf32>
    %456 = tpu.matmul %455, %453, %cst_166 {dimension_numbers = #tpu.dot_dimension_numbers<[1], [0], [0], [1], [0, 0, 1, 1], [], []>} : vector<8x8xf32>, vector<8x512xf32>, vector<8x512xf32> -> vector<8x512xf32>
    %457 = arith.addf %451, %456 : vector<8x512xf32>
    %c15_i32_167 = arith.constant 15 : i32
    %458 = tpu.dynamic_rotate %444 by %c15_i32_167 dim 1 : vector<8x512xf32>, i32 -> vector<8x512xf32>
    %459 = arith.mulf %458, %60 : vector<8x512xf32>
    %460 = vector.extract_strided_slice %446 {offsets = [2, 0, 0], sizes = [1, 8, 8], strides = [1, 1, 1]} : vector<9x8x8xf32> to vector<1x8x8xf32>
    %461 = vector.shape_cast %460 : vector<1x8x8xf32> to vector<8x8xf32>
    %cst_168 = arith.constant dense<0.000000e+00> : vector<8x512xf32>
    %462 = tpu.matmul %461, %459, %cst_168 {dimension_numbers = #tpu.dot_dimension_numbers<[1], [0], [0], [1], [0, 0, 1, 1], [], []>} : vector<8x8xf32>, vector<8x512xf32>, vector<8x512xf32> -> vector<8x512xf32>
    %463 = arith.addf %457, %462 : vector<8x512xf32>
    %c1_i32_169 = arith.constant 1 : i32
    %464 = tpu.dynamic_rotate %444 by %c1_i32_169 dim 1 : vector<8x512xf32>, i32 -> vector<8x512xf32>
    %465 = arith.mulf %464, %73 : vector<8x512xf32>
    %466 = vector.extract_strided_slice %446 {offsets = [3, 0, 0], sizes = [1, 8, 8], strides = [1, 1, 1]} : vector<9x8x8xf32> to vector<1x8x8xf32>
    %467 = vector.shape_cast %466 : vector<1x8x8xf32> to vector<8x8xf32>
    %cst_170 = arith.constant dense<0.000000e+00> : vector<8x512xf32>
    %468 = tpu.matmul %467, %465, %cst_170 {dimension_numbers = #tpu.dot_dimension_numbers<[1], [0], [0], [1], [0, 0, 1, 1], [], []>} : vector<8x8xf32>, vector<8x512xf32>, vector<8x512xf32> -> vector<8x512xf32>
    %469 = arith.addf %463, %468 : vector<8x512xf32>
    %470 = vector.extract_strided_slice %446 {offsets = [4, 0, 0], sizes = [1, 8, 8], strides = [1, 1, 1]} : vector<9x8x8xf32> to vector<1x8x8xf32>
    %471 = vector.shape_cast %470 : vector<1x8x8xf32> to vector<8x8xf32>
    %cst_171 = arith.constant dense<0.000000e+00> : vector<8x512xf32>
    %472 = tpu.matmul %471, %444, %cst_171 {dimension_numbers = #tpu.dot_dimension_numbers<[1], [0], [0], [1], [0, 0, 1, 1], [], []>} : vector<8x8xf32>, vector<8x512xf32>, vector<8x512xf32> -> vector<8x512xf32>
    %473 = arith.addf %469, %472 : vector<8x512xf32>
    %c511_i32_172 = arith.constant 511 : i32
    %474 = tpu.dynamic_rotate %444 by %c511_i32_172 dim 1 : vector<8x512xf32>, i32 -> vector<8x512xf32>
    %475 = arith.mulf %474, %86 : vector<8x512xf32>
    %476 = vector.extract_strided_slice %446 {offsets = [5, 0, 0], sizes = [1, 8, 8], strides = [1, 1, 1]} : vector<9x8x8xf32> to vector<1x8x8xf32>
    %477 = vector.shape_cast %476 : vector<1x8x8xf32> to vector<8x8xf32>
    %cst_173 = arith.constant dense<0.000000e+00> : vector<8x512xf32>
    %478 = tpu.matmul %477, %475, %cst_173 {dimension_numbers = #tpu.dot_dimension_numbers<[1], [0], [0], [1], [0, 0, 1, 1], [], []>} : vector<8x8xf32>, vector<8x512xf32>, vector<8x512xf32> -> vector<8x512xf32>
    %479 = arith.addf %473, %478 : vector<8x512xf32>
    %c497_i32_174 = arith.constant 497 : i32
    %480 = tpu.dynamic_rotate %444 by %c497_i32_174 dim 1 : vector<8x512xf32>, i32 -> vector<8x512xf32>
    %481 = arith.mulf %480, %109 : vector<8x512xf32>
    %482 = vector.extract_strided_slice %446 {offsets = [6, 0, 0], sizes = [1, 8, 8], strides = [1, 1, 1]} : vector<9x8x8xf32> to vector<1x8x8xf32>
    %483 = vector.shape_cast %482 : vector<1x8x8xf32> to vector<8x8xf32>
    %cst_175 = arith.constant dense<0.000000e+00> : vector<8x512xf32>
    %484 = tpu.matmul %483, %481, %cst_175 {dimension_numbers = #tpu.dot_dimension_numbers<[1], [0], [0], [1], [0, 0, 1, 1], [], []>} : vector<8x8xf32>, vector<8x512xf32>, vector<8x512xf32> -> vector<8x512xf32>
    %485 = arith.addf %479, %484 : vector<8x512xf32>
    %c496_i32_176 = arith.constant 496 : i32
    %486 = tpu.dynamic_rotate %444 by %c496_i32_176 dim 1 : vector<8x512xf32>, i32 -> vector<8x512xf32>
    %487 = arith.mulf %486, %122 : vector<8x512xf32>
    %488 = vector.extract_strided_slice %446 {offsets = [7, 0, 0], sizes = [1, 8, 8], strides = [1, 1, 1]} : vector<9x8x8xf32> to vector<1x8x8xf32>
    %489 = vector.shape_cast %488 : vector<1x8x8xf32> to vector<8x8xf32>
    %cst_177 = arith.constant dense<0.000000e+00> : vector<8x512xf32>
    %490 = tpu.matmul %489, %487, %cst_177 {dimension_numbers = #tpu.dot_dimension_numbers<[1], [0], [0], [1], [0, 0, 1, 1], [], []>} : vector<8x8xf32>, vector<8x512xf32>, vector<8x512xf32> -> vector<8x512xf32>
    %491 = arith.addf %485, %490 : vector<8x512xf32>
    %c495_i32_178 = arith.constant 495 : i32
    %492 = tpu.dynamic_rotate %444 by %c495_i32_178 dim 1 : vector<8x512xf32>, i32 -> vector<8x512xf32>
    %493 = arith.mulf %492, %145 : vector<8x512xf32>
    %494 = vector.extract_strided_slice %446 {offsets = [8, 0, 0], sizes = [1, 8, 8], strides = [1, 1, 1]} : vector<9x8x8xf32> to vector<1x8x8xf32>
    %495 = vector.shape_cast %494 : vector<1x8x8xf32> to vector<8x8xf32>
    %cst_179 = arith.constant dense<0.000000e+00> : vector<8x512xf32>
    %496 = tpu.matmul %495, %493, %cst_179 {dimension_numbers = #tpu.dot_dimension_numbers<[1], [0], [0], [1], [0, 0, 1, 1], [], []>} : vector<8x8xf32>, vector<8x512xf32>, vector<8x512xf32> -> vector<8x512xf32>
    %497 = arith.addf %491, %496 : vector<8x512xf32>
    %498 = vector.broadcast %445 : vector<8x1xf32> to vector<8x512xf32>
    %499 = arith.addf %497, %498 : vector<8x512xf32>
    %cst_180 = arith.constant 0.000000e+00 : f32
    %500 = vector.broadcast %cst_180 : f32 to vector<8x512xf32>
    %501 = arith.maximumf %499, %500 : vector<8x512xf32>
    %cst_181 = arith.constant dense<0.000000e+00> : vector<8xf32>
    %502 = vector.multi_reduction <add>, %501, %cst_181 [1] : vector<8x512xf32> to vector<8xf32>
    %503 = vector.shape_cast %502 : vector<8xf32> to vector<8x1xf32>
    %504 = arith.mulf %501, %501 : vector<8x512xf32>
    %cst_182 = arith.constant dense<0.000000e+00> : vector<8xf32>
    %505 = vector.multi_reduction <add>, %504, %cst_182 [1] : vector<8x512xf32> to vector<8xf32>
    %506 = vector.shape_cast %505 : vector<8xf32> to vector<8x1xf32>
    %cst_183 = arith.constant 0.001953125 : f32
    %507 = vector.broadcast %cst_183 : f32 to vector<8x1xf32>
    %508 = arith.mulf %503, %507 : vector<8x1xf32>
    %cst_184 = arith.constant 0.001953125 : f32
    %509 = vector.broadcast %cst_184 : f32 to vector<8x1xf32>
    %510 = arith.mulf %506, %509 : vector<8x1xf32>
    %511 = arith.mulf %508, %508 : vector<8x1xf32>
    %512 = arith.subf %510, %511 : vector<8x1xf32>
    %513 = vector.broadcast %508 : vector<8x1xf32> to vector<8x512xf32>
    %514 = arith.subf %501, %513 : vector<8x512xf32>
    %cst_185 = arith.constant 9.99999974E-6 : f32
    %515 = vector.broadcast %cst_185 : f32 to vector<8x1xf32>
    %516 = arith.addf %512, %515 : vector<8x1xf32>
    %517 = math.rsqrt %516 : vector<8x1xf32>
    %518 = vector.broadcast %517 : vector<8x1xf32> to vector<8x512xf32>
    %519 = arith.mulf %514, %518 : vector<8x512xf32>
    %c0_186 = arith.constant 0 : index
    %c0_187 = arith.constant 0 : index
    %520 = vector.load %arg17[%c0_186, %c0_187] : memref<1x8xf32, #tpu.memory_space<vmem>>, vector<1x8xf32>
    %cst_188 = arith.constant dense<0.000000e+00> : vector<1x512xf32>
    %521 = tpu.matmul %520, %519, %cst_188 {dimension_numbers = #tpu.dot_dimension_numbers<[1], [0], [0], [1], [0, 0, 1, 1], [], []>} : vector<1x8xf32>, vector<8x512xf32>, vector<1x512xf32> -> vector<1x512xf32>
    %c0_189 = arith.constant 0 : index
    %c0_190 = arith.constant 0 : index
    %522 = vector.load %arg18[%c0_189, %c0_190] : memref<1x1xf32, #tpu.memory_space<vmem>>, vector<1x1xf32>
    %523 = vector.broadcast %522 : vector<1x1xf32> to vector<1x512xf32>
    %524 = arith.addf %521, %523 : vector<1x512xf32>
    %cst_191 = arith.constant 0.000000e+00 : f32
    %525 = vector.broadcast %cst_191 : f32 to vector<1x512xf32>
    %526 = arith.subf %525, %524 : vector<1x512xf32>
    %527 = math.exp %526 : vector<1x512xf32>
    %cst_192 = arith.constant 1.000000e+00 : f32
    %528 = vector.broadcast %cst_192 : f32 to vector<1x512xf32>
    %529 = arith.addf %528, %527 : vector<1x512xf32>
    %cst_193 = arith.constant 1.000000e+00 : f32
    %530 = vector.broadcast %cst_193 : f32 to vector<1x512xf32>
    %531 = arith.divf %530, %529 : vector<1x512xf32>
    %532 = vector.broadcast %531 : vector<1x512xf32> to vector<8x512xf32>
    %533 = arith.mulf %148, %532 : vector<8x512xf32>
    %534 = arith.addf %367, %533 : vector<8x512xf32>
    %c0_194 = arith.constant 0 : index
    %c0_195 = arith.constant 0 : index
    %535 = vector.load %arg19[%c0_194, %c0_195] : memref<8x512xf32, #tpu.memory_space<vmem>>, vector<8x512xf32>
    tpu.vector_store %arg19[%c0_194, %c0_195], %534 {strides = array<i32>} : memref<8x512xf32, #tpu.memory_space<vmem>>, vector<8x512xf32>,
    return
  }
  func.func @transform_0(%arg0: i32) -> (i32, i32) {
    %c0_i32 = arith.constant 0 : i32
    %c0_i32_0 = arith.constant 0 : i32
    %c0_i32_1 = arith.constant 0 : i32
    return %c0_i32, %c0_i32_0 : i32, i32
  }
  func.func @transform_1(%arg0: i32) -> (i32, i32) {
    %c0_i32 = arith.constant 0 : i32
    %c0_i32_0 = arith.constant 0 : i32
    %c0_i32_1 = arith.constant 0 : i32
    return %c0_i32, %c0_i32_0 : i32, i32
  }
  func.func @transform_2(%arg0: i32) -> (i32, i32) {
    %c0_i32 = arith.constant 0 : i32
    %c0_i32_0 = arith.constant 0 : i32
    %c0_i32_1 = arith.constant 0 : i32
    return %c0_i32, %c0_i32_0 : i32, i32
  }
  func.func @transform_3(%arg0: i32) -> (i32, i32) {
    %c0_i32 = arith.constant 0 : i32
    %c0_i32_0 = arith.constant 0 : i32
    %c0_i32_1 = arith.constant 0 : i32
    return %c0_i32, %c0_i32_0 : i32, i32
  }
  func.func @transform_4(%arg0: i32) -> (i32, i32) {
    %c0_i32 = arith.constant 0 : i32
    %c0_i32_0 = arith.constant 0 : i32
    %c0_i32_1 = arith.constant 0 : i32
    return %c0_i32, %c0_i32_0 : i32, i32
  }
  func.func @transform_5(%arg0: i32) -> (i32, i32, i32) {
    %c0_i32 = arith.constant 0 : i32
    %c0_i32_0 = arith.constant 0 : i32
    %c0_i32_1 = arith.constant 0 : i32
    %c0_i32_2 = arith.constant 0 : i32
    return %c0_i32, %c0_i32_0, %c0_i32_1 : i32, i32, i32
  }
  func.func @transform_6(%arg0: i32) -> (i32, i32, i32) {
    %c0_i32 = arith.constant 0 : i32
    %c0_i32_0 = arith.constant 0 : i32
    %c0_i32_1 = arith.constant 0 : i32
    %c0_i32_2 = arith.constant 0 : i32
    return %c0_i32, %c0_i32_0, %c0_i32_1 : i32, i32, i32
  }
  func.func @transform_7(%arg0: i32) -> (i32, i32) {
    %c0_i32 = arith.constant 0 : i32
    %c0_i32_0 = arith.constant 0 : i32
    %c0_i32_1 = arith.constant 0 : i32
    return %c0_i32, %c0_i32_0 : i32, i32
  }
  func.func @transform_8(%arg0: i32) -> (i32, i32, i32) {
    %c0_i32 = arith.constant 0 : i32
    %c0_i32_0 = arith.constant 0 : i32
    %c0_i32_1 = arith.constant 0 : i32
    %c0_i32_2 = arith.constant 0 : i32
    return %c0_i32, %c0_i32_0, %c0_i32_1 : i32, i32, i32
  }
  func.func @transform_9(%arg0: i32) -> (i32, i32) {
    %c0_i32 = arith.constant 0 : i32
    %c0_i32_0 = arith.constant 0 : i32
    %c0_i32_1 = arith.constant 0 : i32
    return %c0_i32, %c0_i32_0 : i32, i32
  }
  func.func @transform_10(%arg0: i32) -> (i32, i32, i32) {
    %c0_i32 = arith.constant 0 : i32
    %c0_i32_0 = arith.constant 0 : i32
    %c0_i32_1 = arith.constant 0 : i32
    %c0_i32_2 = arith.constant 0 : i32
    return %c0_i32, %c0_i32_0, %c0_i32_1 : i32, i32, i32
  }
  func.func @transform_11(%arg0: i32) -> (i32, i32) {
    %c0_i32 = arith.constant 0 : i32
    %c0_i32_0 = arith.constant 0 : i32
    %c0_i32_1 = arith.constant 0 : i32
    return %c0_i32, %c0_i32_0 : i32, i32
  }
  func.func @transform_12(%arg0: i32) -> (i32, i32, i32) {
    %c0_i32 = arith.constant 0 : i32
    %c0_i32_0 = arith.constant 0 : i32
    %c0_i32_1 = arith.constant 0 : i32
    %c0_i32_2 = arith.constant 0 : i32
    return %c0_i32, %c0_i32_0, %c0_i32_1 : i32, i32, i32
  }
  func.func @transform_13(%arg0: i32) -> (i32, i32) {
    %c0_i32 = arith.constant 0 : i32
    %c0_i32_0 = arith.constant 0 : i32
    %c0_i32_1 = arith.constant 0 : i32
    return %c0_i32, %c0_i32_0 : i32, i32
  }
  func.func @transform_14(%arg0: i32) -> (i32, i32) {
    %c0_i32 = arith.constant 0 : i32
    %c0_i32_0 = arith.constant 0 : i32
    %c0_i32_1 = arith.constant 0 : i32
    return %c0_i32, %c0_i32_0 : i32, i32
  }
  func.func @transform_15(%arg0: i32) -> (i32, i32) {
    %c0_i32 = arith.constant 0 : i32
    %c0_i32_0 = arith.constant 0 : i32
    %c0_i32_1 = arith.constant 0 : i32
    return %c0_i32, %c0_i32_0 : i32, i32
  }
  func.func @transform_16(%arg0: i32) -> (i32, i32) {
    %c0_i32 = arith.constant 0 : i32
    %c0_i32_0 = arith.constant 0 : i32
    %c0_i32_1 = arith.constant 0 : i32
    return %c0_i32, %c0_i32_0 : i32, i32
  }
  func.func @transform_17(%arg0: i32) -> (i32, i32) {
    %c0_i32 = arith.constant 0 : i32
    %c0_i32_0 = arith.constant 0 : i32
    %c0_i32_1 = arith.constant 0 : i32
    return %c0_i32, %c0_i32_0 : i32, i32
  }
  func.func @transform_18(%arg0: i32) -> (i32, i32) {
    %c0_i32 = arith.constant 0 : i32
    %c0_i32_0 = arith.constant 0 : i32
    %c0_i32_1 = arith.constant 0 : i32
    return %c0_i32, %c0_i32_0 : i32, i32
  }
}

</mosaic_0001>

<llo_original>
// kernel: pixel_attention_forward.1
$region0: #{pixel_attention_forward.1}
  #allocation0 [shape = 'u32[]', space=smem, size = 0x4, offset = 0x4, fixed_abs, tag = 'smem constant byte address 0x4 - core index']
  #allocation1 [shape = 'u32[72,128]{1,0:T(1,128)}', space=vmem, size = 0x9000, scoped, tag = 'internal scratch']
  #allocation2 [shape = 'f32[1,1]{1,0:T(1,128)S(1)}', space=vmem, size = 0x200, scoped, tag = 'scoped memory for pixel_attention_forward.1']
  #allocation3 [shape = 'f32[1,1]{1,0:T(1,128)S(1)}', space=vmem, size = 0x200, scoped, tag = 'scoped memory for pixel_attention_forward.1']
  %s0 = inlined_call_operand.vmem [shape: s32[1,512], index: 0, kind: input, shape index: {}]
  %s1 = inlined_call_operand.vmem [shape: s32[1,512], index: 1, kind: input, shape index: {}]
  %s2 = inlined_call_operand.vmem [shape: f32[8,512], index: 2, kind: input, shape index: {}]
  %s3 = inlined_call_operand.vmem [shape: f32[8,512], index: 3, kind: input, shape index: {}]
  %s4 = inlined_call_operand.vmem [shape: f32[8,512], index: 4, kind: input, shape index: {}]
  %s5 = inlined_call_operand.vmem [shape: f32[9,16,8], index: 5, kind: input, shape index: {}]
  %s6 = inlined_call_operand.vmem [shape: f32[9,8,8], index: 6, kind: input, shape index: {}]
  %s7 = inlined_call_operand.vmem [shape: f32[8,1], index: 7, kind: input, shape index: {}]
  %s8 = inlined_call_operand.vmem [shape: f32[9,8,8], index: 8, kind: input, shape index: {}]
  %s9 = inlined_call_operand.vmem [shape: f32[8,1], index: 9, kind: input, shape index: {}]
  %s10 = inlined_call_operand.vmem [shape: f32[9,8,8], index: 10, kind: input, shape index: {}]
  %s11 = inlined_call_operand.vmem [shape: f32[8,1], index: 11, kind: input, shape index: {}]
  %s12 = inlined_call_operand.vmem [shape: f32[9,8,8], index: 12, kind: input, shape index: {}]
  %s13 = inlined_call_operand.vmem [shape: f32[8,1], index: 13, kind: input, shape index: {}]
  %s14 = inlined_call_operand.vmem [shape: f32[1,8], index: 14, kind: input, shape index: {}]
  %s15 = inlined_call_operand.<no memory space> [shape: f32[1,1], index: 15, kind: input, shape index: {}]
  %s16 = inlined_call_operand.vmem [shape: f32[1,8], index: 16, kind: input, shape index: {}]
  %s17 = inlined_call_operand.<no memory space> [shape: f32[1,1], index: 17, kind: input, shape index: {}]
  %s18 = inlined_call_operand.vmem [shape: f32[8,512], index: 18, kind: output, shape index: {}]
  %s19 = sld [smem:[#allocation0]]
  $region82: #{pixel_attention_forward.1} parent=0
    _
  %s21 = ssub.s32 1, %s19
  %s22 = scalar_select 0, %s21, %s19
  %v23 = vstv %s15
  %24 = vst [vmem:[#allocation2] sm:$0x1] %v23
  %v25 = vstv %s17
  %26 = vst [vmem:[#allocation3] sm:$0x1] %v25
  // Predicated region
  $region2: #{pixel_attention_forward.1} parent=0 // pred_check
    _
  $region3: #{pixel_attention_forward.1} parent=0 // pred_check_branch
    %28 = sbr.rel (0) target = $region5
  $region4: #{pixel_attention_forward.1} parent=0 // pred_region
    _
  $region5: #{pixel_attention_forward.1} parent=0 // pred_fallthru
    _
  // Predicated region
  $region6: #{pixel_attention_forward.1} parent=0 // pred_check
    _
  $region7: #{pixel_attention_forward.1} parent=0 // pred_check_branch
    %30 = sbr.rel (0) target = $region9
  $region8: #{pixel_attention_forward.1} parent=0 // pred_region
    _
  $region9: #{pixel_attention_forward.1} parent=0 // pred_fallthru
    _
  // Predicated region
  $region10: #{pixel_attention_forward.1} parent=0 // pred_check
    _
  $region11: #{pixel_attention_forward.1} parent=0 // pred_check_branch
    %32 = sbr.rel (0) target = $region13
  $region12: #{pixel_attention_forward.1} parent=0 // pred_region
    _
  $region13: #{pixel_attention_forward.1} parent=0 // pred_fallthru
    _
  // Predicated region
  $region14: #{pixel_attention_forward.1} parent=0 // pred_check
    _
  $region15: #{pixel_attention_forward.1} parent=0 // pred_check_branch
    %34 = sbr.rel (0) target = $region17
  $region16: #{pixel_attention_forward.1} parent=0 // pred_region
    _
  $region17: #{pixel_attention_forward.1} parent=0 // pred_fallthru
    _
  // Predicated region
  $region18: #{pixel_attention_forward.1} parent=0 // pred_check
    _
  $region19: #{pixel_attention_forward.1} parent=0 // pred_check_branch
    %36 = sbr.rel (0) target = $region21
  $region20: #{pixel_attention_forward.1} parent=0 // pred_region
    _
  $region21: #{pixel_attention_forward.1} parent=0 // pred_fallthru
    _
  // Predicated region
  $region22: #{pixel_attention_forward.1} parent=0 // pred_check
    _
  $region23: #{pixel_attention_forward.1} parent=0 // pred_check_branch
    %38 = sbr.rel (0) target = $region25
  $region24: #{pixel_attention_forward.1} parent=0 // pred_region
    _
  $region25: #{pixel_attention_forward.1} parent=0 // pred_fallthru
    _
  // Predicated region
  $region26: #{pixel_attention_forward.1} parent=0 // pred_check
    _
  $region27: #{pixel_attention_forward.1} parent=0 // pred_check_branch
    %40 = sbr.rel (0) target = $region29
  $region28: #{pixel_attention_forward.1} parent=0 // pred_region
    _
  $region29: #{pixel_attention_forward.1} parent=0 // pred_fallthru
    _
  // Predicated region
  $region30: #{pixel_attention_forward.1} parent=0 // pred_check
    _
  $region31: #{pixel_attention_forward.1} parent=0 // pred_check_branch
    %42 = sbr.rel (0) target = $region33
  $region32: #{pixel_attention_forward.1} parent=0 // pred_region
    _
  $region33: #{pixel_attention_forward.1} parent=0 // pred_fallthru
    _
  // Predicated region
  $region34: #{pixel_attention_forward.1} parent=0 // pred_check
    _
  $region35: #{pixel_attention_forward.1} parent=0 // pred_check_branch
    %44 = sbr.rel (0) target = $region37
  $region36: #{pixel_attention_forward.1} parent=0 // pred_region
    _
  $region37: #{pixel_attention_forward.1} parent=0 // pred_fallthru
    _
  // Predicated region
  $region38: #{pixel_attention_forward.1} parent=0 // pred_check
    _
  $region39: #{pixel_attention_forward.1} parent=0 // pred_check_branch
    %46 = sbr.rel (0) target = $region41
  $region40: #{pixel_attention_forward.1} parent=0 // pred_region
    _
  $region41: #{pixel_attention_forward.1} parent=0 // pred_fallthru
    _
  // Predicated region
  $region42: #{pixel_attention_forward.1} parent=0 // pred_check
    _
  $region43: #{pixel_attention_forward.1} parent=0 // pred_check_branch
    %48 = sbr.rel (0) target = $region45
  $region44: #{pixel_attention_forward.1} parent=0 // pred_region
    _
  $region45: #{pixel_attention_forward.1} parent=0 // pred_fallthru
    _
  // Predicated region
  $region46: #{pixel_attention_forward.1} parent=0 // pred_check
    _
  $region47: #{pixel_attention_forward.1} parent=0 // pred_check_branch
    %50 = sbr.rel (0) target = $region49
  $region48: #{pixel_attention_forward.1} parent=0 // pred_region
    _
  $region49: #{pixel_attention_forward.1} parent=0 // pred_fallthru
    _
  // Predicated region
  $region50: #{pixel_attention_forward.1} parent=0 // pred_check
    _
  $region51: #{pixel_attention_forward.1} parent=0 // pred_check_branch
    %52 = sbr.rel (0) target = $region53
  $region52: #{pixel_attention_forward.1} parent=0 // pred_region
    _
  $region53: #{pixel_attention_forward.1} parent=0 // pred_fallthru
    _
  // Predicated region
  $region54: #{pixel_attention_forward.1} parent=0 // pred_check
    _
  $region55: #{pixel_attention_forward.1} parent=0 // pred_check_branch
    %54 = sbr.rel (0) target = $region57
  $region56: #{pixel_attention_forward.1} parent=0 // pred_region
    _
  $region57: #{pixel_attention_forward.1} parent=0 // pred_fallthru
    _
  // Predicated region
  $region58: #{pixel_attention_forward.1} parent=0 // pred_check
    _
  $region59: #{pixel_attention_forward.1} parent=0 // pred_check_branch
    %56 = sbr.rel (0) target = $region61
  $region60: #{pixel_attention_forward.1} parent=0 // pred_region
    _
  $region61: #{pixel_attention_forward.1} parent=0 // pred_fallthru
    _
  // Predicated region
  $region62: #{pixel_attention_forward.1} parent=0 // pred_check
    _
  $region63: #{pixel_attention_forward.1} parent=0 // pred_check_branch
    %58 = sbr.rel (0) target = $region65
  $region64: #{pixel_attention_forward.1} parent=0 // pred_region
    _
  $region65: #{pixel_attention_forward.1} parent=0 // pred_fallthru
    _
  // Predicated region
  $region66: #{pixel_attention_forward.1} parent=0 // pred_check
    _
  $region67: #{pixel_attention_forward.1} parent=0 // pred_check_branch
    %60 = sbr.rel (0) target = $region69
  $region68: #{pixel_attention_forward.1} parent=0 // pred_region
    _
  $region69: #{pixel_attention_forward.1} parent=0 // pred_fallthru
    _
  // Predicated region
  $region70: #{pixel_attention_forward.1} parent=0 // pred_check
    _
  $region71: #{pixel_attention_forward.1} parent=0 // pred_check_branch
    %62 = sbr.rel (0) target = $region73
  $region72: #{pixel_attention_forward.1} parent=0 // pred_region
    _
  $region73: #{pixel_attention_forward.1} parent=0 // pred_fallthru
    _
  %v63 = vld [vmem:[%s0] sm:$0xf]
  %v64 = vld [vmem:[%s1] sm:$0xf]
  %v65 = vadd.s32 %v63, 4294967295
  %vm66 = vcmp.ge.s32.totalorder %v65, 0
  %vm67 = vcmp.lt.s32.totalorder %v65, 16
  %vm68 = vmand %vm66, %vm67
  %v69 = vadd.s32 %v64, 4294967295
  %vm70 = vcmp.ge.s32.totalorder %v69, 0
  %vm71 = vcmp.lt.s32.totalorder %v69, 16
  %vm72 = vmand %vm70, %vm71
  %vm73 = vmand %vm68, %vm72
  %v74 = vsel %vm73, 1, 0
  %v75 = vcvt.s32.f32 %v74
  %v77 = vperm.slane %v75, 0
  %v78 = vperm.slane %v75, 1
  %v79 = vperm.slane %v75, 2
  %v80 = vperm.slane %v75, 3
  %v85 = vsel %vm68, 1, 0
  %v86 = vcvt.s32.f32 %v85
  %v88 = vperm.slane %v86, 0
  %v89 = vperm.slane %v86, 1
  %v90 = vperm.slane %v86, 2
  %v91 = vperm.slane %v86, 3
  %v96 = vadd.s32 %v64, 1
  %vm97 = vcmp.ge.s32.totalorder %v96, 0
  %vm98 = vcmp.lt.s32.totalorder %v96, 16
  %vm99 = vmand %vm97, %vm98
  %vm100 = vmand %vm68, %vm99
  %v101 = vsel %vm100, 1, 0
  %v102 = vcvt.s32.f32 %v101
  %v104 = vperm.slane %v102, 0
  %v105 = vperm.slane %v102, 1
  %v106 = vperm.slane %v102, 2
  %v107 = vperm.slane %v102, 3
  %v112 = vsel %vm72, 1, 0
  %v113 = vcvt.s32.f32 %v112
  %v115 = vperm.slane %v113, 0
  %v116 = vperm.slane %v113, 1
  %v117 = vperm.slane %v113, 2
  %v118 = vperm.slane %v113, 3
  %v123 = vsel %vm99, 1, 0
  %v124 = vcvt.s32.f32 %v123
  %v126 = vperm.slane %v124, 0
  %v127 = vperm.slane %v124, 1
  %v128 = vperm.slane %v124, 2
  %v129 = vperm.slane %v124, 3
  %v134 = vadd.s32 %v63, 1
  %vm135 = vcmp.ge.s32.totalorder %v134, 0
  %vm136 = vcmp.lt.s32.totalorder %v134, 16
  %vm137 = vmand %vm135, %vm136
  %vm138 = vmand %vm137, %vm72
  %v139 = vsel %vm138, 1, 0
  %v140 = vcvt.s32.f32 %v139
  %v142 = vperm.slane %v140, 0
  %v143 = vperm.slane %v140, 1
  %v144 = vperm.slane %v140, 2
  %v145 = vperm.slane %v140, 3
  %v150 = vsel %vm137, 1, 0
  %v151 = vcvt.s32.f32 %v150
  %v153 = vperm.slane %v151, 0
  %v154 = vperm.slane %v151, 1
  %v155 = vperm.slane %v151, 2
  %v156 = vperm.slane %v151, 3
  %vm161 = vmand %vm137, %vm99
  %v162 = vsel %vm161, 1, 0
  %v163 = vcvt.s32.f32 %v162
  %v165 = vperm.slane %v163, 0
  %v166 = vperm.slane %v163, 1
  %v167 = vperm.slane %v163, 2
  %v168 = vperm.slane %v163, 3
  %v173 = vld [vmem:[%s2] sm:$0xff]
  %v174 = vld [vmem:[%s2 + $0x8] sm:$0xff]
  %v175 = vld [vmem:[%s2 + $0x10] sm:$0xff]
  %v176 = vld [vmem:[%s2 + $0x18] sm:$0xff]
  %v177 = vld [vmem:[%s3] sm:$0xff]
  %v178 = vld [vmem:[%s3 + $0x8] sm:$0xff]
  %v179 = vld [vmem:[%s3 + $0x10] sm:$0xff]
  %v180 = vld [vmem:[%s3 + $0x18] sm:$0xff]
  %v181 = vld [vmem:[%s4] sm:$0xff]
  %v182 = vld [vmem:[%s4 + $0x8] sm:$0xff]
  %v183 = vld [vmem:[%s4 + $0x10] sm:$0xff]
  %v184 = vld [vmem:[%s4 + $0x18] sm:$0xff]
  %v185 = vld [vmem:[%s5] sm:$0xff]
  %v186 = vld [vmem:[%s5 + $0x8] sm:$0xff]
  %v187 = vld [vmem:[%s5 + $0x10] sm:$0xff]
  %v188 = vld [vmem:[%s5 + $0x18] sm:$0xff]
  %v189 = vld [vmem:[%s5 + $0x20] sm:$0xff]
  %v190 = vld [vmem:[%s5 + $0x28] sm:$0xff]
  %v191 = vld [vmem:[%s5 + $0x30] sm:$0xff]
  %v192 = vld [vmem:[%s5 + $0x38] sm:$0xff]
  %v193 = vld [vmem:[%s5 + $0x40] sm:$0xff]
  %v194 = vld [vmem:[%s5 + $0x48] sm:$0xff]
  %v195 = vld [vmem:[%s5 + $0x50] sm:$0xff]
  %v196 = vld [vmem:[%s5 + $0x58] sm:$0xff]
  %v197 = vld [vmem:[%s5 + $0x60] sm:$0xff]
  %v198 = vld [vmem:[%s5 + $0x68] sm:$0xff]
  %v199 = vld [vmem:[%s5 + $0x70] sm:$0xff]
  %v200 = vld [vmem:[%s5 + $0x78] sm:$0xff]
  %v201 = vld [vmem:[%s5 + $0x80] sm:$0xff]
  %v202 = vld [vmem:[%s5 + $0x88] sm:$0xff]
  %203 = vrot.lane.b32.xlu0 %v173, 17
  %v204 = vpop.permute.xlu0 %203
  %205 = vrot.lane.b32.xlu0 %v174, 17
  %v206 = vpop.permute.xlu0 %205
  %207 = vrot.lane.b32.xlu0 %v175, 17
  %v208 = vpop.permute.xlu0 %207
  %209 = vrot.lane.b32.xlu0 %v176, 17
  %v210 = vpop.permute.xlu0 %209
  %v211 = vlaneseq
  %v212 = vand.u32 %v211, 127
  %vm213 = vcmp.lt.s32.totalorder %v212, 17
  %v214 = vsel %vm213, %v208, %v210
  %v215 = vsel %vm213, %v206, %v208
  %v216 = vsel %vm213, %v204, %v206
  %v217 = vsel %vm213, %v210, %v204
  %v218 = vmul.f32 %v217, %v77
  %v219 = vmul.f32 %v216, %v78
  %v220 = vmul.f32 %v215, %v79
  %v221 = vmul.f32 %v214, %v80
  %222 = vrot.lane.b32.xlu0 %v173, 16
  %v223 = vpop.permute.xlu0 %222
  %224 = vrot.lane.b32.xlu0 %v174, 16
  %v225 = vpop.permute.xlu0 %224
  %226 = vrot.lane.b32.xlu0 %v175, 16
  %v227 = vpop.permute.xlu0 %226
  %228 = vrot.lane.b32.xlu0 %v176, 16
  %v229 = vpop.permute.xlu0 %228
  %vm230 = vcmp.lt.s32.totalorder %v212, 16
  %v231 = vsel %vm230, %v227, %v229
  %v232 = vsel %vm230, %v225, %v227
  %v233 = vsel %vm230, %v223, %v225
  %v234 = vsel %vm230, %v229, %v223
  %v235 = vmul.f32 %v234, %v88
  %v236 = vmul.f32 %v233, %v89
  %v237 = vmul.f32 %v232, %v90
  %v238 = vmul.f32 %v231, %v91
  %vm239 = vcmask 64512
  %v241 = vsel %vm239, %v187, 0
  %v244 = vsel %vm239, %v188, 0
  %246 = vmatpush.msra.mxu0 0.0
  %247 = vmatpush.msra.mxu0 0.0
  %248 = vmatpush.msra.mxu0 0.0
  %249 = vmatpush.msra.mxu0 0.0
  %250 = vmatpush.msra.mxu0 0.0
  %251 = vmatpush.msra.mxu0 0.0
  %252 = vmatpush.msra.mxu0 0.0
  %253 = vmatpush.msra.mxu0 0.0
  %254 = vmatpush.msra.mxu0 0.0
  %255 = vmatpush.msra.mxu0 0.0
  %256 = vmatpush.msra.mxu0 0.0
  %257 = vmatpush.msra.mxu0 0.0
  %258 = vmatpush.msra.mxu0 0.0
  %259 = vmatpush.msra.mxu0 0.0
  %260 = vmatpush.msra.mxu0 0.0
  %261 = vmatpush.msra.mxu0 %v235
  %262 = vmatmul.f32.gmra.mxu0 %v241
  %v263 = vpop.f32.mrf.mxu0
  %v264 = vadd.f32 0.0, %v263
  %265 = vmatmul.f32.gmra.mxu0 %v244
  %v266 = vpop.f32.mrf.mxu0
  %v267 = vadd.f32 0.0, %v266
  %268 = vdwg.mxu0
  %269 = vmatpush.msra.mxu0 0.0
  %270 = vmatpush.msra.mxu0 0.0
  %271 = vmatpush.msra.mxu0 0.0
  %272 = vmatpush.msra.mxu0 0.0
  %273 = vmatpush.msra.mxu0 0.0
  %274 = vmatpush.msra.mxu0 0.0
  %275 = vmatpush.msra.mxu0 0.0
  %276 = vmatpush.msra.mxu0 0.0
  %277 = vmatpush.msra.mxu0 0.0
  %278 = vmatpush.msra.mxu0 0.0
  %279 = vmatpush.msra.mxu0 0.0
  %280 = vmatpush.msra.mxu0 0.0
  %281 = vmatpush.msra.mxu0 0.0
  %282 = vmatpush.msra.mxu0 0.0
  %283 = vmatpush.msra.mxu0 0.0
  %284 = vmatpush.msra.mxu0 %v236
  %285 = vmatmul.f32.gmra.mxu0 %v241
  %v286 = vpop.f32.mrf.mxu0
  %v287 = vadd.f32 0.0, %v286
  %288 = vmatmul.f32.gmra.mxu0 %v244
  %v289 = vpop.f32.mrf.mxu0
  %v290 = vadd.f32 0.0, %v289
  %291 = vdwg.mxu0
  %292 = vmatpush.msra.mxu0 0.0
  %293 = vmatpush.msra.mxu0 0.0
  %294 = vmatpush.msra.mxu0 0.0
  %295 = vmatpush.msra.mxu0 0.0
  %296 = vmatpush.msra.mxu0 0.0
  %297 = vmatpush.msra.mxu0 0.0
  %298 = vmatpush.msra.mxu0 0.0
  %299 = vmatpush.msra.mxu0 0.0
  %300 = vmatpush.msra.mxu0 0.0
  %301 = vmatpush.msra.mxu0 0.0
  %302 = vmatpush.msra.mxu0 0.0
  %303 = vmatpush.msra.mxu0 0.0
  %304 = vmatpush.msra.mxu0 0.0
  %305 = vmatpush.msra.mxu0 0.0
  %306 = vmatpush.msra.mxu0 0.0
  %307 = vmatpush.msra.mxu0 %v237
  %308 = vmatmul.f32.gmra.mxu0 %v241
  %v309 = vpop.f32.mrf.mxu0
  %v310 = vadd.f32 0.0, %v309
  %311 = vmatmul.f32.gmra.mxu0 %v244
  %v312 = vpop.f32.mrf.mxu0
  %v313 = vadd.f32 0.0, %v312
  %314 = vdwg.mxu0
  %315 = vmatpush.msra.mxu0 0.0
  %316 = vmatpush.msra.mxu0 0.0
  %317 = vmatpush.msra.mxu0 0.0
  %318 = vmatpush.msra.mxu0 0.0
  %319 = vmatpush.msra.mxu0 0.0
  %320 = vmatpush.msra.mxu0 0.0
  %321 = vmatpush.msra.mxu0 0.0
  %322 = vmatpush.msra.mxu0 0.0
  %323 = vmatpush.msra.mxu0 0.0
  %324 = vmatpush.msra.mxu0 0.0
  %325 = vmatpush.msra.mxu0 0.0
  %326 = vmatpush.msra.mxu0 0.0
  %327 = vmatpush.msra.mxu0 0.0
  %328 = vmatpush.msra.mxu0 0.0
  %329 = vmatpush.msra.mxu0 0.0
  %330 = vmatpush.msra.mxu0 %v238
  %331 = vmatmul.f32.gmra.mxu0 %v241
  %v332 = vpop.f32.mrf.mxu0
  %v333 = vadd.f32 0.0, %v332
  %334 = vmatmul.f32.gmra.mxu0 %v244
  %v335 = vpop.f32.mrf.mxu0
  %v336 = vadd.f32 0.0, %v335
  %337 = vdwg.mxu0
  %v339 = vsel %vm239, %v185, 0
  %v342 = vsel %vm239, %v186, 0
  %344 = vmatpush.msra.mxu0 0.0
  %345 = vmatpush.msra.mxu0 0.0
  %346 = vmatpush.msra.mxu0 0.0
  %347 = vmatpush.msra.mxu0 0.0
  %348 = vmatpush.msra.mxu0 0.0
  %349 = vmatpush.msra.mxu0 0.0
  %350 = vmatpush.msra.mxu0 0.0
  %351 = vmatpush.msra.mxu0 0.0
  %352 = vmatpush.msra.mxu0 0.0
  %353 = vmatpush.msra.mxu0 0.0
  %354 = vmatpush.msra.mxu0 0.0
  %355 = vmatpush.msra.mxu0 0.0
  %356 = vmatpush.msra.mxu0 0.0
  %357 = vmatpush.msra.mxu0 0.0
  %358 = vmatpush.msra.mxu0 0.0
  %359 = vmatpush.msra.mxu0 %v218
  %360 = vmatmul.f32.gmra.mxu0 %v339
  %v361 = vpop.f32.mrf.mxu0
  %v362 = vadd.f32 %v264, %v361
  %363 = vmatmul.f32.gmra.mxu0 %v342
  %v364 = vpop.f32.mrf.mxu0
  %v365 = vadd.f32 %v267, %v364
  %366 = vdwg.mxu0
  %367 = vmatpush.msra.mxu0 0.0
  %368 = vmatpush.msra.mxu0 0.0
  %369 = vmatpush.msra.mxu0 0.0
  %370 = vmatpush.msra.mxu0 0.0
  %371 = vmatpush.msra.mxu0 0.0
  %372 = vmatpush.msra.mxu0 0.0
  %373 = vmatpush.msra.mxu0 0.0
  %374 = vmatpush.msra.mxu0 0.0
  %375 = vmatpush.msra.mxu0 0.0
  %376 = vmatpush.msra.mxu0 0.0
  %377 = vmatpush.msra.mxu0 0.0
  %378 = vmatpush.msra.mxu0 0.0
  %379 = vmatpush.msra.mxu0 0.0
  %380 = vmatpush.msra.mxu0 0.0
  %381 = vmatpush.msra.mxu0 0.0
  %382 = vmatpush.msra.mxu0 %v219
  %383 = vmatmul.f32.gmra.mxu0 %v339
  %v384 = vpop.f32.mrf.mxu0
  %v385 = vadd.f32 %v287, %v384
  %386 = vmatmul.f32.gmra.mxu0 %v342
  %v387 = vpop.f32.mrf.mxu0
  %v388 = vadd.f32 %v290, %v387
  %389 = vdwg.mxu0
  %390 = vmatpush.msra.mxu0 0.0
  %391 = vmatpush.msra.mxu0 0.0
  %392 = vmatpush.msra.mxu0 0.0
  %393 = vmatpush.msra.mxu0 0.0
  %394 = vmatpush.msra.mxu0 0.0
  %395 = vmatpush.msra.mxu0 0.0
  %396 = vmatpush.msra.mxu0 0.0
  %397 = vmatpush.msra.mxu0 0.0
  %398 = vmatpush.msra.mxu0 0.0
  %399 = vmatpush.msra.mxu0 0.0
  %400 = vmatpush.msra.mxu0 0.0
  %401 = vmatpush.msra.mxu0 0.0
  %402 = vmatpush.msra.mxu0 0.0
  %403 = vmatpush.msra.mxu0 0.0
  %404 = vmatpush.msra.mxu0 0.0
  %405 = vmatpush.msra.mxu0 %v220
  %406 = vmatmul.f32.gmra.mxu0 %v339
  %v407 = vpop.f32.mrf.mxu0
  %v408 = vadd.f32 %v310, %v407
  %409 = vmatmul.f32.gmra.mxu0 %v342
  %v410 = vpop.f32.mrf.mxu0
  %v411 = vadd.f32 %v313, %v410
  %412 = vdwg.mxu0
  %413 = vmatpush.msra.mxu0 0.0
  %414 = vmatpush.msra.mxu0 0.0
  %415 = vmatpush.msra.mxu0 0.0
  %416 = vmatpush.msra.mxu0 0.0
  %417 = vmatpush.msra.mxu0 0.0
  %418 = vmatpush.msra.mxu0 0.0
  %419 = vmatpush.msra.mxu0 0.0
  %420 = vmatpush.msra.mxu0 0.0
  %421 = vmatpush.msra.mxu0 0.0
  %422 = vmatpush.msra.mxu0 0.0
  %423 = vmatpush.msra.mxu0 0.0
  %424 = vmatpush.msra.mxu0 0.0
  %425 = vmatpush.msra.mxu0 0.0
  %426 = vmatpush.msra.mxu0 0.0
  %427 = vmatpush.msra.mxu0 0.0
  %428 = vmatpush.msra.mxu0 %v221
  %429 = vmatmul.f32.gmra.mxu0 %v339
  %v430 = vpop.f32.mrf.mxu0
  %v431 = vadd.f32 %v333, %v430
  %432 = vmatmul.f32.gmra.mxu0 %v342
  %v433 = vpop.f32.mrf.mxu0
  %v434 = vadd.f32 %v336, %v433
  %435 = vdwg.mxu0
  %436 = vrot.lane.b32.xlu0 %v173, 15
  %v437 = vpop.permute.xlu0 %436
  %438 = vrot.lane.b32.xlu0 %v174, 15
  %v439 = vpop.permute.xlu0 %438
  %440 = vrot.lane.b32.xlu0 %v175, 15
  %v441 = vpop.permute.xlu0 %440
  %442 = vrot.lane.b32.xlu0 %v176, 15
  %v443 = vpop.permute.xlu0 %442
  %vm444 = vcmp.lt.s32.totalorder %v212, 15
  %v445 = vsel %vm444, %v441, %v443
  %v446 = vsel %vm444, %v439, %v441
  %v447 = vsel %vm444, %v437, %v439
  %v448 = vsel %vm444, %v443, %v437
  %v449 = vmul.f32 %v448, %v104
  %v450 = vmul.f32 %v447, %v105
  %v451 = vmul.f32 %v446, %v106
  %v452 = vmul.f32 %v445, %v107
  %v454 = vsel %vm239, %v189, 0
  %v457 = vsel %vm239, %v190, 0
  %459 = vmatpush.msra.mxu0 0.0
  %460 = vmatpush.msra.mxu0 0.0
  %461 = vmatpush.msra.mxu0 0.0
  %462 = vmatpush.msra.mxu0 0.0
  %463 = vmatpush.msra.mxu0 0.0
  %464 = vmatpush.msra.mxu0 0.0
  %465 = vmatpush.msra.mxu0 0.0
  %466 = vmatpush.msra.mxu0 0.0
  %467 = vmatpush.msra.mxu0 0.0
  %468 = vmatpush.msra.mxu0 0.0
  %469 = vmatpush.msra.mxu0 0.0
  %470 = vmatpush.msra.mxu0 0.0
  %471 = vmatpush.msra.mxu0 0.0
  %472 = vmatpush.msra.mxu0 0.0
  %473 = vmatpush.msra.mxu0 0.0
  %474 = vmatpush.msra.mxu0 %v449
  %475 = vmatmul.f32.gmra.mxu0 %v454
  %v476 = vpop.f32.mrf.mxu0
  %v477 = vadd.f32 0.0, %v476
  %478 = vmatmul.f32.gmra.mxu0 %v457
  %v479 = vpop.f32.mrf.mxu0
  %v480 = vadd.f32 0.0, %v479
  %481 = vdwg.mxu0
  %482 = vmatpush.msra.mxu0 0.0
  %483 = vmatpush.msra.mxu0 0.0
  %484 = vmatpush.msra.mxu0 0.0
  %485 = vmatpush.msra.mxu0 0.0
  %486 = vmatpush.msra.mxu0 0.0
  %487 = vmatpush.msra.mxu0 0.0
  %488 = vmatpush.msra.mxu0 0.0
  %489 = vmatpush.msra.mxu0 0.0
  %490 = vmatpush.msra.mxu0 0.0
  %491 = vmatpush.msra.mxu0 0.0
  %492 = vmatpush.msra.mxu0 0.0
  %493 = vmatpush.msra.mxu0 0.0
  %494 = vmatpush.msra.mxu0 0.0
  %495 = vmatpush.msra.mxu0 0.0
  %496 = vmatpush.msra.mxu0 0.0
  %497 = vmatpush.msra.mxu0 %v450
  %498 = vmatmul.f32.gmra.mxu0 %v454
  %v499 = vpop.f32.mrf.mxu0
  %v500 = vadd.f32 0.0, %v499
  %501 = vmatmul.f32.gmra.mxu0 %v457
  %v502 = vpop.f32.mrf.mxu0
  %v503 = vadd.f32 0.0, %v502
  %504 = vdwg.mxu0
  %505 = vmatpush.msra.mxu0 0.0
  %506 = vmatpush.msra.mxu0 0.0
  %507 = vmatpush.msra.mxu0 0.0
  %508 = vmatpush.msra.mxu0 0.0
  %509 = vmatpush.msra.mxu0 0.0
  %510 = vmatpush.msra.mxu0 0.0
  %511 = vmatpush.msra.mxu0 0.0
  %512 = vmatpush.msra.mxu0 0.0
  %513 = vmatpush.msra.mxu0 0.0
  %514 = vmatpush.msra.mxu0 0.0
  %515 = vmatpush.msra.mxu0 0.0
  %516 = vmatpush.msra.mxu0 0.0
  %517 = vmatpush.msra.mxu0 0.0
  %518 = vmatpush.msra.mxu0 0.0
  %519 = vmatpush.msra.mxu0 0.0
  %520 = vmatpush.msra.mxu0 %v451
  %521 = vmatmul.f32.gmra.mxu0 %v454
  %v522 = vpop.f32.mrf.mxu0
  %v523 = vadd.f32 0.0, %v522
  %524 = vmatmul.f32.gmra.mxu0 %v457
  %v525 = vpop.f32.mrf.mxu0
  %v526 = vadd.f32 0.0, %v525
  %527 = vdwg.mxu0
  %528 = vmatpush.msra.mxu0 0.0
  %529 = vmatpush.msra.mxu0 0.0
  %530 = vmatpush.msra.mxu0 0.0
  %531 = vmatpush.msra.mxu0 0.0
  %532 = vmatpush.msra.mxu0 0.0
  %533 = vmatpush.msra.mxu0 0.0
  %534 = vmatpush.msra.mxu0 0.0
  %535 = vmatpush.msra.mxu0 0.0
  %536 = vmatpush.msra.mxu0 0.0
  %537 = vmatpush.msra.mxu0 0.0
  %538 = vmatpush.msra.mxu0 0.0
  %539 = vmatpush.msra.mxu0 0.0
  %540 = vmatpush.msra.mxu0 0.0
  %541 = vmatpush.msra.mxu0 0.0
  %542 = vmatpush.msra.mxu0 0.0
  %543 = vmatpush.msra.mxu0 %v452
  %544 = vmatmul.f32.gmra.mxu0 %v454
  %v545 = vpop.f32.mrf.mxu0
  %v546 = vadd.f32 0.0, %v545
  %547 = vmatmul.f32.gmra.mxu0 %v457
  %v548 = vpop.f32.mrf.mxu0
  %v549 = vadd.f32 0.0, %v548
  %550 = vdwg.mxu0
  %v551 = vadd.f32 %v362, %v477
  %v552 = vadd.f32 %v385, %v500
  %v553 = vadd.f32 %v408, %v523
  %v554 = vadd.f32 %v431, %v546
  %v555 = vadd.f32 %v365, %v480
  %v556 = vadd.f32 %v388, %v503
  %v557 = vadd.f32 %v411, %v526
  %v558 = vadd.f32 %v434, %v549
  %559 = vrot.lane.b32.xlu0 %v173, 1
  %v560 = vpop.permute.xlu0 %559
  %561 = vrot.lane.b32.xlu0 %v174, 1
  %v562 = vpop.permute.xlu0 %561
  %563 = vrot.lane.b32.xlu0 %v175, 1
  %v564 = vpop.permute.xlu0 %563
  %565 = vrot.lane.b32.xlu0 %v176, 1
  %v566 = vpop.permute.xlu0 %565
  %vm567 = vcmp.lt.s32.totalorder %v212, 1
  %v568 = vsel %vm567, %v564, %v566
  %v569 = vsel %vm567, %v562, %v564
  %v570 = vsel %vm567, %v560, %v562
  %v571 = vsel %vm567, %v566, %v560
  %v572 = vmul.f32 %v571, %v115
  %v573 = vmul.f32 %v570, %v116
  %v574 = vmul.f32 %v569, %v117
  %v575 = vmul.f32 %v568, %v118
  %v577 = vsel %vm239, %v191, 0
  %v580 = vsel %vm239, %v192, 0
  %582 = vmatpush.msra.mxu0 0.0
  %583 = vmatpush.msra.mxu0 0.0
  %584 = vmatpush.msra.mxu0 0.0
  %585 = vmatpush.msra.mxu0 0.0
  %586 = vmatpush.msra.mxu0 0.0
  %587 = vmatpush.msra.mxu0 0.0
  %588 = vmatpush.msra.mxu0 0.0
  %589 = vmatpush.msra.mxu0 0.0
  %590 = vmatpush.msra.mxu0 0.0
  %591 = vmatpush.msra.mxu0 0.0
  %592 = vmatpush.msra.mxu0 0.0
  %593 = vmatpush.msra.mxu0 0.0
  %594 = vmatpush.msra.mxu0 0.0
  %595 = vmatpush.msra.mxu0 0.0
  %596 = vmatpush.msra.mxu0 0.0
  %597 = vmatpush.msra.mxu0 %v572
  %598 = vmatmul.f32.gmra.mxu0 %v577
  %v599 = vpop.f32.mrf.mxu0
  %v600 = vadd.f32 0.0, %v599
  %601 = vmatmul.f32.gmra.mxu0 %v580
  %v602 = vpop.f32.mrf.mxu0
  %v603 = vadd.f32 0.0, %v602
  %604 = vdwg.mxu0
  %605 = vmatpush.msra.mxu0 0.0
  %606 = vmatpush.msra.mxu0 0.0
  %607 = vmatpush.msra.mxu0 0.0
  %608 = vmatpush.msra.mxu0 0.0
  %609 = vmatpush.msra.mxu0 0.0
  %610 = vmatpush.msra.mxu0 0.0
  %611 = vmatpush.msra.mxu0 0.0
  %612 = vmatpush.msra.mxu0 0.0
  %613 = vmatpush.msra.mxu0 0.0
  %614 = vmatpush.msra.mxu0 0.0
  %615 = vmatpush.msra.mxu0 0.0
  %616 = vmatpush.msra.mxu0 0.0
  %617 = vmatpush.msra.mxu0 0.0
  %618 = vmatpush.msra.mxu0 0.0
  %619 = vmatpush.msra.mxu0 0.0
  %620 = vmatpush.msra.mxu0 %v573
  %621 = vmatmul.f32.gmra.mxu0 %v577
  %v622 = vpop.f32.mrf.mxu0
  %v623 = vadd.f32 0.0, %v622
  %624 = vmatmul.f32.gmra.mxu0 %v580
  %v625 = vpop.f32.mrf.mxu0
  %v626 = vadd.f32 0.0, %v625
  %627 = vdwg.mxu0
  %628 = vmatpush.msra.mxu0 0.0
  %629 = vmatpush.msra.mxu0 0.0
  %630 = vmatpush.msra.mxu0 0.0
  %631 = vmatpush.msra.mxu0 0.0
  %632 = vmatpush.msra.mxu0 0.0
  %633 = vmatpush.msra.mxu0 0.0
  %634 = vmatpush.msra.mxu0 0.0
  %635 = vmatpush.msra.mxu0 0.0
  %636 = vmatpush.msra.mxu0 0.0
  %637 = vmatpush.msra.mxu0 0.0
  %638 = vmatpush.msra.mxu0 0.0
  %639 = vmatpush.msra.mxu0 0.0
  %640 = vmatpush.msra.mxu0 0.0
  %641 = vmatpush.msra.mxu0 0.0
  %642 = vmatpush.msra.mxu0 0.0
  %643 = vmatpush.msra.mxu0 %v574
  %644 = vmatmul.f32.gmra.mxu0 %v577
  %v645 = vpop.f32.mrf.mxu0
  %v646 = vadd.f32 0.0, %v645
  %647 = vmatmul.f32.gmra.mxu0 %v580
  %v648 = vpop.f32.mrf.mxu0
  %v649 = vadd.f32 0.0, %v648
  %650 = vdwg.mxu0
  %651 = vmatpush.msra.mxu0 0.0
  %652 = vmatpush.msra.mxu0 0.0
  %653 = vmatpush.msra.mxu0 0.0
  %654 = vmatpush.msra.mxu0 0.0
  %655 = vmatpush.msra.mxu0 0.0
  %656 = vmatpush.msra.mxu0 0.0
  %657 = vmatpush.msra.mxu0 0.0
  %658 = vmatpush.msra.mxu0 0.0
  %659 = vmatpush.msra.mxu0 0.0
  %660 = vmatpush.msra.mxu0 0.0
  %661 = vmatpush.msra.mxu0 0.0
  %662 = vmatpush.msra.mxu0 0.0
  %663 = vmatpush.msra.mxu0 0.0
  %664 = vmatpush.msra.mxu0 0.0
  %665 = vmatpush.msra.mxu0 0.0
  %666 = vmatpush.msra.mxu0 %v575
  %667 = vmatmul.f32.gmra.mxu0 %v577
  %v668 = vpop.f32.mrf.mxu0
  %v669 = vadd.f32 0.0, %v668
  %670 = vmatmul.f32.gmra.mxu0 %v580
  %v671 = vpop.f32.mrf.mxu0
  %v672 = vadd.f32 0.0, %v671
  %673 = vdwg.mxu0
  %v674 = vadd.f32 %v551, %v600
  %v675 = vadd.f32 %v552, %v623
  %v676 = vadd.f32 %v553, %v646
  %v677 = vadd.f32 %v554, %v669
  %v678 = vadd.f32 %v555, %v603
  %v679 = vadd.f32 %v556, %v626
  %v680 = vadd.f32 %v557, %v649
  %v681 = vadd.f32 %v558, %v672
  %v683 = vsel %vm239, %v193, 0
  %v686 = vsel %vm239, %v194, 0
  %688 = vmatpush.msra.mxu0 0.0
  %689 = vmatpush.msra.mxu0 0.0
  %690 = vmatpush.msra.mxu0 0.0
  %691 = vmatpush.msra.mxu0 0.0
  %692 = vmatpush.msra.mxu0 0.0
  %693 = vmatpush.msra.mxu0 0.0
  %694 = vmatpush.msra.mxu0 0.0
  %695 = vmatpush.msra.mxu0 0.0
  %696 = vmatpush.msra.mxu0 0.0
  %697 = vmatpush.msra.mxu0 0.0
  %698 = vmatpush.msra.mxu0 0.0
  %699 = vmatpush.msra.mxu0 0.0
  %700 = vmatpush.msra.mxu0 0.0
  %701 = vmatpush.msra.mxu0 0.0
  %702 = vmatpush.msra.mxu0 0.0
  %703 = vmatpush.msra.mxu0 %v173
  %704 = vmatmul.f32.gmra.mxu0 %v683
  %v705 = vpop.f32.mrf.mxu0
  %v706 = vadd.f32 0.0, %v705
  %707 = vmatmul.f32.gmra.mxu0 %v686
  %v708 = vpop.f32.mrf.mxu0
  %v709 = vadd.f32 0.0, %v708
  %710 = vdwg.mxu0
  %711 = vmatpush.msra.mxu0 0.0
  %712 = vmatpush.msra.mxu0 0.0
  %713 = vmatpush.msra.mxu0 0.0
  %714 = vmatpush.msra.mxu0 0.0
  %715 = vmatpush.msra.mxu0 0.0
  %716 = vmatpush.msra.mxu0 0.0
  %717 = vmatpush.msra.mxu0 0.0
  %718 = vmatpush.msra.mxu0 0.0
  %719 = vmatpush.msra.mxu0 0.0
  %720 = vmatpush.msra.mxu0 0.0
  %721 = vmatpush.msra.mxu0 0.0
  %722 = vmatpush.msra.mxu0 0.0
  %723 = vmatpush.msra.mxu0 0.0
  %724 = vmatpush.msra.mxu0 0.0
  %725 = vmatpush.msra.mxu0 0.0
  %726 = vmatpush.msra.mxu0 %v174
  %727 = vmatmul.f32.gmra.mxu0 %v683
  %v728 = vpop.f32.mrf.mxu0
  %v729 = vadd.f32 0.0, %v728
  %730 = vmatmul.f32.gmra.mxu0 %v686
  %v731 = vpop.f32.mrf.mxu0
  %v732 = vadd.f32 0.0, %v731
  %733 = vdwg.mxu0
  %734 = vmatpush.msra.mxu0 0.0
  %735 = vmatpush.msra.mxu0 0.0
  %736 = vmatpush.msra.mxu0 0.0
  %737 = vmatpush.msra.mxu0 0.0
  %738 = vmatpush.msra.mxu0 0.0
  %739 = vmatpush.msra.mxu0 0.0
  %740 = vmatpush.msra.mxu0 0.0
  %741 = vmatpush.msra.mxu0 0.0
  %742 = vmatpush.msra.mxu0 0.0
  %743 = vmatpush.msra.mxu0 0.0
  %744 = vmatpush.msra.mxu0 0.0
  %745 = vmatpush.msra.mxu0 0.0
  %746 = vmatpush.msra.mxu0 0.0
  %747 = vmatpush.msra.mxu0 0.0
  %748 = vmatpush.msra.mxu0 0.0
  %749 = vmatpush.msra.mxu0 %v175
  %750 = vmatmul.f32.gmra.mxu0 %v683
  %v751 = vpop.f32.mrf.mxu0
  %v752 = vadd.f32 0.0, %v751
  %753 = vmatmul.f32.gmra.mxu0 %v686
  %v754 = vpop.f32.mrf.mxu0
  %v755 = vadd.f32 0.0, %v754
  %756 = vdwg.mxu0
  %757 = vmatpush.msra.mxu0 0.0
  %758 = vmatpush.msra.mxu0 0.0
  %759 = vmatpush.msra.mxu0 0.0
  %760 = vmatpush.msra.mxu0 0.0
  %761 = vmatpush.msra.mxu0 0.0
  %762 = vmatpush.msra.mxu0 0.0
  %763 = vmatpush.msra.mxu0 0.0
  %764 = vmatpush.msra.mxu0 0.0
  %765 = vmatpush.msra.mxu0 0.0
  %766 = vmatpush.msra.mxu0 0.0
  %767 = vmatpush.msra.mxu0 0.0
  %768 = vmatpush.msra.mxu0 0.0
  %769 = vmatpush.msra.mxu0 0.0
  %770 = vmatpush.msra.mxu0 0.0
  %771 = vmatpush.msra.mxu0 0.0
  %772 = vmatpush.msra.mxu0 %v176
  %773 = vmatmul.f32.gmra.mxu0 %v683
  %v774 = vpop.f32.mrf.mxu0
  %v775 = vadd.f32 0.0, %v774
  %776 = vmatmul.f32.gmra.mxu0 %v686
  %v777 = vpop.f32.mrf.mxu0
  %v778 = vadd.f32 0.0, %v777
  %779 = vdwg.mxu0
  %v780 = vadd.f32 %v674, %v706
  %v781 = vadd.f32 %v675, %v729
  %v782 = vadd.f32 %v676, %v752
  %v783 = vadd.f32 %v677, %v775
  %v784 = vadd.f32 %v678, %v709
  %v785 = vadd.f32 %v679, %v732
  %v786 = vadd.f32 %v680, %v755
  %v787 = vadd.f32 %v681, %v778
  %788 = vrot.lane.b32.xlu0 %v173, 127
  %v789 = vpop.permute.xlu0 %788
  %790 = vrot.lane.b32.xlu0 %v174, 127
  %v791 = vpop.permute.xlu0 %790
  %792 = vrot.lane.b32.xlu0 %v175, 127
  %v793 = vpop.permute.xlu0 %792
  %794 = vrot.lane.b32.xlu0 %v176, 127
  %v795 = vpop.permute.xlu0 %794
  %vm796 = vcmp.lt.s32.totalorder %v212, 127
  %v797 = vsel %vm796, %v793, %v795
  %v798 = vsel %vm796, %v791, %v793
  %v799 = vsel %vm796, %v789, %v791
  %v800 = vsel %vm796, %v795, %v789
  %v801 = vmul.f32 %v799, %v126
  %v802 = vmul.f32 %v798, %v127
  %v803 = vmul.f32 %v797, %v128
  %v804 = vmul.f32 %v800, %v129
  %v806 = vsel %vm239, %v195, 0
  %v809 = vsel %vm239, %v196, 0
  %811 = vmatpush.msra.mxu0 0.0
  %812 = vmatpush.msra.mxu0 0.0
  %813 = vmatpush.msra.mxu0 0.0
  %814 = vmatpush.msra.mxu0 0.0
  %815 = vmatpush.msra.mxu0 0.0
  %816 = vmatpush.msra.mxu0 0.0
  %817 = vmatpush.msra.mxu0 0.0
  %818 = vmatpush.msra.mxu0 0.0
  %819 = vmatpush.msra.mxu0 0.0
  %820 = vmatpush.msra.mxu0 0.0
  %821 = vmatpush.msra.mxu0 0.0
  %822 = vmatpush.msra.mxu0 0.0
  %823 = vmatpush.msra.mxu0 0.0
  %824 = vmatpush.msra.mxu0 0.0
  %825 = vmatpush.msra.mxu0 0.0
  %826 = vmatpush.msra.mxu0 %v801
  %827 = vmatmul.f32.gmra.mxu0 %v806
  %v828 = vpop.f32.mrf.mxu0
  %v829 = vadd.f32 0.0, %v828
  %830 = vmatmul.f32.gmra.mxu0 %v809
  %v831 = vpop.f32.mrf.mxu0
  %v832 = vadd.f32 0.0, %v831
  %833 = vdwg.mxu0
  %834 = vmatpush.msra.mxu0 0.0
  %835 = vmatpush.msra.mxu0 0.0
  %836 = vmatpush.msra.mxu0 0.0
  %837 = vmatpush.msra.mxu0 0.0
  %838 = vmatpush.msra.mxu0 0.0
  %839 = vmatpush.msra.mxu0 0.0
  %840 = vmatpush.msra.mxu0 0.0
  %841 = vmatpush.msra.mxu0 0.0
  %842 = vmatpush.msra.mxu0 0.0
  %843 = vmatpush.msra.mxu0 0.0
  %844 = vmatpush.msra.mxu0 0.0
  %845 = vmatpush.msra.mxu0 0.0
  %846 = vmatpush.msra.mxu0 0.0
  %847 = vmatpush.msra.mxu0 0.0
  %848 = vmatpush.msra.mxu0 0.0
  %849 = vmatpush.msra.mxu0 %v802
  %850 = vmatmul.f32.gmra.mxu0 %v806
  %v851 = vpop.f32.mrf.mxu0
  %v852 = vadd.f32 0.0, %v851
  %853 = vmatmul.f32.gmra.mxu0 %v809
  %v854 = vpop.f32.mrf.mxu0
  %v855 = vadd.f32 0.0, %v854
  %856 = vdwg.mxu0
  %857 = vmatpush.msra.mxu0 0.0
  %858 = vmatpush.msra.mxu0 0.0
  %859 = vmatpush.msra.mxu0 0.0
  %860 = vmatpush.msra.mxu0 0.0
  %861 = vmatpush.msra.mxu0 0.0
  %862 = vmatpush.msra.mxu0 0.0
  %863 = vmatpush.msra.mxu0 0.0
  %864 = vmatpush.msra.mxu0 0.0
  %865 = vmatpush.msra.mxu0 0.0
  %866 = vmatpush.msra.mxu0 0.0
  %867 = vmatpush.msra.mxu0 0.0
  %868 = vmatpush.msra.mxu0 0.0
  %869 = vmatpush.msra.mxu0 0.0
  %870 = vmatpush.msra.mxu0 0.0
  %871 = vmatpush.msra.mxu0 0.0
  %872 = vmatpush.msra.mxu0 %v803
  %873 = vmatmul.f32.gmra.mxu0 %v806
  %v874 = vpop.f32.mrf.mxu0
  %v875 = vadd.f32 0.0, %v874
  %876 = vmatmul.f32.gmra.mxu0 %v809
  %v877 = vpop.f32.mrf.mxu0
  %v878 = vadd.f32 0.0, %v877
  %879 = vdwg.mxu0
  %880 = vmatpush.msra.mxu0 0.0
  %881 = vmatpush.msra.mxu0 0.0
  %882 = vmatpush.msra.mxu0 0.0
  %883 = vmatpush.msra.mxu0 0.0
  %884 = vmatpush.msra.mxu0 0.0
  %885 = vmatpush.msra.mxu0 0.0
  %886 = vmatpush.msra.mxu0 0.0
  %887 = vmatpush.msra.mxu0 0.0
  %888 = vmatpush.msra.mxu0 0.0
  %889 = vmatpush.msra.mxu0 0.0
  %890 = vmatpush.msra.mxu0 0.0
  %891 = vmatpush.msra.mxu0 0.0
  %892 = vmatpush.msra.mxu0 0.0
  %893 = vmatpush.msra.mxu0 0.0
  %894 = vmatpush.msra.mxu0 0.0
  %895 = vmatpush.msra.mxu0 %v804
  %896 = vmatmul.f32.gmra.mxu0 %v806
  %v897 = vpop.f32.mrf.mxu0
  %v898 = vadd.f32 0.0, %v897
  %899 = vmatmul.f32.gmra.mxu0 %v809
  %v900 = vpop.f32.mrf.mxu0
  %v901 = vadd.f32 0.0, %v900
  %902 = vdwg.mxu0
  %v903 = vadd.f32 %v780, %v829
  %v904 = vadd.f32 %v781, %v852
  %v905 = vadd.f32 %v782, %v875
  %v906 = vadd.f32 %v783, %v898
  %v907 = vadd.f32 %v784, %v832
  %v908 = vadd.f32 %v785, %v855
  %v909 = vadd.f32 %v786, %v878
  %v910 = vadd.f32 %v787, %v901
  %911 = vrot.lane.b32.xlu0 %v173, 113
  %v912 = vpop.permute.xlu0 %911
  %913 = vrot.lane.b32.xlu0 %v174, 113
  %v914 = vpop.permute.xlu0 %913
  %915 = vrot.lane.b32.xlu0 %v175, 113
  %v916 = vpop.permute.xlu0 %915
  %917 = vrot.lane.b32.xlu0 %v176, 113
  %v918 = vpop.permute.xlu0 %917
  %vm919 = vcmp.lt.s32.totalorder %v212, 113
  %v920 = vsel %vm919, %v916, %v918
  %v921 = vsel %vm919, %v914, %v916
  %v922 = vsel %vm919, %v912, %v914
  %v923 = vsel %vm919, %v918, %v912
  %v924 = vmul.f32 %v922, %v142
  %v925 = vmul.f32 %v921, %v143
  %v926 = vmul.f32 %v920, %v144
  %v927 = vmul.f32 %v923, %v145
  %v929 = vsel %vm239, %v197, 0
  %v932 = vsel %vm239, %v198, 0
  %934 = vmatpush.msra.mxu0 0.0
  %935 = vmatpush.msra.mxu0 0.0
  %936 = vmatpush.msra.mxu0 0.0
  %937 = vmatpush.msra.mxu0 0.0
  %938 = vmatpush.msra.mxu0 0.0
  %939 = vmatpush.msra.mxu0 0.0
  %940 = vmatpush.msra.mxu0 0.0
  %941 = vmatpush.msra.mxu0 0.0
  %942 = vmatpush.msra.mxu0 0.0
  %943 = vmatpush.msra.mxu0 0.0
  %944 = vmatpush.msra.mxu0 0.0
  %945 = vmatpush.msra.mxu0 0.0
  %946 = vmatpush.msra.mxu0 0.0
  %947 = vmatpush.msra.mxu0 0.0
  %948 = vmatpush.msra.mxu0 0.0
  %949 = vmatpush.msra.mxu0 %v924
  %950 = vmatmul.f32.gmra.mxu0 %v929
  %v951 = vpop.f32.mrf.mxu0
  %v952 = vadd.f32 0.0, %v951
  %953 = vmatmul.f32.gmra.mxu0 %v932
  %v954 = vpop.f32.mrf.mxu0
  %v955 = vadd.f32 0.0, %v954
  %956 = vdwg.mxu0
  %957 = vmatpush.msra.mxu0 0.0
  %958 = vmatpush.msra.mxu0 0.0
  %959 = vmatpush.msra.mxu0 0.0
  %960 = vmatpush.msra.mxu0 0.0
  %961 = vmatpush.msra.mxu0 0.0
  %962 = vmatpush.msra.mxu0 0.0
  %963 = vmatpush.msra.mxu0 0.0
  %964 = vmatpush.msra.mxu0 0.0
  %965 = vmatpush.msra.mxu0 0.0
  %966 = vmatpush.msra.mxu0 0.0
  %967 = vmatpush.msra.mxu0 0.0
  %968 = vmatpush.msra.mxu0 0.0
  %969 = vmatpush.msra.mxu0 0.0
  %970 = vmatpush.msra.mxu0 0.0
  %971 = vmatpush.msra.mxu0 0.0
  %972 = vmatpush.msra.mxu0 %v925
  %973 = vmatmul.f32.gmra.mxu0 %v929
  %v974 = vpop.f32.mrf.mxu0
  %v975 = vadd.f32 0.0, %v974
  %976 = vmatmul.f32.gmra.mxu0 %v932
  %v977 = vpop.f32.mrf.mxu0
  %v978 = vadd.f32 0.0, %v977
  %979 = vdwg.mxu0
  %980 = vmatpush.msra.mxu0 0.0
  %981 = vmatpush.msra.mxu0 0.0
  %982 = vmatpush.msra.mxu0 0.0
  %983 = vmatpush.msra.mxu0 0.0
  %984 = vmatpush.msra.mxu0 0.0
  %985 = vmatpush.msra.mxu0 0.0
  %986 = vmatpush.msra.mxu0 0.0
  %987 = vmatpush.msra.mxu0 0.0
  %988 = vmatpush.msra.mxu0 0.0
  %989 = vmatpush.msra.mxu0 0.0
  %990 = vmatpush.msra.mxu0 0.0
  %991 = vmatpush.msra.mxu0 0.0
  %992 = vmatpush.msra.mxu0 0.0
  %993 = vmatpush.msra.mxu0 0.0
  %994 = vmatpush.msra.mxu0 0.0
  %995 = vmatpush.msra.mxu0 %v926
  %996 = vmatmul.f32.gmra.mxu0 %v929
  %v997 = vpop.f32.mrf.mxu0
  %v998 = vadd.f32 0.0, %v997
  %999 = vmatmul.f32.gmra.mxu0 %v932
  %v1000 = vpop.f32.mrf.mxu0
  %v1001 = vadd.f32 0.0, %v1000
  %1002 = vdwg.mxu0
  %1003 = vmatpush.msra.mxu0 0.0
  %1004 = vmatpush.msra.mxu0 0.0
  %1005 = vmatpush.msra.mxu0 0.0
  %1006 = vmatpush.msra.mxu0 0.0
  %1007 = vmatpush.msra.mxu0 0.0
  %1008 = vmatpush.msra.mxu0 0.0
  %1009 = vmatpush.msra.mxu0 0.0
  %1010 = vmatpush.msra.mxu0 0.0
  %1011 = vmatpush.msra.mxu0 0.0
  %1012 = vmatpush.msra.mxu0 0.0
  %1013 = vmatpush.msra.mxu0 0.0
  %1014 = vmatpush.msra.mxu0 0.0
  %1015 = vmatpush.msra.mxu0 0.0
  %1016 = vmatpush.msra.mxu0 0.0
  %1017 = vmatpush.msra.mxu0 0.0
  %1018 = vmatpush.msra.mxu0 %v927
  %1019 = vmatmul.f32.gmra.mxu0 %v929
  %v1020 = vpop.f32.mrf.mxu0
  %v1021 = vadd.f32 0.0, %v1020
  %1022 = vmatmul.f32.gmra.mxu0 %v932
  %v1023 = vpop.f32.mrf.mxu0
  %v1024 = vadd.f32 0.0, %v1023
  %1025 = vdwg.mxu0
  %v1026 = vadd.f32 %v903, %v952
  %v1027 = vadd.f32 %v904, %v975
  %v1028 = vadd.f32 %v905, %v998
  %v1029 = vadd.f32 %v906, %v1021
  %v1030 = vadd.f32 %v907, %v955
  %v1031 = vadd.f32 %v908, %v978
  %v1032 = vadd.f32 %v909, %v1001
  %v1033 = vadd.f32 %v910, %v1024
  %1034 = vrot.lane.b32.xlu0 %v173, 112
  %v1035 = vpop.permute.xlu0 %1034
  %1036 = vrot.lane.b32.xlu0 %v174, 112
  %v1037 = vpop.permute.xlu0 %1036
  %1038 = vrot.lane.b32.xlu0 %v175, 112
  %v1039 = vpop.permute.xlu0 %1038
  %1040 = vrot.lane.b32.xlu0 %v176, 112
  %v1041 = vpop.permute.xlu0 %1040
  %vm1042 = vcmp.lt.s32.totalorder %v212, 112
  %v1043 = vsel %vm1042, %v1039, %v1041
  %v1044 = vsel %vm1042, %v1037, %v1039
  %v1045 = vsel %vm1042, %v1035, %v1037
  %v1046 = vsel %vm1042, %v1041, %v1035
  %v1047 = vmul.f32 %v1045, %v153
  %v1048 = vmul.f32 %v1044, %v154
  %v1049 = vmul.f32 %v1043, %v155
  %v1050 = vmul.f32 %v1046, %v156
  %v1052 = vsel %vm239, %v199, 0
  %v1055 = vsel %vm239, %v200, 0
  %1057 = vmatpush.msra.mxu0 0.0
  %1058 = vmatpush.msra.mxu0 0.0
  %1059 = vmatpush.msra.mxu0 0.0
  %1060 = vmatpush.msra.mxu0 0.0
  %1061 = vmatpush.msra.mxu0 0.0
  %1062 = vmatpush.msra.mxu0 0.0
  %1063 = vmatpush.msra.mxu0 0.0
  %1064 = vmatpush.msra.mxu0 0.0
  %1065 = vmatpush.msra.mxu0 0.0
  %1066 = vmatpush.msra.mxu0 0.0
  %1067 = vmatpush.msra.mxu0 0.0
  %1068 = vmatpush.msra.mxu0 0.0
  %1069 = vmatpush.msra.mxu0 0.0
  %1070 = vmatpush.msra.mxu0 0.0
  %1071 = vmatpush.msra.mxu0 0.0
  %1072 = vmatpush.msra.mxu0 %v1047
  %1073 = vmatmul.f32.gmra.mxu0 %v1052
  %v1074 = vpop.f32.mrf.mxu0
  %v1075 = vadd.f32 0.0, %v1074
  %1076 = vmatmul.f32.gmra.mxu0 %v1055
  %v1077 = vpop.f32.mrf.mxu0
  %v1078 = vadd.f32 0.0, %v1077
  %1079 = vdwg.mxu0
  %1080 = vmatpush.msra.mxu0 0.0
  %1081 = vmatpush.msra.mxu0 0.0
  %1082 = vmatpush.msra.mxu0 0.0
  %1083 = vmatpush.msra.mxu0 0.0
  %1084 = vmatpush.msra.mxu0 0.0
  %1085 = vmatpush.msra.mxu0 0.0
  %1086 = vmatpush.msra.mxu0 0.0
  %1087 = vmatpush.msra.mxu0 0.0
  %1088 = vmatpush.msra.mxu0 0.0
  %1089 = vmatpush.msra.mxu0 0.0
  %1090 = vmatpush.msra.mxu0 0.0
  %1091 = vmatpush.msra.mxu0 0.0
  %1092 = vmatpush.msra.mxu0 0.0
  %1093 = vmatpush.msra.mxu0 0.0
  %1094 = vmatpush.msra.mxu0 0.0
  %1095 = vmatpush.msra.mxu0 %v1048
  %1096 = vmatmul.f32.gmra.mxu0 %v1052
  %v1097 = vpop.f32.mrf.mxu0
  %v1098 = vadd.f32 0.0, %v1097
  %1099 = vmatmul.f32.gmra.mxu0 %v1055
  %v1100 = vpop.f32.mrf.mxu0
  %v1101 = vadd.f32 0.0, %v1100
  %1102 = vdwg.mxu0
  %1103 = vmatpush.msra.mxu0 0.0
  %1104 = vmatpush.msra.mxu0 0.0
  %1105 = vmatpush.msra.mxu0 0.0
  %1106 = vmatpush.msra.mxu0 0.0
  %1107 = vmatpush.msra.mxu0 0.0
  %1108 = vmatpush.msra.mxu0 0.0
  %1109 = vmatpush.msra.mxu0 0.0
  %1110 = vmatpush.msra.mxu0 0.0
  %1111 = vmatpush.msra.mxu0 0.0
  %1112 = vmatpush.msra.mxu0 0.0
  %1113 = vmatpush.msra.mxu0 0.0
  %1114 = vmatpush.msra.mxu0 0.0
  %1115 = vmatpush.msra.mxu0 0.0
  %1116 = vmatpush.msra.mxu0 0.0
  %1117 = vmatpush.msra.mxu0 0.0
  %1118 = vmatpush.msra.mxu0 %v1049
  %1119 = vmatmul.f32.gmra.mxu0 %v1052
  %v1120 = vpop.f32.mrf.mxu0
  %v1121 = vadd.f32 0.0, %v1120
  %1122 = vmatmul.f32.gmra.mxu0 %v1055
  %v1123 = vpop.f32.mrf.mxu0
  %v1124 = vadd.f32 0.0, %v1123
  %1125 = vdwg.mxu0
  %1126 = vmatpush.msra.mxu0 0.0
  %1127 = vmatpush.msra.mxu0 0.0
  %1128 = vmatpush.msra.mxu0 0.0
  %1129 = vmatpush.msra.mxu0 0.0
  %1130 = vmatpush.msra.mxu0 0.0
  %1131 = vmatpush.msra.mxu0 0.0
  %1132 = vmatpush.msra.mxu0 0.0
  %1133 = vmatpush.msra.mxu0 0.0
  %1134 = vmatpush.msra.mxu0 0.0
  %1135 = vmatpush.msra.mxu0 0.0
  %1136 = vmatpush.msra.mxu0 0.0
  %1137 = vmatpush.msra.mxu0 0.0
  %1138 = vmatpush.msra.mxu0 0.0
  %1139 = vmatpush.msra.mxu0 0.0
  %1140 = vmatpush.msra.mxu0 0.0
  %1141 = vmatpush.msra.mxu0 %v1050
  %1142 = vmatmul.f32.gmra.mxu0 %v1052
  %v1143 = vpop.f32.mrf.mxu0
  %v1144 = vadd.f32 0.0, %v1143
  %1145 = vmatmul.f32.gmra.mxu0 %v1055
  %v1146 = vpop.f32.mrf.mxu0
  %v1147 = vadd.f32 0.0, %v1146
  %1148 = vdwg.mxu0
  %v1149 = vadd.f32 %v1026, %v1075
  %v1150 = vadd.f32 %v1027, %v1098
  %v1151 = vadd.f32 %v1028, %v1121
  %v1152 = vadd.f32 %v1029, %v1144
  %v1153 = vadd.f32 %v1030, %v1078
  %v1154 = vadd.f32 %v1031, %v1101
  %v1155 = vadd.f32 %v1032, %v1124
  %v1156 = vadd.f32 %v1033, %v1147
  %1157 = vrot.lane.b32.xlu0 %v173, 111
  %v1158 = vpop.permute.xlu0 %1157
  %1159 = vrot.lane.b32.xlu0 %v174, 111
  %v1160 = vpop.permute.xlu0 %1159
  %1161 = vrot.lane.b32.xlu0 %v175, 111
  %v1162 = vpop.permute.xlu0 %1161
  %1163 = vrot.lane.b32.xlu0 %v176, 111
  %v1164 = vpop.permute.xlu0 %1163
  %vm1165 = vcmp.lt.s32.totalorder %v212, 111
  %v1166 = vsel %vm1165, %v1162, %v1164
  %v1167 = vsel %vm1165, %v1160, %v1162
  %v1168 = vsel %vm1165, %v1158, %v1160
  %v1169 = vsel %vm1165, %v1164, %v1158
  %v1170 = vmul.f32 %v1168, %v165
  %v1171 = vmul.f32 %v1167, %v166
  %v1172 = vmul.f32 %v1166, %v167
  %v1173 = vmul.f32 %v1169, %v168
  %v1175 = vsel %vm239, %v201, 0
  %v1178 = vsel %vm239, %v202, 0
  %1180 = vmatpush.msra.mxu0 0.0
  %1181 = vmatpush.msra.mxu0 0.0
  %1182 = vmatpush.msra.mxu0 0.0
  %1183 = vmatpush.msra.mxu0 0.0
  %1184 = vmatpush.msra.mxu0 0.0
  %1185 = vmatpush.msra.mxu0 0.0
  %1186 = vmatpush.msra.mxu0 0.0
  %1187 = vmatpush.msra.mxu0 0.0
  %1188 = vmatpush.msra.mxu0 0.0
  %1189 = vmatpush.msra.mxu0 0.0
  %1190 = vmatpush.msra.mxu0 0.0
  %1191 = vmatpush.msra.mxu0 0.0
  %1192 = vmatpush.msra.mxu0 0.0
  %1193 = vmatpush.msra.mxu0 0.0
  %1194 = vmatpush.msra.mxu0 0.0
  %1195 = vmatpush.msra.mxu0 %v1170
  %1196 = vmatmul.f32.gmra.mxu0 %v1175
  %v1197 = vpop.f32.mrf.mxu0
  %v1198 = vadd.f32 0.0, %v1197
  %1199 = vmatmul.f32.gmra.mxu0 %v1178
  %v1200 = vpop.f32.mrf.mxu0
  %v1201 = vadd.f32 0.0, %v1200
  %1202 = vdwg.mxu0
  %1203 = vmatpush.msra.mxu0 0.0
  %1204 = vmatpush.msra.mxu0 0.0
  %1205 = vmatpush.msra.mxu0 0.0
  %1206 = vmatpush.msra.mxu0 0.0
  %1207 = vmatpush.msra.mxu0 0.0
  %1208 = vmatpush.msra.mxu0 0.0
  %1209 = vmatpush.msra.mxu0 0.0
  %1210 = vmatpush.msra.mxu0 0.0
  %1211 = vmatpush.msra.mxu0 0.0
  %1212 = vmatpush.msra.mxu0 0.0
  %1213 = vmatpush.msra.mxu0 0.0
  %1214 = vmatpush.msra.mxu0 0.0
  %1215 = vmatpush.msra.mxu0 0.0
  %1216 = vmatpush.msra.mxu0 0.0
  %1217 = vmatpush.msra.mxu0 0.0
  %1218 = vmatpush.msra.mxu0 %v1171
  %1219 = vmatmul.f32.gmra.mxu0 %v1175
  %v1220 = vpop.f32.mrf.mxu0
  %v1221 = vadd.f32 0.0, %v1220
  %1222 = vmatmul.f32.gmra.mxu0 %v1178
  %v1223 = vpop.f32.mrf.mxu0
  %v1224 = vadd.f32 0.0, %v1223
  %1225 = vdwg.mxu0
  %1226 = vmatpush.msra.mxu0 0.0
  %1227 = vmatpush.msra.mxu0 0.0
  %1228 = vmatpush.msra.mxu0 0.0
  %1229 = vmatpush.msra.mxu0 0.0
  %1230 = vmatpush.msra.mxu0 0.0
  %1231 = vmatpush.msra.mxu0 0.0
  %1232 = vmatpush.msra.mxu0 0.0
  %1233 = vmatpush.msra.mxu0 0.0
  %1234 = vmatpush.msra.mxu0 0.0
  %1235 = vmatpush.msra.mxu0 0.0
  %1236 = vmatpush.msra.mxu0 0.0
  %1237 = vmatpush.msra.mxu0 0.0
  %1238 = vmatpush.msra.mxu0 0.0
  %1239 = vmatpush.msra.mxu0 0.0
  %1240 = vmatpush.msra.mxu0 0.0
  %1241 = vmatpush.msra.mxu0 %v1172
  %1242 = vmatmul.f32.gmra.mxu0 %v1175
  %v1243 = vpop.f32.mrf.mxu0
  %v1244 = vadd.f32 0.0, %v1243
  %1245 = vmatmul.f32.gmra.mxu0 %v1178
  %v1246 = vpop.f32.mrf.mxu0
  %v1247 = vadd.f32 0.0, %v1246
  %1248 = vdwg.mxu0
  %1249 = vmatpush.msra.mxu0 0.0
  %1250 = vmatpush.msra.mxu0 0.0
  %1251 = vmatpush.msra.mxu0 0.0
  %1252 = vmatpush.msra.mxu0 0.0
  %1253 = vmatpush.msra.mxu0 0.0
  %1254 = vmatpush.msra.mxu0 0.0
  %1255 = vmatpush.msra.mxu0 0.0
  %1256 = vmatpush.msra.mxu0 0.0
  %1257 = vmatpush.msra.mxu0 0.0
  %1258 = vmatpush.msra.mxu0 0.0
  %1259 = vmatpush.msra.mxu0 0.0
  %1260 = vmatpush.msra.mxu0 0.0
  %1261 = vmatpush.msra.mxu0 0.0
  %1262 = vmatpush.msra.mxu0 0.0
  %1263 = vmatpush.msra.mxu0 0.0
  %1264 = vmatpush.msra.mxu0 %v1173
  %1265 = vmatmul.f32.gmra.mxu0 %v1175
  %v1266 = vpop.f32.mrf.mxu0
  %v1267 = vadd.f32 0.0, %v1266
  %1268 = vmatmul.f32.gmra.mxu0 %v1178
  %v1269 = vpop.f32.mrf.mxu0
  %v1270 = vadd.f32 0.0, %v1269
  %1271 = vdwg.mxu0
  %v1272 = vadd.f32 %v1149, %v1198
  %v1273 = vadd.f32 %v1150, %v1221
  %v1274 = vadd.f32 %v1151, %v1244
  %v1275 = vadd.f32 %v1152, %v1267
  %v1276 = vadd.f32 %v1153, %v1201
  %v1277 = vadd.f32 %v1154, %v1224
  %v1278 = vadd.f32 %v1155, %v1247
  %v1279 = vadd.f32 %v1156, %v1270
  %v1280 = vld [vmem:[%s7] sm:$0xff]
  %v1281 = vld [vmem:[%s6] sm:$0xff]
  %v1282 = vld [vmem:[%s6 + $0x8] sm:$0xff]
  %v1283 = vld [vmem:[%s6 + $0x10] sm:$0xff]
  %v1284 = vld [vmem:[%s6 + $0x18] sm:$0xff]
  %v1285 = vld [vmem:[%s6 + $0x20] sm:$0xff]
  %v1286 = vld [vmem:[%s6 + $0x28] sm:$0xff]
  %v1287 = vld [vmem:[%s6 + $0x30] sm:$0xff]
  %v1288 = vld [vmem:[%s6 + $0x38] sm:$0xff]
  %v1289 = vld [vmem:[%s6 + $0x40] sm:$0xff]
  %1290 = vrot.lane.b32.xlu0 %v177, 17
  %v1291 = vpop.permute.xlu0 %1290
  %1292 = vrot.lane.b32.xlu0 %v178, 17
  %v1293 = vpop.permute.xlu0 %1292
  %1294 = vrot.lane.b32.xlu0 %v179, 17
  %v1295 = vpop.permute.xlu0 %1294
  %1296 = vrot.lane.b32.xlu0 %v180, 17
  %v1297 = vpop.permute.xlu0 %1296
  %v1298 = vsel %vm213, %v1295, %v1297
  %v1299 = vsel %vm213, %v1293, %v1295
  %v1300 = vsel %vm213, %v1291, %v1293
  %v1301 = vsel %vm213, %v1297, %v1291
  %v1302 = vmul.f32 %v1301, %v77
  %v1303 = vmul.f32 %v1300, %v78
  %v1304 = vmul.f32 %v1299, %v79
  %v1305 = vmul.f32 %v1298, %v80
  %1306 = vrot.lane.b32.xlu0 %v177, 16
  %v1307 = vpop.permute.xlu0 %1306
  %1308 = vrot.lane.b32.xlu0 %v178, 16
  %v1309 = vpop.permute.xlu0 %1308
  %1310 = vrot.lane.b32.xlu0 %v179, 16
  %v1311 = vpop.permute.xlu0 %1310
  %1312 = vrot.lane.b32.xlu0 %v180, 16
  %v1313 = vpop.permute.xlu0 %1312
  %v1314 = vsel %vm230, %v1311, %v1313
  %v1315 = vsel %vm230, %v1309, %v1311
  %v1316 = vsel %vm230, %v1307, %v1309
  %v1317 = vsel %vm230, %v1313, %v1307
  %v1318 = vmul.f32 %v1317, %v88
  %v1319 = vmul.f32 %v1316, %v89
  %v1320 = vmul.f32 %v1315, %v90
  %v1321 = vmul.f32 %v1314, %v91
  %v1323 = vsel %vm239, %v1282, 0
  %1325 = vmatpush.msra.mxu0 0.0
  %1326 = vmatpush.msra.mxu0 0.0
  %1327 = vmatpush.msra.mxu0 0.0
  %1328 = vmatpush.msra.mxu0 0.0
  %1329 = vmatpush.msra.mxu0 0.0
  %1330 = vmatpush.msra.mxu0 0.0
  %1331 = vmatpush.msra.mxu0 0.0
  %1332 = vmatpush.msra.mxu0 0.0
  %1333 = vmatpush.msra.mxu0 0.0
  %1334 = vmatpush.msra.mxu0 0.0
  %1335 = vmatpush.msra.mxu0 0.0
  %1336 = vmatpush.msra.mxu0 0.0
  %1337 = vmatpush.msra.mxu0 0.0
  %1338 = vmatpush.msra.mxu0 0.0
  %1339 = vmatpush.msra.mxu0 0.0
  %1340 = vmatpush.msra.mxu0 %v1318
  %1341 = vmatmul.f32.gmra.mxu0 %v1323
  %v1342 = vpop.f32.mrf.mxu0
  %v1343 = vadd.f32 0.0, %v1342
  %1344 = vdwg.mxu0
  %1345 = vmatpush.msra.mxu0 0.0
  %1346 = vmatpush.msra.mxu0 0.0
  %1347 = vmatpush.msra.mxu0 0.0
  %1348 = vmatpush.msra.mxu0 0.0
  %1349 = vmatpush.msra.mxu0 0.0
  %1350 = vmatpush.msra.mxu0 0.0
  %1351 = vmatpush.msra.mxu0 0.0
  %1352 = vmatpush.msra.mxu0 0.0
  %1353 = vmatpush.msra.mxu0 0.0
  %1354 = vmatpush.msra.mxu0 0.0
  %1355 = vmatpush.msra.mxu0 0.0
  %1356 = vmatpush.msra.mxu0 0.0
  %1357 = vmatpush.msra.mxu0 0.0
  %1358 = vmatpush.msra.mxu0 0.0
  %1359 = vmatpush.msra.mxu0 0.0
  %1360 = vmatpush.msra.mxu0 %v1319
  %1361 = vmatmul.f32.gmra.mxu0 %v1323
  %v1362 = vpop.f32.mrf.mxu0
  %v1363 = vadd.f32 0.0, %v1362
  %1364 = vdwg.mxu0
  %1365 = vmatpush.msra.mxu0 0.0
  %1366 = vmatpush.msra.mxu0 0.0
  %1367 = vmatpush.msra.mxu0 0.0
  %1368 = vmatpush.msra.mxu0 0.0
  %1369 = vmatpush.msra.mxu0 0.0
  %1370 = vmatpush.msra.mxu0 0.0
  %1371 = vmatpush.msra.mxu0 0.0
  %1372 = vmatpush.msra.mxu0 0.0
  %1373 = vmatpush.msra.mxu0 0.0
  %1374 = vmatpush.msra.mxu0 0.0
  %1375 = vmatpush.msra.mxu0 0.0
  %1376 = vmatpush.msra.mxu0 0.0
  %1377 = vmatpush.msra.mxu0 0.0
  %1378 = vmatpush.msra.mxu0 0.0
  %1379 = vmatpush.msra.mxu0 0.0
  %1380 = vmatpush.msra.mxu0 %v1320
  %1381 = vmatmul.f32.gmra.mxu0 %v1323
  %v1382 = vpop.f32.mrf.mxu0
  %v1383 = vadd.f32 0.0, %v1382
  %1384 = vdwg.mxu0
  %1385 = vmatpush.msra.mxu0 0.0
  %1386 = vmatpush.msra.mxu0 0.0
  %1387 = vmatpush.msra.mxu0 0.0
  %1388 = vmatpush.msra.mxu0 0.0
  %1389 = vmatpush.msra.mxu0 0.0
  %1390 = vmatpush.msra.mxu0 0.0
  %1391 = vmatpush.msra.mxu0 0.0
  %1392 = vmatpush.msra.mxu0 0.0
  %1393 = vmatpush.msra.mxu0 0.0
  %1394 = vmatpush.msra.mxu0 0.0
  %1395 = vmatpush.msra.mxu0 0.0
  %1396 = vmatpush.msra.mxu0 0.0
  %1397 = vmatpush.msra.mxu0 0.0
  %1398 = vmatpush.msra.mxu0 0.0
  %1399 = vmatpush.msra.mxu0 0.0
  %1400 = vmatpush.msra.mxu0 %v1321
  %1401 = vmatmul.f32.gmra.mxu0 %v1323
  %v1402 = vpop.f32.mrf.mxu0
  %v1403 = vadd.f32 0.0, %v1402
  %1404 = vdwg.mxu0
  %v1406 = vsel %vm239, %v1281, 0
  %1408 = vmatpush.msra.mxu0 0.0
  %1409 = vmatpush.msra.mxu0 0.0
  %1410 = vmatpush.msra.mxu0 0.0
  %1411 = vmatpush.msra.mxu0 0.0
  %1412 = vmatpush.msra.mxu0 0.0
  %1413 = vmatpush.msra.mxu0 0.0
  %1414 = vmatpush.msra.mxu0 0.0
  %1415 = vmatpush.msra.mxu0 0.0
  %1416 = vmatpush.msra.mxu0 0.0
  %1417 = vmatpush.msra.mxu0 0.0
  %1418 = vmatpush.msra.mxu0 0.0
  %1419 = vmatpush.msra.mxu0 0.0
  %1420 = vmatpush.msra.mxu0 0.0
  %1421 = vmatpush.msra.mxu0 0.0
  %1422 = vmatpush.msra.mxu0 0.0
  %1423 = vmatpush.msra.mxu0 %v1302
  %1424 = vmatmul.f32.gmra.mxu0 %v1406
  %v1425 = vpop.f32.mrf.mxu0
  %v1426 = vadd.f32 %v1343, %v1425
  %1427 = vdwg.mxu0
  %1428 = vmatpush.msra.mxu0 0.0
  %1429 = vmatpush.msra.mxu0 0.0
  %1430 = vmatpush.msra.mxu0 0.0
  %1431 = vmatpush.msra.mxu0 0.0
  %1432 = vmatpush.msra.mxu0 0.0
  %1433 = vmatpush.msra.mxu0 0.0
  %1434 = vmatpush.msra.mxu0 0.0
  %1435 = vmatpush.msra.mxu0 0.0
  %1436 = vmatpush.msra.mxu0 0.0
  %1437 = vmatpush.msra.mxu0 0.0
  %1438 = vmatpush.msra.mxu0 0.0
  %1439 = vmatpush.msra.mxu0 0.0
  %1440 = vmatpush.msra.mxu0 0.0
  %1441 = vmatpush.msra.mxu0 0.0
  %1442 = vmatpush.msra.mxu0 0.0
  %1443 = vmatpush.msra.mxu0 %v1303
  %1444 = vmatmul.f32.gmra.mxu0 %v1406
  %v1445 = vpop.f32.mrf.mxu0
  %v1446 = vadd.f32 %v1363, %v1445
  %1447 = vdwg.mxu0
  %1448 = vmatpush.msra.mxu0 0.0
  %1449 = vmatpush.msra.mxu0 0.0
  %1450 = vmatpush.msra.mxu0 0.0
  %1451 = vmatpush.msra.mxu0 0.0
  %1452 = vmatpush.msra.mxu0 0.0
  %1453 = vmatpush.msra.mxu0 0.0
  %1454 = vmatpush.msra.mxu0 0.0
  %1455 = vmatpush.msra.mxu0 0.0
  %1456 = vmatpush.msra.mxu0 0.0
  %1457 = vmatpush.msra.mxu0 0.0
  %1458 = vmatpush.msra.mxu0 0.0
  %1459 = vmatpush.msra.mxu0 0.0
  %1460 = vmatpush.msra.mxu0 0.0
  %1461 = vmatpush.msra.mxu0 0.0
  %1462 = vmatpush.msra.mxu0 0.0
  %1463 = vmatpush.msra.mxu0 %v1304
  %1464 = vmatmul.f32.gmra.mxu0 %v1406
  %v1465 = vpop.f32.mrf.mxu0
  %v1466 = vadd.f32 %v1383, %v1465
  %1467 = vdwg.mxu0
  %1468 = vmatpush.msra.mxu0 0.0
  %1469 = vmatpush.msra.mxu0 0.0
  %1470 = vmatpush.msra.mxu0 0.0
  %1471 = vmatpush.msra.mxu0 0.0
  %1472 = vmatpush.msra.mxu0 0.0
  %1473 = vmatpush.msra.mxu0 0.0
  %1474 = vmatpush.msra.mxu0 0.0
  %1475 = vmatpush.msra.mxu0 0.0
  %1476 = vmatpush.msra.mxu0 0.0
  %1477 = vmatpush.msra.mxu0 0.0
  %1478 = vmatpush.msra.mxu0 0.0
  %1479 = vmatpush.msra.mxu0 0.0
  %1480 = vmatpush.msra.mxu0 0.0
  %1481 = vmatpush.msra.mxu0 0.0
  %1482 = vmatpush.msra.mxu0 0.0
  %1483 = vmatpush.msra.mxu0 %v1305
  %1484 = vmatmul.f32.gmra.mxu0 %v1406
  %v1485 = vpop.f32.mrf.mxu0
  %v1486 = vadd.f32 %v1403, %v1485
  %1487 = vdwg.mxu0
  %1488 = vrot.lane.b32.xlu0 %v177, 15
  %v1489 = vpop.permute.xlu0 %1488
  %1490 = vrot.lane.b32.xlu0 %v178, 15
  %v1491 = vpop.permute.xlu0 %1490
  %1492 = vrot.lane.b32.xlu0 %v179, 15
  %v1493 = vpop.permute.xlu0 %1492
  %1494 = vrot.lane.b32.xlu0 %v180, 15
  %v1495 = vpop.permute.xlu0 %1494
  %v1496 = vsel %vm444, %v1493, %v1495
  %v1497 = vsel %vm444, %v1491, %v1493
  %v1498 = vsel %vm444, %v1489, %v1491
  %v1499 = vsel %vm444, %v1495, %v1489
  %v1500 = vmul.f32 %v1499, %v104
  %v1501 = vmul.f32 %v1498, %v105
  %v1502 = vmul.f32 %v1497, %v106
  %v1503 = vmul.f32 %v1496, %v107
  %v1505 = vsel %vm239, %v1283, 0
  %1507 = vmatpush.msra.mxu0 0.0
  %1508 = vmatpush.msra.mxu0 0.0
  %1509 = vmatpush.msra.mxu0 0.0
  %1510 = vmatpush.msra.mxu0 0.0
  %1511 = vmatpush.msra.mxu0 0.0
  %1512 = vmatpush.msra.mxu0 0.0
  %1513 = vmatpush.msra.mxu0 0.0
  %1514 = vmatpush.msra.mxu0 0.0
  %1515 = vmatpush.msra.mxu0 0.0
  %1516 = vmatpush.msra.mxu0 0.0
  %1517 = vmatpush.msra.mxu0 0.0
  %1518 = vmatpush.msra.mxu0 0.0
  %1519 = vmatpush.msra.mxu0 0.0
  %1520 = vmatpush.msra.mxu0 0.0
  %1521 = vmatpush.msra.mxu0 0.0
  %1522 = vmatpush.msra.mxu0 %v1500
  %1523 = vmatmul.f32.gmra.mxu0 %v1505
  %v1524 = vpop.f32.mrf.mxu0
  %v1525 = vadd.f32 0.0, %v1524
  %1526 = vdwg.mxu0
  %1527 = vmatpush.msra.mxu0 0.0
  %1528 = vmatpush.msra.mxu0 0.0
  %1529 = vmatpush.msra.mxu0 0.0
  %1530 = vmatpush.msra.mxu0 0.0
  %1531 = vmatpush.msra.mxu0 0.0
  %1532 = vmatpush.msra.mxu0 0.0
  %1533 = vmatpush.msra.mxu0 0.0
  %1534 = vmatpush.msra.mxu0 0.0
  %1535 = vmatpush.msra.mxu0 0.0
  %1536 = vmatpush.msra.mxu0 0.0
  %1537 = vmatpush.msra.mxu0 0.0
  %1538 = vmatpush.msra.mxu0 0.0
  %1539 = vmatpush.msra.mxu0 0.0
  %1540 = vmatpush.msra.mxu0 0.0
  %1541 = vmatpush.msra.mxu0 0.0
  %1542 = vmatpush.msra.mxu0 %v1501
  %1543 = vmatmul.f32.gmra.mxu0 %v1505
  %v1544 = vpop.f32.mrf.mxu0
  %v1545 = vadd.f32 0.0, %v1544
  %1546 = vdwg.mxu0
  %1547 = vmatpush.msra.mxu0 0.0
  %1548 = vmatpush.msra.mxu0 0.0
  %1549 = vmatpush.msra.mxu0 0.0
  %1550 = vmatpush.msra.mxu0 0.0
  %1551 = vmatpush.msra.mxu0 0.0
  %1552 = vmatpush.msra.mxu0 0.0
  %1553 = vmatpush.msra.mxu0 0.0
  %1554 = vmatpush.msra.mxu0 0.0
  %1555 = vmatpush.msra.mxu0 0.0
  %1556 = vmatpush.msra.mxu0 0.0
  %1557 = vmatpush.msra.mxu0 0.0
  %1558 = vmatpush.msra.mxu0 0.0
  %1559 = vmatpush.msra.mxu0 0.0
  %1560 = vmatpush.msra.mxu0 0.0
  %1561 = vmatpush.msra.mxu0 0.0
  %1562 = vmatpush.msra.mxu0 %v1502
  %1563 = vmatmul.f32.gmra.mxu0 %v1505
  %v1564 = vpop.f32.mrf.mxu0
  %v1565 = vadd.f32 0.0, %v1564
  %1566 = vdwg.mxu0
  %1567 = vmatpush.msra.mxu0 0.0
  %1568 = vmatpush.msra.mxu0 0.0
  %1569 = vmatpush.msra.mxu0 0.0
  %1570 = vmatpush.msra.mxu0 0.0
  %1571 = vmatpush.msra.mxu0 0.0
  %1572 = vmatpush.msra.mxu0 0.0
  %1573 = vmatpush.msra.mxu0 0.0
  %1574 = vmatpush.msra.mxu0 0.0
  %1575 = vmatpush.msra.mxu0 0.0
  %1576 = vmatpush.msra.mxu0 0.0
  %1577 = vmatpush.msra.mxu0 0.0
  %1578 = vmatpush.msra.mxu0 0.0
  %1579 = vmatpush.msra.mxu0 0.0
  %1580 = vmatpush.msra.mxu0 0.0
  %1581 = vmatpush.msra.mxu0 0.0
  %1582 = vmatpush.msra.mxu0 %v1503
  %1583 = vmatmul.f32.gmra.mxu0 %v1505
  %v1584 = vpop.f32.mrf.mxu0
  %v1585 = vadd.f32 0.0, %v1584
  %1586 = vdwg.mxu0
  %v1587 = vadd.f32 %v1426, %v1525
  %v1588 = vadd.f32 %v1446, %v1545
  %v1589 = vadd.f32 %v1466, %v1565
  %v1590 = vadd.f32 %v1486, %v1585
  %1591 = vrot.lane.b32.xlu0 %v177, 1
  %v1592 = vpop.permute.xlu0 %1591
  %1593 = vrot.lane.b32.xlu0 %v178, 1
  %v1594 = vpop.permute.xlu0 %1593
  %1595 = vrot.lane.b32.xlu0 %v179, 1
  %v1596 = vpop.permute.xlu0 %1595
  %1597 = vrot.lane.b32.xlu0 %v180, 1
  %v1598 = vpop.permute.xlu0 %1597
  %v1599 = vsel %vm567, %v1596, %v1598
  %v1600 = vsel %vm567, %v1594, %v1596
  %v1601 = vsel %vm567, %v1592, %v1594
  %v1602 = vsel %vm567, %v1598, %v1592
  %v1603 = vmul.f32 %v1602, %v115
  %v1604 = vmul.f32 %v1601, %v116
  %v1605 = vmul.f32 %v1600, %v117
  %v1606 = vmul.f32 %v1599, %v118
  %v1608 = vsel %vm239, %v1284, 0
  %1610 = vmatpush.msra.mxu0 0.0
  %1611 = vmatpush.msra.mxu0 0.0
  %1612 = vmatpush.msra.mxu0 0.0
  %1613 = vmatpush.msra.mxu0 0.0
  %1614 = vmatpush.msra.mxu0 0.0
  %1615 = vmatpush.msra.mxu0 0.0
  %1616 = vmatpush.msra.mxu0 0.0
  %1617 = vmatpush.msra.mxu0 0.0
  %1618 = vmatpush.msra.mxu0 0.0
  %1619 = vmatpush.msra.mxu0 0.0
  %1620 = vmatpush.msra.mxu0 0.0
  %1621 = vmatpush.msra.mxu0 0.0
  %1622 = vmatpush.msra.mxu0 0.0
  %1623 = vmatpush.msra.mxu0 0.0
  %1624 = vmatpush.msra.mxu0 0.0
  %1625 = vmatpush.msra.mxu0 %v1603
  %1626 = vmatmul.f32.gmra.mxu0 %v1608
  %v1627 = vpop.f32.mrf.mxu0
  %v1628 = vadd.f32 0.0, %v1627
  %1629 = vdwg.mxu0
  %1630 = vmatpush.msra.mxu0 0.0
  %1631 = vmatpush.msra.mxu0 0.0
  %1632 = vmatpush.msra.mxu0 0.0
  %1633 = vmatpush.msra.mxu0 0.0
  %1634 = vmatpush.msra.mxu0 0.0
  %1635 = vmatpush.msra.mxu0 0.0
  %1636 = vmatpush.msra.mxu0 0.0
  %1637 = vmatpush.msra.mxu0 0.0
  %1638 = vmatpush.msra.mxu0 0.0
  %1639 = vmatpush.msra.mxu0 0.0
  %1640 = vmatpush.msra.mxu0 0.0
  %1641 = vmatpush.msra.mxu0 0.0
  %1642 = vmatpush.msra.mxu0 0.0
  %1643 = vmatpush.msra.mxu0 0.0
  %1644 = vmatpush.msra.mxu0 0.0
  %1645 = vmatpush.msra.mxu0 %v1604
  %1646 = vmatmul.f32.gmra.mxu0 %v1608
  %v1647 = vpop.f32.mrf.mxu0
  %v1648 = vadd.f32 0.0, %v1647
  %1649 = vdwg.mxu0
  %1650 = vmatpush.msra.mxu0 0.0
  %1651 = vmatpush.msra.mxu0 0.0
  %1652 = vmatpush.msra.mxu0 0.0
  %1653 = vmatpush.msra.mxu0 0.0
  %1654 = vmatpush.msra.mxu0 0.0
  %1655 = vmatpush.msra.mxu0 0.0
  %1656 = vmatpush.msra.mxu0 0.0
  %1657 = vmatpush.msra.mxu0 0.0
  %1658 = vmatpush.msra.mxu0 0.0
  %1659 = vmatpush.msra.mxu0 0.0
  %1660 = vmatpush.msra.mxu0 0.0
  %1661 = vmatpush.msra.mxu0 0.0
  %1662 = vmatpush.msra.mxu0 0.0
  %1663 = vmatpush.msra.mxu0 0.0
  %1664 = vmatpush.msra.mxu0 0.0
  %1665 = vmatpush.msra.mxu0 %v1605
  %1666 = vmatmul.f32.gmra.mxu0 %v1608
  %v1667 = vpop.f32.mrf.mxu0
  %v1668 = vadd.f32 0.0, %v1667
  %1669 = vdwg.mxu0
  %1670 = vmatpush.msra.mxu0 0.0
  %1671 = vmatpush.msra.mxu0 0.0
  %1672 = vmatpush.msra.mxu0 0.0
  %1673 = vmatpush.msra.mxu0 0.0
  %1674 = vmatpush.msra.mxu0 0.0
  %1675 = vmatpush.msra.mxu0 0.0
  %1676 = vmatpush.msra.mxu0 0.0
  %1677 = vmatpush.msra.mxu0 0.0
  %1678 = vmatpush.msra.mxu0 0.0
  %1679 = vmatpush.msra.mxu0 0.0
  %1680 = vmatpush.msra.mxu0 0.0
  %1681 = vmatpush.msra.mxu0 0.0
  %1682 = vmatpush.msra.mxu0 0.0
  %1683 = vmatpush.msra.mxu0 0.0
  %1684 = vmatpush.msra.mxu0 0.0
  %1685 = vmatpush.msra.mxu0 %v1606
  %1686 = vmatmul.f32.gmra.mxu0 %v1608
  %v1687 = vpop.f32.mrf.mxu0
  %v1688 = vadd.f32 0.0, %v1687
  %1689 = vdwg.mxu0
  %v1690 = vadd.f32 %v1587, %v1628
  %v1691 = vadd.f32 %v1588, %v1648
  %v1692 = vadd.f32 %v1589, %v1668
  %v1693 = vadd.f32 %v1590, %v1688
  %v1695 = vsel %vm239, %v1285, 0
  %1697 = vmatpush.msra.mxu0 0.0
  %1698 = vmatpush.msra.mxu0 0.0
  %1699 = vmatpush.msra.mxu0 0.0
  %1700 = vmatpush.msra.mxu0 0.0
  %1701 = vmatpush.msra.mxu0 0.0
  %1702 = vmatpush.msra.mxu0 0.0
  %1703 = vmatpush.msra.mxu0 0.0
  %1704 = vmatpush.msra.mxu0 0.0
  %1705 = vmatpush.msra.mxu0 0.0
  %1706 = vmatpush.msra.mxu0 0.0
  %1707 = vmatpush.msra.mxu0 0.0
  %1708 = vmatpush.msra.mxu0 0.0
  %1709 = vmatpush.msra.mxu0 0.0
  %1710 = vmatpush.msra.mxu0 0.0
  %1711 = vmatpush.msra.mxu0 0.0
  %1712 = vmatpush.msra.mxu0 %v177
  %1713 = vmatmul.f32.gmra.mxu0 %v1695
  %v1714 = vpop.f32.mrf.mxu0
  %v1715 = vadd.f32 0.0, %v1714
  %1716 = vdwg.mxu0
  %1717 = vmatpush.msra.mxu0 0.0
  %1718 = vmatpush.msra.mxu0 0.0
  %1719 = vmatpush.msra.mxu0 0.0
  %1720 = vmatpush.msra.mxu0 0.0
  %1721 = vmatpush.msra.mxu0 0.0
  %1722 = vmatpush.msra.mxu0 0.0
  %1723 = vmatpush.msra.mxu0 0.0
  %1724 = vmatpush.msra.mxu0 0.0
  %1725 = vmatpush.msra.mxu0 0.0
  %1726 = vmatpush.msra.mxu0 0.0
  %1727 = vmatpush.msra.mxu0 0.0
  %1728 = vmatpush.msra.mxu0 0.0
  %1729 = vmatpush.msra.mxu0 0.0
  %1730 = vmatpush.msra.mxu0 0.0
  %1731 = vmatpush.msra.mxu0 0.0
  %1732 = vmatpush.msra.mxu0 %v178
  %1733 = vmatmul.f32.gmra.mxu0 %v1695
  %v1734 = vpop.f32.mrf.mxu0
  %v1735 = vadd.f32 0.0, %v1734
  %1736 = vdwg.mxu0
  %1737 = vmatpush.msra.mxu0 0.0
  %1738 = vmatpush.msra.mxu0 0.0
  %1739 = vmatpush.msra.mxu0 0.0
  %1740 = vmatpush.msra.mxu0 0.0
  %1741 = vmatpush.msra.mxu0 0.0
  %1742 = vmatpush.msra.mxu0 0.0
  %1743 = vmatpush.msra.mxu0 0.0
  %1744 = vmatpush.msra.mxu0 0.0
  %1745 = vmatpush.msra.mxu0 0.0
  %1746 = vmatpush.msra.mxu0 0.0
  %1747 = vmatpush.msra.mxu0 0.0
  %1748 = vmatpush.msra.mxu0 0.0
  %1749 = vmatpush.msra.mxu0 0.0
  %1750 = vmatpush.msra.mxu0 0.0
  %1751 = vmatpush.msra.mxu0 0.0
  %1752 = vmatpush.msra.mxu0 %v179
  %1753 = vmatmul.f32.gmra.mxu0 %v1695
  %v1754 = vpop.f32.mrf.mxu0
  %v1755 = vadd.f32 0.0, %v1754
  %1756 = vdwg.mxu0
  %1757 = vmatpush.msra.mxu0 0.0
  %1758 = vmatpush.msra.mxu0 0.0
  %1759 = vmatpush.msra.mxu0 0.0
  %1760 = vmatpush.msra.mxu0 0.0
  %1761 = vmatpush.msra.mxu0 0.0
  %1762 = vmatpush.msra.mxu0 0.0
  %1763 = vmatpush.msra.mxu0 0.0
  %1764 = vmatpush.msra.mxu0 0.0
  %1765 = vmatpush.msra.mxu0 0.0
  %1766 = vmatpush.msra.mxu0 0.0
  %1767 = vmatpush.msra.mxu0 0.0
  %1768 = vmatpush.msra.mxu0 0.0
  %1769 = vmatpush.msra.mxu0 0.0
  %1770 = vmatpush.msra.mxu0 0.0
  %1771 = vmatpush.msra.mxu0 0.0
  %1772 = vmatpush.msra.mxu0 %v180
  %1773 = vmatmul.f32.gmra.mxu0 %v1695
  %v1774 = vpop.f32.mrf.mxu0
  %v1775 = vadd.f32 0.0, %v1774
  %1776 = vdwg.mxu0
  %v1777 = vadd.f32 %v1690, %v1715
  %v1778 = vadd.f32 %v1691, %v1735
  %v1779 = vadd.f32 %v1692, %v1755
  %v1780 = vadd.f32 %v1693, %v1775
  %1781 = vrot.lane.b32.xlu0 %v177, 127
  %v1782 = vpop.permute.xlu0 %1781
  %1783 = vrot.lane.b32.xlu0 %v178, 127
  %v1784 = vpop.permute.xlu0 %1783
  %1785 = vrot.lane.b32.xlu0 %v179, 127
  %v1786 = vpop.permute.xlu0 %1785
  %1787 = vrot.lane.b32.xlu0 %v180, 127
  %v1788 = vpop.permute.xlu0 %1787
  %v1789 = vsel %vm796, %v1786, %v1788
  %v1790 = vsel %vm796, %v1784, %v1786
  %v1791 = vsel %vm796, %v1782, %v1784
  %v1792 = vsel %vm796, %v1788, %v1782
  %v1793 = vmul.f32 %v1791, %v126
  %v1794 = vmul.f32 %v1790, %v127
  %v1795 = vmul.f32 %v1789, %v128
  %v1796 = vmul.f32 %v1792, %v129
  %v1798 = vsel %vm239, %v1286, 0
  %1800 = vmatpush.msra.mxu0 0.0
  %1801 = vmatpush.msra.mxu0 0.0
  %1802 = vmatpush.msra.mxu0 0.0
  %1803 = vmatpush.msra.mxu0 0.0
  %1804 = vmatpush.msra.mxu0 0.0
  %1805 = vmatpush.msra.mxu0 0.0
  %1806 = vmatpush.msra.mxu0 0.0
  %1807 = vmatpush.msra.mxu0 0.0
  %1808 = vmatpush.msra.mxu0 0.0
  %1809 = vmatpush.msra.mxu0 0.0
  %1810 = vmatpush.msra.mxu0 0.0
  %1811 = vmatpush.msra.mxu0 0.0
  %1812 = vmatpush.msra.mxu0 0.0
  %1813 = vmatpush.msra.mxu0 0.0
  %1814 = vmatpush.msra.mxu0 0.0
  %1815 = vmatpush.msra.mxu0 %v1793
  %1816 = vmatmul.f32.gmra.mxu0 %v1798
  %v1817 = vpop.f32.mrf.mxu0
  %v1818 = vadd.f32 0.0, %v1817
  %1819 = vdwg.mxu0
  %1820 = vmatpush.msra.mxu0 0.0
  %1821 = vmatpush.msra.mxu0 0.0
  %1822 = vmatpush.msra.mxu0 0.0
  %1823 = vmatpush.msra.mxu0 0.0
  %1824 = vmatpush.msra.mxu0 0.0
  %1825 = vmatpush.msra.mxu0 0.0
  %1826 = vmatpush.msra.mxu0 0.0
  %1827 = vmatpush.msra.mxu0 0.0
  %1828 = vmatpush.msra.mxu0 0.0
  %1829 = vmatpush.msra.mxu0 0.0
  %1830 = vmatpush.msra.mxu0 0.0
  %1831 = vmatpush.msra.mxu0 0.0
  %1832 = vmatpush.msra.mxu0 0.0
  %1833 = vmatpush.msra.mxu0 0.0
  %1834 = vmatpush.msra.mxu0 0.0
  %1835 = vmatpush.msra.mxu0 %v1794
  %1836 = vmatmul.f32.gmra.mxu0 %v1798
  %v1837 = vpop.f32.mrf.mxu0
  %v1838 = vadd.f32 0.0, %v1837
  %1839 = vdwg.mxu0
  %1840 = vmatpush.msra.mxu0 0.0
  %1841 = vmatpush.msra.mxu0 0.0
  %1842 = vmatpush.msra.mxu0 0.0
  %1843 = vmatpush.msra.mxu0 0.0
  %1844 = vmatpush.msra.mxu0 0.0
  %1845 = vmatpush.msra.mxu0 0.0
  %1846 = vmatpush.msra.mxu0 0.0
  %1847 = vmatpush.msra.mxu0 0.0
  %1848 = vmatpush.msra.mxu0 0.0
  %1849 = vmatpush.msra.mxu0 0.0
  %1850 = vmatpush.msra.mxu0 0.0
  %1851 = vmatpush.msra.mxu0 0.0
  %1852 = vmatpush.msra.mxu0 0.0
  %1853 = vmatpush.msra.mxu0 0.0
  %1854 = vmatpush.msra.mxu0 0.0
  %1855 = vmatpush.msra.mxu0 %v1795
  %1856 = vmatmul.f32.gmra.mxu0 %v1798
  %v1857 = vpop.f32.mrf.mxu0
  %v1858 = vadd.f32 0.0, %v1857
  %1859 = vdwg.mxu0
  %1860 = vmatpush.msra.mxu0 0.0
  %1861 = vmatpush.msra.mxu0 0.0
  %1862 = vmatpush.msra.mxu0 0.0
  %1863 = vmatpush.msra.mxu0 0.0
  %1864 = vmatpush.msra.mxu0 0.0
  %1865 = vmatpush.msra.mxu0 0.0
  %1866 = vmatpush.msra.mxu0 0.0
  %1867 = vmatpush.msra.mxu0 0.0
  %1868 = vmatpush.msra.mxu0 0.0
  %1869 = vmatpush.msra.mxu0 0.0
  %1870 = vmatpush.msra.mxu0 0.0
  %1871 = vmatpush.msra.mxu0 0.0
  %1872 = vmatpush.msra.mxu0 0.0
  %1873 = vmatpush.msra.mxu0 0.0
  %1874 = vmatpush.msra.mxu0 0.0
  %1875 = vmatpush.msra.mxu0 %v1796
  %1876 = vmatmul.f32.gmra.mxu0 %v1798
  %v1877 = vpop.f32.mrf.mxu0
  %v1878 = vadd.f32 0.0, %v1877
  %1879 = vdwg.mxu0
  %v1880 = vadd.f32 %v1777, %v1818
  %v1881 = vadd.f32 %v1778, %v1838
  %v1882 = vadd.f32 %v1779, %v1858
  %v1883 = vadd.f32 %v1780, %v1878
  %1884 = vrot.lane.b32.xlu0 %v177, 113
  %v1885 = vpop.permute.xlu0 %1884
  %1886 = vrot.lane.b32.xlu0 %v178, 113
  %v1887 = vpop.permute.xlu0 %1886
  %1888 = vrot.lane.b32.xlu0 %v179, 113
  %v1889 = vpop.permute.xlu0 %1888
  %1890 = vrot.lane.b32.xlu0 %v180, 113
  %v1891 = vpop.permute.xlu0 %1890
  %v1892 = vsel %vm919, %v1889, %v1891
  %v1893 = vsel %vm919, %v1887, %v1889
  %v1894 = vsel %vm919, %v1885, %v1887
  %v1895 = vsel %vm919, %v1891, %v1885
  %v1896 = vmul.f32 %v1894, %v142
  %v1897 = vmul.f32 %v1893, %v143
  %v1898 = vmul.f32 %v1892, %v144
  %v1899 = vmul.f32 %v1895, %v145
  %v1901 = vsel %vm239, %v1287, 0
  %1903 = vmatpush.msra.mxu0 0.0
  %1904 = vmatpush.msra.mxu0 0.0
  %1905 = vmatpush.msra.mxu0 0.0
  %1906 = vmatpush.msra.mxu0 0.0
  %1907 = vmatpush.msra.mxu0 0.0
  %1908 = vmatpush.msra.mxu0 0.0
  %1909 = vmatpush.msra.mxu0 0.0
  %1910 = vmatpush.msra.mxu0 0.0
  %1911 = vmatpush.msra.mxu0 0.0
  %1912 = vmatpush.msra.mxu0 0.0
  %1913 = vmatpush.msra.mxu0 0.0
  %1914 = vmatpush.msra.mxu0 0.0
  %1915 = vmatpush.msra.mxu0 0.0
  %1916 = vmatpush.msra.mxu0 0.0
  %1917 = vmatpush.msra.mxu0 0.0
  %1918 = vmatpush.msra.mxu0 %v1896
  %1919 = vmatmul.f32.gmra.mxu0 %v1901
  %v1920 = vpop.f32.mrf.mxu0
  %v1921 = vadd.f32 0.0, %v1920
  %1922 = vdwg.mxu0
  %1923 = vmatpush.msra.mxu0 0.0
  %1924 = vmatpush.msra.mxu0 0.0
  %1925 = vmatpush.msra.mxu0 0.0
  %1926 = vmatpush.msra.mxu0 0.0
  %1927 = vmatpush.msra.mxu0 0.0
  %1928 = vmatpush.msra.mxu0 0.0
  %1929 = vmatpush.msra.mxu0 0.0
  %1930 = vmatpush.msra.mxu0 0.0
  %1931 = vmatpush.msra.mxu0 0.0
  %1932 = vmatpush.msra.mxu0 0.0
  %1933 = vmatpush.msra.mxu0 0.0
  %1934 = vmatpush.msra.mxu0 0.0
  %1935 = vmatpush.msra.mxu0 0.0
  %1936 = vmatpush.msra.mxu0 0.0
  %1937 = vmatpush.msra.mxu0 0.0
  %1938 = vmatpush.msra.mxu0 %v1897
  %1939 = vmatmul.f32.gmra.mxu0 %v1901
  %v1940 = vpop.f32.mrf.mxu0
  %v1941 = vadd.f32 0.0, %v1940
  %1942 = vdwg.mxu0
  %1943 = vmatpush.msra.mxu0 0.0
  %1944 = vmatpush.msra.mxu0 0.0
  %1945 = vmatpush.msra.mxu0 0.0
  %1946 = vmatpush.msra.mxu0 0.0
  %1947 = vmatpush.msra.mxu0 0.0
  %1948 = vmatpush.msra.mxu0 0.0
  %1949 = vmatpush.msra.mxu0 0.0
  %1950 = vmatpush.msra.mxu0 0.0
  %1951 = vmatpush.msra.mxu0 0.0
  %1952 = vmatpush.msra.mxu0 0.0
  %1953 = vmatpush.msra.mxu0 0.0
  %1954 = vmatpush.msra.mxu0 0.0
  %1955 = vmatpush.msra.mxu0 0.0
  %1956 = vmatpush.msra.mxu0 0.0
  %1957 = vmatpush.msra.mxu0 0.0
  %1958 = vmatpush.msra.mxu0 %v1898
  %1959 = vmatmul.f32.gmra.mxu0 %v1901
  %v1960 = vpop.f32.mrf.mxu0
  %v1961 = vadd.f32 0.0, %v1960
  %1962 = vdwg.mxu0
  %1963 = vmatpush.msra.mxu0 0.0
  %1964 = vmatpush.msra.mxu0 0.0
  %1965 = vmatpush.msra.mxu0 0.0
  %1966 = vmatpush.msra.mxu0 0.0
  %1967 = vmatpush.msra.mxu0 0.0
  %1968 = vmatpush.msra.mxu0 0.0
  %1969 = vmatpush.msra.mxu0 0.0
  %1970 = vmatpush.msra.mxu0 0.0
  %1971 = vmatpush.msra.mxu0 0.0
  %1972 = vmatpush.msra.mxu0 0.0
  %1973 = vmatpush.msra.mxu0 0.0
  %1974 = vmatpush.msra.mxu0 0.0
  %1975 = vmatpush.msra.mxu0 0.0
  %1976 = vmatpush.msra.mxu0 0.0
  %1977 = vmatpush.msra.mxu0 0.0
  %1978 = vmatpush.msra.mxu0 %v1899
  %1979 = vmatmul.f32.gmra.mxu0 %v1901
  %v1980 = vpop.f32.mrf.mxu0
  %v1981 = vadd.f32 0.0, %v1980
  %1982 = vdwg.mxu0
  %v1983 = vadd.f32 %v1880, %v1921
  %v1984 = vadd.f32 %v1881, %v1941
  %v1985 = vadd.f32 %v1882, %v1961
  %v1986 = vadd.f32 %v1883, %v1981
  %1987 = vrot.lane.b32.xlu0 %v177, 112
  %v1988 = vpop.permute.xlu0 %1987
  %1989 = vrot.lane.b32.xlu0 %v178, 112
  %v1990 = vpop.permute.xlu0 %1989
  %1991 = vrot.lane.b32.xlu0 %v179, 112
  %v1992 = vpop.permute.xlu0 %1991
  %1993 = vrot.lane.b32.xlu0 %v180, 112
  %v1994 = vpop.permute.xlu0 %1993
  %v1995 = vsel %vm1042, %v1992, %v1994
  %v1996 = vsel %vm1042, %v1990, %v1992
  %v1997 = vsel %vm1042, %v1988, %v1990
  %v1998 = vsel %vm1042, %v1994, %v1988
  %v1999 = vmul.f32 %v1997, %v153
  %v2000 = vmul.f32 %v1996, %v154
  %v2001 = vmul.f32 %v1995, %v155
  %v2002 = vmul.f32 %v1998, %v156
  %v2004 = vsel %vm239, %v1288, 0
  %2006 = vmatpush.msra.mxu0 0.0
  %2007 = vmatpush.msra.mxu0 0.0
  %2008 = vmatpush.msra.mxu0 0.0
  %2009 = vmatpush.msra.mxu0 0.0
  %2010 = vmatpush.msra.mxu0 0.0
  %2011 = vmatpush.msra.mxu0 0.0
  %2012 = vmatpush.msra.mxu0 0.0
  %2013 = vmatpush.msra.mxu0 0.0
  %2014 = vmatpush.msra.mxu0 0.0
  %2015 = vmatpush.msra.mxu0 0.0
  %2016 = vmatpush.msra.mxu0 0.0
  %2017 = vmatpush.msra.mxu0 0.0
  %2018 = vmatpush.msra.mxu0 0.0
  %2019 = vmatpush.msra.mxu0 0.0
  %2020 = vmatpush.msra.mxu0 0.0
  %2021 = vmatpush.msra.mxu0 %v1999
  %2022 = vmatmul.f32.gmra.mxu0 %v2004
  %v2023 = vpop.f32.mrf.mxu0
  %v2024 = vadd.f32 0.0, %v2023
  %2025 = vdwg.mxu0
  %2026 = vmatpush.msra.mxu0 0.0
  %2027 = vmatpush.msra.mxu0 0.0
  %2028 = vmatpush.msra.mxu0 0.0
  %2029 = vmatpush.msra.mxu0 0.0
  %2030 = vmatpush.msra.mxu0 0.0
  %2031 = vmatpush.msra.mxu0 0.0
  %2032 = vmatpush.msra.mxu0 0.0
  %2033 = vmatpush.msra.mxu0 0.0
  %2034 = vmatpush.msra.mxu0 0.0
  %2035 = vmatpush.msra.mxu0 0.0
  %2036 = vmatpush.msra.mxu0 0.0
  %2037 = vmatpush.msra.mxu0 0.0
  %2038 = vmatpush.msra.mxu0 0.0
  %2039 = vmatpush.msra.mxu0 0.0
  %2040 = vmatpush.msra.mxu0 0.0
  %2041 = vmatpush.msra.mxu0 %v2000
  %2042 = vmatmul.f32.gmra.mxu0 %v2004
  %v2043 = vpop.f32.mrf.mxu0
  %v2044 = vadd.f32 0.0, %v2043
  %2045 = vdwg.mxu0
  %2046 = vmatpush.msra.mxu0 0.0
  %2047 = vmatpush.msra.mxu0 0.0
  %2048 = vmatpush.msra.mxu0 0.0
  %2049 = vmatpush.msra.mxu0 0.0
  %2050 = vmatpush.msra.mxu0 0.0
  %2051 = vmatpush.msra.mxu0 0.0
  %2052 = vmatpush.msra.mxu0 0.0
  %2053 = vmatpush.msra.mxu0 0.0
  %2054 = vmatpush.msra.mxu0 0.0
  %2055 = vmatpush.msra.mxu0 0.0
  %2056 = vmatpush.msra.mxu0 0.0
  %2057 = vmatpush.msra.mxu0 0.0
  %2058 = vmatpush.msra.mxu0 0.0
  %2059 = vmatpush.msra.mxu0 0.0
  %2060 = vmatpush.msra.mxu0 0.0
  %2061 = vmatpush.msra.mxu0 %v2001
  %2062 = vmatmul.f32.gmra.mxu0 %v2004
  %v2063 = vpop.f32.mrf.mxu0
  %v2064 = vadd.f32 0.0, %v2063
  %2065 = vdwg.mxu0
  %2066 = vmatpush.msra.mxu0 0.0
  %2067 = vmatpush.msra.mxu0 0.0
  %2068 = vmatpush.msra.mxu0 0.0
  %2069 = vmatpush.msra.mxu0 0.0
  %2070 = vmatpush.msra.mxu0 0.0
  %2071 = vmatpush.msra.mxu0 0.0
  %2072 = vmatpush.msra.mxu0 0.0
  %2073 = vmatpush.msra.mxu0 0.0
  %2074 = vmatpush.msra.mxu0 0.0
  %2075 = vmatpush.msra.mxu0 0.0
  %2076 = vmatpush.msra.mxu0 0.0
  %2077 = vmatpush.msra.mxu0 0.0
  %2078 = vmatpush.msra.mxu0 0.0
  %2079 = vmatpush.msra.mxu0 0.0
  %2080 = vmatpush.msra.mxu0 0.0
  %2081 = vmatpush.msra.mxu0 %v2002
  %2082 = vmatmul.f32.gmra.mxu0 %v2004
  %v2083 = vpop.f32.mrf.mxu0
  %v2084 = vadd.f32 0.0, %v2083
  %2085 = vdwg.mxu0
  %v2086 = vadd.f32 %v1983, %v2024
  %v2087 = vadd.f32 %v1984, %v2044
  %v2088 = vadd.f32 %v1985, %v2064
  %v2089 = vadd.f32 %v1986, %v2084
  %2090 = vrot.lane.b32.xlu0 %v177, 111
  %v2091 = vpop.permute.xlu0 %2090
  %2092 = vrot.lane.b32.xlu0 %v178, 111
  %v2093 = vpop.permute.xlu0 %2092
  %2094 = vrot.lane.b32.xlu0 %v179, 111
  %v2095 = vpop.permute.xlu0 %2094
  %2096 = vrot.lane.b32.xlu0 %v180, 111
  %v2097 = vpop.permute.xlu0 %2096
  %v2098 = vsel %vm1165, %v2095, %v2097
  %v2099 = vsel %vm1165, %v2093, %v2095
  %v2100 = vsel %vm1165, %v2091, %v2093
  %v2101 = vsel %vm1165, %v2097, %v2091
  %v2102 = vmul.f32 %v2100, %v165
  %v2103 = vmul.f32 %v2099, %v166
  %v2104 = vmul.f32 %v2098, %v167
  %v2105 = vmul.f32 %v2101, %v168
  %v2107 = vsel %vm239, %v1289, 0
  %2109 = vmatpush.msra.mxu0 0.0
  %2110 = vmatpush.msra.mxu0 0.0
  %2111 = vmatpush.msra.mxu0 0.0
  %2112 = vmatpush.msra.mxu0 0.0
  %2113 = vmatpush.msra.mxu0 0.0
  %2114 = vmatpush.msra.mxu0 0.0
  %2115 = vmatpush.msra.mxu0 0.0
  %2116 = vmatpush.msra.mxu0 0.0
  %2117 = vmatpush.msra.mxu0 0.0
  %2118 = vmatpush.msra.mxu0 0.0
  %2119 = vmatpush.msra.mxu0 0.0
  %2120 = vmatpush.msra.mxu0 0.0
  %2121 = vmatpush.msra.mxu0 0.0
  %2122 = vmatpush.msra.mxu0 0.0
  %2123 = vmatpush.msra.mxu0 0.0
  %2124 = vmatpush.msra.mxu0 %v2102
  %2125 = vmatmul.f32.gmra.mxu0 %v2107
  %v2126 = vpop.f32.mrf.mxu0
  %v2127 = vadd.f32 0.0, %v2126
  %2128 = vdwg.mxu0
  %2129 = vmatpush.msra.mxu0 0.0
  %2130 = vmatpush.msra.mxu0 0.0
  %2131 = vmatpush.msra.mxu0 0.0
  %2132 = vmatpush.msra.mxu0 0.0
  %2133 = vmatpush.msra.mxu0 0.0
  %2134 = vmatpush.msra.mxu0 0.0
  %2135 = vmatpush.msra.mxu0 0.0
  %2136 = vmatpush.msra.mxu0 0.0
  %2137 = vmatpush.msra.mxu0 0.0
  %2138 = vmatpush.msra.mxu0 0.0
  %2139 = vmatpush.msra.mxu0 0.0
  %2140 = vmatpush.msra.mxu0 0.0
  %2141 = vmatpush.msra.mxu0 0.0
  %2142 = vmatpush.msra.mxu0 0.0
  %2143 = vmatpush.msra.mxu0 0.0
  %2144 = vmatpush.msra.mxu0 %v2103
  %2145 = vmatmul.f32.gmra.mxu0 %v2107
  %v2146 = vpop.f32.mrf.mxu0
  %v2147 = vadd.f32 0.0, %v2146
  %2148 = vdwg.mxu0
  %2149 = vmatpush.msra.mxu0 0.0
  %2150 = vmatpush.msra.mxu0 0.0
  %2151 = vmatpush.msra.mxu0 0.0
  %2152 = vmatpush.msra.mxu0 0.0
  %2153 = vmatpush.msra.mxu0 0.0
  %2154 = vmatpush.msra.mxu0 0.0
  %2155 = vmatpush.msra.mxu0 0.0
  %2156 = vmatpush.msra.mxu0 0.0
  %2157 = vmatpush.msra.mxu0 0.0
  %2158 = vmatpush.msra.mxu0 0.0
  %2159 = vmatpush.msra.mxu0 0.0
  %2160 = vmatpush.msra.mxu0 0.0
  %2161 = vmatpush.msra.mxu0 0.0
  %2162 = vmatpush.msra.mxu0 0.0
  %2163 = vmatpush.msra.mxu0 0.0
  %2164 = vmatpush.msra.mxu0 %v2104
  %2165 = vmatmul.f32.gmra.mxu0 %v2107
  %v2166 = vpop.f32.mrf.mxu0
  %v2167 = vadd.f32 0.0, %v2166
  %2168 = vdwg.mxu0
  %2169 = vmatpush.msra.mxu0 0.0
  %2170 = vmatpush.msra.mxu0 0.0
  %2171 = vmatpush.msra.mxu0 0.0
  %2172 = vmatpush.msra.mxu0 0.0
  %2173 = vmatpush.msra.mxu0 0.0
  %2174 = vmatpush.msra.mxu0 0.0
  %2175 = vmatpush.msra.mxu0 0.0
  %2176 = vmatpush.msra.mxu0 0.0
  %2177 = vmatpush.msra.mxu0 0.0
  %2178 = vmatpush.msra.mxu0 0.0
  %2179 = vmatpush.msra.mxu0 0.0
  %2180 = vmatpush.msra.mxu0 0.0
  %2181 = vmatpush.msra.mxu0 0.0
  %2182 = vmatpush.msra.mxu0 0.0
  %2183 = vmatpush.msra.mxu0 0.0
  %2184 = vmatpush.msra.mxu0 %v2105
  %2185 = vmatmul.f32.gmra.mxu0 %v2107
  %v2186 = vpop.f32.mrf.mxu0
  %v2187 = vadd.f32 0.0, %v2186
  %2188 = vdwg.mxu0
  %v2189 = vadd.f32 %v2086, %v2127
  %v2190 = vadd.f32 %v2087, %v2147
  %v2191 = vadd.f32 %v2088, %v2167
  %v2192 = vadd.f32 %v2089, %v2187
  %2194 = vset.pattern.permute.xlu0 0
  %2195 = vperm.xlu0 %2194, %v1280
  %v2196 = vpop.permute.xlu0 %2195
  %v2198 = vadd.f32 %v2189, %v2196
  %v2199 = vadd.f32 %v2190, %v2196
  %v2200 = vadd.f32 %v2191, %v2196
  %v2201 = vadd.f32 %v2192, %v2196
  %v2202 = vadd.f32 %v1272, %v2198
  %v2203 = vadd.f32 %v1273, %v2199
  %v2204 = vadd.f32 %v1274, %v2200
  %v2205 = vadd.f32 %v1275, %v2201
  %v2206 = vmax.f32 %v2202, 0.0
  %v2207 = vmax.f32 %v2203, 0.0
  %v2208 = vmax.f32 %v2204, 0.0
  %v2209 = vmax.f32 %v2205, 0.0
  %v2210 = vadd.f32 %v2206, %v2207
  %v2211 = vadd.f32 %v2210, %v2208
  %v2212 = vadd.f32 %v2211, %v2209
  %2213 = vadd.xlane.f32.xlu0 %v2212
  %v2214 = vpop.xlane.xlu0 %2213
  %v2215 = vmul.f32 %v2206, %v2206
  %v2216 = vmul.f32 %v2207, %v2207
  %v2217 = vmul.f32 %v2208, %v2208
  %v2218 = vmul.f32 %v2209, %v2209
  %v2219 = vadd.f32 %v2215, %v2216
  %v2220 = vadd.f32 %v2219, %v2217
  %v2221 = vadd.f32 %v2220, %v2218
  %2222 = vadd.xlane.f32.xlu0 %v2221
  %v2223 = vpop.xlane.xlu0 %2222
  %v2224 = vmul.f32 %v2214, 0.001953125
  %v2225 = vmul.f32 %v2223, 0.001953125
  %v2226 = vmul.f32 %v2224, %v2224
  %v2227 = vsub.f32 %v2225, %v2226
  %v2228 = vsub.f32 %v2206, %v2224
  %v2229 = vsub.f32 %v2207, %v2224
  %v2230 = vsub.f32 %v2208, %v2224
  %v2231 = vsub.f32 %v2209, %v2224
  %v2232 = vadd.f32 %v2227, 1e-05
  %v2233 = vrsqrt.pop %v2232
  %v2234 = vmul.f32 %v2233, %v2232
  %v2235 = vmul.f32 %v2234, %v2233
  %v2236 = vmul.f32 0.5, %v2235
  %v2237 = vsub.f32 1.5, %v2236
  %v2238 = vmul.f32 %v2233, %v2237
  %vm2239 = vweird.f32 %v2232
  %vm2240 = vweird.f32 %v2233
  %vm2241 = vmor %vm2239, %vm2240
  %v2242 = vsel %vm2241, %v2233, %v2238
  %v2243 = vmul.f32 %v2228, %v2242
  %v2244 = vmul.f32 %v2229, %v2242
  %v2245 = vmul.f32 %v2230, %v2242
  %v2246 = vmul.f32 %v2231, %v2242
  %v2247 = vld [vmem:[%s11] sm:$0xff]
  %v2248 = vld [vmem:[%s10] sm:$0xff]
  %v2249 = vld [vmem:[%s10 + $0x8] sm:$0xff]
  %v2250 = vld [vmem:[%s10 + $0x10] sm:$0xff]
  %v2251 = vld [vmem:[%s10 + $0x18] sm:$0xff]
  %v2252 = vld [vmem:[%s10 + $0x20] sm:$0xff]
  %v2253 = vld [vmem:[%s10 + $0x28] sm:$0xff]
  %v2254 = vld [vmem:[%s10 + $0x30] sm:$0xff]
  %v2255 = vld [vmem:[%s10 + $0x38] sm:$0xff]
  %v2256 = vld [vmem:[%s10 + $0x40] sm:$0xff]
  %2257 = vrot.lane.b32.xlu0 %v2243, 17
  %v2258 = vpop.permute.xlu0 %2257
  %2259 = vrot.lane.b32.xlu0 %v2244, 17
  %v2260 = vpop.permute.xlu0 %2259
  %2261 = vrot.lane.b32.xlu0 %v2245, 17
  %v2262 = vpop.permute.xlu0 %2261
  %2263 = vrot.lane.b32.xlu0 %v2246, 17
  %v2264 = vpop.permute.xlu0 %2263
  %v2265 = vsel %vm213, %v2262, %v2264
  %v2266 = vsel %vm213, %v2260, %v2262
  %v2267 = vsel %vm213, %v2258, %v2260
  %v2268 = vsel %vm213, %v2264, %v2258
  %v2269 = vmul.f32 %v2268, %v77
  %v2270 = vmul.f32 %v2267, %v78
  %v2271 = vmul.f32 %v2266, %v79
  %v2272 = vmul.f32 %v2265, %v80
  %2273 = vrot.lane.b32.xlu0 %v2243, 16
  %v2274 = vpop.permute.xlu0 %2273
  %2275 = vrot.lane.b32.xlu0 %v2244, 16
  %v2276 = vpop.permute.xlu0 %2275
  %2277 = vrot.lane.b32.xlu0 %v2245, 16
  %v2278 = vpop.permute.xlu0 %2277
  %2279 = vrot.lane.b32.xlu0 %v2246, 16
  %v2280 = vpop.permute.xlu0 %2279
  %v2281 = vsel %vm230, %v2278, %v2280
  %v2282 = vsel %vm230, %v2276, %v2278
  %v2283 = vsel %vm230, %v2274, %v2276
  %v2284 = vsel %vm230, %v2280, %v2274
  %v2285 = vmul.f32 %v2284, %v88
  %v2286 = vmul.f32 %v2283, %v89
  %v2287 = vmul.f32 %v2282, %v90
  %v2288 = vmul.f32 %v2281, %v91
  %v2290 = vsel %vm239, %v2249, 0
  %2292 = vmatpush.msra.mxu0 0.0
  %2293 = vmatpush.msra.mxu0 0.0
  %2294 = vmatpush.msra.mxu0 0.0
  %2295 = vmatpush.msra.mxu0 0.0
  %2296 = vmatpush.msra.mxu0 0.0
  %2297 = vmatpush.msra.mxu0 0.0
  %2298 = vmatpush.msra.mxu0 0.0
  %2299 = vmatpush.msra.mxu0 0.0
  %2300 = vmatpush.msra.mxu0 0.0
  %2301 = vmatpush.msra.mxu0 0.0
  %2302 = vmatpush.msra.mxu0 0.0
  %2303 = vmatpush.msra.mxu0 0.0
  %2304 = vmatpush.msra.mxu0 0.0
  %2305 = vmatpush.msra.mxu0 0.0
  %2306 = vmatpush.msra.mxu0 0.0
  %2307 = vmatpush.msra.mxu0 %v2285
  %2308 = vmatmul.f32.gmra.mxu0 %v2290
  %v2309 = vpop.f32.mrf.mxu0
  %v2310 = vadd.f32 0.0, %v2309
  %2311 = vdwg.mxu0
  %2312 = vmatpush.msra.mxu0 0.0
  %2313 = vmatpush.msra.mxu0 0.0
  %2314 = vmatpush.msra.mxu0 0.0
  %2315 = vmatpush.msra.mxu0 0.0
  %2316 = vmatpush.msra.mxu0 0.0
  %2317 = vmatpush.msra.mxu0 0.0
  %2318 = vmatpush.msra.mxu0 0.0
  %2319 = vmatpush.msra.mxu0 0.0
  %2320 = vmatpush.msra.mxu0 0.0
  %2321 = vmatpush.msra.mxu0 0.0
  %2322 = vmatpush.msra.mxu0 0.0
  %2323 = vmatpush.msra.mxu0 0.0
  %2324 = vmatpush.msra.mxu0 0.0
  %2325 = vmatpush.msra.mxu0 0.0
  %2326 = vmatpush.msra.mxu0 0.0
  %2327 = vmatpush.msra.mxu0 %v2286
  %2328 = vmatmul.f32.gmra.mxu0 %v2290
  %v2329 = vpop.f32.mrf.mxu0
  %v2330 = vadd.f32 0.0, %v2329
  %2331 = vdwg.mxu0
  %2332 = vmatpush.msra.mxu0 0.0
  %2333 = vmatpush.msra.mxu0 0.0
  %2334 = vmatpush.msra.mxu0 0.0
  %2335 = vmatpush.msra.mxu0 0.0
  %2336 = vmatpush.msra.mxu0 0.0
  %2337 = vmatpush.msra.mxu0 0.0
  %2338 = vmatpush.msra.mxu0 0.0
  %2339 = vmatpush.msra.mxu0 0.0
  %2340 = vmatpush.msra.mxu0 0.0
  %2341 = vmatpush.msra.mxu0 0.0
  %2342 = vmatpush.msra.mxu0 0.0
  %2343 = vmatpush.msra.mxu0 0.0
  %2344 = vmatpush.msra.mxu0 0.0
  %2345 = vmatpush.msra.mxu0 0.0
  %2346 = vmatpush.msra.mxu0 0.0
  %2347 = vmatpush.msra.mxu0 %v2287
  %2348 = vmatmul.f32.gmra.mxu0 %v2290
  %v2349 = vpop.f32.mrf.mxu0
  %v2350 = vadd.f32 0.0, %v2349
  %2351 = vdwg.mxu0
  %2352 = vmatpush.msra.mxu0 0.0
  %2353 = vmatpush.msra.mxu0 0.0
  %2354 = vmatpush.msra.mxu0 0.0
  %2355 = vmatpush.msra.mxu0 0.0
  %2356 = vmatpush.msra.mxu0 0.0
  %2357 = vmatpush.msra.mxu0 0.0
  %2358 = vmatpush.msra.mxu0 0.0
  %2359 = vmatpush.msra.mxu0 0.0
  %2360 = vmatpush.msra.mxu0 0.0
  %2361 = vmatpush.msra.mxu0 0.0
  %2362 = vmatpush.msra.mxu0 0.0
  %2363 = vmatpush.msra.mxu0 0.0
  %2364 = vmatpush.msra.mxu0 0.0
  %2365 = vmatpush.msra.mxu0 0.0
  %2366 = vmatpush.msra.mxu0 0.0
  %2367 = vmatpush.msra.mxu0 %v2288
  %2368 = vmatmul.f32.gmra.mxu0 %v2290
  %v2369 = vpop.f32.mrf.mxu0
  %v2370 = vadd.f32 0.0, %v2369
  %2371 = vdwg.mxu0
  %v2373 = vsel %vm239, %v2248, 0
  %2375 = vmatpush.msra.mxu0 0.0
  %2376 = vmatpush.msra.mxu0 0.0
  %2377 = vmatpush.msra.mxu0 0.0
  %2378 = vmatpush.msra.mxu0 0.0
  %2379 = vmatpush.msra.mxu0 0.0
  %2380 = vmatpush.msra.mxu0 0.0
  %2381 = vmatpush.msra.mxu0 0.0
  %2382 = vmatpush.msra.mxu0 0.0
  %2383 = vmatpush.msra.mxu0 0.0
  %2384 = vmatpush.msra.mxu0 0.0
  %2385 = vmatpush.msra.mxu0 0.0
  %2386 = vmatpush.msra.mxu0 0.0
  %2387 = vmatpush.msra.mxu0 0.0
  %2388 = vmatpush.msra.mxu0 0.0
  %2389 = vmatpush.msra.mxu0 0.0
  %2390 = vmatpush.msra.mxu0 %v2269
  %2391 = vmatmul.f32.gmra.mxu0 %v2373
  %v2392 = vpop.f32.mrf.mxu0
  %v2393 = vadd.f32 %v2310, %v2392
  %2394 = vdwg.mxu0
  %2395 = vmatpush.msra.mxu0 0.0
  %2396 = vmatpush.msra.mxu0 0.0
  %2397 = vmatpush.msra.mxu0 0.0
  %2398 = vmatpush.msra.mxu0 0.0
  %2399 = vmatpush.msra.mxu0 0.0
  %2400 = vmatpush.msra.mxu0 0.0
  %2401 = vmatpush.msra.mxu0 0.0
  %2402 = vmatpush.msra.mxu0 0.0
  %2403 = vmatpush.msra.mxu0 0.0
  %2404 = vmatpush.msra.mxu0 0.0
  %2405 = vmatpush.msra.mxu0 0.0
  %2406 = vmatpush.msra.mxu0 0.0
  %2407 = vmatpush.msra.mxu0 0.0
  %2408 = vmatpush.msra.mxu0 0.0
  %2409 = vmatpush.msra.mxu0 0.0
  %2410 = vmatpush.msra.mxu0 %v2270
  %2411 = vmatmul.f32.gmra.mxu0 %v2373
  %v2412 = vpop.f32.mrf.mxu0
  %v2413 = vadd.f32 %v2330, %v2412
  %2414 = vdwg.mxu0
  %2415 = vmatpush.msra.mxu0 0.0
  %2416 = vmatpush.msra.mxu0 0.0
  %2417 = vmatpush.msra.mxu0 0.0
  %2418 = vmatpush.msra.mxu0 0.0
  %2419 = vmatpush.msra.mxu0 0.0
  %2420 = vmatpush.msra.mxu0 0.0
  %2421 = vmatpush.msra.mxu0 0.0
  %2422 = vmatpush.msra.mxu0 0.0
  %2423 = vmatpush.msra.mxu0 0.0
  %2424 = vmatpush.msra.mxu0 0.0
  %2425 = vmatpush.msra.mxu0 0.0
  %2426 = vmatpush.msra.mxu0 0.0
  %2427 = vmatpush.msra.mxu0 0.0
  %2428 = vmatpush.msra.mxu0 0.0
  %2429 = vmatpush.msra.mxu0 0.0
  %2430 = vmatpush.msra.mxu0 %v2271
  %2431 = vmatmul.f32.gmra.mxu0 %v2373
  %v2432 = vpop.f32.mrf.mxu0
  %v2433 = vadd.f32 %v2350, %v2432
  %2434 = vdwg.mxu0
  %2435 = vmatpush.msra.mxu0 0.0
  %2436 = vmatpush.msra.mxu0 0.0
  %2437 = vmatpush.msra.mxu0 0.0
  %2438 = vmatpush.msra.mxu0 0.0
  %2439 = vmatpush.msra.mxu0 0.0
  %2440 = vmatpush.msra.mxu0 0.0
  %2441 = vmatpush.msra.mxu0 0.0
  %2442 = vmatpush.msra.mxu0 0.0
  %2443 = vmatpush.msra.mxu0 0.0
  %2444 = vmatpush.msra.mxu0 0.0
  %2445 = vmatpush.msra.mxu0 0.0
  %2446 = vmatpush.msra.mxu0 0.0
  %2447 = vmatpush.msra.mxu0 0.0
  %2448 = vmatpush.msra.mxu0 0.0
  %2449 = vmatpush.msra.mxu0 0.0
  %2450 = vmatpush.msra.mxu0 %v2272
  %2451 = vmatmul.f32.gmra.mxu0 %v2373
  %v2452 = vpop.f32.mrf.mxu0
  %v2453 = vadd.f32 %v2370, %v2452
  %2454 = vdwg.mxu0
  %2455 = vrot.lane.b32.xlu0 %v2243, 15
  %v2456 = vpop.permute.xlu0 %2455
  %2457 = vrot.lane.b32.xlu0 %v2244, 15
  %v2458 = vpop.permute.xlu0 %2457
  %2459 = vrot.lane.b32.xlu0 %v2245, 15
  %v2460 = vpop.permute.xlu0 %2459
  %2461 = vrot.lane.b32.xlu0 %v2246, 15
  %v2462 = vpop.permute.xlu0 %2461
  %v2463 = vsel %vm444, %v2460, %v2462
  %v2464 = vsel %vm444, %v2458, %v2460
  %v2465 = vsel %vm444, %v2456, %v2458
  %v2466 = vsel %vm444, %v2462, %v2456
  %v2467 = vmul.f32 %v2466, %v104
  %v2468 = vmul.f32 %v2465, %v105
  %v2469 = vmul.f32 %v2464, %v106
  %v2470 = vmul.f32 %v2463, %v107
  %v2472 = vsel %vm239, %v2250, 0
  %2474 = vmatpush.msra.mxu0 0.0
  %2475 = vmatpush.msra.mxu0 0.0
  %2476 = vmatpush.msra.mxu0 0.0
  %2477 = vmatpush.msra.mxu0 0.0
  %2478 = vmatpush.msra.mxu0 0.0
  %2479 = vmatpush.msra.mxu0 0.0
  %2480 = vmatpush.msra.mxu0 0.0
  %2481 = vmatpush.msra.mxu0 0.0
  %2482 = vmatpush.msra.mxu0 0.0
  %2483 = vmatpush.msra.mxu0 0.0
  %2484 = vmatpush.msra.mxu0 0.0
  %2485 = vmatpush.msra.mxu0 0.0
  %2486 = vmatpush.msra.mxu0 0.0
  %2487 = vmatpush.msra.mxu0 0.0
  %2488 = vmatpush.msra.mxu0 0.0
  %2489 = vmatpush.msra.mxu0 %v2467
  %2490 = vmatmul.f32.gmra.mxu0 %v2472
  %v2491 = vpop.f32.mrf.mxu0
  %v2492 = vadd.f32 0.0, %v2491
  %2493 = vdwg.mxu0
  %2494 = vmatpush.msra.mxu0 0.0
  %2495 = vmatpush.msra.mxu0 0.0
  %2496 = vmatpush.msra.mxu0 0.0
  %2497 = vmatpush.msra.mxu0 0.0
  %2498 = vmatpush.msra.mxu0 0.0
  %2499 = vmatpush.msra.mxu0 0.0
  %2500 = vmatpush.msra.mxu0 0.0
  %2501 = vmatpush.msra.mxu0 0.0
  %2502 = vmatpush.msra.mxu0 0.0
  %2503 = vmatpush.msra.mxu0 0.0
  %2504 = vmatpush.msra.mxu0 0.0
  %2505 = vmatpush.msra.mxu0 0.0
  %2506 = vmatpush.msra.mxu0 0.0
  %2507 = vmatpush.msra.mxu0 0.0
  %2508 = vmatpush.msra.mxu0 0.0
  %2509 = vmatpush.msra.mxu0 %v2468
  %2510 = vmatmul.f32.gmra.mxu0 %v2472
  %v2511 = vpop.f32.mrf.mxu0
  %v2512 = vadd.f32 0.0, %v2511
  %2513 = vdwg.mxu0
  %2514 = vmatpush.msra.mxu0 0.0
  %2515 = vmatpush.msra.mxu0 0.0
  %2516 = vmatpush.msra.mxu0 0.0
  %2517 = vmatpush.msra.mxu0 0.0
  %2518 = vmatpush.msra.mxu0 0.0
  %2519 = vmatpush.msra.mxu0 0.0
  %2520 = vmatpush.msra.mxu0 0.0
  %2521 = vmatpush.msra.mxu0 0.0
  %2522 = vmatpush.msra.mxu0 0.0
  %2523 = vmatpush.msra.mxu0 0.0
  %2524 = vmatpush.msra.mxu0 0.0
  %2525 = vmatpush.msra.mxu0 0.0
  %2526 = vmatpush.msra.mxu0 0.0
  %2527 = vmatpush.msra.mxu0 0.0
  %2528 = vmatpush.msra.mxu0 0.0
  %2529 = vmatpush.msra.mxu0 %v2469
  %2530 = vmatmul.f32.gmra.mxu0 %v2472
  %v2531 = vpop.f32.mrf.mxu0
  %v2532 = vadd.f32 0.0, %v2531
  %2533 = vdwg.mxu0
  %2534 = vmatpush.msra.mxu0 0.0
  %2535 = vmatpush.msra.mxu0 0.0
  %2536 = vmatpush.msra.mxu0 0.0
  %2537 = vmatpush.msra.mxu0 0.0
  %2538 = vmatpush.msra.mxu0 0.0
  %2539 = vmatpush.msra.mxu0 0.0
  %2540 = vmatpush.msra.mxu0 0.0
  %2541 = vmatpush.msra.mxu0 0.0
  %2542 = vmatpush.msra.mxu0 0.0
  %2543 = vmatpush.msra.mxu0 0.0
  %2544 = vmatpush.msra.mxu0 0.0
  %2545 = vmatpush.msra.mxu0 0.0
  %2546 = vmatpush.msra.mxu0 0.0
  %2547 = vmatpush.msra.mxu0 0.0
  %2548 = vmatpush.msra.mxu0 0.0
  %2549 = vmatpush.msra.mxu0 %v2470
  %2550 = vmatmul.f32.gmra.mxu0 %v2472
  %v2551 = vpop.f32.mrf.mxu0
  %v2552 = vadd.f32 0.0, %v2551
  %2553 = vdwg.mxu0
  %v2554 = vadd.f32 %v2393, %v2492
  %v2555 = vadd.f32 %v2413, %v2512
  %v2556 = vadd.f32 %v2433, %v2532
  %v2557 = vadd.f32 %v2453, %v2552
  %2558 = vrot.lane.b32.xlu0 %v2243, 1
  %v2559 = vpop.permute.xlu0 %2558
  %2560 = vrot.lane.b32.xlu0 %v2244, 1
  %v2561 = vpop.permute.xlu0 %2560
  %2562 = vrot.lane.b32.xlu0 %v2245, 1
  %v2563 = vpop.permute.xlu0 %2562
  %2564 = vrot.lane.b32.xlu0 %v2246, 1
  %v2565 = vpop.permute.xlu0 %2564
  %v2566 = vsel %vm567, %v2563, %v2565
  %v2567 = vsel %vm567, %v2561, %v2563
  %v2568 = vsel %vm567, %v2559, %v2561
  %v2569 = vsel %vm567, %v2565, %v2559
  %v2570 = vmul.f32 %v2569, %v115
  %v2571 = vmul.f32 %v2568, %v116
  %v2572 = vmul.f32 %v2567, %v117
  %v2573 = vmul.f32 %v2566, %v118
  %v2575 = vsel %vm239, %v2251, 0
  %2577 = vmatpush.msra.mxu0 0.0
  %2578 = vmatpush.msra.mxu0 0.0
  %2579 = vmatpush.msra.mxu0 0.0
  %2580 = vmatpush.msra.mxu0 0.0
  %2581 = vmatpush.msra.mxu0 0.0
  %2582 = vmatpush.msra.mxu0 0.0
  %2583 = vmatpush.msra.mxu0 0.0
  %2584 = vmatpush.msra.mxu0 0.0
  %2585 = vmatpush.msra.mxu0 0.0
  %2586 = vmatpush.msra.mxu0 0.0
  %2587 = vmatpush.msra.mxu0 0.0
  %2588 = vmatpush.msra.mxu0 0.0
  %2589 = vmatpush.msra.mxu0 0.0
  %2590 = vmatpush.msra.mxu0 0.0
  %2591 = vmatpush.msra.mxu0 0.0
  %2592 = vmatpush.msra.mxu0 %v2570
  %2593 = vmatmul.f32.gmra.mxu0 %v2575
  %v2594 = vpop.f32.mrf.mxu0
  %v2595 = vadd.f32 0.0, %v2594
  %2596 = vdwg.mxu0
  %2597 = vmatpush.msra.mxu0 0.0
  %2598 = vmatpush.msra.mxu0 0.0
  %2599 = vmatpush.msra.mxu0 0.0
  %2600 = vmatpush.msra.mxu0 0.0
  %2601 = vmatpush.msra.mxu0 0.0
  %2602 = vmatpush.msra.mxu0 0.0
  %2603 = vmatpush.msra.mxu0 0.0
  %2604 = vmatpush.msra.mxu0 0.0
  %2605 = vmatpush.msra.mxu0 0.0
  %2606 = vmatpush.msra.mxu0 0.0
  %2607 = vmatpush.msra.mxu0 0.0
  %2608 = vmatpush.msra.mxu0 0.0
  %2609 = vmatpush.msra.mxu0 0.0
  %2610 = vmatpush.msra.mxu0 0.0
  %2611 = vmatpush.msra.mxu0 0.0
  %2612 = vmatpush.msra.mxu0 %v2571
  %2613 = vmatmul.f32.gmra.mxu0 %v2575
  %v2614 = vpop.f32.mrf.mxu0
  %v2615 = vadd.f32 0.0, %v2614
  %2616 = vdwg.mxu0
  %2617 = vmatpush.msra.mxu0 0.0
  %2618 = vmatpush.msra.mxu0 0.0
  %2619 = vmatpush.msra.mxu0 0.0
  %2620 = vmatpush.msra.mxu0 0.0
  %2621 = vmatpush.msra.mxu0 0.0
  %2622 = vmatpush.msra.mxu0 0.0
  %2623 = vmatpush.msra.mxu0 0.0
  %2624 = vmatpush.msra.mxu0 0.0
  %2625 = vmatpush.msra.mxu0 0.0
  %2626 = vmatpush.msra.mxu0 0.0
  %2627 = vmatpush.msra.mxu0 0.0
  %2628 = vmatpush.msra.mxu0 0.0
  %2629 = vmatpush.msra.mxu0 0.0
  %2630 = vmatpush.msra.mxu0 0.0
  %2631 = vmatpush.msra.mxu0 0.0
  %2632 = vmatpush.msra.mxu0 %v2572
  %2633 = vmatmul.f32.gmra.mxu0 %v2575
  %v2634 = vpop.f32.mrf.mxu0
  %v2635 = vadd.f32 0.0, %v2634
  %2636 = vdwg.mxu0
  %2637 = vmatpush.msra.mxu0 0.0
  %2638 = vmatpush.msra.mxu0 0.0
  %2639 = vmatpush.msra.mxu0 0.0
  %2640 = vmatpush.msra.mxu0 0.0
  %2641 = vmatpush.msra.mxu0 0.0
  %2642 = vmatpush.msra.mxu0 0.0
  %2643 = vmatpush.msra.mxu0 0.0
  %2644 = vmatpush.msra.mxu0 0.0
  %2645 = vmatpush.msra.mxu0 0.0
  %2646 = vmatpush.msra.mxu0 0.0
  %2647 = vmatpush.msra.mxu0 0.0
  %2648 = vmatpush.msra.mxu0 0.0
  %2649 = vmatpush.msra.mxu0 0.0
  %2650 = vmatpush.msra.mxu0 0.0
  %2651 = vmatpush.msra.mxu0 0.0
  %2652 = vmatpush.msra.mxu0 %v2573
  %2653 = vmatmul.f32.gmra.mxu0 %v2575
  %v2654 = vpop.f32.mrf.mxu0
  %v2655 = vadd.f32 0.0, %v2654
  %2656 = vdwg.mxu0
  %v2657 = vadd.f32 %v2554, %v2595
  %v2658 = vadd.f32 %v2555, %v2615
  %v2659 = vadd.f32 %v2556, %v2635
  %v2660 = vadd.f32 %v2557, %v2655
  %v2662 = vsel %vm239, %v2252, 0
  %2664 = vmatpush.msra.mxu0 0.0
  %2665 = vmatpush.msra.mxu0 0.0
  %2666 = vmatpush.msra.mxu0 0.0
  %2667 = vmatpush.msra.mxu0 0.0
  %2668 = vmatpush.msra.mxu0 0.0
  %2669 = vmatpush.msra.mxu0 0.0
  %2670 = vmatpush.msra.mxu0 0.0
  %2671 = vmatpush.msra.mxu0 0.0
  %2672 = vmatpush.msra.mxu0 0.0
  %2673 = vmatpush.msra.mxu0 0.0
  %2674 = vmatpush.msra.mxu0 0.0
  %2675 = vmatpush.msra.mxu0 0.0
  %2676 = vmatpush.msra.mxu0 0.0
  %2677 = vmatpush.msra.mxu0 0.0
  %2678 = vmatpush.msra.mxu0 0.0
  %2679 = vmatpush.msra.mxu0 %v2243
  %2680 = vmatmul.f32.gmra.mxu0 %v2662
  %v2681 = vpop.f32.mrf.mxu0
  %v2682 = vadd.f32 0.0, %v2681
  %2683 = vdwg.mxu0
  %2684 = vmatpush.msra.mxu0 0.0
  %2685 = vmatpush.msra.mxu0 0.0
  %2686 = vmatpush.msra.mxu0 0.0
  %2687 = vmatpush.msra.mxu0 0.0
  %2688 = vmatpush.msra.mxu0 0.0
  %2689 = vmatpush.msra.mxu0 0.0
  %2690 = vmatpush.msra.mxu0 0.0
  %2691 = vmatpush.msra.mxu0 0.0
  %2692 = vmatpush.msra.mxu0 0.0
  %2693 = vmatpush.msra.mxu0 0.0
  %2694 = vmatpush.msra.mxu0 0.0
  %2695 = vmatpush.msra.mxu0 0.0
  %2696 = vmatpush.msra.mxu0 0.0
  %2697 = vmatpush.msra.mxu0 0.0
  %2698 = vmatpush.msra.mxu0 0.0
  %2699 = vmatpush.msra.mxu0 %v2244
  %2700 = vmatmul.f32.gmra.mxu0 %v2662
  %v2701 = vpop.f32.mrf.mxu0
  %v2702 = vadd.f32 0.0, %v2701
  %2703 = vdwg.mxu0
  %2704 = vmatpush.msra.mxu0 0.0
  %2705 = vmatpush.msra.mxu0 0.0
  %2706 = vmatpush.msra.mxu0 0.0
  %2707 = vmatpush.msra.mxu0 0.0
  %2708 = vmatpush.msra.mxu0 0.0
  %2709 = vmatpush.msra.mxu0 0.0
  %2710 = vmatpush.msra.mxu0 0.0
  %2711 = vmatpush.msra.mxu0 0.0
  %2712 = vmatpush.msra.mxu0 0.0
  %2713 = vmatpush.msra.mxu0 0.0
  %2714 = vmatpush.msra.mxu0 0.0
  %2715 = vmatpush.msra.mxu0 0.0
  %2716 = vmatpush.msra.mxu0 0.0
  %2717 = vmatpush.msra.mxu0 0.0
  %2718 = vmatpush.msra.mxu0 0.0
  %2719 = vmatpush.msra.mxu0 %v2245
  %2720 = vmatmul.f32.gmra.mxu0 %v2662
  %v2721 = vpop.f32.mrf.mxu0
  %v2722 = vadd.f32 0.0, %v2721
  %2723 = vdwg.mxu0
  %2724 = vmatpush.msra.mxu0 0.0
  %2725 = vmatpush.msra.mxu0 0.0
  %2726 = vmatpush.msra.mxu0 0.0
  %2727 = vmatpush.msra.mxu0 0.0
  %2728 = vmatpush.msra.mxu0 0.0
  %2729 = vmatpush.msra.mxu0 0.0
  %2730 = vmatpush.msra.mxu0 0.0
  %2731 = vmatpush.msra.mxu0 0.0
  %2732 = vmatpush.msra.mxu0 0.0
  %2733 = vmatpush.msra.mxu0 0.0
  %2734 = vmatpush.msra.mxu0 0.0
  %2735 = vmatpush.msra.mxu0 0.0
  %2736 = vmatpush.msra.mxu0 0.0
  %2737 = vmatpush.msra.mxu0 0.0
  %2738 = vmatpush.msra.mxu0 0.0
  %2739 = vmatpush.msra.mxu0 %v2246
  %2740 = vmatmul.f32.gmra.mxu0 %v2662
  %v2741 = vpop.f32.mrf.mxu0
  %v2742 = vadd.f32 0.0, %v2741
  %2743 = vdwg.mxu0
  %v2744 = vadd.f32 %v2657, %v2682
  %v2745 = vadd.f32 %v2658, %v2702
  %v2746 = vadd.f32 %v2659, %v2722
  %v2747 = vadd.f32 %v2660, %v2742
  %2748 = vrot.lane.b32.xlu0 %v2243, 127
  %v2749 = vpop.permute.xlu0 %2748
  %2750 = vrot.lane.b32.xlu0 %v2244, 127
  %v2751 = vpop.permute.xlu0 %2750
  %2752 = vrot.lane.b32.xlu0 %v2245, 127
  %v2753 = vpop.permute.xlu0 %2752
  %2754 = vrot.lane.b32.xlu0 %v2246, 127
  %v2755 = vpop.permute.xlu0 %2754
  %v2756 = vsel %vm796, %v2753, %v2755
  %v2757 = vsel %vm796, %v2751, %v2753
  %v2758 = vsel %vm796, %v2749, %v2751
  %v2759 = vsel %vm796, %v2755, %v2749
  %v2760 = vmul.f32 %v2758, %v126
  %v2761 = vmul.f32 %v2757, %v127
  %v2762 = vmul.f32 %v2756, %v128
  %v2763 = vmul.f32 %v2759, %v129
  %v2765 = vsel %vm239, %v2253, 0
  %2767 = vmatpush.msra.mxu0 0.0
  %2768 = vmatpush.msra.mxu0 0.0
  %2769 = vmatpush.msra.mxu0 0.0
  %2770 = vmatpush.msra.mxu0 0.0
  %2771 = vmatpush.msra.mxu0 0.0
  %2772 = vmatpush.msra.mxu0 0.0
  %2773 = vmatpush.msra.mxu0 0.0
  %2774 = vmatpush.msra.mxu0 0.0
  %2775 = vmatpush.msra.mxu0 0.0
  %2776 = vmatpush.msra.mxu0 0.0
  %2777 = vmatpush.msra.mxu0 0.0
  %2778 = vmatpush.msra.mxu0 0.0
  %2779 = vmatpush.msra.mxu0 0.0
  %2780 = vmatpush.msra.mxu0 0.0
  %2781 = vmatpush.msra.mxu0 0.0
  %2782 = vmatpush.msra.mxu0 %v2760
  %2783 = vmatmul.f32.gmra.mxu0 %v2765
  %v2784 = vpop.f32.mrf.mxu0
  %v2785 = vadd.f32 0.0, %v2784
  %2786 = vdwg.mxu0
  %2787 = vmatpush.msra.mxu0 0.0
  %2788 = vmatpush.msra.mxu0 0.0
  %2789 = vmatpush.msra.mxu0 0.0
  %2790 = vmatpush.msra.mxu0 0.0
  %2791 = vmatpush.msra.mxu0 0.0
  %2792 = vmatpush.msra.mxu0 0.0
  %2793 = vmatpush.msra.mxu0 0.0
  %2794 = vmatpush.msra.mxu0 0.0
  %2795 = vmatpush.msra.mxu0 0.0
  %2796 = vmatpush.msra.mxu0 0.0
  %2797 = vmatpush.msra.mxu0 0.0
  %2798 = vmatpush.msra.mxu0 0.0
  %2799 = vmatpush.msra.mxu0 0.0
  %2800 = vmatpush.msra.mxu0 0.0
  %2801 = vmatpush.msra.mxu0 0.0
  %2802 = vmatpush.msra.mxu0 %v2761
  %2803 = vmatmul.f32.gmra.mxu0 %v2765
  %v2804 = vpop.f32.mrf.mxu0
  %v2805 = vadd.f32 0.0, %v2804
  %2806 = vdwg.mxu0
  %2807 = vmatpush.msra.mxu0 0.0
  %2808 = vmatpush.msra.mxu0 0.0
  %2809 = vmatpush.msra.mxu0 0.0
  %2810 = vmatpush.msra.mxu0 0.0
  %2811 = vmatpush.msra.mxu0 0.0
  %2812 = vmatpush.msra.mxu0 0.0
  %2813 = vmatpush.msra.mxu0 0.0
  %2814 = vmatpush.msra.mxu0 0.0
  %2815 = vmatpush.msra.mxu0 0.0
  %2816 = vmatpush.msra.mxu0 0.0
  %2817 = vmatpush.msra.mxu0 0.0
  %2818 = vmatpush.msra.mxu0 0.0
  %2819 = vmatpush.msra.mxu0 0.0
  %2820 = vmatpush.msra.mxu0 0.0
  %2821 = vmatpush.msra.mxu0 0.0
  %2822 = vmatpush.msra.mxu0 %v2762
  %2823 = vmatmul.f32.gmra.mxu0 %v2765
  %v2824 = vpop.f32.mrf.mxu0
  %v2825 = vadd.f32 0.0, %v2824
  %2826 = vdwg.mxu0
  %2827 = vmatpush.msra.mxu0 0.0
  %2828 = vmatpush.msra.mxu0 0.0
  %2829 = vmatpush.msra.mxu0 0.0
  %2830 = vmatpush.msra.mxu0 0.0
  %2831 = vmatpush.msra.mxu0 0.0
  %2832 = vmatpush.msra.mxu0 0.0
  %2833 = vmatpush.msra.mxu0 0.0
  %2834 = vmatpush.msra.mxu0 0.0
  %2835 = vmatpush.msra.mxu0 0.0
  %2836 = vmatpush.msra.mxu0 0.0
  %2837 = vmatpush.msra.mxu0 0.0
  %2838 = vmatpush.msra.mxu0 0.0
  %2839 = vmatpush.msra.mxu0 0.0
  %2840 = vmatpush.msra.mxu0 0.0
  %2841 = vmatpush.msra.mxu0 0.0
  %2842 = vmatpush.msra.mxu0 %v2763
  %2843 = vmatmul.f32.gmra.mxu0 %v2765
  %v2844 = vpop.f32.mrf.mxu0
  %v2845 = vadd.f32 0.0, %v2844
  %2846 = vdwg.mxu0
  %v2847 = vadd.f32 %v2744, %v2785
  %v2848 = vadd.f32 %v2745, %v2805
  %v2849 = vadd.f32 %v2746, %v2825
  %v2850 = vadd.f32 %v2747, %v2845
  %2851 = vrot.lane.b32.xlu0 %v2243, 113
  %v2852 = vpop.permute.xlu0 %2851
  %2853 = vrot.lane.b32.xlu0 %v2244, 113
  %v2854 = vpop.permute.xlu0 %2853
  %2855 = vrot.lane.b32.xlu0 %v2245, 113
  %v2856 = vpop.permute.xlu0 %2855
  %2857 = vrot.lane.b32.xlu0 %v2246, 113
  %v2858 = vpop.permute.xlu0 %2857
  %v2859 = vsel %vm919, %v2856, %v2858
  %v2860 = vsel %vm919, %v2854, %v2856
  %v2861 = vsel %vm919, %v2852, %v2854
  %v2862 = vsel %vm919, %v2858, %v2852
  %v2863 = vmul.f32 %v2861, %v142
  %v2864 = vmul.f32 %v2860, %v143
  %v2865 = vmul.f32 %v2859, %v144
  %v2866 = vmul.f32 %v2862, %v145
  %v2868 = vsel %vm239, %v2254, 0
  %2870 = vmatpush.msra.mxu0 0.0
  %2871 = vmatpush.msra.mxu0 0.0
  %2872 = vmatpush.msra.mxu0 0.0
  %2873 = vmatpush.msra.mxu0 0.0
  %2874 = vmatpush.msra.mxu0 0.0
  %2875 = vmatpush.msra.mxu0 0.0
  %2876 = vmatpush.msra.mxu0 0.0
  %2877 = vmatpush.msra.mxu0 0.0
  %2878 = vmatpush.msra.mxu0 0.0
  %2879 = vmatpush.msra.mxu0 0.0
  %2880 = vmatpush.msra.mxu0 0.0
  %2881 = vmatpush.msra.mxu0 0.0
  %2882 = vmatpush.msra.mxu0 0.0
  %2883 = vmatpush.msra.mxu0 0.0
  %2884 = vmatpush.msra.mxu0 0.0
  %2885 = vmatpush.msra.mxu0 %v2863
  %2886 = vmatmul.f32.gmra.mxu0 %v2868
  %v2887 = vpop.f32.mrf.mxu0
  %v2888 = vadd.f32 0.0, %v2887
  %2889 = vdwg.mxu0
  %2890 = vmatpush.msra.mxu0 0.0
  %2891 = vmatpush.msra.mxu0 0.0
  %2892 = vmatpush.msra.mxu0 0.0
  %2893 = vmatpush.msra.mxu0 0.0
  %2894 = vmatpush.msra.mxu0 0.0
  %2895 = vmatpush.msra.mxu0 0.0
  %2896 = vmatpush.msra.mxu0 0.0
  %2897 = vmatpush.msra.mxu0 0.0
  %2898 = vmatpush.msra.mxu0 0.0
  %2899 = vmatpush.msra.mxu0 0.0
  %2900 = vmatpush.msra.mxu0 0.0
  %2901 = vmatpush.msra.mxu0 0.0
  %2902 = vmatpush.msra.mxu0 0.0
  %2903 = vmatpush.msra.mxu0 0.0
  %2904 = vmatpush.msra.mxu0 0.0
  %2905 = vmatpush.msra.mxu0 %v2864
  %2906 = vmatmul.f32.gmra.mxu0 %v2868
  %v2907 = vpop.f32.mrf.mxu0
  %v2908 = vadd.f32 0.0, %v2907
  %2909 = vdwg.mxu0
  %2910 = vmatpush.msra.mxu0 0.0
  %2911 = vmatpush.msra.mxu0 0.0
  %2912 = vmatpush.msra.mxu0 0.0
  %2913 = vmatpush.msra.mxu0 0.0
  %2914 = vmatpush.msra.mxu0 0.0
  %2915 = vmatpush.msra.mxu0 0.0
  %2916 = vmatpush.msra.mxu0 0.0
  %2917 = vmatpush.msra.mxu0 0.0
  %2918 = vmatpush.msra.mxu0 0.0
  %2919 = vmatpush.msra.mxu0 0.0
  %2920 = vmatpush.msra.mxu0 0.0
  %2921 = vmatpush.msra.mxu0 0.0
  %2922 = vmatpush.msra.mxu0 0.0
  %2923 = vmatpush.msra.mxu0 0.0
  %2924 = vmatpush.msra.mxu0 0.0
  %2925 = vmatpush.msra.mxu0 %v2865
  %2926 = vmatmul.f32.gmra.mxu0 %v2868
  %v2927 = vpop.f32.mrf.mxu0
  %v2928 = vadd.f32 0.0, %v2927
  %2929 = vdwg.mxu0
  %2930 = vmatpush.msra.mxu0 0.0
  %2931 = vmatpush.msra.mxu0 0.0
  %2932 = vmatpush.msra.mxu0 0.0
  %2933 = vmatpush.msra.mxu0 0.0
  %2934 = vmatpush.msra.mxu0 0.0
  %2935 = vmatpush.msra.mxu0 0.0
  %2936 = vmatpush.msra.mxu0 0.0
  %2937 = vmatpush.msra.mxu0 0.0
  %2938 = vmatpush.msra.mxu0 0.0
  %2939 = vmatpush.msra.mxu0 0.0
  %2940 = vmatpush.msra.mxu0 0.0
  %2941 = vmatpush.msra.mxu0 0.0
  %2942 = vmatpush.msra.mxu0 0.0
  %2943 = vmatpush.msra.mxu0 0.0
  %2944 = vmatpush.msra.mxu0 0.0
  %2945 = vmatpush.msra.mxu0 %v2866
  %2946 = vmatmul.f32.gmra.mxu0 %v2868
  %v2947 = vpop.f32.mrf.mxu0
  %v2948 = vadd.f32 0.0, %v2947
  %2949 = vdwg.mxu0
  %v2950 = vadd.f32 %v2847, %v2888
  %v2951 = vadd.f32 %v2848, %v2908
  %v2952 = vadd.f32 %v2849, %v2928
  %v2953 = vadd.f32 %v2850, %v2948
  %2954 = vrot.lane.b32.xlu0 %v2243, 112
  %v2955 = vpop.permute.xlu0 %2954
  %2956 = vrot.lane.b32.xlu0 %v2244, 112
  %v2957 = vpop.permute.xlu0 %2956
  %2958 = vrot.lane.b32.xlu0 %v2245, 112
  %v2959 = vpop.permute.xlu0 %2958
  %2960 = vrot.lane.b32.xlu0 %v2246, 112
  %v2961 = vpop.permute.xlu0 %2960
  %v2962 = vsel %vm1042, %v2959, %v2961
  %v2963 = vsel %vm1042, %v2957, %v2959
  %v2964 = vsel %vm1042, %v2955, %v2957
  %v2965 = vsel %vm1042, %v2961, %v2955
  %v2966 = vmul.f32 %v2964, %v153
  %v2967 = vmul.f32 %v2963, %v154
  %v2968 = vmul.f32 %v2962, %v155
  %v2969 = vmul.f32 %v2965, %v156
  %v2971 = vsel %vm239, %v2255, 0
  %2973 = vmatpush.msra.mxu0 0.0
  %2974 = vmatpush.msra.mxu0 0.0
  %2975 = vmatpush.msra.mxu0 0.0
  %2976 = vmatpush.msra.mxu0 0.0
  %2977 = vmatpush.msra.mxu0 0.0
  %2978 = vmatpush.msra.mxu0 0.0
  %2979 = vmatpush.msra.mxu0 0.0
  %2980 = vmatpush.msra.mxu0 0.0
  %2981 = vmatpush.msra.mxu0 0.0
  %2982 = vmatpush.msra.mxu0 0.0
  %2983 = vmatpush.msra.mxu0 0.0
  %2984 = vmatpush.msra.mxu0 0.0
  %2985 = vmatpush.msra.mxu0 0.0
  %2986 = vmatpush.msra.mxu0 0.0
  %2987 = vmatpush.msra.mxu0 0.0
  %2988 = vmatpush.msra.mxu0 %v2966
  %2989 = vmatmul.f32.gmra.mxu0 %v2971
  %v2990 = vpop.f32.mrf.mxu0
  %v2991 = vadd.f32 0.0, %v2990
  %2992 = vdwg.mxu0
  %2993 = vmatpush.msra.mxu0 0.0
  %2994 = vmatpush.msra.mxu0 0.0
  %2995 = vmatpush.msra.mxu0 0.0
  %2996 = vmatpush.msra.mxu0 0.0
  %2997 = vmatpush.msra.mxu0 0.0
  %2998 = vmatpush.msra.mxu0 0.0
  %2999 = vmatpush.msra.mxu0 0.0
  %3000 = vmatpush.msra.mxu0 0.0
  %3001 = vmatpush.msra.mxu0 0.0
  %3002 = vmatpush.msra.mxu0 0.0
  %3003 = vmatpush.msra.mxu0 0.0
  %3004 = vmatpush.msra.mxu0 0.0
  %3005 = vmatpush.msra.mxu0 0.0
  %3006 = vmatpush.msra.mxu0 0.0
  %3007 = vmatpush.msra.mxu0 0.0
  %3008 = vmatpush.msra.mxu0 %v2967
  %3009 = vmatmul.f32.gmra.mxu0 %v2971
  %v3010 = vpop.f32.mrf.mxu0
  %v3011 = vadd.f32 0.0, %v3010
  %3012 = vdwg.mxu0
  %3013 = vmatpush.msra.mxu0 0.0
  %3014 = vmatpush.msra.mxu0 0.0
  %3015 = vmatpush.msra.mxu0 0.0
  %3016 = vmatpush.msra.mxu0 0.0
  %3017 = vmatpush.msra.mxu0 0.0
  %3018 = vmatpush.msra.mxu0 0.0
  %3019 = vmatpush.msra.mxu0 0.0
  %3020 = vmatpush.msra.mxu0 0.0
  %3021 = vmatpush.msra.mxu0 0.0
  %3022 = vmatpush.msra.mxu0 0.0
  %3023 = vmatpush.msra.mxu0 0.0
  %3024 = vmatpush.msra.mxu0 0.0
  %3025 = vmatpush.msra.mxu0 0.0
  %3026 = vmatpush.msra.mxu0 0.0
  %3027 = vmatpush.msra.mxu0 0.0
  %3028 = vmatpush.msra.mxu0 %v2968
  %3029 = vmatmul.f32.gmra.mxu0 %v2971
  %v3030 = vpop.f32.mrf.mxu0
  %v3031 = vadd.f32 0.0, %v3030
  %3032 = vdwg.mxu0
  %3033 = vmatpush.msra.mxu0 0.0
  %3034 = vmatpush.msra.mxu0 0.0
  %3035 = vmatpush.msra.mxu0 0.0
  %3036 = vmatpush.msra.mxu0 0.0
  %3037 = vmatpush.msra.mxu0 0.0
  %3038 = vmatpush.msra.mxu0 0.0
  %3039 = vmatpush.msra.mxu0 0.0
  %3040 = vmatpush.msra.mxu0 0.0
  %3041 = vmatpush.msra.mxu0 0.0
  %3042 = vmatpush.msra.mxu0 0.0
  %3043 = vmatpush.msra.mxu0 0.0
  %3044 = vmatpush.msra.mxu0 0.0
  %3045 = vmatpush.msra.mxu0 0.0
  %3046 = vmatpush.msra.mxu0 0.0
  %3047 = vmatpush.msra.mxu0 0.0
  %3048 = vmatpush.msra.mxu0 %v2969
  %3049 = vmatmul.f32.gmra.mxu0 %v2971
  %v3050 = vpop.f32.mrf.mxu0
  %v3051 = vadd.f32 0.0, %v3050
  %3052 = vdwg.mxu0
  %v3053 = vadd.f32 %v2950, %v2991
  %v3054 = vadd.f32 %v2951, %v3011
  %v3055 = vadd.f32 %v2952, %v3031
  %v3056 = vadd.f32 %v2953, %v3051
  %3057 = vrot.lane.b32.xlu0 %v2243, 111
  %v3058 = vpop.permute.xlu0 %3057
  %3059 = vrot.lane.b32.xlu0 %v2244, 111
  %v3060 = vpop.permute.xlu0 %3059
  %3061 = vrot.lane.b32.xlu0 %v2245, 111
  %v3062 = vpop.permute.xlu0 %3061
  %3063 = vrot.lane.b32.xlu0 %v2246, 111
  %v3064 = vpop.permute.xlu0 %3063
  %v3065 = vsel %vm1165, %v3062, %v3064
  %v3066 = vsel %vm1165, %v3060, %v3062
  %v3067 = vsel %vm1165, %v3058, %v3060
  %v3068 = vsel %vm1165, %v3064, %v3058
  %v3069 = vmul.f32 %v3067, %v165
  %v3070 = vmul.f32 %v3066, %v166
  %v3071 = vmul.f32 %v3065, %v167
  %v3072 = vmul.f32 %v3068, %v168
  %v3074 = vsel %vm239, %v2256, 0
  %3076 = vmatpush.msra.mxu0 0.0
  %3077 = vmatpush.msra.mxu0 0.0
  %3078 = vmatpush.msra.mxu0 0.0
  %3079 = vmatpush.msra.mxu0 0.0
  %3080 = vmatpush.msra.mxu0 0.0
  %3081 = vmatpush.msra.mxu0 0.0
  %3082 = vmatpush.msra.mxu0 0.0
  %3083 = vmatpush.msra.mxu0 0.0
  %3084 = vmatpush.msra.mxu0 0.0
  %3085 = vmatpush.msra.mxu0 0.0
  %3086 = vmatpush.msra.mxu0 0.0
  %3087 = vmatpush.msra.mxu0 0.0
  %3088 = vmatpush.msra.mxu0 0.0
  %3089 = vmatpush.msra.mxu0 0.0
  %3090 = vmatpush.msra.mxu0 0.0
  %3091 = vmatpush.msra.mxu0 %v3069
  %3092 = vmatmul.f32.gmra.mxu0 %v3074
  %v3093 = vpop.f32.mrf.mxu0
  %v3094 = vadd.f32 0.0, %v3093
  %3095 = vdwg.mxu0
  %3096 = vmatpush.msra.mxu0 0.0
  %3097 = vmatpush.msra.mxu0 0.0
  %3098 = vmatpush.msra.mxu0 0.0
  %3099 = vmatpush.msra.mxu0 0.0
  %3100 = vmatpush.msra.mxu0 0.0
  %3101 = vmatpush.msra.mxu0 0.0
  %3102 = vmatpush.msra.mxu0 0.0
  %3103 = vmatpush.msra.mxu0 0.0
  %3104 = vmatpush.msra.mxu0 0.0
  %3105 = vmatpush.msra.mxu0 0.0
  %3106 = vmatpush.msra.mxu0 0.0
  %3107 = vmatpush.msra.mxu0 0.0
  %3108 = vmatpush.msra.mxu0 0.0
  %3109 = vmatpush.msra.mxu0 0.0
  %3110 = vmatpush.msra.mxu0 0.0
  %3111 = vmatpush.msra.mxu0 %v3070
  %3112 = vmatmul.f32.gmra.mxu0 %v3074
  %v3113 = vpop.f32.mrf.mxu0
  %v3114 = vadd.f32 0.0, %v3113
  %3115 = vdwg.mxu0
  %3116 = vmatpush.msra.mxu0 0.0
  %3117 = vmatpush.msra.mxu0 0.0
  %3118 = vmatpush.msra.mxu0 0.0
  %3119 = vmatpush.msra.mxu0 0.0
  %3120 = vmatpush.msra.mxu0 0.0
  %3121 = vmatpush.msra.mxu0 0.0
  %3122 = vmatpush.msra.mxu0 0.0
  %3123 = vmatpush.msra.mxu0 0.0
  %3124 = vmatpush.msra.mxu0 0.0
  %3125 = vmatpush.msra.mxu0 0.0
  %3126 = vmatpush.msra.mxu0 0.0
  %3127 = vmatpush.msra.mxu0 0.0
  %3128 = vmatpush.msra.mxu0 0.0
  %3129 = vmatpush.msra.mxu0 0.0
  %3130 = vmatpush.msra.mxu0 0.0
  %3131 = vmatpush.msra.mxu0 %v3071
  %3132 = vmatmul.f32.gmra.mxu0 %v3074
  %v3133 = vpop.f32.mrf.mxu0
  %v3134 = vadd.f32 0.0, %v3133
  %3135 = vdwg.mxu0
  %3136 = vmatpush.msra.mxu0 0.0
  %3137 = vmatpush.msra.mxu0 0.0
  %3138 = vmatpush.msra.mxu0 0.0
  %3139 = vmatpush.msra.mxu0 0.0
  %3140 = vmatpush.msra.mxu0 0.0
  %3141 = vmatpush.msra.mxu0 0.0
  %3142 = vmatpush.msra.mxu0 0.0
  %3143 = vmatpush.msra.mxu0 0.0
  %3144 = vmatpush.msra.mxu0 0.0
  %3145 = vmatpush.msra.mxu0 0.0
  %3146 = vmatpush.msra.mxu0 0.0
  %3147 = vmatpush.msra.mxu0 0.0
  %3148 = vmatpush.msra.mxu0 0.0
  %3149 = vmatpush.msra.mxu0 0.0
  %3150 = vmatpush.msra.mxu0 0.0
  %3151 = vmatpush.msra.mxu0 %v3072
  %3152 = vmatmul.f32.gmra.mxu0 %v3074
  %v3153 = vpop.f32.mrf.mxu0
  %v3154 = vadd.f32 0.0, %v3153
  %3155 = vdwg.mxu0
  %v3156 = vadd.f32 %v3053, %v3094
  %v3157 = vadd.f32 %v3054, %v3114
  %v3158 = vadd.f32 %v3055, %v3134
  %v3159 = vadd.f32 %v3056, %v3154
  %3161 = vset.pattern.permute.xlu0 0
  %3162 = vperm.xlu0 %3161, %v2247
  %v3163 = vpop.permute.xlu0 %3162
  %v3165 = vadd.f32 %v3156, %v3163
  %v3166 = vadd.f32 %v3157, %v3163
  %v3167 = vadd.f32 %v3158, %v3163
  %v3168 = vadd.f32 %v3159, %v3163
  %v3169 = vmax.f32 %v3165, 0.0
  %v3170 = vmax.f32 %v3166, 0.0
  %v3171 = vmax.f32 %v3167, 0.0
  %v3172 = vmax.f32 %v3168, 0.0
  %v3173 = vadd.f32 %v3169, %v3170
  %v3174 = vadd.f32 %v3173, %v3171
  %v3175 = vadd.f32 %v3174, %v3172
  %3176 = vadd.xlane.f32.xlu0 %v3175
  %v3177 = vpop.xlane.xlu0 %3176
  %v3178 = vmul.f32 %v3169, %v3169
  %v3179 = vmul.f32 %v3170, %v3170
  %v3180 = vmul.f32 %v3171, %v3171
  %v3181 = vmul.f32 %v3172, %v3172
  %v3182 = vadd.f32 %v3178, %v3179
  %v3183 = vadd.f32 %v3182, %v3180
  %v3184 = vadd.f32 %v3183, %v3181
  %3185 = vadd.xlane.f32.xlu0 %v3184
  %v3186 = vpop.xlane.xlu0 %3185
  %v3187 = vmul.f32 %v3177, 0.001953125
  %v3188 = vmul.f32 %v3186, 0.001953125
  %v3189 = vmul.f32 %v3187, %v3187
  %v3190 = vsub.f32 %v3188, %v3189
  %v3191 = vsub.f32 %v3169, %v3187
  %v3192 = vsub.f32 %v3170, %v3187
  %v3193 = vsub.f32 %v3171, %v3187
  %v3194 = vsub.f32 %v3172, %v3187
  %v3195 = vadd.f32 %v3190, 1e-05
  %v3196 = vrsqrt.pop %v3195
  %v3197 = vmul.f32 %v3196, %v3195
  %v3198 = vmul.f32 %v3197, %v3196
  %v3199 = vmul.f32 0.5, %v3198
  %v3200 = vsub.f32 1.5, %v3199
  %v3201 = vmul.f32 %v3196, %v3200
  %vm3202 = vweird.f32 %v3195
  %vm3203 = vweird.f32 %v3196
  %vm3204 = vmor %vm3202, %vm3203
  %v3205 = vsel %vm3204, %v3196, %v3201
  %v3206 = vmul.f32 %v3191, %v3205
  %v3207 = vmul.f32 %v3192, %v3205
  %v3208 = vmul.f32 %v3193, %v3205
  %v3209 = vmul.f32 %v3194, %v3205
  %v3210 = vld [vmem:[%s14] sm:$0x1]
  %v3211 = vld [vmem:[#allocation2] sm:$0x1]
  %3213 = vset.pattern.permute.xlu0 0
  %3214 = vperm.xlu0 %3213, %v3211
  %v3215 = vpop.permute.xlu0 %3214
  %v3217 = vperm.slane %v3215, 0
  %v3219 = vsel %vm239, %v3210, 0
  %3221 = vmatpush.msra.mxu0 0.0
  %3222 = vmatpush.msra.mxu0 0.0
  %3223 = vmatpush.msra.mxu0 0.0
  %3224 = vmatpush.msra.mxu0 0.0
  %3225 = vmatpush.msra.mxu0 0.0
  %3226 = vmatpush.msra.mxu0 0.0
  %3227 = vmatpush.msra.mxu0 0.0
  %3228 = vmatpush.msra.mxu0 0.0
  %3229 = vmatpush.msra.mxu0 0.0
  %3230 = vmatpush.msra.mxu0 0.0
  %3231 = vmatpush.msra.mxu0 0.0
  %3232 = vmatpush.msra.mxu0 0.0
  %3233 = vmatpush.msra.mxu0 0.0
  %3234 = vmatpush.msra.mxu0 0.0
  %3235 = vmatpush.msra.mxu0 0.0
  %3236 = vmatpush.msra.mxu0 %v3206
  %3237 = vmatmul.f32.gmra.mxu0 %v3219
  %v3238 = vpop.f32.mrf.mxu0
  %v3239 = vadd.f32 %v3217, %v3238
  %3240 = vdwg.mxu0
  %3241 = vmatpush.msra.mxu0 0.0
  %3242 = vmatpush.msra.mxu0 0.0
  %3243 = vmatpush.msra.mxu0 0.0
  %3244 = vmatpush.msra.mxu0 0.0
  %3245 = vmatpush.msra.mxu0 0.0
  %3246 = vmatpush.msra.mxu0 0.0
  %3247 = vmatpush.msra.mxu0 0.0
  %3248 = vmatpush.msra.mxu0 0.0
  %3249 = vmatpush.msra.mxu0 0.0
  %3250 = vmatpush.msra.mxu0 0.0
  %3251 = vmatpush.msra.mxu0 0.0
  %3252 = vmatpush.msra.mxu0 0.0
  %3253 = vmatpush.msra.mxu0 0.0
  %3254 = vmatpush.msra.mxu0 0.0
  %3255 = vmatpush.msra.mxu0 0.0
  %3256 = vmatpush.msra.mxu0 %v3207
  %3257 = vmatmul.f32.gmra.mxu0 %v3219
  %v3258 = vpop.f32.mrf.mxu0
  %v3259 = vadd.f32 %v3217, %v3258
  %3260 = vdwg.mxu0
  %3261 = vmatpush.msra.mxu0 0.0
  %3262 = vmatpush.msra.mxu0 0.0
  %3263 = vmatpush.msra.mxu0 0.0
  %3264 = vmatpush.msra.mxu0 0.0
  %3265 = vmatpush.msra.mxu0 0.0
  %3266 = vmatpush.msra.mxu0 0.0
  %3267 = vmatpush.msra.mxu0 0.0
  %3268 = vmatpush.msra.mxu0 0.0
  %3269 = vmatpush.msra.mxu0 0.0
  %3270 = vmatpush.msra.mxu0 0.0
  %3271 = vmatpush.msra.mxu0 0.0
  %3272 = vmatpush.msra.mxu0 0.0
  %3273 = vmatpush.msra.mxu0 0.0
  %3274 = vmatpush.msra.mxu0 0.0
  %3275 = vmatpush.msra.mxu0 0.0
  %3276 = vmatpush.msra.mxu0 %v3208
  %3277 = vmatmul.f32.gmra.mxu0 %v3219
  %v3278 = vpop.f32.mrf.mxu0
  %v3279 = vadd.f32 %v3217, %v3278
  %3280 = vdwg.mxu0
  %3281 = vmatpush.msra.mxu0 0.0
  %3282 = vmatpush.msra.mxu0 0.0
  %3283 = vmatpush.msra.mxu0 0.0
  %3284 = vmatpush.msra.mxu0 0.0
  %3285 = vmatpush.msra.mxu0 0.0
  %3286 = vmatpush.msra.mxu0 0.0
  %3287 = vmatpush.msra.mxu0 0.0
  %3288 = vmatpush.msra.mxu0 0.0
  %3289 = vmatpush.msra.mxu0 0.0
  %3290 = vmatpush.msra.mxu0 0.0
  %3291 = vmatpush.msra.mxu0 0.0
  %3292 = vmatpush.msra.mxu0 0.0
  %3293 = vmatpush.msra.mxu0 0.0
  %3294 = vmatpush.msra.mxu0 0.0
  %3295 = vmatpush.msra.mxu0 0.0
  %3296 = vmatpush.msra.mxu0 %v3209
  %3297 = vmatmul.f32.gmra.mxu0 %v3219
  %v3298 = vpop.f32.mrf.mxu0
  %v3299 = vadd.f32 %v3217, %v3298
  %3300 = vdwg.mxu0
  %v3301 = vsub.f32 0.0, %v3239
  %v3302 = vsub.f32 0.0, %v3259
  %v3303 = vsub.f32 0.0, %v3279
  %v3304 = vsub.f32 0.0, %v3299
  %v3305 = vmul.f32 %v3301, 1.442695
  %v3306 = vpow.pop %v3305
  %v3307 = vmul.f32 %v3302, 1.442695
  %v3308 = vpow.pop %v3307
  %v3309 = vmul.f32 %v3303, 1.442695
  %v3310 = vpow.pop %v3309
  %v3311 = vmul.f32 %v3304, 1.442695
  %v3312 = vpow.pop %v3311
  %v3313 = vadd.f32 %v3306, 1.0
  %v3314 = vadd.f32 %v3308, 1.0
  %v3315 = vadd.f32 %v3310, 1.0
  %v3316 = vadd.f32 %v3312, 1.0
  %v3317 = vrcp.pop %v3313
  %v3318 = vmul.f32 %v3313, %v3317
  %v3319 = vsub.f32 1.0, %v3318
  %v3320 = vmul.f32 %v3317, %v3319
  %v3321 = vadd.f32 %v3317, %v3320
  %vm3322 = vweird.f32 %v3313
  %vm3323 = vweird.f32 %v3317
  %vm3324 = vmor %vm3322, %vm3323
  %v3325 = vsel %vm3324, %v3317, %v3321
  %v3326 = vand.u32 2147483647, %v3313
  %vm3327 = vcmp.eq.f32.partialorder %v3326, 8.507059e+37
  %v3328 = vand.u32 %v3313, 2147483648
  %v3329 = vor.u32 1.1754944e-38, %v3328
  %v3330 = vsel %vm3327, %v3329, %v3325
  %v3331 = vmul.f32 1.0, %v3330
  %v3332 = vrcp.pop %v3314
  %v3333 = vmul.f32 %v3314, %v3332
  %v3334 = vsub.f32 1.0, %v3333
  %v3335 = vmul.f32 %v3332, %v3334
  %v3336 = vadd.f32 %v3332, %v3335
  %vm3337 = vweird.f32 %v3314
  %vm3338 = vweird.f32 %v3332
  %vm3339 = vmor %vm3337, %vm3338
  %v3340 = vsel %vm3339, %v3332, %v3336
  %v3341 = vand.u32 2147483647, %v3314
  %vm3342 = vcmp.eq.f32.partialorder %v3341, 8.507059e+37
  %v3343 = vand.u32 %v3314, 2147483648
  %v3344 = vor.u32 1.1754944e-38, %v3343
  %v3345 = vsel %vm3342, %v3344, %v3340
  %v3346 = vmul.f32 1.0, %v3345
  %v3347 = vrcp.pop %v3315
  %v3348 = vmul.f32 %v3315, %v3347
  %v3349 = vsub.f32 1.0, %v3348
  %v3350 = vmul.f32 %v3347, %v3349
  %v3351 = vadd.f32 %v3347, %v3350
  %vm3352 = vweird.f32 %v3315
  %vm3353 = vweird.f32 %v3347
  %vm3354 = vmor %vm3352, %vm3353
  %v3355 = vsel %vm3354, %v3347, %v3351
  %v3356 = vand.u32 2147483647, %v3315
  %vm3357 = vcmp.eq.f32.partialorder %v3356, 8.507059e+37
  %v3358 = vand.u32 %v3315, 2147483648
  %v3359 = vor.u32 1.1754944e-38, %v3358
  %v3360 = vsel %vm3357, %v3359, %v3355
  %v3361 = vmul.f32 1.0, %v3360
  %v3362 = vrcp.pop %v3316
  %v3363 = vmul.f32 %v3316, %v3362
  %v3364 = vsub.f32 1.0, %v3363
  %v3365 = vmul.f32 %v3362, %v3364
  %v3366 = vadd.f32 %v3362, %v3365
  %vm3367 = vweird.f32 %v3316
  %vm3368 = vweird.f32 %v3362
  %vm3369 = vmor %vm3367, %vm3368
  %v3370 = vsel %vm3369, %v3362, %v3366
  %v3371 = vand.u32 2147483647, %v3316
  %vm3372 = vcmp.eq.f32.partialorder %v3371, 8.507059e+37
  %v3373 = vand.u32 %v3316, 2147483648
  %v3374 = vor.u32 1.1754944e-38, %v3373
  %v3375 = vsel %vm3372, %v3374, %v3370
  %v3376 = vmul.f32 1.0, %v3375
  %v3377 = vperm.slane %v3331, 0
  %v3378 = vperm.slane %v3346, 0
  %v3379 = vperm.slane %v3361, 0
  %v3380 = vperm.slane %v3376, 0
  %v3381 = vmul.f32 %v177, %v3377
  %v3382 = vmul.f32 %v178, %v3378
  %v3383 = vmul.f32 %v179, %v3379
  %v3384 = vmul.f32 %v180, %v3380
  %v3385 = vadd.f32 %v173, %v3381
  %v3386 = vadd.f32 %v174, %v3382
  %v3387 = vadd.f32 %v175, %v3383
  %v3388 = vadd.f32 %v176, %v3384
  %v3389 = vld [vmem:[%s9] sm:$0xff]
  %v3390 = vld [vmem:[%s8] sm:$0xff]
  %v3391 = vld [vmem:[%s8 + $0x8] sm:$0xff]
  %v3392 = vld [vmem:[%s8 + $0x10] sm:$0xff]
  %v3393 = vld [vmem:[%s8 + $0x18] sm:$0xff]
  %v3394 = vld [vmem:[%s8 + $0x20] sm:$0xff]
  %v3395 = vld [vmem:[%s8 + $0x28] sm:$0xff]
  %v3396 = vld [vmem:[%s8 + $0x30] sm:$0xff]
  %v3397 = vld [vmem:[%s8 + $0x38] sm:$0xff]
  %v3398 = vld [vmem:[%s8 + $0x40] sm:$0xff]
  %3399 = vrot.lane.b32.xlu0 %v181, 17
  %v3400 = vpop.permute.xlu0 %3399
  %3401 = vrot.lane.b32.xlu0 %v182, 17
  %v3402 = vpop.permute.xlu0 %3401
  %3403 = vrot.lane.b32.xlu0 %v183, 17
  %v3404 = vpop.permute.xlu0 %3403
  %3405 = vrot.lane.b32.xlu0 %v184, 17
  %v3406 = vpop.permute.xlu0 %3405
  %v3407 = vsel %vm213, %v3404, %v3406
  %v3408 = vsel %vm213, %v3402, %v3404
  %v3409 = vsel %vm213, %v3400, %v3402
  %v3410 = vsel %vm213, %v3406, %v3400
  %v3411 = vmul.f32 %v3410, %v77
  %v3412 = vmul.f32 %v3409, %v78
  %v3413 = vmul.f32 %v3408, %v79
  %v3414 = vmul.f32 %v3407, %v80
  %3415 = vrot.lane.b32.xlu0 %v181, 16
  %v3416 = vpop.permute.xlu0 %3415
  %3417 = vrot.lane.b32.xlu0 %v182, 16
  %v3418 = vpop.permute.xlu0 %3417
  %3419 = vrot.lane.b32.xlu0 %v183, 16
  %v3420 = vpop.permute.xlu0 %3419
  %3421 = vrot.lane.b32.xlu0 %v184, 16
  %v3422 = vpop.permute.xlu0 %3421
  %v3423 = vsel %vm230, %v3420, %v3422
  %v3424 = vsel %vm230, %v3418, %v3420
  %v3425 = vsel %vm230, %v3416, %v3418
  %v3426 = vsel %vm230, %v3422, %v3416
  %v3427 = vmul.f32 %v3426, %v88
  %v3428 = vmul.f32 %v3425, %v89
  %v3429 = vmul.f32 %v3424, %v90
  %v3430 = vmul.f32 %v3423, %v91
  %v3432 = vsel %vm239, %v3391, 0
  %3434 = vmatpush.msra.mxu0 0.0
  %3435 = vmatpush.msra.mxu0 0.0
  %3436 = vmatpush.msra.mxu0 0.0
  %3437 = vmatpush.msra.mxu0 0.0
  %3438 = vmatpush.msra.mxu0 0.0
  %3439 = vmatpush.msra.mxu0 0.0
  %3440 = vmatpush.msra.mxu0 0.0
  %3441 = vmatpush.msra.mxu0 0.0
  %3442 = vmatpush.msra.mxu0 0.0
  %3443 = vmatpush.msra.mxu0 0.0
  %3444 = vmatpush.msra.mxu0 0.0
  %3445 = vmatpush.msra.mxu0 0.0
  %3446 = vmatpush.msra.mxu0 0.0
  %3447 = vmatpush.msra.mxu0 0.0
  %3448 = vmatpush.msra.mxu0 0.0
  %3449 = vmatpush.msra.mxu0 %v3427
  %3450 = vmatmul.f32.gmra.mxu0 %v3432
  %v3451 = vpop.f32.mrf.mxu0
  %v3452 = vadd.f32 0.0, %v3451
  %3453 = vdwg.mxu0
  %3454 = vmatpush.msra.mxu0 0.0
  %3455 = vmatpush.msra.mxu0 0.0
  %3456 = vmatpush.msra.mxu0 0.0
  %3457 = vmatpush.msra.mxu0 0.0
  %3458 = vmatpush.msra.mxu0 0.0
  %3459 = vmatpush.msra.mxu0 0.0
  %3460 = vmatpush.msra.mxu0 0.0
  %3461 = vmatpush.msra.mxu0 0.0
  %3462 = vmatpush.msra.mxu0 0.0
  %3463 = vmatpush.msra.mxu0 0.0
  %3464 = vmatpush.msra.mxu0 0.0
  %3465 = vmatpush.msra.mxu0 0.0
  %3466 = vmatpush.msra.mxu0 0.0
  %3467 = vmatpush.msra.mxu0 0.0
  %3468 = vmatpush.msra.mxu0 0.0
  %3469 = vmatpush.msra.mxu0 %v3428
  %3470 = vmatmul.f32.gmra.mxu0 %v3432
  %v3471 = vpop.f32.mrf.mxu0
  %v3472 = vadd.f32 0.0, %v3471
  %3473 = vdwg.mxu0
  %3474 = vmatpush.msra.mxu0 0.0
  %3475 = vmatpush.msra.mxu0 0.0
  %3476 = vmatpush.msra.mxu0 0.0
  %3477 = vmatpush.msra.mxu0 0.0
  %3478 = vmatpush.msra.mxu0 0.0
  %3479 = vmatpush.msra.mxu0 0.0
  %3480 = vmatpush.msra.mxu0 0.0
  %3481 = vmatpush.msra.mxu0 0.0
  %3482 = vmatpush.msra.mxu0 0.0
  %3483 = vmatpush.msra.mxu0 0.0
  %3484 = vmatpush.msra.mxu0 0.0
  %3485 = vmatpush.msra.mxu0 0.0
  %3486 = vmatpush.msra.mxu0 0.0
  %3487 = vmatpush.msra.mxu0 0.0
  %3488 = vmatpush.msra.mxu0 0.0
  %3489 = vmatpush.msra.mxu0 %v3429
  %3490 = vmatmul.f32.gmra.mxu0 %v3432
  %v3491 = vpop.f32.mrf.mxu0
  %v3492 = vadd.f32 0.0, %v3491
  %3493 = vdwg.mxu0
  %3494 = vmatpush.msra.mxu0 0.0
  %3495 = vmatpush.msra.mxu0 0.0
  %3496 = vmatpush.msra.mxu0 0.0
  %3497 = vmatpush.msra.mxu0 0.0
  %3498 = vmatpush.msra.mxu0 0.0
  %3499 = vmatpush.msra.mxu0 0.0
  %3500 = vmatpush.msra.mxu0 0.0
  %3501 = vmatpush.msra.mxu0 0.0
  %3502 = vmatpush.msra.mxu0 0.0
  %3503 = vmatpush.msra.mxu0 0.0
  %3504 = vmatpush.msra.mxu0 0.0
  %3505 = vmatpush.msra.mxu0 0.0
  %3506 = vmatpush.msra.mxu0 0.0
  %3507 = vmatpush.msra.mxu0 0.0
  %3508 = vmatpush.msra.mxu0 0.0
  %3509 = vmatpush.msra.mxu0 %v3430
  %3510 = vmatmul.f32.gmra.mxu0 %v3432
  %v3511 = vpop.f32.mrf.mxu0
  %v3512 = vadd.f32 0.0, %v3511
  %3513 = vdwg.mxu0
  %v3515 = vsel %vm239, %v3390, 0
  %3517 = vmatpush.msra.mxu0 0.0
  %3518 = vmatpush.msra.mxu0 0.0
  %3519 = vmatpush.msra.mxu0 0.0
  %3520 = vmatpush.msra.mxu0 0.0
  %3521 = vmatpush.msra.mxu0 0.0
  %3522 = vmatpush.msra.mxu0 0.0
  %3523 = vmatpush.msra.mxu0 0.0
  %3524 = vmatpush.msra.mxu0 0.0
  %3525 = vmatpush.msra.mxu0 0.0
  %3526 = vmatpush.msra.mxu0 0.0
  %3527 = vmatpush.msra.mxu0 0.0
  %3528 = vmatpush.msra.mxu0 0.0
  %3529 = vmatpush.msra.mxu0 0.0
  %3530 = vmatpush.msra.mxu0 0.0
  %3531 = vmatpush.msra.mxu0 0.0
  %3532 = vmatpush.msra.mxu0 %v3411
  %3533 = vmatmul.f32.gmra.mxu0 %v3515
  %v3534 = vpop.f32.mrf.mxu0
  %v3535 = vadd.f32 %v3452, %v3534
  %3536 = vdwg.mxu0
  %3537 = vmatpush.msra.mxu0 0.0
  %3538 = vmatpush.msra.mxu0 0.0
  %3539 = vmatpush.msra.mxu0 0.0
  %3540 = vmatpush.msra.mxu0 0.0
  %3541 = vmatpush.msra.mxu0 0.0
  %3542 = vmatpush.msra.mxu0 0.0
  %3543 = vmatpush.msra.mxu0 0.0
  %3544 = vmatpush.msra.mxu0 0.0
  %3545 = vmatpush.msra.mxu0 0.0
  %3546 = vmatpush.msra.mxu0 0.0
  %3547 = vmatpush.msra.mxu0 0.0
  %3548 = vmatpush.msra.mxu0 0.0
  %3549 = vmatpush.msra.mxu0 0.0
  %3550 = vmatpush.msra.mxu0 0.0
  %3551 = vmatpush.msra.mxu0 0.0
  %3552 = vmatpush.msra.mxu0 %v3412
  %3553 = vmatmul.f32.gmra.mxu0 %v3515
  %v3554 = vpop.f32.mrf.mxu0
  %v3555 = vadd.f32 %v3472, %v3554
  %3556 = vdwg.mxu0
  %3557 = vmatpush.msra.mxu0 0.0
  %3558 = vmatpush.msra.mxu0 0.0
  %3559 = vmatpush.msra.mxu0 0.0
  %3560 = vmatpush.msra.mxu0 0.0
  %3561 = vmatpush.msra.mxu0 0.0
  %3562 = vmatpush.msra.mxu0 0.0
  %3563 = vmatpush.msra.mxu0 0.0
  %3564 = vmatpush.msra.mxu0 0.0
  %3565 = vmatpush.msra.mxu0 0.0
  %3566 = vmatpush.msra.mxu0 0.0
  %3567 = vmatpush.msra.mxu0 0.0
  %3568 = vmatpush.msra.mxu0 0.0
  %3569 = vmatpush.msra.mxu0 0.0
  %3570 = vmatpush.msra.mxu0 0.0
  %3571 = vmatpush.msra.mxu0 0.0
  %3572 = vmatpush.msra.mxu0 %v3413
  %3573 = vmatmul.f32.gmra.mxu0 %v3515
  %v3574 = vpop.f32.mrf.mxu0
  %v3575 = vadd.f32 %v3492, %v3574
  %3576 = vdwg.mxu0
  %3577 = vmatpush.msra.mxu0 0.0
  %3578 = vmatpush.msra.mxu0 0.0
  %3579 = vmatpush.msra.mxu0 0.0
  %3580 = vmatpush.msra.mxu0 0.0
  %3581 = vmatpush.msra.mxu0 0.0
  %3582 = vmatpush.msra.mxu0 0.0
  %3583 = vmatpush.msra.mxu0 0.0
  %3584 = vmatpush.msra.mxu0 0.0
  %3585 = vmatpush.msra.mxu0 0.0
  %3586 = vmatpush.msra.mxu0 0.0
  %3587 = vmatpush.msra.mxu0 0.0
  %3588 = vmatpush.msra.mxu0 0.0
  %3589 = vmatpush.msra.mxu0 0.0
  %3590 = vmatpush.msra.mxu0 0.0
  %3591 = vmatpush.msra.mxu0 0.0
  %3592 = vmatpush.msra.mxu0 %v3414
  %3593 = vmatmul.f32.gmra.mxu0 %v3515
  %v3594 = vpop.f32.mrf.mxu0
  %v3595 = vadd.f32 %v3512, %v3594
  %3596 = vdwg.mxu0
  %3597 = vrot.lane.b32.xlu0 %v181, 15
  %v3598 = vpop.permute.xlu0 %3597
  %3599 = vrot.lane.b32.xlu0 %v182, 15
  %v3600 = vpop.permute.xlu0 %3599
  %3601 = vrot.lane.b32.xlu0 %v183, 15
  %v3602 = vpop.permute.xlu0 %3601
  %3603 = vrot.lane.b32.xlu0 %v184, 15
  %v3604 = vpop.permute.xlu0 %3603
  %v3605 = vsel %vm444, %v3602, %v3604
  %v3606 = vsel %vm444, %v3600, %v3602
  %v3607 = vsel %vm444, %v3598, %v3600
  %v3608 = vsel %vm444, %v3604, %v3598
  %v3609 = vmul.f32 %v3608, %v104
  %v3610 = vmul.f32 %v3607, %v105
  %v3611 = vmul.f32 %v3606, %v106
  %v3612 = vmul.f32 %v3605, %v107
  %v3614 = vsel %vm239, %v3392, 0
  %3616 = vmatpush.msra.mxu0 0.0
  %3617 = vmatpush.msra.mxu0 0.0
  %3618 = vmatpush.msra.mxu0 0.0
  %3619 = vmatpush.msra.mxu0 0.0
  %3620 = vmatpush.msra.mxu0 0.0
  %3621 = vmatpush.msra.mxu0 0.0
  %3622 = vmatpush.msra.mxu0 0.0
  %3623 = vmatpush.msra.mxu0 0.0
  %3624 = vmatpush.msra.mxu0 0.0
  %3625 = vmatpush.msra.mxu0 0.0
  %3626 = vmatpush.msra.mxu0 0.0
  %3627 = vmatpush.msra.mxu0 0.0
  %3628 = vmatpush.msra.mxu0 0.0
  %3629 = vmatpush.msra.mxu0 0.0
  %3630 = vmatpush.msra.mxu0 0.0
  %3631 = vmatpush.msra.mxu0 %v3609
  %3632 = vmatmul.f32.gmra.mxu0 %v3614
  %v3633 = vpop.f32.mrf.mxu0
  %v3634 = vadd.f32 0.0, %v3633
  %3635 = vdwg.mxu0
  %3636 = vmatpush.msra.mxu0 0.0
  %3637 = vmatpush.msra.mxu0 0.0
  %3638 = vmatpush.msra.mxu0 0.0
  %3639 = vmatpush.msra.mxu0 0.0
  %3640 = vmatpush.msra.mxu0 0.0
  %3641 = vmatpush.msra.mxu0 0.0
  %3642 = vmatpush.msra.mxu0 0.0
  %3643 = vmatpush.msra.mxu0 0.0
  %3644 = vmatpush.msra.mxu0 0.0
  %3645 = vmatpush.msra.mxu0 0.0
  %3646 = vmatpush.msra.mxu0 0.0
  %3647 = vmatpush.msra.mxu0 0.0
  %3648 = vmatpush.msra.mxu0 0.0
  %3649 = vmatpush.msra.mxu0 0.0
  %3650 = vmatpush.msra.mxu0 0.0
  %3651 = vmatpush.msra.mxu0 %v3610
  %3652 = vmatmul.f32.gmra.mxu0 %v3614
  %v3653 = vpop.f32.mrf.mxu0
  %v3654 = vadd.f32 0.0, %v3653
  %3655 = vdwg.mxu0
  %3656 = vmatpush.msra.mxu0 0.0
  %3657 = vmatpush.msra.mxu0 0.0
  %3658 = vmatpush.msra.mxu0 0.0
  %3659 = vmatpush.msra.mxu0 0.0
  %3660 = vmatpush.msra.mxu0 0.0
  %3661 = vmatpush.msra.mxu0 0.0
  %3662 = vmatpush.msra.mxu0 0.0
  %3663 = vmatpush.msra.mxu0 0.0
  %3664 = vmatpush.msra.mxu0 0.0
  %3665 = vmatpush.msra.mxu0 0.0
  %3666 = vmatpush.msra.mxu0 0.0
  %3667 = vmatpush.msra.mxu0 0.0
  %3668 = vmatpush.msra.mxu0 0.0
  %3669 = vmatpush.msra.mxu0 0.0
  %3670 = vmatpush.msra.mxu0 0.0
  %3671 = vmatpush.msra.mxu0 %v3611
  %3672 = vmatmul.f32.gmra.mxu0 %v3614
  %v3673 = vpop.f32.mrf.mxu0
  %v3674 = vadd.f32 0.0, %v3673
  %3675 = vdwg.mxu0
  %3676 = vmatpush.msra.mxu0 0.0
  %3677 = vmatpush.msra.mxu0 0.0
  %3678 = vmatpush.msra.mxu0 0.0
  %3679 = vmatpush.msra.mxu0 0.0
  %3680 = vmatpush.msra.mxu0 0.0
  %3681 = vmatpush.msra.mxu0 0.0
  %3682 = vmatpush.msra.mxu0 0.0
  %3683 = vmatpush.msra.mxu0 0.0
  %3684 = vmatpush.msra.mxu0 0.0
  %3685 = vmatpush.msra.mxu0 0.0
  %3686 = vmatpush.msra.mxu0 0.0
  %3687 = vmatpush.msra.mxu0 0.0
  %3688 = vmatpush.msra.mxu0 0.0
  %3689 = vmatpush.msra.mxu0 0.0
  %3690 = vmatpush.msra.mxu0 0.0
  %3691 = vmatpush.msra.mxu0 %v3612
  %3692 = vmatmul.f32.gmra.mxu0 %v3614
  %v3693 = vpop.f32.mrf.mxu0
  %v3694 = vadd.f32 0.0, %v3693
  %3695 = vdwg.mxu0
  %v3696 = vadd.f32 %v3535, %v3634
  %v3697 = vadd.f32 %v3555, %v3654
  %v3698 = vadd.f32 %v3575, %v3674
  %v3699 = vadd.f32 %v3595, %v3694
  %3700 = vrot.lane.b32.xlu0 %v181, 1
  %v3701 = vpop.permute.xlu0 %3700
  %3702 = vrot.lane.b32.xlu0 %v182, 1
  %v3703 = vpop.permute.xlu0 %3702
  %3704 = vrot.lane.b32.xlu0 %v183, 1
  %v3705 = vpop.permute.xlu0 %3704
  %3706 = vrot.lane.b32.xlu0 %v184, 1
  %v3707 = vpop.permute.xlu0 %3706
  %v3708 = vsel %vm567, %v3705, %v3707
  %v3709 = vsel %vm567, %v3703, %v3705
  %v3710 = vsel %vm567, %v3701, %v3703
  %v3711 = vsel %vm567, %v3707, %v3701
  %v3712 = vmul.f32 %v3711, %v115
  %v3713 = vmul.f32 %v3710, %v116
  %v3714 = vmul.f32 %v3709, %v117
  %v3715 = vmul.f32 %v3708, %v118
  %v3717 = vsel %vm239, %v3393, 0
  %3719 = vmatpush.msra.mxu0 0.0
  %3720 = vmatpush.msra.mxu0 0.0
  %3721 = vmatpush.msra.mxu0 0.0
  %3722 = vmatpush.msra.mxu0 0.0
  %3723 = vmatpush.msra.mxu0 0.0
  %3724 = vmatpush.msra.mxu0 0.0
  %3725 = vmatpush.msra.mxu0 0.0
  %3726 = vmatpush.msra.mxu0 0.0
  %3727 = vmatpush.msra.mxu0 0.0
  %3728 = vmatpush.msra.mxu0 0.0
  %3729 = vmatpush.msra.mxu0 0.0
  %3730 = vmatpush.msra.mxu0 0.0
  %3731 = vmatpush.msra.mxu0 0.0
  %3732 = vmatpush.msra.mxu0 0.0
  %3733 = vmatpush.msra.mxu0 0.0
  %3734 = vmatpush.msra.mxu0 %v3712
  %3735 = vmatmul.f32.gmra.mxu0 %v3717
  %v3736 = vpop.f32.mrf.mxu0
  %v3737 = vadd.f32 0.0, %v3736
  %3738 = vdwg.mxu0
  %3739 = vmatpush.msra.mxu0 0.0
  %3740 = vmatpush.msra.mxu0 0.0
  %3741 = vmatpush.msra.mxu0 0.0
  %3742 = vmatpush.msra.mxu0 0.0
  %3743 = vmatpush.msra.mxu0 0.0
  %3744 = vmatpush.msra.mxu0 0.0
  %3745 = vmatpush.msra.mxu0 0.0
  %3746 = vmatpush.msra.mxu0 0.0
  %3747 = vmatpush.msra.mxu0 0.0
  %3748 = vmatpush.msra.mxu0 0.0
  %3749 = vmatpush.msra.mxu0 0.0
  %3750 = vmatpush.msra.mxu0 0.0
  %3751 = vmatpush.msra.mxu0 0.0
  %3752 = vmatpush.msra.mxu0 0.0
  %3753 = vmatpush.msra.mxu0 0.0
  %3754 = vmatpush.msra.mxu0 %v3713
  %3755 = vmatmul.f32.gmra.mxu0 %v3717
  %v3756 = vpop.f32.mrf.mxu0
  %v3757 = vadd.f32 0.0, %v3756
  %3758 = vdwg.mxu0
  %3759 = vmatpush.msra.mxu0 0.0
  %3760 = vmatpush.msra.mxu0 0.0
  %3761 = vmatpush.msra.mxu0 0.0
  %3762 = vmatpush.msra.mxu0 0.0
  %3763 = vmatpush.msra.mxu0 0.0
  %3764 = vmatpush.msra.mxu0 0.0
  %3765 = vmatpush.msra.mxu0 0.0
  %3766 = vmatpush.msra.mxu0 0.0
  %3767 = vmatpush.msra.mxu0 0.0
  %3768 = vmatpush.msra.mxu0 0.0
  %3769 = vmatpush.msra.mxu0 0.0
  %3770 = vmatpush.msra.mxu0 0.0
  %3771 = vmatpush.msra.mxu0 0.0
  %3772 = vmatpush.msra.mxu0 0.0
  %3773 = vmatpush.msra.mxu0 0.0
  %3774 = vmatpush.msra.mxu0 %v3714
  %3775 = vmatmul.f32.gmra.mxu0 %v3717
  %v3776 = vpop.f32.mrf.mxu0
  %v3777 = vadd.f32 0.0, %v3776
  %3778 = vdwg.mxu0
  %3779 = vmatpush.msra.mxu0 0.0
  %3780 = vmatpush.msra.mxu0 0.0
  %3781 = vmatpush.msra.mxu0 0.0
  %3782 = vmatpush.msra.mxu0 0.0
  %3783 = vmatpush.msra.mxu0 0.0
  %3784 = vmatpush.msra.mxu0 0.0
  %3785 = vmatpush.msra.mxu0 0.0
  %3786 = vmatpush.msra.mxu0 0.0
  %3787 = vmatpush.msra.mxu0 0.0
  %3788 = vmatpush.msra.mxu0 0.0
  %3789 = vmatpush.msra.mxu0 0.0
  %3790 = vmatpush.msra.mxu0 0.0
  %3791 = vmatpush.msra.mxu0 0.0
  %3792 = vmatpush.msra.mxu0 0.0
  %3793 = vmatpush.msra.mxu0 0.0
  %3794 = vmatpush.msra.mxu0 %v3715
  %3795 = vmatmul.f32.gmra.mxu0 %v3717
  %v3796 = vpop.f32.mrf.mxu0
  %v3797 = vadd.f32 0.0, %v3796
  %3798 = vdwg.mxu0
  %v3799 = vadd.f32 %v3696, %v3737
  %v3800 = vadd.f32 %v3697, %v3757
  %v3801 = vadd.f32 %v3698, %v3777
  %v3802 = vadd.f32 %v3699, %v3797
  %v3804 = vsel %vm239, %v3394, 0
  %3806 = vmatpush.msra.mxu0 0.0
  %3807 = vmatpush.msra.mxu0 0.0
  %3808 = vmatpush.msra.mxu0 0.0
  %3809 = vmatpush.msra.mxu0 0.0
  %3810 = vmatpush.msra.mxu0 0.0
  %3811 = vmatpush.msra.mxu0 0.0
  %3812 = vmatpush.msra.mxu0 0.0
  %3813 = vmatpush.msra.mxu0 0.0
  %3814 = vmatpush.msra.mxu0 0.0
  %3815 = vmatpush.msra.mxu0 0.0
  %3816 = vmatpush.msra.mxu0 0.0
  %3817 = vmatpush.msra.mxu0 0.0
  %3818 = vmatpush.msra.mxu0 0.0
  %3819 = vmatpush.msra.mxu0 0.0
  %3820 = vmatpush.msra.mxu0 0.0
  %3821 = vmatpush.msra.mxu0 %v181
  %3822 = vmatmul.f32.gmra.mxu0 %v3804
  %v3823 = vpop.f32.mrf.mxu0
  %v3824 = vadd.f32 0.0, %v3823
  %3825 = vdwg.mxu0
  %3826 = vmatpush.msra.mxu0 0.0
  %3827 = vmatpush.msra.mxu0 0.0
  %3828 = vmatpush.msra.mxu0 0.0
  %3829 = vmatpush.msra.mxu0 0.0
  %3830 = vmatpush.msra.mxu0 0.0
  %3831 = vmatpush.msra.mxu0 0.0
  %3832 = vmatpush.msra.mxu0 0.0
  %3833 = vmatpush.msra.mxu0 0.0
  %3834 = vmatpush.msra.mxu0 0.0
  %3835 = vmatpush.msra.mxu0 0.0
  %3836 = vmatpush.msra.mxu0 0.0
  %3837 = vmatpush.msra.mxu0 0.0
  %3838 = vmatpush.msra.mxu0 0.0
  %3839 = vmatpush.msra.mxu0 0.0
  %3840 = vmatpush.msra.mxu0 0.0
  %3841 = vmatpush.msra.mxu0 %v182
  %3842 = vmatmul.f32.gmra.mxu0 %v3804
  %v3843 = vpop.f32.mrf.mxu0
  %v3844 = vadd.f32 0.0, %v3843
  %3845 = vdwg.mxu0
  %3846 = vmatpush.msra.mxu0 0.0
  %3847 = vmatpush.msra.mxu0 0.0
  %3848 = vmatpush.msra.mxu0 0.0
  %3849 = vmatpush.msra.mxu0 0.0
  %3850 = vmatpush.msra.mxu0 0.0
  %3851 = vmatpush.msra.mxu0 0.0
  %3852 = vmatpush.msra.mxu0 0.0
  %3853 = vmatpush.msra.mxu0 0.0
  %3854 = vmatpush.msra.mxu0 0.0
  %3855 = vmatpush.msra.mxu0 0.0
  %3856 = vmatpush.msra.mxu0 0.0
  %3857 = vmatpush.msra.mxu0 0.0
  %3858 = vmatpush.msra.mxu0 0.0
  %3859 = vmatpush.msra.mxu0 0.0
  %3860 = vmatpush.msra.mxu0 0.0
  %3861 = vmatpush.msra.mxu0 %v183
  %3862 = vmatmul.f32.gmra.mxu0 %v3804
  %v3863 = vpop.f32.mrf.mxu0
  %v3864 = vadd.f32 0.0, %v3863
  %3865 = vdwg.mxu0
  %3866 = vmatpush.msra.mxu0 0.0
  %3867 = vmatpush.msra.mxu0 0.0
  %3868 = vmatpush.msra.mxu0 0.0
  %3869 = vmatpush.msra.mxu0 0.0
  %3870 = vmatpush.msra.mxu0 0.0
  %3871 = vmatpush.msra.mxu0 0.0
  %3872 = vmatpush.msra.mxu0 0.0
  %3873 = vmatpush.msra.mxu0 0.0
  %3874 = vmatpush.msra.mxu0 0.0
  %3875 = vmatpush.msra.mxu0 0.0
  %3876 = vmatpush.msra.mxu0 0.0
  %3877 = vmatpush.msra.mxu0 0.0
  %3878 = vmatpush.msra.mxu0 0.0
  %3879 = vmatpush.msra.mxu0 0.0
  %3880 = vmatpush.msra.mxu0 0.0
  %3881 = vmatpush.msra.mxu0 %v184
  %3882 = vmatmul.f32.gmra.mxu0 %v3804
  %v3883 = vpop.f32.mrf.mxu0
  %v3884 = vadd.f32 0.0, %v3883
  %3885 = vdwg.mxu0
  %v3886 = vadd.f32 %v3799, %v3824
  %v3887 = vadd.f32 %v3800, %v3844
  %v3888 = vadd.f32 %v3801, %v3864
  %v3889 = vadd.f32 %v3802, %v3884
  %3890 = vrot.lane.b32.xlu0 %v181, 127
  %v3891 = vpop.permute.xlu0 %3890
  %3892 = vrot.lane.b32.xlu0 %v182, 127
  %v3893 = vpop.permute.xlu0 %3892
  %3894 = vrot.lane.b32.xlu0 %v183, 127
  %v3895 = vpop.permute.xlu0 %3894
  %3896 = vrot.lane.b32.xlu0 %v184, 127
  %v3897 = vpop.permute.xlu0 %3896
  %v3898 = vsel %vm796, %v3895, %v3897
  %v3899 = vsel %vm796, %v3893, %v3895
  %v3900 = vsel %vm796, %v3891, %v3893
  %v3901 = vsel %vm796, %v3897, %v3891
  %v3902 = vmul.f32 %v3900, %v126
  %v3903 = vmul.f32 %v3899, %v127
  %v3904 = vmul.f32 %v3898, %v128
  %v3905 = vmul.f32 %v3901, %v129
  %v3907 = vsel %vm239, %v3395, 0
  %3909 = vmatpush.msra.mxu0 0.0
  %3910 = vmatpush.msra.mxu0 0.0
  %3911 = vmatpush.msra.mxu0 0.0
  %3912 = vmatpush.msra.mxu0 0.0
  %3913 = vmatpush.msra.mxu0 0.0
  %3914 = vmatpush.msra.mxu0 0.0
  %3915 = vmatpush.msra.mxu0 0.0
  %3916 = vmatpush.msra.mxu0 0.0
  %3917 = vmatpush.msra.mxu0 0.0
  %3918 = vmatpush.msra.mxu0 0.0
  %3919 = vmatpush.msra.mxu0 0.0
  %3920 = vmatpush.msra.mxu0 0.0
  %3921 = vmatpush.msra.mxu0 0.0
  %3922 = vmatpush.msra.mxu0 0.0
  %3923 = vmatpush.msra.mxu0 0.0
  %3924 = vmatpush.msra.mxu0 %v3902
  %3925 = vmatmul.f32.gmra.mxu0 %v3907
  %v3926 = vpop.f32.mrf.mxu0
  %v3927 = vadd.f32 0.0, %v3926
  %3928 = vdwg.mxu0
  %3929 = vmatpush.msra.mxu0 0.0
  %3930 = vmatpush.msra.mxu0 0.0
  %3931 = vmatpush.msra.mxu0 0.0
  %3932 = vmatpush.msra.mxu0 0.0
  %3933 = vmatpush.msra.mxu0 0.0
  %3934 = vmatpush.msra.mxu0 0.0
  %3935 = vmatpush.msra.mxu0 0.0
  %3936 = vmatpush.msra.mxu0 0.0
  %3937 = vmatpush.msra.mxu0 0.0
  %3938 = vmatpush.msra.mxu0 0.0
  %3939 = vmatpush.msra.mxu0 0.0
  %3940 = vmatpush.msra.mxu0 0.0
  %3941 = vmatpush.msra.mxu0 0.0
  %3942 = vmatpush.msra.mxu0 0.0
  %3943 = vmatpush.msra.mxu0 0.0
  %3944 = vmatpush.msra.mxu0 %v3903
  %3945 = vmatmul.f32.gmra.mxu0 %v3907
  %v3946 = vpop.f32.mrf.mxu0
  %v3947 = vadd.f32 0.0, %v3946
  %3948 = vdwg.mxu0
  %3949 = vmatpush.msra.mxu0 0.0
  %3950 = vmatpush.msra.mxu0 0.0
  %3951 = vmatpush.msra.mxu0 0.0
  %3952 = vmatpush.msra.mxu0 0.0
  %3953 = vmatpush.msra.mxu0 0.0
  %3954 = vmatpush.msra.mxu0 0.0
  %3955 = vmatpush.msra.mxu0 0.0
  %3956 = vmatpush.msra.mxu0 0.0
  %3957 = vmatpush.msra.mxu0 0.0
  %3958 = vmatpush.msra.mxu0 0.0
  %3959 = vmatpush.msra.mxu0 0.0
  %3960 = vmatpush.msra.mxu0 0.0
  %3961 = vmatpush.msra.mxu0 0.0
  %3962 = vmatpush.msra.mxu0 0.0
  %3963 = vmatpush.msra.mxu0 0.0
  %3964 = vmatpush.msra.mxu0 %v3904
  %3965 = vmatmul.f32.gmra.mxu0 %v3907
  %v3966 = vpop.f32.mrf.mxu0
  %v3967 = vadd.f32 0.0, %v3966
  %3968 = vdwg.mxu0
  %3969 = vmatpush.msra.mxu0 0.0
  %3970 = vmatpush.msra.mxu0 0.0
  %3971 = vmatpush.msra.mxu0 0.0
  %3972 = vmatpush.msra.mxu0 0.0
  %3973 = vmatpush.msra.mxu0 0.0
  %3974 = vmatpush.msra.mxu0 0.0
  %3975 = vmatpush.msra.mxu0 0.0
  %3976 = vmatpush.msra.mxu0 0.0
  %3977 = vmatpush.msra.mxu0 0.0
  %3978 = vmatpush.msra.mxu0 0.0
  %3979 = vmatpush.msra.mxu0 0.0
  %3980 = vmatpush.msra.mxu0 0.0
  %3981 = vmatpush.msra.mxu0 0.0
  %3982 = vmatpush.msra.mxu0 0.0
  %3983 = vmatpush.msra.mxu0 0.0
  %3984 = vmatpush.msra.mxu0 %v3905
  %3985 = vmatmul.f32.gmra.mxu0 %v3907
  %v3986 = vpop.f32.mrf.mxu0
  %v3987 = vadd.f32 0.0, %v3986
  %3988 = vdwg.mxu0
  %v3989 = vadd.f32 %v3886, %v3927
  %v3990 = vadd.f32 %v3887, %v3947
  %v3991 = vadd.f32 %v3888, %v3967
  %v3992 = vadd.f32 %v3889, %v3987
  %3993 = vrot.lane.b32.xlu0 %v181, 113
  %v3994 = vpop.permute.xlu0 %3993
  %3995 = vrot.lane.b32.xlu0 %v182, 113
  %v3996 = vpop.permute.xlu0 %3995
  %3997 = vrot.lane.b32.xlu0 %v183, 113
  %v3998 = vpop.permute.xlu0 %3997
  %3999 = vrot.lane.b32.xlu0 %v184, 113
  %v4000 = vpop.permute.xlu0 %3999
  %v4001 = vsel %vm919, %v3998, %v4000
  %v4002 = vsel %vm919, %v3996, %v3998
  %v4003 = vsel %vm919, %v3994, %v3996
  %v4004 = vsel %vm919, %v4000, %v3994
  %v4005 = vmul.f32 %v4003, %v142
  %v4006 = vmul.f32 %v4002, %v143
  %v4007 = vmul.f32 %v4001, %v144
  %v4008 = vmul.f32 %v4004, %v145
  %v4010 = vsel %vm239, %v3396, 0
  %4012 = vmatpush.msra.mxu0 0.0
  %4013 = vmatpush.msra.mxu0 0.0
  %4014 = vmatpush.msra.mxu0 0.0
  %4015 = vmatpush.msra.mxu0 0.0
  %4016 = vmatpush.msra.mxu0 0.0
  %4017 = vmatpush.msra.mxu0 0.0
  %4018 = vmatpush.msra.mxu0 0.0
  %4019 = vmatpush.msra.mxu0 0.0
  %4020 = vmatpush.msra.mxu0 0.0
  %4021 = vmatpush.msra.mxu0 0.0
  %4022 = vmatpush.msra.mxu0 0.0
  %4023 = vmatpush.msra.mxu0 0.0
  %4024 = vmatpush.msra.mxu0 0.0
  %4025 = vmatpush.msra.mxu0 0.0
  %4026 = vmatpush.msra.mxu0 0.0
  %4027 = vmatpush.msra.mxu0 %v4005
  %4028 = vmatmul.f32.gmra.mxu0 %v4010
  %v4029 = vpop.f32.mrf.mxu0
  %v4030 = vadd.f32 0.0, %v4029
  %4031 = vdwg.mxu0
  %4032 = vmatpush.msra.mxu0 0.0
  %4033 = vmatpush.msra.mxu0 0.0
  %4034 = vmatpush.msra.mxu0 0.0
  %4035 = vmatpush.msra.mxu0 0.0
  %4036 = vmatpush.msra.mxu0 0.0
  %4037 = vmatpush.msra.mxu0 0.0
  %4038 = vmatpush.msra.mxu0 0.0
  %4039 = vmatpush.msra.mxu0 0.0
  %4040 = vmatpush.msra.mxu0 0.0
  %4041 = vmatpush.msra.mxu0 0.0
  %4042 = vmatpush.msra.mxu0 0.0
  %4043 = vmatpush.msra.mxu0 0.0
  %4044 = vmatpush.msra.mxu0 0.0
  %4045 = vmatpush.msra.mxu0 0.0
  %4046 = vmatpush.msra.mxu0 0.0
  %4047 = vmatpush.msra.mxu0 %v4006
  %4048 = vmatmul.f32.gmra.mxu0 %v4010
  %v4049 = vpop.f32.mrf.mxu0
  %v4050 = vadd.f32 0.0, %v4049
  %4051 = vdwg.mxu0
  %4052 = vmatpush.msra.mxu0 0.0
  %4053 = vmatpush.msra.mxu0 0.0
  %4054 = vmatpush.msra.mxu0 0.0
  %4055 = vmatpush.msra.mxu0 0.0
  %4056 = vmatpush.msra.mxu0 0.0
  %4057 = vmatpush.msra.mxu0 0.0
  %4058 = vmatpush.msra.mxu0 0.0
  %4059 = vmatpush.msra.mxu0 0.0
  %4060 = vmatpush.msra.mxu0 0.0
  %4061 = vmatpush.msra.mxu0 0.0
  %4062 = vmatpush.msra.mxu0 0.0
  %4063 = vmatpush.msra.mxu0 0.0
  %4064 = vmatpush.msra.mxu0 0.0
  %4065 = vmatpush.msra.mxu0 0.0
  %4066 = vmatpush.msra.mxu0 0.0
  %4067 = vmatpush.msra.mxu0 %v4007
  %4068 = vmatmul.f32.gmra.mxu0 %v4010
  %v4069 = vpop.f32.mrf.mxu0
  %v4070 = vadd.f32 0.0, %v4069
  %4071 = vdwg.mxu0
  %4072 = vmatpush.msra.mxu0 0.0
  %4073 = vmatpush.msra.mxu0 0.0
  %4074 = vmatpush.msra.mxu0 0.0
  %4075 = vmatpush.msra.mxu0 0.0
  %4076 = vmatpush.msra.mxu0 0.0
  %4077 = vmatpush.msra.mxu0 0.0
  %4078 = vmatpush.msra.mxu0 0.0
  %4079 = vmatpush.msra.mxu0 0.0
  %4080 = vmatpush.msra.mxu0 0.0
  %4081 = vmatpush.msra.mxu0 0.0
  %4082 = vmatpush.msra.mxu0 0.0
  %4083 = vmatpush.msra.mxu0 0.0
  %4084 = vmatpush.msra.mxu0 0.0
  %4085 = vmatpush.msra.mxu0 0.0
  %4086 = vmatpush.msra.mxu0 0.0
  %4087 = vmatpush.msra.mxu0 %v4008
  %4088 = vmatmul.f32.gmra.mxu0 %v4010
  %v4089 = vpop.f32.mrf.mxu0
  %v4090 = vadd.f32 0.0, %v4089
  %4091 = vdwg.mxu0
  %v4092 = vadd.f32 %v3989, %v4030
  %v4093 = vadd.f32 %v3990, %v4050
  %v4094 = vadd.f32 %v3991, %v4070
  %v4095 = vadd.f32 %v3992, %v4090
  %4096 = vrot.lane.b32.xlu0 %v181, 112
  %v4097 = vpop.permute.xlu0 %4096
  %4098 = vrot.lane.b32.xlu0 %v182, 112
  %v4099 = vpop.permute.xlu0 %4098
  %4100 = vrot.lane.b32.xlu0 %v183, 112
  %v4101 = vpop.permute.xlu0 %4100
  %4102 = vrot.lane.b32.xlu0 %v184, 112
  %v4103 = vpop.permute.xlu0 %4102
  %v4104 = vsel %vm1042, %v4101, %v4103
  %v4105 = vsel %vm1042, %v4099, %v4101
  %v4106 = vsel %vm1042, %v4097, %v4099
  %v4107 = vsel %vm1042, %v4103, %v4097
  %v4108 = vmul.f32 %v4106, %v153
  %v4109 = vmul.f32 %v4105, %v154
  %v4110 = vmul.f32 %v4104, %v155
  %v4111 = vmul.f32 %v4107, %v156
  %v4113 = vsel %vm239, %v3397, 0
  %4115 = vmatpush.msra.mxu0 0.0
  %4116 = vmatpush.msra.mxu0 0.0
  %4117 = vmatpush.msra.mxu0 0.0
  %4118 = vmatpush.msra.mxu0 0.0
  %4119 = vmatpush.msra.mxu0 0.0
  %4120 = vmatpush.msra.mxu0 0.0
  %4121 = vmatpush.msra.mxu0 0.0
  %4122 = vmatpush.msra.mxu0 0.0
  %4123 = vmatpush.msra.mxu0 0.0
  %4124 = vmatpush.msra.mxu0 0.0
  %4125 = vmatpush.msra.mxu0 0.0
  %4126 = vmatpush.msra.mxu0 0.0
  %4127 = vmatpush.msra.mxu0 0.0
  %4128 = vmatpush.msra.mxu0 0.0
  %4129 = vmatpush.msra.mxu0 0.0
  %4130 = vmatpush.msra.mxu0 %v4108
  %4131 = vmatmul.f32.gmra.mxu0 %v4113
  %v4132 = vpop.f32.mrf.mxu0
  %v4133 = vadd.f32 0.0, %v4132
  %4134 = vdwg.mxu0
  %4135 = vmatpush.msra.mxu0 0.0
  %4136 = vmatpush.msra.mxu0 0.0
  %4137 = vmatpush.msra.mxu0 0.0
  %4138 = vmatpush.msra.mxu0 0.0
  %4139 = vmatpush.msra.mxu0 0.0
  %4140 = vmatpush.msra.mxu0 0.0
  %4141 = vmatpush.msra.mxu0 0.0
  %4142 = vmatpush.msra.mxu0 0.0
  %4143 = vmatpush.msra.mxu0 0.0
  %4144 = vmatpush.msra.mxu0 0.0
  %4145 = vmatpush.msra.mxu0 0.0
  %4146 = vmatpush.msra.mxu0 0.0
  %4147 = vmatpush.msra.mxu0 0.0
  %4148 = vmatpush.msra.mxu0 0.0
  %4149 = vmatpush.msra.mxu0 0.0
  %4150 = vmatpush.msra.mxu0 %v4109
  %4151 = vmatmul.f32.gmra.mxu0 %v4113
  %v4152 = vpop.f32.mrf.mxu0
  %v4153 = vadd.f32 0.0, %v4152
  %4154 = vdwg.mxu0
  %4155 = vmatpush.msra.mxu0 0.0
  %4156 = vmatpush.msra.mxu0 0.0
  %4157 = vmatpush.msra.mxu0 0.0
  %4158 = vmatpush.msra.mxu0 0.0
  %4159 = vmatpush.msra.mxu0 0.0
  %4160 = vmatpush.msra.mxu0 0.0
  %4161 = vmatpush.msra.mxu0 0.0
  %4162 = vmatpush.msra.mxu0 0.0
  %4163 = vmatpush.msra.mxu0 0.0
  %4164 = vmatpush.msra.mxu0 0.0
  %4165 = vmatpush.msra.mxu0 0.0
  %4166 = vmatpush.msra.mxu0 0.0
  %4167 = vmatpush.msra.mxu0 0.0
  %4168 = vmatpush.msra.mxu0 0.0
  %4169 = vmatpush.msra.mxu0 0.0
  %4170 = vmatpush.msra.mxu0 %v4110
  %4171 = vmatmul.f32.gmra.mxu0 %v4113
  %v4172 = vpop.f32.mrf.mxu0
  %v4173 = vadd.f32 0.0, %v4172
  %4174 = vdwg.mxu0
  %4175 = vmatpush.msra.mxu0 0.0
  %4176 = vmatpush.msra.mxu0 0.0
  %4177 = vmatpush.msra.mxu0 0.0
  %4178 = vmatpush.msra.mxu0 0.0
  %4179 = vmatpush.msra.mxu0 0.0
  %4180 = vmatpush.msra.mxu0 0.0
  %4181 = vmatpush.msra.mxu0 0.0
  %4182 = vmatpush.msra.mxu0 0.0
  %4183 = vmatpush.msra.mxu0 0.0
  %4184 = vmatpush.msra.mxu0 0.0
  %4185 = vmatpush.msra.mxu0 0.0
  %4186 = vmatpush.msra.mxu0 0.0
  %4187 = vmatpush.msra.mxu0 0.0
  %4188 = vmatpush.msra.mxu0 0.0
  %4189 = vmatpush.msra.mxu0 0.0
  %4190 = vmatpush.msra.mxu0 %v4111
  %4191 = vmatmul.f32.gmra.mxu0 %v4113
  %v4192 = vpop.f32.mrf.mxu0
  %v4193 = vadd.f32 0.0, %v4192
  %4194 = vdwg.mxu0
  %v4195 = vadd.f32 %v4092, %v4133
  %v4196 = vadd.f32 %v4093, %v4153
  %v4197 = vadd.f32 %v4094, %v4173
  %v4198 = vadd.f32 %v4095, %v4193
  %4199 = vrot.lane.b32.xlu0 %v181, 111
  %v4200 = vpop.permute.xlu0 %4199
  %4201 = vrot.lane.b32.xlu0 %v182, 111
  %v4202 = vpop.permute.xlu0 %4201
  %4203 = vrot.lane.b32.xlu0 %v183, 111
  %v4204 = vpop.permute.xlu0 %4203
  %4205 = vrot.lane.b32.xlu0 %v184, 111
  %v4206 = vpop.permute.xlu0 %4205
  %v4207 = vsel %vm1165, %v4204, %v4206
  %v4208 = vsel %vm1165, %v4202, %v4204
  %v4209 = vsel %vm1165, %v4200, %v4202
  %v4210 = vsel %vm1165, %v4206, %v4200
  %v4211 = vmul.f32 %v4209, %v165
  %v4212 = vmul.f32 %v4208, %v166
  %v4213 = vmul.f32 %v4207, %v167
  %v4214 = vmul.f32 %v4210, %v168
  %v4216 = vsel %vm239, %v3398, 0
  %4218 = vmatpush.msra.mxu0 0.0
  %4219 = vmatpush.msra.mxu0 0.0
  %4220 = vmatpush.msra.mxu0 0.0
  %4221 = vmatpush.msra.mxu0 0.0
  %4222 = vmatpush.msra.mxu0 0.0
  %4223 = vmatpush.msra.mxu0 0.0
  %4224 = vmatpush.msra.mxu0 0.0
  %4225 = vmatpush.msra.mxu0 0.0
  %4226 = vmatpush.msra.mxu0 0.0
  %4227 = vmatpush.msra.mxu0 0.0
  %4228 = vmatpush.msra.mxu0 0.0
  %4229 = vmatpush.msra.mxu0 0.0
  %4230 = vmatpush.msra.mxu0 0.0
  %4231 = vmatpush.msra.mxu0 0.0
  %4232 = vmatpush.msra.mxu0 0.0
  %4233 = vmatpush.msra.mxu0 %v4211
  %4234 = vmatmul.f32.gmra.mxu0 %v4216
  %v4235 = vpop.f32.mrf.mxu0
  %v4236 = vadd.f32 0.0, %v4235
  %4237 = vdwg.mxu0
  %4238 = vmatpush.msra.mxu0 0.0
  %4239 = vmatpush.msra.mxu0 0.0
  %4240 = vmatpush.msra.mxu0 0.0
  %4241 = vmatpush.msra.mxu0 0.0
  %4242 = vmatpush.msra.mxu0 0.0
  %4243 = vmatpush.msra.mxu0 0.0
  %4244 = vmatpush.msra.mxu0 0.0
  %4245 = vmatpush.msra.mxu0 0.0
  %4246 = vmatpush.msra.mxu0 0.0
  %4247 = vmatpush.msra.mxu0 0.0
  %4248 = vmatpush.msra.mxu0 0.0
  %4249 = vmatpush.msra.mxu0 0.0
  %4250 = vmatpush.msra.mxu0 0.0
  %4251 = vmatpush.msra.mxu0 0.0
  %4252 = vmatpush.msra.mxu0 0.0
  %4253 = vmatpush.msra.mxu0 %v4212
  %4254 = vmatmul.f32.gmra.mxu0 %v4216
  %v4255 = vpop.f32.mrf.mxu0
  %v4256 = vadd.f32 0.0, %v4255
  %4257 = vdwg.mxu0
  %4258 = vmatpush.msra.mxu0 0.0
  %4259 = vmatpush.msra.mxu0 0.0
  %4260 = vmatpush.msra.mxu0 0.0
  %4261 = vmatpush.msra.mxu0 0.0
  %4262 = vmatpush.msra.mxu0 0.0
  %4263 = vmatpush.msra.mxu0 0.0
  %4264 = vmatpush.msra.mxu0 0.0
  %4265 = vmatpush.msra.mxu0 0.0
  %4266 = vmatpush.msra.mxu0 0.0
  %4267 = vmatpush.msra.mxu0 0.0
  %4268 = vmatpush.msra.mxu0 0.0
  %4269 = vmatpush.msra.mxu0 0.0
  %4270 = vmatpush.msra.mxu0 0.0
  %4271 = vmatpush.msra.mxu0 0.0
  %4272 = vmatpush.msra.mxu0 0.0
  %4273 = vmatpush.msra.mxu0 %v4213
  %4274 = vmatmul.f32.gmra.mxu0 %v4216
  %v4275 = vpop.f32.mrf.mxu0
  %v4276 = vadd.f32 0.0, %v4275
  %4277 = vdwg.mxu0
  %4278 = vmatpush.msra.mxu0 0.0
  %4279 = vmatpush.msra.mxu0 0.0
  %4280 = vmatpush.msra.mxu0 0.0
  %4281 = vmatpush.msra.mxu0 0.0
  %4282 = vmatpush.msra.mxu0 0.0
  %4283 = vmatpush.msra.mxu0 0.0
  %4284 = vmatpush.msra.mxu0 0.0
  %4285 = vmatpush.msra.mxu0 0.0
  %4286 = vmatpush.msra.mxu0 0.0
  %4287 = vmatpush.msra.mxu0 0.0
  %4288 = vmatpush.msra.mxu0 0.0
  %4289 = vmatpush.msra.mxu0 0.0
  %4290 = vmatpush.msra.mxu0 0.0
  %4291 = vmatpush.msra.mxu0 0.0
  %4292 = vmatpush.msra.mxu0 0.0
  %4293 = vmatpush.msra.mxu0 %v4214
  %4294 = vmatmul.f32.gmra.mxu0 %v4216
  %v4295 = vpop.f32.mrf.mxu0
  %v4296 = vadd.f32 0.0, %v4295
  %4297 = vdwg.mxu0
  %v4298 = vadd.f32 %v4195, %v4236
  %v4299 = vadd.f32 %v4196, %v4256
  %v4300 = vadd.f32 %v4197, %v4276
  %v4301 = vadd.f32 %v4198, %v4296
  %4303 = vset.pattern.permute.xlu0 0
  %4304 = vperm.xlu0 %4303, %v3389
  %v4305 = vpop.permute.xlu0 %4304
  %v4307 = vadd.f32 %v4298, %v4305
  %v4308 = vadd.f32 %v4299, %v4305
  %v4309 = vadd.f32 %v4300, %v4305
  %v4310 = vadd.f32 %v4301, %v4305
  %v4311 = vadd.f32 %v1276, %v4307
  %v4312 = vadd.f32 %v1277, %v4308
  %v4313 = vadd.f32 %v1278, %v4309
  %v4314 = vadd.f32 %v1279, %v4310
  %v4315 = vmax.f32 %v4311, 0.0
  %v4316 = vmax.f32 %v4312, 0.0
  %v4317 = vmax.f32 %v4313, 0.0
  %v4318 = vmax.f32 %v4314, 0.0
  %v4319 = vadd.f32 %v4315, %v4316
  %v4320 = vadd.f32 %v4319, %v4317
  %v4321 = vadd.f32 %v4320, %v4318
  %4322 = vadd.xlane.f32.xlu0 %v4321
  %v4323 = vpop.xlane.xlu0 %4322
  %v4324 = vmul.f32 %v4315, %v4315
  %v4325 = vmul.f32 %v4316, %v4316
  %v4326 = vmul.f32 %v4317, %v4317
  %v4327 = vmul.f32 %v4318, %v4318
  %v4328 = vadd.f32 %v4324, %v4325
  %v4329 = vadd.f32 %v4328, %v4326
  %v4330 = vadd.f32 %v4329, %v4327
  %4331 = vadd.xlane.f32.xlu0 %v4330
  %v4332 = vpop.xlane.xlu0 %4331
  %v4333 = vmul.f32 %v4323, 0.001953125
  %v4334 = vmul.f32 %v4332, 0.001953125
  %v4335 = vmul.f32 %v4333, %v4333
  %v4336 = vsub.f32 %v4334, %v4335
  %v4337 = vsub.f32 %v4315, %v4333
  %v4338 = vsub.f32 %v4316, %v4333
  %v4339 = vsub.f32 %v4317, %v4333
  %v4340 = vsub.f32 %v4318, %v4333
  %v4341 = vadd.f32 %v4336, 1e-05
  %v4342 = vrsqrt.pop %v4341
  %v4343 = vmul.f32 %v4342, %v4341
  %v4344 = vmul.f32 %v4343, %v4342
  %v4345 = vmul.f32 0.5, %v4344
  %v4346 = vsub.f32 1.5, %v4345
  %v4347 = vmul.f32 %v4342, %v4346
  %vm4348 = vweird.f32 %v4341
  %vm4349 = vweird.f32 %v4342
  %vm4350 = vmor %vm4348, %vm4349
  %v4351 = vsel %vm4350, %v4342, %v4347
  %v4352 = vmul.f32 %v4337, %v4351
  %v4353 = vmul.f32 %v4338, %v4351
  %v4354 = vmul.f32 %v4339, %v4351
  %v4355 = vmul.f32 %v4340, %v4351
  %v4356 = vld [vmem:[%s13] sm:$0xff]
  %v4357 = vld [vmem:[%s12] sm:$0xff]
  %v4358 = vld [vmem:[%s12 + $0x8] sm:$0xff]
  %v4359 = vld [vmem:[%s12 + $0x10] sm:$0xff]
  %v4360 = vld [vmem:[%s12 + $0x18] sm:$0xff]
  %v4361 = vld [vmem:[%s12 + $0x20] sm:$0xff]
  %v4362 = vld [vmem:[%s12 + $0x28] sm:$0xff]
  %v4363 = vld [vmem:[%s12 + $0x30] sm:$0xff]
  %v4364 = vld [vmem:[%s12 + $0x38] sm:$0xff]
  %v4365 = vld [vmem:[%s12 + $0x40] sm:$0xff]
  %4366 = vrot.lane.b32.xlu0 %v4352, 17
  %v4367 = vpop.permute.xlu0 %4366
  %4368 = vrot.lane.b32.xlu0 %v4353, 17
  %v4369 = vpop.permute.xlu0 %4368
  %4370 = vrot.lane.b32.xlu0 %v4354, 17
  %v4371 = vpop.permute.xlu0 %4370
  %4372 = vrot.lane.b32.xlu0 %v4355, 17
  %v4373 = vpop.permute.xlu0 %4372
  %v4374 = vsel %vm213, %v4371, %v4373
  %v4375 = vsel %vm213, %v4369, %v4371
  %v4376 = vsel %vm213, %v4367, %v4369
  %v4377 = vsel %vm213, %v4373, %v4367
  %v4378 = vmul.f32 %v4377, %v77
  %v4379 = vmul.f32 %v4376, %v78
  %v4380 = vmul.f32 %v4375, %v79
  %v4381 = vmul.f32 %v4374, %v80
  %4382 = vrot.lane.b32.xlu0 %v4352, 16
  %v4383 = vpop.permute.xlu0 %4382
  %4384 = vrot.lane.b32.xlu0 %v4353, 16
  %v4385 = vpop.permute.xlu0 %4384
  %4386 = vrot.lane.b32.xlu0 %v4354, 16
  %v4387 = vpop.permute.xlu0 %4386
  %4388 = vrot.lane.b32.xlu0 %v4355, 16
  %v4389 = vpop.permute.xlu0 %4388
  %v4390 = vsel %vm230, %v4387, %v4389
  %v4391 = vsel %vm230, %v4385, %v4387
  %v4392 = vsel %vm230, %v4383, %v4385
  %v4393 = vsel %vm230, %v4389, %v4383
  %v4394 = vmul.f32 %v4393, %v88
  %v4395 = vmul.f32 %v4392, %v89
  %v4396 = vmul.f32 %v4391, %v90
  %v4397 = vmul.f32 %v4390, %v91
  %v4399 = vsel %vm239, %v4358, 0
  %4401 = vmatpush.msra.mxu0 0.0
  %4402 = vmatpush.msra.mxu0 0.0
  %4403 = vmatpush.msra.mxu0 0.0
  %4404 = vmatpush.msra.mxu0 0.0
  %4405 = vmatpush.msra.mxu0 0.0
  %4406 = vmatpush.msra.mxu0 0.0
  %4407 = vmatpush.msra.mxu0 0.0
  %4408 = vmatpush.msra.mxu0 0.0
  %4409 = vmatpush.msra.mxu0 0.0
  %4410 = vmatpush.msra.mxu0 0.0
  %4411 = vmatpush.msra.mxu0 0.0
  %4412 = vmatpush.msra.mxu0 0.0
  %4413 = vmatpush.msra.mxu0 0.0
  %4414 = vmatpush.msra.mxu0 0.0
  %4415 = vmatpush.msra.mxu0 0.0
  %4416 = vmatpush.msra.mxu0 %v4394
  %4417 = vmatmul.f32.gmra.mxu0 %v4399
  %v4418 = vpop.f32.mrf.mxu0
  %v4419 = vadd.f32 0.0, %v4418
  %4420 = vdwg.mxu0
  %4421 = vmatpush.msra.mxu0 0.0
  %4422 = vmatpush.msra.mxu0 0.0
  %4423 = vmatpush.msra.mxu0 0.0
  %4424 = vmatpush.msra.mxu0 0.0
  %4425 = vmatpush.msra.mxu0 0.0
  %4426 = vmatpush.msra.mxu0 0.0
  %4427 = vmatpush.msra.mxu0 0.0
  %4428 = vmatpush.msra.mxu0 0.0
  %4429 = vmatpush.msra.mxu0 0.0
  %4430 = vmatpush.msra.mxu0 0.0
  %4431 = vmatpush.msra.mxu0 0.0
  %4432 = vmatpush.msra.mxu0 0.0
  %4433 = vmatpush.msra.mxu0 0.0
  %4434 = vmatpush.msra.mxu0 0.0
  %4435 = vmatpush.msra.mxu0 0.0
  %4436 = vmatpush.msra.mxu0 %v4395
  %4437 = vmatmul.f32.gmra.mxu0 %v4399
  %v4438 = vpop.f32.mrf.mxu0
  %v4439 = vadd.f32 0.0, %v4438
  %4440 = vdwg.mxu0
  %4441 = vmatpush.msra.mxu0 0.0
  %4442 = vmatpush.msra.mxu0 0.0
  %4443 = vmatpush.msra.mxu0 0.0
  %4444 = vmatpush.msra.mxu0 0.0
  %4445 = vmatpush.msra.mxu0 0.0
  %4446 = vmatpush.msra.mxu0 0.0
  %4447 = vmatpush.msra.mxu0 0.0
  %4448 = vmatpush.msra.mxu0 0.0
  %4449 = vmatpush.msra.mxu0 0.0
  %4450 = vmatpush.msra.mxu0 0.0
  %4451 = vmatpush.msra.mxu0 0.0
  %4452 = vmatpush.msra.mxu0 0.0
  %4453 = vmatpush.msra.mxu0 0.0
  %4454 = vmatpush.msra.mxu0 0.0
  %4455 = vmatpush.msra.mxu0 0.0
  %4456 = vmatpush.msra.mxu0 %v4396
  %4457 = vmatmul.f32.gmra.mxu0 %v4399
  %v4458 = vpop.f32.mrf.mxu0
  %v4459 = vadd.f32 0.0, %v4458
  %4460 = vdwg.mxu0
  %4461 = vmatpush.msra.mxu0 0.0
  %4462 = vmatpush.msra.mxu0 0.0
  %4463 = vmatpush.msra.mxu0 0.0
  %4464 = vmatpush.msra.mxu0 0.0
  %4465 = vmatpush.msra.mxu0 0.0
  %4466 = vmatpush.msra.mxu0 0.0
  %4467 = vmatpush.msra.mxu0 0.0
  %4468 = vmatpush.msra.mxu0 0.0
  %4469 = vmatpush.msra.mxu0 0.0
  %4470 = vmatpush.msra.mxu0 0.0
  %4471 = vmatpush.msra.mxu0 0.0
  %4472 = vmatpush.msra.mxu0 0.0
  %4473 = vmatpush.msra.mxu0 0.0
  %4474 = vmatpush.msra.mxu0 0.0
  %4475 = vmatpush.msra.mxu0 0.0
  %4476 = vmatpush.msra.mxu0 %v4397
  %4477 = vmatmul.f32.gmra.mxu0 %v4399
  %v4478 = vpop.f32.mrf.mxu0
  %v4479 = vadd.f32 0.0, %v4478
  %4480 = vdwg.mxu0
  %v4482 = vsel %vm239, %v4357, 0
  %4484 = vmatpush.msra.mxu0 0.0
  %4485 = vmatpush.msra.mxu0 0.0
  %4486 = vmatpush.msra.mxu0 0.0
  %4487 = vmatpush.msra.mxu0 0.0
  %4488 = vmatpush.msra.mxu0 0.0
  %4489 = vmatpush.msra.mxu0 0.0
  %4490 = vmatpush.msra.mxu0 0.0
  %4491 = vmatpush.msra.mxu0 0.0
  %4492 = vmatpush.msra.mxu0 0.0
  %4493 = vmatpush.msra.mxu0 0.0
  %4494 = vmatpush.msra.mxu0 0.0
  %4495 = vmatpush.msra.mxu0 0.0
  %4496 = vmatpush.msra.mxu0 0.0
  %4497 = vmatpush.msra.mxu0 0.0
  %4498 = vmatpush.msra.mxu0 0.0
  %4499 = vmatpush.msra.mxu0 %v4378
  %4500 = vmatmul.f32.gmra.mxu0 %v4482
  %v4501 = vpop.f32.mrf.mxu0
  %v4502 = vadd.f32 %v4419, %v4501
  %4503 = vdwg.mxu0
  %4504 = vmatpush.msra.mxu0 0.0
  %4505 = vmatpush.msra.mxu0 0.0
  %4506 = vmatpush.msra.mxu0 0.0
  %4507 = vmatpush.msra.mxu0 0.0
  %4508 = vmatpush.msra.mxu0 0.0
  %4509 = vmatpush.msra.mxu0 0.0
  %4510 = vmatpush.msra.mxu0 0.0
  %4511 = vmatpush.msra.mxu0 0.0
  %4512 = vmatpush.msra.mxu0 0.0
  %4513 = vmatpush.msra.mxu0 0.0
  %4514 = vmatpush.msra.mxu0 0.0
  %4515 = vmatpush.msra.mxu0 0.0
  %4516 = vmatpush.msra.mxu0 0.0
  %4517 = vmatpush.msra.mxu0 0.0
  %4518 = vmatpush.msra.mxu0 0.0
  %4519 = vmatpush.msra.mxu0 %v4379
  %4520 = vmatmul.f32.gmra.mxu0 %v4482
  %v4521 = vpop.f32.mrf.mxu0
  %v4522 = vadd.f32 %v4439, %v4521
  %4523 = vdwg.mxu0
  %4524 = vmatpush.msra.mxu0 0.0
  %4525 = vmatpush.msra.mxu0 0.0
  %4526 = vmatpush.msra.mxu0 0.0
  %4527 = vmatpush.msra.mxu0 0.0
  %4528 = vmatpush.msra.mxu0 0.0
  %4529 = vmatpush.msra.mxu0 0.0
  %4530 = vmatpush.msra.mxu0 0.0
  %4531 = vmatpush.msra.mxu0 0.0
  %4532 = vmatpush.msra.mxu0 0.0
  %4533 = vmatpush.msra.mxu0 0.0
  %4534 = vmatpush.msra.mxu0 0.0
  %4535 = vmatpush.msra.mxu0 0.0
  %4536 = vmatpush.msra.mxu0 0.0
  %4537 = vmatpush.msra.mxu0 0.0
  %4538 = vmatpush.msra.mxu0 0.0
  %4539 = vmatpush.msra.mxu0 %v4380
  %4540 = vmatmul.f32.gmra.mxu0 %v4482
  %v4541 = vpop.f32.mrf.mxu0
  %v4542 = vadd.f32 %v4459, %v4541
  %4543 = vdwg.mxu0
  %4544 = vmatpush.msra.mxu0 0.0
  %4545 = vmatpush.msra.mxu0 0.0
  %4546 = vmatpush.msra.mxu0 0.0
  %4547 = vmatpush.msra.mxu0 0.0
  %4548 = vmatpush.msra.mxu0 0.0
  %4549 = vmatpush.msra.mxu0 0.0
  %4550 = vmatpush.msra.mxu0 0.0
  %4551 = vmatpush.msra.mxu0 0.0
  %4552 = vmatpush.msra.mxu0 0.0
  %4553 = vmatpush.msra.mxu0 0.0
  %4554 = vmatpush.msra.mxu0 0.0
  %4555 = vmatpush.msra.mxu0 0.0
  %4556 = vmatpush.msra.mxu0 0.0
  %4557 = vmatpush.msra.mxu0 0.0
  %4558 = vmatpush.msra.mxu0 0.0
  %4559 = vmatpush.msra.mxu0 %v4381
  %4560 = vmatmul.f32.gmra.mxu0 %v4482
  %v4561 = vpop.f32.mrf.mxu0
  %v4562 = vadd.f32 %v4479, %v4561
  %4563 = vdwg.mxu0
  %4564 = vrot.lane.b32.xlu0 %v4352, 15
  %v4565 = vpop.permute.xlu0 %4564
  %4566 = vrot.lane.b32.xlu0 %v4353, 15
  %v4567 = vpop.permute.xlu0 %4566
  %4568 = vrot.lane.b32.xlu0 %v4354, 15
  %v4569 = vpop.permute.xlu0 %4568
  %4570 = vrot.lane.b32.xlu0 %v4355, 15
  %v4571 = vpop.permute.xlu0 %4570
  %v4572 = vsel %vm444, %v4569, %v4571
  %v4573 = vsel %vm444, %v4567, %v4569
  %v4574 = vsel %vm444, %v4565, %v4567
  %v4575 = vsel %vm444, %v4571, %v4565
  %v4576 = vmul.f32 %v4575, %v104
  %v4577 = vmul.f32 %v4574, %v105
  %v4578 = vmul.f32 %v4573, %v106
  %v4579 = vmul.f32 %v4572, %v107
  %v4581 = vsel %vm239, %v4359, 0
  %4583 = vmatpush.msra.mxu0 0.0
  %4584 = vmatpush.msra.mxu0 0.0
  %4585 = vmatpush.msra.mxu0 0.0
  %4586 = vmatpush.msra.mxu0 0.0
  %4587 = vmatpush.msra.mxu0 0.0
  %4588 = vmatpush.msra.mxu0 0.0
  %4589 = vmatpush.msra.mxu0 0.0
  %4590 = vmatpush.msra.mxu0 0.0
  %4591 = vmatpush.msra.mxu0 0.0
  %4592 = vmatpush.msra.mxu0 0.0
  %4593 = vmatpush.msra.mxu0 0.0
  %4594 = vmatpush.msra.mxu0 0.0
  %4595 = vmatpush.msra.mxu0 0.0
  %4596 = vmatpush.msra.mxu0 0.0
  %4597 = vmatpush.msra.mxu0 0.0
  %4598 = vmatpush.msra.mxu0 %v4576
  %4599 = vmatmul.f32.gmra.mxu0 %v4581
  %v4600 = vpop.f32.mrf.mxu0
  %v4601 = vadd.f32 0.0, %v4600
  %4602 = vdwg.mxu0
  %4603 = vmatpush.msra.mxu0 0.0
  %4604 = vmatpush.msra.mxu0 0.0
  %4605 = vmatpush.msra.mxu0 0.0
  %4606 = vmatpush.msra.mxu0 0.0
  %4607 = vmatpush.msra.mxu0 0.0
  %4608 = vmatpush.msra.mxu0 0.0
  %4609 = vmatpush.msra.mxu0 0.0
  %4610 = vmatpush.msra.mxu0 0.0
  %4611 = vmatpush.msra.mxu0 0.0
  %4612 = vmatpush.msra.mxu0 0.0
  %4613 = vmatpush.msra.mxu0 0.0
  %4614 = vmatpush.msra.mxu0 0.0
  %4615 = vmatpush.msra.mxu0 0.0
  %4616 = vmatpush.msra.mxu0 0.0
  %4617 = vmatpush.msra.mxu0 0.0
  %4618 = vmatpush.msra.mxu0 %v4577
  %4619 = vmatmul.f32.gmra.mxu0 %v4581
  %v4620 = vpop.f32.mrf.mxu0
  %v4621 = vadd.f32 0.0, %v4620
  %4622 = vdwg.mxu0
  %4623 = vmatpush.msra.mxu0 0.0
  %4624 = vmatpush.msra.mxu0 0.0
  %4625 = vmatpush.msra.mxu0 0.0
  %4626 = vmatpush.msra.mxu0 0.0
  %4627 = vmatpush.msra.mxu0 0.0
  %4628 = vmatpush.msra.mxu0 0.0
  %4629 = vmatpush.msra.mxu0 0.0
  %4630 = vmatpush.msra.mxu0 0.0
  %4631 = vmatpush.msra.mxu0 0.0
  %4632 = vmatpush.msra.mxu0 0.0
  %4633 = vmatpush.msra.mxu0 0.0
  %4634 = vmatpush.msra.mxu0 0.0
  %4635 = vmatpush.msra.mxu0 0.0
  %4636 = vmatpush.msra.mxu0 0.0
  %4637 = vmatpush.msra.mxu0 0.0
  %4638 = vmatpush.msra.mxu0 %v4578
  %4639 = vmatmul.f32.gmra.mxu0 %v4581
  %v4640 = vpop.f32.mrf.mxu0
  %v4641 = vadd.f32 0.0, %v4640
  %4642 = vdwg.mxu0
  %4643 = vmatpush.msra.mxu0 0.0
  %4644 = vmatpush.msra.mxu0 0.0
  %4645 = vmatpush.msra.mxu0 0.0
  %4646 = vmatpush.msra.mxu0 0.0
  %4647 = vmatpush.msra.mxu0 0.0
  %4648 = vmatpush.msra.mxu0 0.0
  %4649 = vmatpush.msra.mxu0 0.0
  %4650 = vmatpush.msra.mxu0 0.0
  %4651 = vmatpush.msra.mxu0 0.0
  %4652 = vmatpush.msra.mxu0 0.0
  %4653 = vmatpush.msra.mxu0 0.0
  %4654 = vmatpush.msra.mxu0 0.0
  %4655 = vmatpush.msra.mxu0 0.0
  %4656 = vmatpush.msra.mxu0 0.0
  %4657 = vmatpush.msra.mxu0 0.0
  %4658 = vmatpush.msra.mxu0 %v4579
  %4659 = vmatmul.f32.gmra.mxu0 %v4581
  %v4660 = vpop.f32.mrf.mxu0
  %v4661 = vadd.f32 0.0, %v4660
  %4662 = vdwg.mxu0
  %v4663 = vadd.f32 %v4502, %v4601
  %v4664 = vadd.f32 %v4522, %v4621
  %v4665 = vadd.f32 %v4542, %v4641
  %v4666 = vadd.f32 %v4562, %v4661
  %4667 = vrot.lane.b32.xlu0 %v4352, 1
  %v4668 = vpop.permute.xlu0 %4667
  %4669 = vrot.lane.b32.xlu0 %v4353, 1
  %v4670 = vpop.permute.xlu0 %4669
  %4671 = vrot.lane.b32.xlu0 %v4354, 1
  %v4672 = vpop.permute.xlu0 %4671
  %4673 = vrot.lane.b32.xlu0 %v4355, 1
  %v4674 = vpop.permute.xlu0 %4673
  %v4675 = vsel %vm567, %v4672, %v4674
  %v4676 = vsel %vm567, %v4670, %v4672
  %v4677 = vsel %vm567, %v4668, %v4670
  %v4678 = vsel %vm567, %v4674, %v4668
  %v4679 = vmul.f32 %v4678, %v115
  %v4680 = vmul.f32 %v4677, %v116
  %v4681 = vmul.f32 %v4676, %v117
  %v4682 = vmul.f32 %v4675, %v118
  %v4684 = vsel %vm239, %v4360, 0
  %4686 = vmatpush.msra.mxu0 0.0
  %4687 = vmatpush.msra.mxu0 0.0
  %4688 = vmatpush.msra.mxu0 0.0
  %4689 = vmatpush.msra.mxu0 0.0
  %4690 = vmatpush.msra.mxu0 0.0
  %4691 = vmatpush.msra.mxu0 0.0
  %4692 = vmatpush.msra.mxu0 0.0
  %4693 = vmatpush.msra.mxu0 0.0
  %4694 = vmatpush.msra.mxu0 0.0
  %4695 = vmatpush.msra.mxu0 0.0
  %4696 = vmatpush.msra.mxu0 0.0
  %4697 = vmatpush.msra.mxu0 0.0
  %4698 = vmatpush.msra.mxu0 0.0
  %4699 = vmatpush.msra.mxu0 0.0
  %4700 = vmatpush.msra.mxu0 0.0
  %4701 = vmatpush.msra.mxu0 %v4679
  %4702 = vmatmul.f32.gmra.mxu0 %v4684
  %v4703 = vpop.f32.mrf.mxu0
  %v4704 = vadd.f32 0.0, %v4703
  %4705 = vdwg.mxu0
  %4706 = vmatpush.msra.mxu0 0.0
  %4707 = vmatpush.msra.mxu0 0.0
  %4708 = vmatpush.msra.mxu0 0.0
  %4709 = vmatpush.msra.mxu0 0.0
  %4710 = vmatpush.msra.mxu0 0.0
  %4711 = vmatpush.msra.mxu0 0.0
  %4712 = vmatpush.msra.mxu0 0.0
  %4713 = vmatpush.msra.mxu0 0.0
  %4714 = vmatpush.msra.mxu0 0.0
  %4715 = vmatpush.msra.mxu0 0.0
  %4716 = vmatpush.msra.mxu0 0.0
  %4717 = vmatpush.msra.mxu0 0.0
  %4718 = vmatpush.msra.mxu0 0.0
  %4719 = vmatpush.msra.mxu0 0.0
  %4720 = vmatpush.msra.mxu0 0.0
  %4721 = vmatpush.msra.mxu0 %v4680
  %4722 = vmatmul.f32.gmra.mxu0 %v4684
  %v4723 = vpop.f32.mrf.mxu0
  %v4724 = vadd.f32 0.0, %v4723
  %4725 = vdwg.mxu0
  %4726 = vmatpush.msra.mxu0 0.0
  %4727 = vmatpush.msra.mxu0 0.0
  %4728 = vmatpush.msra.mxu0 0.0
  %4729 = vmatpush.msra.mxu0 0.0
  %4730 = vmatpush.msra.mxu0 0.0
  %4731 = vmatpush.msra.mxu0 0.0
  %4732 = vmatpush.msra.mxu0 0.0
  %4733 = vmatpush.msra.mxu0 0.0
  %4734 = vmatpush.msra.mxu0 0.0
  %4735 = vmatpush.msra.mxu0 0.0
  %4736 = vmatpush.msra.mxu0 0.0
  %4737 = vmatpush.msra.mxu0 0.0
  %4738 = vmatpush.msra.mxu0 0.0
  %4739 = vmatpush.msra.mxu0 0.0
  %4740 = vmatpush.msra.mxu0 0.0
  %4741 = vmatpush.msra.mxu0 %v4681
  %4742 = vmatmul.f32.gmra.mxu0 %v4684
  %v4743 = vpop.f32.mrf.mxu0
  %v4744 = vadd.f32 0.0, %v4743
  %4745 = vdwg.mxu0
  %4746 = vmatpush.msra.mxu0 0.0
  %4747 = vmatpush.msra.mxu0 0.0
  %4748 = vmatpush.msra.mxu0 0.0
  %4749 = vmatpush.msra.mxu0 0.0
  %4750 = vmatpush.msra.mxu0 0.0
  %4751 = vmatpush.msra.mxu0 0.0
  %4752 = vmatpush.msra.mxu0 0.0
  %4753 = vmatpush.msra.mxu0 0.0
  %4754 = vmatpush.msra.mxu0 0.0
  %4755 = vmatpush.msra.mxu0 0.0
  %4756 = vmatpush.msra.mxu0 0.0
  %4757 = vmatpush.msra.mxu0 0.0
  %4758 = vmatpush.msra.mxu0 0.0
  %4759 = vmatpush.msra.mxu0 0.0
  %4760 = vmatpush.msra.mxu0 0.0
  %4761 = vmatpush.msra.mxu0 %v4682
  %4762 = vmatmul.f32.gmra.mxu0 %v4684
  %v4763 = vpop.f32.mrf.mxu0
  %v4764 = vadd.f32 0.0, %v4763
  %4765 = vdwg.mxu0
  %v4766 = vadd.f32 %v4663, %v4704
  %v4767 = vadd.f32 %v4664, %v4724
  %v4768 = vadd.f32 %v4665, %v4744
  %v4769 = vadd.f32 %v4666, %v4764
  %v4771 = vsel %vm239, %v4361, 0
  %4773 = vmatpush.msra.mxu0 0.0
  %4774 = vmatpush.msra.mxu0 0.0
  %4775 = vmatpush.msra.mxu0 0.0
  %4776 = vmatpush.msra.mxu0 0.0
  %4777 = vmatpush.msra.mxu0 0.0
  %4778 = vmatpush.msra.mxu0 0.0
  %4779 = vmatpush.msra.mxu0 0.0
  %4780 = vmatpush.msra.mxu0 0.0
  %4781 = vmatpush.msra.mxu0 0.0
  %4782 = vmatpush.msra.mxu0 0.0
  %4783 = vmatpush.msra.mxu0 0.0
  %4784 = vmatpush.msra.mxu0 0.0
  %4785 = vmatpush.msra.mxu0 0.0
  %4786 = vmatpush.msra.mxu0 0.0
  %4787 = vmatpush.msra.mxu0 0.0
  %4788 = vmatpush.msra.mxu0 %v4352
  %4789 = vmatmul.f32.gmra.mxu0 %v4771
  %v4790 = vpop.f32.mrf.mxu0
  %v4791 = vadd.f32 0.0, %v4790
  %4792 = vdwg.mxu0
  %4793 = vmatpush.msra.mxu0 0.0
  %4794 = vmatpush.msra.mxu0 0.0
  %4795 = vmatpush.msra.mxu0 0.0
  %4796 = vmatpush.msra.mxu0 0.0
  %4797 = vmatpush.msra.mxu0 0.0
  %4798 = vmatpush.msra.mxu0 0.0
  %4799 = vmatpush.msra.mxu0 0.0
  %4800 = vmatpush.msra.mxu0 0.0
  %4801 = vmatpush.msra.mxu0 0.0
  %4802 = vmatpush.msra.mxu0 0.0
  %4803 = vmatpush.msra.mxu0 0.0
  %4804 = vmatpush.msra.mxu0 0.0
  %4805 = vmatpush.msra.mxu0 0.0
  %4806 = vmatpush.msra.mxu0 0.0
  %4807 = vmatpush.msra.mxu0 0.0
  %4808 = vmatpush.msra.mxu0 %v4353
  %4809 = vmatmul.f32.gmra.mxu0 %v4771
  %v4810 = vpop.f32.mrf.mxu0
  %v4811 = vadd.f32 0.0, %v4810
  %4812 = vdwg.mxu0
  %4813 = vmatpush.msra.mxu0 0.0
  %4814 = vmatpush.msra.mxu0 0.0
  %4815 = vmatpush.msra.mxu0 0.0
  %4816 = vmatpush.msra.mxu0 0.0
  %4817 = vmatpush.msra.mxu0 0.0
  %4818 = vmatpush.msra.mxu0 0.0
  %4819 = vmatpush.msra.mxu0 0.0
  %4820 = vmatpush.msra.mxu0 0.0
  %4821 = vmatpush.msra.mxu0 0.0
  %4822 = vmatpush.msra.mxu0 0.0
  %4823 = vmatpush.msra.mxu0 0.0
  %4824 = vmatpush.msra.mxu0 0.0
  %4825 = vmatpush.msra.mxu0 0.0
  %4826 = vmatpush.msra.mxu0 0.0
  %4827 = vmatpush.msra.mxu0 0.0
  %4828 = vmatpush.msra.mxu0 %v4354
  %4829 = vmatmul.f32.gmra.mxu0 %v4771
  %v4830 = vpop.f32.mrf.mxu0
  %v4831 = vadd.f32 0.0, %v4830
  %4832 = vdwg.mxu0
  %4833 = vmatpush.msra.mxu0 0.0
  %4834 = vmatpush.msra.mxu0 0.0
  %4835 = vmatpush.msra.mxu0 0.0
  %4836 = vmatpush.msra.mxu0 0.0
  %4837 = vmatpush.msra.mxu0 0.0
  %4838 = vmatpush.msra.mxu0 0.0
  %4839 = vmatpush.msra.mxu0 0.0
  %4840 = vmatpush.msra.mxu0 0.0
  %4841 = vmatpush.msra.mxu0 0.0
  %4842 = vmatpush.msra.mxu0 0.0
  %4843 = vmatpush.msra.mxu0 0.0
  %4844 = vmatpush.msra.mxu0 0.0
  %4845 = vmatpush.msra.mxu0 0.0
  %4846 = vmatpush.msra.mxu0 0.0
  %4847 = vmatpush.msra.mxu0 0.0
  %4848 = vmatpush.msra.mxu0 %v4355
  %4849 = vmatmul.f32.gmra.mxu0 %v4771
  %v4850 = vpop.f32.mrf.mxu0
  %v4851 = vadd.f32 0.0, %v4850
  %4852 = vdwg.mxu0
  %v4853 = vadd.f32 %v4766, %v4791
  %v4854 = vadd.f32 %v4767, %v4811
  %v4855 = vadd.f32 %v4768, %v4831
  %v4856 = vadd.f32 %v4769, %v4851
  %4857 = vrot.lane.b32.xlu0 %v4352, 127
  %v4858 = vpop.permute.xlu0 %4857
  %4859 = vrot.lane.b32.xlu0 %v4353, 127
  %v4860 = vpop.permute.xlu0 %4859
  %4861 = vrot.lane.b32.xlu0 %v4354, 127
  %v4862 = vpop.permute.xlu0 %4861
  %4863 = vrot.lane.b32.xlu0 %v4355, 127
  %v4864 = vpop.permute.xlu0 %4863
  %v4865 = vsel %vm796, %v4862, %v4864
  %v4866 = vsel %vm796, %v4860, %v4862
  %v4867 = vsel %vm796, %v4858, %v4860
  %v4868 = vsel %vm796, %v4864, %v4858
  %v4869 = vmul.f32 %v4867, %v126
  %v4870 = vmul.f32 %v4866, %v127
  %v4871 = vmul.f32 %v4865, %v128
  %v4872 = vmul.f32 %v4868, %v129
  %v4874 = vsel %vm239, %v4362, 0
  %4876 = vmatpush.msra.mxu0 0.0
  %4877 = vmatpush.msra.mxu0 0.0
  %4878 = vmatpush.msra.mxu0 0.0
  %4879 = vmatpush.msra.mxu0 0.0
  %4880 = vmatpush.msra.mxu0 0.0
  %4881 = vmatpush.msra.mxu0 0.0
  %4882 = vmatpush.msra.mxu0 0.0
  %4883 = vmatpush.msra.mxu0 0.0
  %4884 = vmatpush.msra.mxu0 0.0
  %4885 = vmatpush.msra.mxu0 0.0
  %4886 = vmatpush.msra.mxu0 0.0
  %4887 = vmatpush.msra.mxu0 0.0
  %4888 = vmatpush.msra.mxu0 0.0
  %4889 = vmatpush.msra.mxu0 0.0
  %4890 = vmatpush.msra.mxu0 0.0
  %4891 = vmatpush.msra.mxu0 %v4869
  %4892 = vmatmul.f32.gmra.mxu0 %v4874
  %v4893 = vpop.f32.mrf.mxu0
  %v4894 = vadd.f32 0.0, %v4893
  %4895 = vdwg.mxu0
  %4896 = vmatpush.msra.mxu0 0.0
  %4897 = vmatpush.msra.mxu0 0.0
  %4898 = vmatpush.msra.mxu0 0.0
  %4899 = vmatpush.msra.mxu0 0.0
  %4900 = vmatpush.msra.mxu0 0.0
  %4901 = vmatpush.msra.mxu0 0.0
  %4902 = vmatpush.msra.mxu0 0.0
  %4903 = vmatpush.msra.mxu0 0.0
  %4904 = vmatpush.msra.mxu0 0.0
  %4905 = vmatpush.msra.mxu0 0.0
  %4906 = vmatpush.msra.mxu0 0.0
  %4907 = vmatpush.msra.mxu0 0.0
  %4908 = vmatpush.msra.mxu0 0.0
  %4909 = vmatpush.msra.mxu0 0.0
  %4910 = vmatpush.msra.mxu0 0.0
  %4911 = vmatpush.msra.mxu0 %v4870
  %4912 = vmatmul.f32.gmra.mxu0 %v4874
  %v4913 = vpop.f32.mrf.mxu0
  %v4914 = vadd.f32 0.0, %v4913
  %4915 = vdwg.mxu0
  %4916 = vmatpush.msra.mxu0 0.0
  %4917 = vmatpush.msra.mxu0 0.0
  %4918 = vmatpush.msra.mxu0 0.0
  %4919 = vmatpush.msra.mxu0 0.0
  %4920 = vmatpush.msra.mxu0 0.0
  %4921 = vmatpush.msra.mxu0 0.0
  %4922 = vmatpush.msra.mxu0 0.0
  %4923 = vmatpush.msra.mxu0 0.0
  %4924 = vmatpush.msra.mxu0 0.0
  %4925 = vmatpush.msra.mxu0 0.0
  %4926 = vmatpush.msra.mxu0 0.0
  %4927 = vmatpush.msra.mxu0 0.0
  %4928 = vmatpush.msra.mxu0 0.0
  %4929 = vmatpush.msra.mxu0 0.0
  %4930 = vmatpush.msra.mxu0 0.0
  %4931 = vmatpush.msra.mxu0 %v4871
  %4932 = vmatmul.f32.gmra.mxu0 %v4874
  %v4933 = vpop.f32.mrf.mxu0
  %v4934 = vadd.f32 0.0, %v4933
  %4935 = vdwg.mxu0
  %4936 = vmatpush.msra.mxu0 0.0
  %4937 = vmatpush.msra.mxu0 0.0
  %4938 = vmatpush.msra.mxu0 0.0
  %4939 = vmatpush.msra.mxu0 0.0
  %4940 = vmatpush.msra.mxu0 0.0
  %4941 = vmatpush.msra.mxu0 0.0
  %4942 = vmatpush.msra.mxu0 0.0
  %4943 = vmatpush.msra.mxu0 0.0
  %4944 = vmatpush.msra.mxu0 0.0
  %4945 = vmatpush.msra.mxu0 0.0
  %4946 = vmatpush.msra.mxu0 0.0
  %4947 = vmatpush.msra.mxu0 0.0
  %4948 = vmatpush.msra.mxu0 0.0
  %4949 = vmatpush.msra.mxu0 0.0
  %4950 = vmatpush.msra.mxu0 0.0
  %4951 = vmatpush.msra.mxu0 %v4872
  %4952 = vmatmul.f32.gmra.mxu0 %v4874
  %v4953 = vpop.f32.mrf.mxu0
  %v4954 = vadd.f32 0.0, %v4953
  %4955 = vdwg.mxu0
  %v4956 = vadd.f32 %v4853, %v4894
  %v4957 = vadd.f32 %v4854, %v4914
  %v4958 = vadd.f32 %v4855, %v4934
  %v4959 = vadd.f32 %v4856, %v4954
  %4960 = vrot.lane.b32.xlu0 %v4352, 113
  %v4961 = vpop.permute.xlu0 %4960
  %4962 = vrot.lane.b32.xlu0 %v4353, 113
  %v4963 = vpop.permute.xlu0 %4962
  %4964 = vrot.lane.b32.xlu0 %v4354, 113
  %v4965 = vpop.permute.xlu0 %4964
  %4966 = vrot.lane.b32.xlu0 %v4355, 113
  %v4967 = vpop.permute.xlu0 %4966
  %v4968 = vsel %vm919, %v4965, %v4967
  %v4969 = vsel %vm919, %v4963, %v4965
  %v4970 = vsel %vm919, %v4961, %v4963
  %v4971 = vsel %vm919, %v4967, %v4961
  %v4972 = vmul.f32 %v4970, %v142
  %v4973 = vmul.f32 %v4969, %v143
  %v4974 = vmul.f32 %v4968, %v144
  %v4975 = vmul.f32 %v4971, %v145
  %v4977 = vsel %vm239, %v4363, 0
  %4979 = vmatpush.msra.mxu0 0.0
  %4980 = vmatpush.msra.mxu0 0.0
  %4981 = vmatpush.msra.mxu0 0.0
  %4982 = vmatpush.msra.mxu0 0.0
  %4983 = vmatpush.msra.mxu0 0.0
  %4984 = vmatpush.msra.mxu0 0.0
  %4985 = vmatpush.msra.mxu0 0.0
  %4986 = vmatpush.msra.mxu0 0.0
  %4987 = vmatpush.msra.mxu0 0.0
  %4988 = vmatpush.msra.mxu0 0.0
  %4989 = vmatpush.msra.mxu0 0.0
  %4990 = vmatpush.msra.mxu0 0.0
  %4991 = vmatpush.msra.mxu0 0.0
  %4992 = vmatpush.msra.mxu0 0.0
  %4993 = vmatpush.msra.mxu0 0.0
  %4994 = vmatpush.msra.mxu0 %v4972
  %4995 = vmatmul.f32.gmra.mxu0 %v4977
  %v4996 = vpop.f32.mrf.mxu0
  %v4997 = vadd.f32 0.0, %v4996
  %4998 = vdwg.mxu0
  %4999 = vmatpush.msra.mxu0 0.0
  %5000 = vmatpush.msra.mxu0 0.0
  %5001 = vmatpush.msra.mxu0 0.0
  %5002 = vmatpush.msra.mxu0 0.0
  %5003 = vmatpush.msra.mxu0 0.0
  %5004 = vmatpush.msra.mxu0 0.0
  %5005 = vmatpush.msra.mxu0 0.0
  %5006 = vmatpush.msra.mxu0 0.0
  %5007 = vmatpush.msra.mxu0 0.0
  %5008 = vmatpush.msra.mxu0 0.0
  %5009 = vmatpush.msra.mxu0 0.0
  %5010 = vmatpush.msra.mxu0 0.0
  %5011 = vmatpush.msra.mxu0 0.0
  %5012 = vmatpush.msra.mxu0 0.0
  %5013 = vmatpush.msra.mxu0 0.0
  %5014 = vmatpush.msra.mxu0 %v4973
  %5015 = vmatmul.f32.gmra.mxu0 %v4977
  %v5016 = vpop.f32.mrf.mxu0
  %v5017 = vadd.f32 0.0, %v5016
  %5018 = vdwg.mxu0
  %5019 = vmatpush.msra.mxu0 0.0
  %5020 = vmatpush.msra.mxu0 0.0
  %5021 = vmatpush.msra.mxu0 0.0
  %5022 = vmatpush.msra.mxu0 0.0
  %5023 = vmatpush.msra.mxu0 0.0
  %5024 = vmatpush.msra.mxu0 0.0
  %5025 = vmatpush.msra.mxu0 0.0
  %5026 = vmatpush.msra.mxu0 0.0
  %5027 = vmatpush.msra.mxu0 0.0
  %5028 = vmatpush.msra.mxu0 0.0
  %5029 = vmatpush.msra.mxu0 0.0
  %5030 = vmatpush.msra.mxu0 0.0
  %5031 = vmatpush.msra.mxu0 0.0
  %5032 = vmatpush.msra.mxu0 0.0
  %5033 = vmatpush.msra.mxu0 0.0
  %5034 = vmatpush.msra.mxu0 %v4974
  %5035 = vmatmul.f32.gmra.mxu0 %v4977
  %v5036 = vpop.f32.mrf.mxu0
  %v5037 = vadd.f32 0.0, %v5036
  %5038 = vdwg.mxu0
  %5039 = vmatpush.msra.mxu0 0.0
  %5040 = vmatpush.msra.mxu0 0.0
  %5041 = vmatpush.msra.mxu0 0.0
  %5042 = vmatpush.msra.mxu0 0.0
  %5043 = vmatpush.msra.mxu0 0.0
  %5044 = vmatpush.msra.mxu0 0.0
  %5045 = vmatpush.msra.mxu0 0.0
  %5046 = vmatpush.msra.mxu0 0.0
  %5047 = vmatpush.msra.mxu0 0.0
  %5048 = vmatpush.msra.mxu0 0.0
  %5049 = vmatpush.msra.mxu0 0.0
  %5050 = vmatpush.msra.mxu0 0.0
  %5051 = vmatpush.msra.mxu0 0.0
  %5052 = vmatpush.msra.mxu0 0.0
  %5053 = vmatpush.msra.mxu0 0.0
  %5054 = vmatpush.msra.mxu0 %v4975
  %5055 = vmatmul.f32.gmra.mxu0 %v4977
  %v5056 = vpop.f32.mrf.mxu0
  %v5057 = vadd.f32 0.0, %v5056
  %5058 = vdwg.mxu0
  %v5059 = vadd.f32 %v4956, %v4997
  %v5060 = vadd.f32 %v4957, %v5017
  %v5061 = vadd.f32 %v4958, %v5037
  %v5062 = vadd.f32 %v4959, %v5057
  %5063 = vrot.lane.b32.xlu0 %v4352, 112
  %v5064 = vpop.permute.xlu0 %5063
  %5065 = vrot.lane.b32.xlu0 %v4353, 112
  %v5066 = vpop.permute.xlu0 %5065
  %5067 = vrot.lane.b32.xlu0 %v4354, 112
  %v5068 = vpop.permute.xlu0 %5067
  %5069 = vrot.lane.b32.xlu0 %v4355, 112
  %v5070 = vpop.permute.xlu0 %5069
  %v5071 = vsel %vm1042, %v5068, %v5070
  %v5072 = vsel %vm1042, %v5066, %v5068
  %v5073 = vsel %vm1042, %v5064, %v5066
  %v5074 = vsel %vm1042, %v5070, %v5064
  %v5075 = vmul.f32 %v5073, %v153
  %v5076 = vmul.f32 %v5072, %v154
  %v5077 = vmul.f32 %v5071, %v155
  %v5078 = vmul.f32 %v5074, %v156
  %v5080 = vsel %vm239, %v4364, 0
  %5082 = vmatpush.msra.mxu0 0.0
  %5083 = vmatpush.msra.mxu0 0.0
  %5084 = vmatpush.msra.mxu0 0.0
  %5085 = vmatpush.msra.mxu0 0.0
  %5086 = vmatpush.msra.mxu0 0.0
  %5087 = vmatpush.msra.mxu0 0.0
  %5088 = vmatpush.msra.mxu0 0.0
  %5089 = vmatpush.msra.mxu0 0.0
  %5090 = vmatpush.msra.mxu0 0.0
  %5091 = vmatpush.msra.mxu0 0.0
  %5092 = vmatpush.msra.mxu0 0.0
  %5093 = vmatpush.msra.mxu0 0.0
  %5094 = vmatpush.msra.mxu0 0.0
  %5095 = vmatpush.msra.mxu0 0.0
  %5096 = vmatpush.msra.mxu0 0.0
  %5097 = vmatpush.msra.mxu0 %v5075
  %5098 = vmatmul.f32.gmra.mxu0 %v5080
  %v5099 = vpop.f32.mrf.mxu0
  %v5100 = vadd.f32 0.0, %v5099
  %5101 = vdwg.mxu0
  %5102 = vmatpush.msra.mxu0 0.0
  %5103 = vmatpush.msra.mxu0 0.0
  %5104 = vmatpush.msra.mxu0 0.0
  %5105 = vmatpush.msra.mxu0 0.0
  %5106 = vmatpush.msra.mxu0 0.0
  %5107 = vmatpush.msra.mxu0 0.0
  %5108 = vmatpush.msra.mxu0 0.0
  %5109 = vmatpush.msra.mxu0 0.0
  %5110 = vmatpush.msra.mxu0 0.0
  %5111 = vmatpush.msra.mxu0 0.0
  %5112 = vmatpush.msra.mxu0 0.0
  %5113 = vmatpush.msra.mxu0 0.0
  %5114 = vmatpush.msra.mxu0 0.0
  %5115 = vmatpush.msra.mxu0 0.0
  %5116 = vmatpush.msra.mxu0 0.0
  %5117 = vmatpush.msra.mxu0 %v5076
  %5118 = vmatmul.f32.gmra.mxu0 %v5080
  %v5119 = vpop.f32.mrf.mxu0
  %v5120 = vadd.f32 0.0, %v5119
  %5121 = vdwg.mxu0
  %5122 = vmatpush.msra.mxu0 0.0
  %5123 = vmatpush.msra.mxu0 0.0
  %5124 = vmatpush.msra.mxu0 0.0
  %5125 = vmatpush.msra.mxu0 0.0
  %5126 = vmatpush.msra.mxu0 0.0
  %5127 = vmatpush.msra.mxu0 0.0
  %5128 = vmatpush.msra.mxu0 0.0
  %5129 = vmatpush.msra.mxu0 0.0
  %5130 = vmatpush.msra.mxu0 0.0
  %5131 = vmatpush.msra.mxu0 0.0
  %5132 = vmatpush.msra.mxu0 0.0
  %5133 = vmatpush.msra.mxu0 0.0
  %5134 = vmatpush.msra.mxu0 0.0
  %5135 = vmatpush.msra.mxu0 0.0
  %5136 = vmatpush.msra.mxu0 0.0
  %5137 = vmatpush.msra.mxu0 %v5077
  %5138 = vmatmul.f32.gmra.mxu0 %v5080
  %v5139 = vpop.f32.mrf.mxu0
  %v5140 = vadd.f32 0.0, %v5139
  %5141 = vdwg.mxu0
  %5142 = vmatpush.msra.mxu0 0.0
  %5143 = vmatpush.msra.mxu0 0.0
  %5144 = vmatpush.msra.mxu0 0.0
  %5145 = vmatpush.msra.mxu0 0.0
  %5146 = vmatpush.msra.mxu0 0.0
  %5147 = vmatpush.msra.mxu0 0.0
  %5148 = vmatpush.msra.mxu0 0.0
  %5149 = vmatpush.msra.mxu0 0.0
  %5150 = vmatpush.msra.mxu0 0.0
  %5151 = vmatpush.msra.mxu0 0.0
  %5152 = vmatpush.msra.mxu0 0.0
  %5153 = vmatpush.msra.mxu0 0.0
  %5154 = vmatpush.msra.mxu0 0.0
  %5155 = vmatpush.msra.mxu0 0.0
  %5156 = vmatpush.msra.mxu0 0.0
  %5157 = vmatpush.msra.mxu0 %v5078
  %5158 = vmatmul.f32.gmra.mxu0 %v5080
  %v5159 = vpop.f32.mrf.mxu0
  %v5160 = vadd.f32 0.0, %v5159
  %5161 = vdwg.mxu0
  %v5162 = vadd.f32 %v5059, %v5100
  %v5163 = vadd.f32 %v5060, %v5120
  %v5164 = vadd.f32 %v5061, %v5140
  %v5165 = vadd.f32 %v5062, %v5160
  %5166 = vrot.lane.b32.xlu0 %v4352, 111
  %v5167 = vpop.permute.xlu0 %5166
  %5168 = vrot.lane.b32.xlu0 %v4353, 111
  %v5169 = vpop.permute.xlu0 %5168
  %5170 = vrot.lane.b32.xlu0 %v4354, 111
  %v5171 = vpop.permute.xlu0 %5170
  %5172 = vrot.lane.b32.xlu0 %v4355, 111
  %v5173 = vpop.permute.xlu0 %5172
  %v5174 = vsel %vm1165, %v5171, %v5173
  %v5175 = vsel %vm1165, %v5169, %v5171
  %v5176 = vsel %vm1165, %v5167, %v5169
  %v5177 = vsel %vm1165, %v5173, %v5167
  %v5178 = vmul.f32 %v5176, %v165
  %v5179 = vmul.f32 %v5175, %v166
  %v5180 = vmul.f32 %v5174, %v167
  %v5181 = vmul.f32 %v5177, %v168
  %v5183 = vsel %vm239, %v4365, 0
  %5185 = vmatpush.msra.mxu0 0.0
  %5186 = vmatpush.msra.mxu0 0.0
  %5187 = vmatpush.msra.mxu0 0.0
  %5188 = vmatpush.msra.mxu0 0.0
  %5189 = vmatpush.msra.mxu0 0.0
  %5190 = vmatpush.msra.mxu0 0.0
  %5191 = vmatpush.msra.mxu0 0.0
  %5192 = vmatpush.msra.mxu0 0.0
  %5193 = vmatpush.msra.mxu0 0.0
  %5194 = vmatpush.msra.mxu0 0.0
  %5195 = vmatpush.msra.mxu0 0.0
  %5196 = vmatpush.msra.mxu0 0.0
  %5197 = vmatpush.msra.mxu0 0.0
  %5198 = vmatpush.msra.mxu0 0.0
  %5199 = vmatpush.msra.mxu0 0.0
  %5200 = vmatpush.msra.mxu0 %v5178
  %5201 = vmatmul.f32.gmra.mxu0 %v5183
  %v5202 = vpop.f32.mrf.mxu0
  %v5203 = vadd.f32 0.0, %v5202
  %5204 = vdwg.mxu0
  %5205 = vmatpush.msra.mxu0 0.0
  %5206 = vmatpush.msra.mxu0 0.0
  %5207 = vmatpush.msra.mxu0 0.0
  %5208 = vmatpush.msra.mxu0 0.0
  %5209 = vmatpush.msra.mxu0 0.0
  %5210 = vmatpush.msra.mxu0 0.0
  %5211 = vmatpush.msra.mxu0 0.0
  %5212 = vmatpush.msra.mxu0 0.0
  %5213 = vmatpush.msra.mxu0 0.0
  %5214 = vmatpush.msra.mxu0 0.0
  %5215 = vmatpush.msra.mxu0 0.0
  %5216 = vmatpush.msra.mxu0 0.0
  %5217 = vmatpush.msra.mxu0 0.0
  %5218 = vmatpush.msra.mxu0 0.0
  %5219 = vmatpush.msra.mxu0 0.0
  %5220 = vmatpush.msra.mxu0 %v5179
  %5221 = vmatmul.f32.gmra.mxu0 %v5183
  %v5222 = vpop.f32.mrf.mxu0
  %v5223 = vadd.f32 0.0, %v5222
  %5224 = vdwg.mxu0
  %5225 = vmatpush.msra.mxu0 0.0
  %5226 = vmatpush.msra.mxu0 0.0
  %5227 = vmatpush.msra.mxu0 0.0
  %5228 = vmatpush.msra.mxu0 0.0
  %5229 = vmatpush.msra.mxu0 0.0
  %5230 = vmatpush.msra.mxu0 0.0
  %5231 = vmatpush.msra.mxu0 0.0
  %5232 = vmatpush.msra.mxu0 0.0
  %5233 = vmatpush.msra.mxu0 0.0
  %5234 = vmatpush.msra.mxu0 0.0
  %5235 = vmatpush.msra.mxu0 0.0
  %5236 = vmatpush.msra.mxu0 0.0
  %5237 = vmatpush.msra.mxu0 0.0
  %5238 = vmatpush.msra.mxu0 0.0
  %5239 = vmatpush.msra.mxu0 0.0
  %5240 = vmatpush.msra.mxu0 %v5180
  %5241 = vmatmul.f32.gmra.mxu0 %v5183
  %v5242 = vpop.f32.mrf.mxu0
  %v5243 = vadd.f32 0.0, %v5242
  %5244 = vdwg.mxu0
  %5245 = vmatpush.msra.mxu0 0.0
  %5246 = vmatpush.msra.mxu0 0.0
  %5247 = vmatpush.msra.mxu0 0.0
  %5248 = vmatpush.msra.mxu0 0.0
  %5249 = vmatpush.msra.mxu0 0.0
  %5250 = vmatpush.msra.mxu0 0.0
  %5251 = vmatpush.msra.mxu0 0.0
  %5252 = vmatpush.msra.mxu0 0.0
  %5253 = vmatpush.msra.mxu0 0.0
  %5254 = vmatpush.msra.mxu0 0.0
  %5255 = vmatpush.msra.mxu0 0.0
  %5256 = vmatpush.msra.mxu0 0.0
  %5257 = vmatpush.msra.mxu0 0.0
  %5258 = vmatpush.msra.mxu0 0.0
  %5259 = vmatpush.msra.mxu0 0.0
  %5260 = vmatpush.msra.mxu0 %v5181
  %5261 = vmatmul.f32.gmra.mxu0 %v5183
  %v5262 = vpop.f32.mrf.mxu0
  %v5263 = vadd.f32 0.0, %v5262
  %5264 = vdwg.mxu0
  %v5265 = vadd.f32 %v5162, %v5203
  %v5266 = vadd.f32 %v5163, %v5223
  %v5267 = vadd.f32 %v5164, %v5243
  %v5268 = vadd.f32 %v5165, %v5263
  %5270 = vset.pattern.permute.xlu0 0
  %5271 = vperm.xlu0 %5270, %v4356
  %v5272 = vpop.permute.xlu0 %5271
  %v5274 = vadd.f32 %v5265, %v5272
  %v5275 = vadd.f32 %v5266, %v5272
  %v5276 = vadd.f32 %v5267, %v5272
  %v5277 = vadd.f32 %v5268, %v5272
  %v5278 = vmax.f32 %v5274, 0.0
  %v5279 = vmax.f32 %v5275, 0.0
  %v5280 = vmax.f32 %v5276, 0.0
  %v5281 = vmax.f32 %v5277, 0.0
  %v5282 = vadd.f32 %v5278, %v5279
  %v5283 = vadd.f32 %v5282, %v5280
  %v5284 = vadd.f32 %v5283, %v5281
  %5285 = vadd.xlane.f32.xlu0 %v5284
  %v5286 = vpop.xlane.xlu0 %5285
  %v5287 = vmul.f32 %v5278, %v5278
  %v5288 = vmul.f32 %v5279, %v5279
  %v5289 = vmul.f32 %v5280, %v5280
  %v5290 = vmul.f32 %v5281, %v5281
  %v5291 = vadd.f32 %v5287, %v5288
  %v5292 = vadd.f32 %v5291, %v5289
  %v5293 = vadd.f32 %v5292, %v5290
  %5294 = vadd.xlane.f32.xlu0 %v5293
  %v5295 = vpop.xlane.xlu0 %5294
  %v5296 = vmul.f32 %v5286, 0.001953125
  %v5297 = vmul.f32 %v5295, 0.001953125
  %v5298 = vmul.f32 %v5296, %v5296
  %v5299 = vsub.f32 %v5297, %v5298
  %v5300 = vsub.f32 %v5278, %v5296
  %v5301 = vsub.f32 %v5279, %v5296
  %v5302 = vsub.f32 %v5280, %v5296
  %v5303 = vsub.f32 %v5281, %v5296
  %v5304 = vadd.f32 %v5299, 1e-05
  %v5305 = vrsqrt.pop %v5304
  %v5306 = vmul.f32 %v5305, %v5304
  %v5307 = vmul.f32 %v5306, %v5305
  %v5308 = vmul.f32 0.5, %v5307
  %v5309 = vsub.f32 1.5, %v5308
  %v5310 = vmul.f32 %v5305, %v5309
  %vm5311 = vweird.f32 %v5304
  %vm5312 = vweird.f32 %v5305
  %vm5313 = vmor %vm5311, %vm5312
  %v5314 = vsel %vm5313, %v5305, %v5310
  %v5315 = vmul.f32 %v5300, %v5314
  %v5316 = vmul.f32 %v5301, %v5314
  %v5317 = vmul.f32 %v5302, %v5314
  %v5318 = vmul.f32 %v5303, %v5314
  %v5319 = vld [vmem:[%s16] sm:$0x1]
  %v5320 = vld [vmem:[#allocation3] sm:$0x1]
  %5322 = vset.pattern.permute.xlu0 0
  %5323 = vperm.xlu0 %5322, %v5320
  %v5324 = vpop.permute.xlu0 %5323
  %v5326 = vperm.slane %v5324, 0
  %v5328 = vsel %vm239, %v5319, 0
  %5330 = vmatpush.msra.mxu0 0.0
  %5331 = vmatpush.msra.mxu0 0.0
  %5332 = vmatpush.msra.mxu0 0.0
  %5333 = vmatpush.msra.mxu0 0.0
  %5334 = vmatpush.msra.mxu0 0.0
  %5335 = vmatpush.msra.mxu0 0.0
  %5336 = vmatpush.msra.mxu0 0.0
  %5337 = vmatpush.msra.mxu0 0.0
  %5338 = vmatpush.msra.mxu0 0.0
  %5339 = vmatpush.msra.mxu0 0.0
  %5340 = vmatpush.msra.mxu0 0.0
  %5341 = vmatpush.msra.mxu0 0.0
  %5342 = vmatpush.msra.mxu0 0.0
  %5343 = vmatpush.msra.mxu0 0.0
  %5344 = vmatpush.msra.mxu0 0.0
  %5345 = vmatpush.msra.mxu0 %v5315
  %5346 = vmatmul.f32.gmra.mxu0 %v5328
  %v5347 = vpop.f32.mrf.mxu0
  %v5348 = vadd.f32 %v5326, %v5347
  %5349 = vdwg.mxu0
  %5350 = vmatpush.msra.mxu0 0.0
  %5351 = vmatpush.msra.mxu0 0.0
  %5352 = vmatpush.msra.mxu0 0.0
  %5353 = vmatpush.msra.mxu0 0.0
  %5354 = vmatpush.msra.mxu0 0.0
  %5355 = vmatpush.msra.mxu0 0.0
  %5356 = vmatpush.msra.mxu0 0.0
  %5357 = vmatpush.msra.mxu0 0.0
  %5358 = vmatpush.msra.mxu0 0.0
  %5359 = vmatpush.msra.mxu0 0.0
  %5360 = vmatpush.msra.mxu0 0.0
  %5361 = vmatpush.msra.mxu0 0.0
  %5362 = vmatpush.msra.mxu0 0.0
  %5363 = vmatpush.msra.mxu0 0.0
  %5364 = vmatpush.msra.mxu0 0.0
  %5365 = vmatpush.msra.mxu0 %v5316
  %5366 = vmatmul.f32.gmra.mxu0 %v5328
  %v5367 = vpop.f32.mrf.mxu0
  %v5368 = vadd.f32 %v5326, %v5367
  %5369 = vdwg.mxu0
  %5370 = vmatpush.msra.mxu0 0.0
  %5371 = vmatpush.msra.mxu0 0.0
  %5372 = vmatpush.msra.mxu0 0.0
  %5373 = vmatpush.msra.mxu0 0.0
  %5374 = vmatpush.msra.mxu0 0.0
  %5375 = vmatpush.msra.mxu0 0.0
  %5376 = vmatpush.msra.mxu0 0.0
  %5377 = vmatpush.msra.mxu0 0.0
  %5378 = vmatpush.msra.mxu0 0.0
  %5379 = vmatpush.msra.mxu0 0.0
  %5380 = vmatpush.msra.mxu0 0.0
  %5381 = vmatpush.msra.mxu0 0.0
  %5382 = vmatpush.msra.mxu0 0.0
  %5383 = vmatpush.msra.mxu0 0.0
  %5384 = vmatpush.msra.mxu0 0.0
  %5385 = vmatpush.msra.mxu0 %v5317
  %5386 = vmatmul.f32.gmra.mxu0 %v5328
  %v5387 = vpop.f32.mrf.mxu0
  %v5388 = vadd.f32 %v5326, %v5387
  %5389 = vdwg.mxu0
  %5390 = vmatpush.msra.mxu0 0.0
  %5391 = vmatpush.msra.mxu0 0.0
  %5392 = vmatpush.msra.mxu0 0.0
  %5393 = vmatpush.msra.mxu0 0.0
  %5394 = vmatpush.msra.mxu0 0.0
  %5395 = vmatpush.msra.mxu0 0.0
  %5396 = vmatpush.msra.mxu0 0.0
  %5397 = vmatpush.msra.mxu0 0.0
  %5398 = vmatpush.msra.mxu0 0.0
  %5399 = vmatpush.msra.mxu0 0.0
  %5400 = vmatpush.msra.mxu0 0.0
  %5401 = vmatpush.msra.mxu0 0.0
  %5402 = vmatpush.msra.mxu0 0.0
  %5403 = vmatpush.msra.mxu0 0.0
  %5404 = vmatpush.msra.mxu0 0.0
  %5405 = vmatpush.msra.mxu0 %v5318
  %5406 = vmatmul.f32.gmra.mxu0 %v5328
  %v5407 = vpop.f32.mrf.mxu0
  %v5408 = vadd.f32 %v5326, %v5407
  %5409 = vdwg.mxu0
  %v5410 = vsub.f32 0.0, %v5348
  %v5411 = vsub.f32 0.0, %v5368
  %v5412 = vsub.f32 0.0, %v5388
  %v5413 = vsub.f32 0.0, %v5408
  %v5414 = vmul.f32 %v5410, 1.442695
  %v5415 = vpow.pop %v5414
  %v5416 = vmul.f32 %v5411, 1.442695
  %v5417 = vpow.pop %v5416
  %v5418 = vmul.f32 %v5412, 1.442695
  %v5419 = vpow.pop %v5418
  %v5420 = vmul.f32 %v5413, 1.442695
  %v5421 = vpow.pop %v5420
  %v5422 = vadd.f32 %v5415, 1.0
  %v5423 = vadd.f32 %v5417, 1.0
  %v5424 = vadd.f32 %v5419, 1.0
  %v5425 = vadd.f32 %v5421, 1.0
  %v5426 = vrcp.pop %v5422
  %v5427 = vmul.f32 %v5422, %v5426
  %v5428 = vsub.f32 1.0, %v5427
  %v5429 = vmul.f32 %v5426, %v5428
  %v5430 = vadd.f32 %v5426, %v5429
  %vm5431 = vweird.f32 %v5422
  %vm5432 = vweird.f32 %v5426
  %vm5433 = vmor %vm5431, %vm5432
  %v5434 = vsel %vm5433, %v5426, %v5430
  %v5435 = vand.u32 2147483647, %v5422
  %vm5436 = vcmp.eq.f32.partialorder %v5435, 8.507059e+37
  %v5437 = vand.u32 %v5422, 2147483648
  %v5438 = vor.u32 1.1754944e-38, %v5437
  %v5439 = vsel %vm5436, %v5438, %v5434
  %v5440 = vmul.f32 1.0, %v5439
  %v5441 = vrcp.pop %v5423
  %v5442 = vmul.f32 %v5423, %v5441
  %v5443 = vsub.f32 1.0, %v5442
  %v5444 = vmul.f32 %v5441, %v5443
  %v5445 = vadd.f32 %v5441, %v5444
  %vm5446 = vweird.f32 %v5423
  %vm5447 = vweird.f32 %v5441
  %vm5448 = vmor %vm5446, %vm5447
  %v5449 = vsel %vm5448, %v5441, %v5445
  %v5450 = vand.u32 2147483647, %v5423
  %vm5451 = vcmp.eq.f32.partialorder %v5450, 8.507059e+37
  %v5452 = vand.u32 %v5423, 2147483648
  %v5453 = vor.u32 1.1754944e-38, %v5452
  %v5454 = vsel %vm5451, %v5453, %v5449
  %v5455 = vmul.f32 1.0, %v5454
  %v5456 = vrcp.pop %v5424
  %v5457 = vmul.f32 %v5424, %v5456
  %v5458 = vsub.f32 1.0, %v5457
  %v5459 = vmul.f32 %v5456, %v5458
  %v5460 = vadd.f32 %v5456, %v5459
  %vm5461 = vweird.f32 %v5424
  %vm5462 = vweird.f32 %v5456
  %vm5463 = vmor %vm5461, %vm5462
  %v5464 = vsel %vm5463, %v5456, %v5460
  %v5465 = vand.u32 2147483647, %v5424
  %vm5466 = vcmp.eq.f32.partialorder %v5465, 8.507059e+37
  %v5467 = vand.u32 %v5424, 2147483648
  %v5468 = vor.u32 1.1754944e-38, %v5467
  %v5469 = vsel %vm5466, %v5468, %v5464
  %v5470 = vmul.f32 1.0, %v5469
  %v5471 = vrcp.pop %v5425
  %v5472 = vmul.f32 %v5425, %v5471
  %v5473 = vsub.f32 1.0, %v5472
  %v5474 = vmul.f32 %v5471, %v5473
  %v5475 = vadd.f32 %v5471, %v5474
  %vm5476 = vweird.f32 %v5425
  %vm5477 = vweird.f32 %v5471
  %vm5478 = vmor %vm5476, %vm5477
  %v5479 = vsel %vm5478, %v5471, %v5475
  %v5480 = vand.u32 2147483647, %v5425
  %vm5481 = vcmp.eq.f32.partialorder %v5480, 8.507059e+37
  %v5482 = vand.u32 %v5425, 2147483648
  %v5483 = vor.u32 1.1754944e-38, %v5482
  %v5484 = vsel %vm5481, %v5483, %v5479
  %v5485 = vmul.f32 1.0, %v5484
  %v5486 = vperm.slane %v5440, 0
  %v5487 = vperm.slane %v5455, 0
  %v5488 = vperm.slane %v5470, 0
  %v5489 = vperm.slane %v5485, 0
  %v5490 = vmul.f32 %v181, %v5486
  %v5491 = vmul.f32 %v182, %v5487
  %v5492 = vmul.f32 %v183, %v5488
  %v5493 = vmul.f32 %v184, %v5489
  %v5494 = vadd.f32 %v3385, %v5490
  %v5495 = vadd.f32 %v3386, %v5491
  %v5496 = vadd.f32 %v3387, %v5492
  %v5497 = vadd.f32 %v3388, %v5493
  %5498 = vst [vmem:[%s18] sm:$0xff] %v5494
  %5499 = vst [vmem:[%s18 + $0x8] sm:$0xff] %v5495
  %5500 = vst [vmem:[%s18 + $0x10] sm:$0xff] %v5496
  %5501 = vst [vmem:[%s18 + $0x18] sm:$0xff] %v5497
  // Predicated region
  $region74: #{pixel_attention_forward.1} parent=0 // pred_check
    _
  $region75: #{pixel_attention_forward.1} parent=0 // pred_check_branch
    %5503 = sbr.rel (0) target = $region77
  $region76: #{pixel_attention_forward.1} parent=0 // pred_region
    _
  $region77: #{pixel_attention_forward.1} parent=0 // pred_fallthru
    _
  // Predicated region
  $region78: #{pixel_attention_forward.1} parent=0 // pred_check
    _
  $region79: #{pixel_attention_forward.1} parent=0 // pred_check_branch
    %5505 = sbr.rel (0) target = $region81
  $region80: #{pixel_attention_forward.1} parent=0 // pred_region
    _
  $region81: #{pixel_attention_forward.1} parent=0 // pred_fallthru
    _

</llo_original>
